<compile_context>
chip_gen: v5e
topology: v5e:2x2
jax: 0.10.0
libtpu: 0.0.40
codegen_flags: <defaults>
</compile_context>

<pallas_src>
import functools
import math

import jax
import jax.numpy as jnp
from jax import lax
from jax.experimental import pallas as pl
from jax.experimental.pallas import tpu as pltpu


NEG_INF = -1e30   # finite: never produces NaN even on fully-masked sub-rows


# ----------------------------- device heuristics ---------------------------- #

def _device_kind():
    try:
        return jax.devices()[0].device_kind.lower()
    except Exception:  # pragma: no cover
        return ""


def _vmem_limit_bytes():
    kind = _device_kind()
    if "v7" in kind:                       # 64 MiB physical -> leave headroom
        return 48 * 1024 * 1024
    if "v5e" in kind or "v5 lite" in kind or "v5lite" in kind:
        return 96 * 1024 * 1024            # 128 MiB physical, bandwidth-starved
    return 64 * 1024 * 1024                # v4/v5p/v6e default


def _use_bf16_exp():
    # bf16 EUP path exists on v6e/v7x; NOT on v2-v5.
    kind = _device_kind()
    return not any(v in kind for v in ("v2", "v3", "v4", "v5"))


VMEM_LIMIT_BYTES = _vmem_limit_bytes()
USE_BF16_EXP = _use_bf16_exp()


def _pick_tile(dim, cap, align):
    """Largest `align`-aligned divisor of `dim` that is <= cap (or dim itself)."""
    if dim <= cap:
        return dim
    t = (cap // align) * align
    while t >= align:
        if dim % t == 0:
            return t
        t -= align
    return dim


# --------------------------- tiled linear (GEMM) ---------------------------- #

def _linear_fullk_kernel(x_ref, w_ref, b_ref, o_ref):
    """One (tm, tn) output tile, whole K reduced in a single MXU pass."""
    o_ref[...] = (
        jnp.dot(x_ref[...], w_ref[...], preferred_element_type=jnp.float32)
        + b_ref[...]
    ).astype(o_ref.dtype)


def _linear_reduce_kernel(x_ref, w_ref, b_ref, o_ref, acc_ref):
    """K-tiled variant (only used for very large K)."""
    k = pl.program_id(2)

    @pl.when(k == 0)
    def _():
        acc_ref[...] = jnp.zeros_like(acc_ref)

    acc_ref[...] += jnp.dot(x_ref[...], w_ref[...],
                            preferred_element_type=jnp.float32)

    @pl.when(k == pl.num_programs(2) - 1)
    def _():
        o_ref[...] = (acc_ref[...] + b_ref[...]).astype(o_ref.dtype)


def pallas_linear(x2d, w_t, b, *, tm_cap=512, tn_cap=512, fullk_max=2048):
    """x2d: (M, K) bf16, w_t: (K, N) bf16 (transposed torch weight), b: (N,) f32.

    Returns (M, N) bf16.
    """
    M, K = x2d.shape
    N = w_t.shape[1]
    tm = _pick_tile(M, tm_cap, 8)
    tn = _pick_tile(N, tn_cap, 128)
    b2d = b.reshape(1, N).astype(jnp.float32)
    out_shape = jax.ShapeDtypeStruct((M, N), jnp.bfloat16)

    if K <= fullk_max:
        # Full-K reduction: no K grid axis, no accumulator scratch.
        return pl.pallas_call(
            _linear_fullk_kernel,
            out_shape=out_shape,
            grid_spec=pltpu.PrefetchScalarGridSpec(
                num_scalar_prefetch=0,
                grid=(M // tm, N // tn),
                in_specs=[
                    pl.BlockSpec((tm, K), lambda i, j: (i, 0)),
                    pl.BlockSpec((K, tn), lambda i, j: (0, j)),
                    pl.BlockSpec((1, tn), lambda i, j: (0, j)),
                ],
                out_specs=pl.BlockSpec((tm, tn), lambda i, j: (i, j)),
            ),
            compiler_params=pltpu.CompilerParams(
                dimension_semantics=("parallel", "parallel"),
                vmem_limit_bytes=VMEM_LIMIT_BYTES,
            ),
        )(x2d, w_t, b2d)

    tk = _pick_tile(K, 1024, 128)
    return pl.pallas_call(
        _linear_reduce_kernel,
        out_shape=out_shape,
        grid_spec=pltpu.PrefetchScalarGridSpec(
            num_scalar_prefetch=0,
            grid=(M // tm, N // tn, K // tk),
            in_specs=[
                pl.BlockSpec((tm, tk), lambda i, j, k: (i, k)),
                pl.BlockSpec((tk, tn), lambda i, j, k: (k, j)),
                pl.BlockSpec((1, tn), lambda i, j, k: (0, j)),
            ],
            out_specs=pl.BlockSpec((tm, tn), lambda i, j, k: (i, j)),
            scratch_shapes=[pltpu.VMEM((tm, tn), jnp.float32)],
        ),
        compiler_params=pltpu.CompilerParams(
            dimension_semantics=("parallel", "parallel", "arbitrary"),
            vmem_limit_bytes=VMEM_LIMIT_BYTES,
        ),
    )(x2d, w_t, b2d)


# --------------------- flash-style causal attention ------------------------- #

def make_flash_attn_kernel(blk_q, head_dim, heads_per_group, kv_chunk, use_bf16_exp):
    D = head_dim
    G = blk_q // kv_chunk          # diagonal-overlapping kv chunks per q block

    def kernel(q_ref, k_ref, v_ref, o_ref, m_sc, l_sc, acc_sc):
        # q_ref/o_ref: (1, blk_q, heads_per_group*D) bf16
        # k_ref/v_ref: (1, T, heads_per_group*D) bf16 (resident across the q axis)
        qi = pl.program_id(2)
        n_full = qi * G            # fully-visible kv chunks (strictly below diag)
        q_row0 = qi * blk_q

        for hi in range(heads_per_group):          # static loop over grouped heads
            col_lo = hi * D
            # 1/sqrt(D) already folded into the c_attn weights -> no rescale here.
            q = q_ref[0, :, col_lo:col_lo + D]      # (blk_q, D) bf16

            m_sc[...] = jnp.full_like(m_sc, NEG_INF)
            l_sc[...] = jnp.zeros_like(l_sc)
            acc_sc[...] = jnp.zeros_like(acc_sc)

            def accumulate(c, masked):
                start = pl.multiple_of(c * kv_chunk, kv_chunk)
                k_t = k_ref[0, pl.ds(start, kv_chunk), col_lo:col_lo + D]
                s = lax.dot_general(q, k_t, (((1,), (1,)), ((), ())),
                                    preferred_element_type=jnp.float32)
                if masked:  # only diagonal-overlapping chunks build the iota mask
                    row = q_row0 + lax.broadcasted_iota(jnp.int32, (blk_q, kv_chunk), 0)
                    col = start + lax.broadcasted_iota(jnp.int32, (blk_q, kv_chunk), 1)
                    s = jnp.where(col <= row, s, NEG_INF)

                m_prev = m_sc[...]
                m_new = jnp.maximum(m_prev, jnp.max(s, axis=-1, keepdims=True))
                alpha = jnp.exp(m_prev - m_new)
                z = s - m_new
                if use_bf16_exp:                    # bf16 EUP path (v6e/v7x only)
                    z = z.astype(jnp.bfloat16)
                p = jnp.exp(z)                      # unnormalised probabilities
                l_sc[...] = alpha * l_sc[...] + jnp.sum(
                    p.astype(jnp.float32), axis=-1, keepdims=True)
                v_t = v_ref[0, pl.ds(start, kv_chunk), col_lo:col_lo + D]
                acc_sc[...] = alpha * acc_sc[...] + jnp.dot(
                    p.astype(jnp.bfloat16), v_t, preferred_element_type=jnp.float32)
                m_sc[...] = m_new

            # Fully-visible kv chunks: dynamic trip count, no mask, no wasted
            # grid steps / DMA for anything above the causal diagonal.
            def body(c, carry):
                accumulate(c, masked=False)
                return carry

            lax.fori_loop(0, n_full, body, 0)

            # Diagonal-overlapping chunks (static count G): masked.
            for g in range(G):
                accumulate(n_full + g, masked=True)

            inv_l = pl.reciprocal(l_sc[...], approx=True)
            o_ref[0, :, col_lo:col_lo + D] = (acc_sc[...] * inv_l).astype(o_ref.dtype)

    return kernel


def pallas_flash_attention(qkv, n_head, *, blk_q=256, kv_chunk=128):
    """qkv: (B, T, 3C) fused c_attn activations (bf16) -> (B, T, C) bf16."""
    B, T, three_c = qkv.shape
    C = three_c // 3
    H = n_head
    D = C // H

    # Group heads so the last block dim is lane-dense (>=128) when D < 128.
    hpg = 1
    if D < 128:
        hpg = min(H, max(1, 128 // D))
        while H % hpg != 0:
            hpg -= 1
    HG = H // hpg
    Dg = hpg * D

    kv_chunk = min(kv_chunk, T)
    if T % kv_chunk != 0:
        kv_chunk = math.gcd(T, kv_chunk)
    blk_q = max(kv_chunk, (min(blk_q, T) // kv_chunk) * kv_chunk)
    while T % blk_q != 0:
        blk_q -= kv_chunk
    n_q = T // blk_q

    # q / k / v are column slices of the fused qkv tensor; the index_maps do the
    # head split "for free" as part of the tile DMA.  K/V index maps are constant
    # across the q axis, so Pallas keeps the block resident and skips the re-DMA.
    q_spec = pl.BlockSpec((1, blk_q, Dg), lambda b, g, qi: (b, qi, g))
    k_spec = pl.BlockSpec((1, T, Dg), lambda b, g, qi: (b, 0, HG + g))
    v_spec = pl.BlockSpec((1, T, Dg), lambda b, g, qi: (b, 0, 2 * HG + g))
    o_spec = pl.BlockSpec((1, blk_q, Dg), lambda b, g, qi: (b, qi, g))

    return pl.pallas_call(
        make_flash_attn_kernel(blk_q, D, hpg, kv_chunk, USE_BF16_EXP),
        out_shape=jax.ShapeDtypeStruct((B, T, C), qkv.dtype),
        grid_spec=pltpu.PrefetchScalarGridSpec(
            num_scalar_prefetch=0,
            grid=(B, HG, n_q),
            in_specs=[q_spec, k_spec, v_spec],
            out_specs=o_spec,
            scratch_shapes=[
                pltpu.VMEM((blk_q, 1), jnp.float32),   # running max  m
                pltpu.VMEM((blk_q, 1), jnp.float32),   # running sum  l
                pltpu.VMEM((blk_q, D), jnp.float32),   # output accumulator
            ],
        ),
        compiler_params=pltpu.CompilerParams(
            dimension_semantics=("parallel", "parallel", "parallel"),
            vmem_limit_bytes=VMEM_LIMIT_BYTES,
        ),
    )(qkv, qkv, qkv)


# ------------------------------ full forward -------------------------------- #

def causal_self_attention(x, params, n_head, *, attn_blk_q=256, attn_kv_chunk=128):
    """Forward pass equivalent to nanoGPT CausalSelfAttention (dropout=0 / eval)."""
    B, T, C = x.shape
    xb = x.astype(jnp.bfloat16)
    qkv = pallas_linear(xb.reshape(B * T, C), params["w_attn_t"], params["b_attn"])
    y = pallas_flash_attention(qkv.reshape(B, T, 3 * C), n_head,
                               blk_q=attn_blk_q, kv_chunk=attn_kv_chunk)
    out = pallas_linear(y.reshape(B * T, C), params["w_proj_t"], params["b_proj"])
    return out.reshape(B, T, C)


def init_params(key, n_embd):
    """Raw f32 parameters in the torch nn.Linear (out, in) layout."""
    k1, k2, k3, k4 = jax.random.split(key, 4)
    std = 0.02
    return {
        "w_attn": jax.random.normal(k1, (3 * n_embd, n_embd), jnp.float32) * std,
        "b_attn": jax.random.normal(k2, (3 * n_embd,), jnp.float32) * std,
        "w_proj": jax.random.normal(k3, (n_embd, n_embd), jnp.float32) * std,
        "b_proj": jax.random.normal(k4, (n_embd,), jnp.float32) * std,
    }


def prepare_params(raw, n_head):
    """Kernel-ready weights: transposed, bf16, 1/sqrt(D) folded into the q path."""
    C = raw["w_proj"].shape[0]
    D = C // n_head
    scale = 1.0 / math.sqrt(D)
    w_attn = raw["w_attn"].at[:C].multiply(scale)     # (3C, C) torch layout
    b_attn = raw["b_attn"].at[:C].multiply(scale)
    return {
        "w_attn_t": w_attn.T.astype(jnp.bfloat16),    # (C, 3C)
        "b_attn": b_attn.astype(jnp.float32),         # (3C,)
        "w_proj_t": raw["w_proj"].T.astype(jnp.bfloat16),   # (C, C)
        "b_proj": raw["b_proj"].astype(jnp.float32),  # (C,)
    }


def reference(x, raw, n_head):
    """Pure-JAX f32 reference (bf16-rounded weights) for sanity checking."""
    B, T, C = x.shape
    D = C // n_head
    w_attn = raw["w_attn"].astype(jnp.bfloat16).astype(jnp.float32)
    w_proj = raw["w_proj"].astype(jnp.bfloat16).astype(jnp.float32)
    qkv = x.reshape(B * T, C) @ w_attn.T + raw["b_attn"]
    q, k, v = jnp.split(qkv.reshape(B, T, 3 * C), 3, axis=2)
    q = q.reshape(B, T, n_head, D).transpose(0, 2, 1, 3)
    k = k.reshape(B, T, n_head, D).transpose(0, 2, 1, 3)
    v = v.reshape(B, T, n_head, D).transpose(0, 2, 1, 3)
    s = jnp.einsum("bhqd,bhkd->bhqk", q, k) / math.sqrt(D)
    mask = jnp.tril(jnp.ones((T, T), bool))
    s = jnp.where(mask, s, -jnp.inf)
    p = jax.nn.softmax(s, axis=-1)
    y = jnp.einsum("bhqk,bhkd->bhqd", p, v)
    y = y.transpose(0, 2, 1, 3).reshape(B * T, C)
    return (y @ w_proj.T + raw["b_proj"]).reshape(B, T, C)


# --------------------------------- driver ----------------------------------- #

if __name__ == "__main__":
    # Small demo shapes.  n_head=4 with C=256 gives D=64 so head-grouping
    # (2 heads / 128 lanes per block) is exercised; T=256 with attn_blk_q=128
    # exercises both the fully-visible fori_loop and the masked diagonal path.
    B, T, n_embd, n_head = 2, 256, 256, 4

    key = jax.random.PRNGKey(0)
    kx, kp = jax.random.split(key)
    x = jax.random.normal(kx, (B, T, n_embd), jnp.float32)
    raw = init_params(kp, n_embd)
    params = prepare_params(raw, n_head)

    fwd = jax.jit(functools.partial(causal_self_attention, n_head=n_head,
                                    attn_blk_q=128, attn_kv_chunk=128))
    y = jax.block_until_ready(fwd(x, params))

    y_ref = reference(x, raw, n_head)
    y32 = y.astype(jnp.float32)
    max_err = float(jnp.max(jnp.abs(y32 - y_ref)))
    assert jnp.allclose(y32, y_ref, atol=3e-2, rtol=3e-2), (
        f"mismatch vs reference (max abs err {max_err:.3e})")

    print("KERNEL_OK")
</pallas_src>

<mosaic_0001>
module attributes {stable_mosaic.version = 11 : i64} {
  func.func @_linear_fullk_kernel(%arg0: i32, %arg1: i32, %arg2: memref<512x256xbf16, #tpu.memory_space<vmem>>, %arg3: memref<256x384xbf16, #tpu.memory_space<vmem>>, %arg4: memref<1x384xf32, #tpu.memory_space<vmem>>, %arg5: memref<512x384xbf16, #tpu.memory_space<vmem>>) attributes {dimension_semantics = [#tpu.dimension_semantics<parallel>, #tpu.dimension_semantics<parallel>], iteration_bounds = array<i64: 1, 2>, scalar_prefetch = 0 : i64, scratch_operands = 0 : i64, tpu.core_type = #tpu.core_type<tc>, window_params = [{transform_indices = @transform_0, window_bounds = array<i64: 512, 256>}, {transform_indices = @transform_1, window_bounds = array<i64: 256, 384>}, {transform_indices = @transform_2, window_bounds = array<i64: 1, 384>}, {transform_indices = @transform_3, window_bounds = array<i64: 512, 384>}]} {
    %c0 = arith.constant 0 : index
    %c0_0 = arith.constant 0 : index
    %0 = vector.load %arg2[%c0, %c0_0] : memref<512x256xbf16, #tpu.memory_space<vmem>>, vector<512x256xbf16>
    %c0_1 = arith.constant 0 : index
    %c0_2 = arith.constant 0 : index
    %1 = vector.load %arg3[%c0_1, %c0_2] : memref<256x384xbf16, #tpu.memory_space<vmem>>, vector<256x384xbf16>
    %cst = arith.constant dense<0.000000e+00> : vector<512x384xf32>
    %2 = tpu.matmul %0, %1, %cst {dimension_numbers = #tpu.dot_dimension_numbers<[1], [0], [0], [1], [0, 0, 1, 1], [], []>} : vector<512x256xbf16>, vector<256x384xbf16>, vector<512x384xf32> -> vector<512x384xf32>
    %c0_3 = arith.constant 0 : index
    %c0_4 = arith.constant 0 : index
    %3 = vector.load %arg4[%c0_3, %c0_4] : memref<1x384xf32, #tpu.memory_space<vmem>>, vector<1x384xf32>
    %4 = vector.broadcast %3 : vector<1x384xf32> to vector<512x384xf32>
    %5 = arith.addf %2, %4 : vector<512x384xf32>
    %6 = arith.truncf %5 : vector<512x384xf32> to vector<512x384xbf16>
    %c0_5 = arith.constant 0 : index
    %c0_6 = arith.constant 0 : index
    %7 = vector.load %arg5[%c0_5, %c0_6] : memref<512x384xbf16, #tpu.memory_space<vmem>>, vector<512x384xbf16>
    tpu.vector_store %arg5[%c0_5, %c0_6], %6 {strides = array<i32>} : memref<512x384xbf16, #tpu.memory_space<vmem>>, vector<512x384xbf16>,
    return
  }
  func.func @transform_0(%arg0: i32, %arg1: i32) -> (i32, i32) {
    %c0_i32 = arith.constant 0 : i32
    %c0_i32_0 = arith.constant 0 : i32
    return %arg0, %c0_i32 : i32, i32
  }
  func.func @transform_1(%arg0: i32, %arg1: i32) -> (i32, i32) {
    %c0_i32 = arith.constant 0 : i32
    %c0_i32_0 = arith.constant 0 : i32
    return %c0_i32, %arg1 : i32, i32
  }
  func.func @transform_2(%arg0: i32, %arg1: i32) -> (i32, i32) {
    %c0_i32 = arith.constant 0 : i32
    %c0_i32_0 = arith.constant 0 : i32
    return %c0_i32, %arg1 : i32, i32
  }
  func.func @transform_3(%arg0: i32, %arg1: i32) -> (i32, i32) {
    %c0_i32 = arith.constant 0 : i32
    return %arg0, %arg1 : i32, i32
  }
}

module attributes {stable_mosaic.version = 11 : i64} {
  func.func @kernel(%arg0: i32, %arg1: i32, %arg2: i32, %arg3: memref<1x128x128xbf16, #tpu.memory_space<vmem>>, %arg4: memref<1x256x128xbf16, #tpu.memory_space<vmem>>, %arg5: memref<1x256x128xbf16, #tpu.memory_space<vmem>>, %arg6: memref<1x128x128xbf16, #tpu.memory_space<vmem>>, %arg7: memref<128x1xf32, #tpu.memory_space<vmem>>, %arg8: memref<128x1xf32, #tpu.memory_space<vmem>>, %arg9: memref<128x64xf32, #tpu.memory_space<vmem>>) attributes {dimension_semantics = [#tpu.dimension_semantics<parallel>, #tpu.dimension_semantics<parallel>, #tpu.dimension_semantics<parallel>], iteration_bounds = array<i64: 2, 2, 2>, scalar_prefetch = 0 : i64, scratch_operands = 3 : i64, tpu.core_type = #tpu.core_type<tc>, window_params = [{transform_indices = @transform_0, window_bounds = array<i64: 1, 128, 128>}, {transform_indices = @transform_1, window_bounds = array<i64: 1, 256, 128>}, {transform_indices = @transform_2, window_bounds = array<i64: 1, 256, 128>}, {transform_indices = @transform_3, window_bounds = array<i64: 1, 128, 128>}]} {
    %c1_i32 = arith.constant 1 : i32
    %0 = arith.muli %arg2, %c1_i32 : i32
    %c128_i32 = arith.constant 128 : i32
    %1 = arith.muli %arg2, %c128_i32 : i32
    %c0 = arith.constant 0 : index
    %c0_0 = arith.constant 0 : index
    %c0_1 = arith.constant 0 : index
    %2 = vector.load %arg3[%c0, %c0_0, %c0_1] : memref<1x128x128xbf16, #tpu.memory_space<vmem>>, vector<1x128x64xbf16>
    %3 = vector.shape_cast %2 : vector<1x128x64xbf16> to vector<128x64xbf16>
    %cst = arith.constant -1.000000e+30 : f32
    %4 = vector.broadcast %cst : f32 to vector<128x1xf32>
    %c0_2 = arith.constant 0 : index
    %c0_3 = arith.constant 0 : index
    %5 = vector.load %arg7[%c0_2, %c0_3] : memref<128x1xf32, #tpu.memory_space<vmem>>, vector<128x1xf32>
    tpu.vector_store %arg7[%c0_2, %c0_3], %4 {strides = array<i32>} : memref<128x1xf32, #tpu.memory_space<vmem>>, vector<128x1xf32>,
    %cst_4 = arith.constant 0.000000e+00 : f32
    %6 = vector.broadcast %cst_4 : f32 to vector<128x1xf32>
    %c0_5 = arith.constant 0 : index
    %c0_6 = arith.constant 0 : index
    %7 = vector.load %arg8[%c0_5, %c0_6] : memref<128x1xf32, #tpu.memory_space<vmem>>, vector<128x1xf32>
    tpu.vector_store %arg8[%c0_5, %c0_6], %6 {strides = array<i32>} : memref<128x1xf32, #tpu.memory_space<vmem>>, vector<128x1xf32>,
    %cst_7 = arith.constant 0.000000e+00 : f32
    %8 = vector.broadcast %cst_7 : f32 to vector<128x64xf32>
    %c0_8 = arith.constant 0 : index
    %c0_9 = arith.constant 0 : index
    %9 = vector.load %arg9[%c0_8, %c0_9] : memref<128x64xf32, #tpu.memory_space<vmem>>, vector<128x64xf32>
    tpu.vector_store %arg9[%c0_8, %c0_9], %8 {strides = array<i32>} : memref<128x64xf32, #tpu.memory_space<vmem>>, vector<128x64xf32>,
    %c0_i32 = arith.constant 0 : i32
    %c0_i32_10 = arith.constant 0 : i32
    %10 = arith.subi %0, %c0_i32_10 : i32
    %11 = arith.addi %c0_i32_10, %10 : i32
    %c1_i32_11 = arith.constant 1 : i32
    scf.for %arg10 = %c0_i32_10 to %11 step %c1_i32_11  : i32 {
      %c128_i32_86 = arith.constant 128 : i32
      %126 = arith.muli %arg10, %c128_i32_86 : i32
      %127 = tpu.assume_multiple %126, 128 : i32
      %c0_87 = arith.constant 0 : index
      %128 = arith.index_cast %127 : i32 to index
      %c0_88 = arith.constant 0 : index
      %129 = vector.load %arg4[%c0_87, %128, %c0_88] : memref<1x256x128xbf16, #tpu.memory_space<vmem>>, vector<1x128x64xbf16>
      %130 = vector.shape_cast %129 : vector<1x128x64xbf16> to vector<128x64xbf16>
      %cst_89 = arith.constant dense<0.000000e+00> : vector<128x128xf32>
      %131 = tpu.matmul %3, %130, %cst_89 {dimension_numbers = #tpu.dot_dimension_numbers<[1], [1], [0], [0], [0, 0, 1, 0], [], []>} : vector<128x64xbf16>, vector<128x64xbf16>, vector<128x128xf32> -> vector<128x128xf32>
      %c0_90 = arith.constant 0 : index
      %c0_91 = arith.constant 0 : index
      %132 = vector.load %arg7[%c0_90, %c0_91] : memref<128x1xf32, #tpu.memory_space<vmem>>, vector<128x1xf32>
      %cst_92 = arith.constant dense<0xFF800000> : vector<128xf32>
      %133 = vector.multi_reduction <maximumf>, %131, %cst_92 [1] : vector<128x128xf32> to vector<128xf32>
      %134 = vector.shape_cast %133 : vector<128xf32> to vector<128x1xf32>
      %135 = arith.maximumf %132, %134 : vector<128x1xf32>
      %136 = arith.subf %132, %135 : vector<128x1xf32>
      %137 = math.exp %136 : vector<128x1xf32>
      %138 = vector.broadcast %135 : vector<128x1xf32> to vector<128x128xf32>
      %139 = arith.subf %131, %138 : vector<128x128xf32>
      %140 = arith.truncf %139 : vector<128x128xf32> to vector<128x128xbf16>
      %141 = math.exp %140 : vector<128x128xbf16>
      %c0_93 = arith.constant 0 : index
      %c0_94 = arith.constant 0 : index
      %142 = vector.load %arg8[%c0_93, %c0_94] : memref<128x1xf32, #tpu.memory_space<vmem>>, vector<128x1xf32>
      %143 = arith.mulf %137, %142 : vector<128x1xf32>
      %144 = arith.extf %141 : vector<128x128xbf16> to vector<128x128xf32>
      %cst_95 = arith.constant dense<0.000000e+00> : vector<128xf32>
      %145 = vector.multi_reduction <add>, %144, %cst_95 [1] : vector<128x128xf32> to vector<128xf32>
      %146 = vector.shape_cast %145 : vector<128xf32> to vector<128x1xf32>
      %147 = arith.addf %143, %146 : vector<128x1xf32>
      %c0_96 = arith.constant 0 : index
      %c0_97 = arith.constant 0 : index
      %148 = vector.load %arg8[%c0_96, %c0_97] : memref<128x1xf32, #tpu.memory_space<vmem>>, vector<128x1xf32>
      tpu.vector_store %arg8[%c0_96, %c0_97], %147 {strides = array<i32>} : memref<128x1xf32, #tpu.memory_space<vmem>>, vector<128x1xf32>,
      %c0_98 = arith.constant 0 : index
      %149 = arith.index_cast %127 : i32 to index
      %c0_99 = arith.constant 0 : index
      %150 = vector.load %arg5[%c0_98, %149, %c0_99] : memref<1x256x128xbf16, #tpu.memory_space<vmem>>, vector<1x128x64xbf16>
      %151 = vector.shape_cast %150 : vector<1x128x64xbf16> to vector<128x64xbf16>
      %c0_100 = arith.constant 0 : index
      %c0_101 = arith.constant 0 : index
      %152 = vector.load %arg9[%c0_100, %c0_101] : memref<128x64xf32, #tpu.memory_space<vmem>>, vector<128x64xf32>
      %153 = vector.broadcast %137 : vector<128x1xf32> to vector<128x64xf32>
      %154 = arith.mulf %153, %152 : vector<128x64xf32>
      %cst_102 = arith.constant dense<0.000000e+00> : vector<128x64xf32>
      %155 = tpu.matmul %141, %151, %cst_102 {dimension_numbers = #tpu.dot_dimension_numbers<[1], [0], [0], [1], [0, 0, 1, 1], [], []>} : vector<128x128xbf16>, vector<128x64xbf16>, vector<128x64xf32> -> vector<128x64xf32>
      %156 = arith.addf %154, %155 : vector<128x64xf32>
      %c0_103 = arith.constant 0 : index
      %c0_104 = arith.constant 0 : index
      %157 = vector.load %arg9[%c0_103, %c0_104] : memref<128x64xf32, #tpu.memory_space<vmem>>, vector<128x64xf32>
      tpu.vector_store %arg9[%c0_103, %c0_104], %156 {strides = array<i32>} : memref<128x64xf32, #tpu.memory_space<vmem>>, vector<128x64xf32>,
      %c0_105 = arith.constant 0 : index
      %c0_106 = arith.constant 0 : index
      %158 = vector.load %arg7[%c0_105, %c0_106] : memref<128x1xf32, #tpu.memory_space<vmem>>, vector<128x1xf32>
      tpu.vector_store %arg7[%c0_105, %c0_106], %135 {strides = array<i32>} : memref<128x1xf32, #tpu.memory_space<vmem>>, vector<128x1xf32>,
    }
    %c0_i32_12 = arith.constant 0 : i32
    %12 = arith.addi %0, %c0_i32_12 : i32
    %c128_i32_13 = arith.constant 128 : i32
    %13 = arith.muli %12, %c128_i32_13 : i32
    %14 = tpu.assume_multiple %13, 128 : i32
    %c0_14 = arith.constant 0 : index
    %15 = arith.index_cast %14 : i32 to index
    %c0_15 = arith.constant 0 : index
    %16 = vector.load %arg4[%c0_14, %15, %c0_15] : memref<1x256x128xbf16, #tpu.memory_space<vmem>>, vector<1x128x64xbf16>
    %17 = vector.shape_cast %16 : vector<1x128x64xbf16> to vector<128x64xbf16>
    %cst_16 = arith.constant dense<0.000000e+00> : vector<128x128xf32>
    %18 = tpu.matmul %3, %17, %cst_16 {dimension_numbers = #tpu.dot_dimension_numbers<[1], [1], [0], [0], [0, 0, 1, 0], [], []>} : vector<128x64xbf16>, vector<128x64xbf16>, vector<128x128xf32> -> vector<128x128xf32>
    %19 = tpu.iota {dimensions = array<i32: 0>} : vector<128x128xi32>
    %20 = vector.broadcast %1 : i32 to vector<128x128xi32>
    %21 = arith.addi %20, %19 : vector<128x128xi32>
    %22 = tpu.iota {dimensions = array<i32: 1>} : vector<128x128xi32>
    %23 = vector.broadcast %14 : i32 to vector<128x128xi32>
    %24 = arith.addi %23, %22 : vector<128x128xi32>
    %25 = arith.cmpi sle, %24, %21 : vector<128x128xi32>
    %cst_17 = arith.constant -1.000000e+30 : f32
    %26 = vector.broadcast %cst_17 : f32 to vector<128x128xf32>
    %27 = arith.select %25, %18, %26 : vector<128x128xi1>, vector<128x128xf32>
    %c0_18 = arith.constant 0 : index
    %c0_19 = arith.constant 0 : index
    %28 = vector.load %arg7[%c0_18, %c0_19] : memref<128x1xf32, #tpu.memory_space<vmem>>, vector<128x1xf32>
    %cst_20 = arith.constant dense<0xFF800000> : vector<128xf32>
    %29 = vector.multi_reduction <maximumf>, %27, %cst_20 [1] : vector<128x128xf32> to vector<128xf32>
    %30 = vector.shape_cast %29 : vector<128xf32> to vector<128x1xf32>
    %31 = arith.maximumf %28, %30 : vector<128x1xf32>
    %32 = arith.subf %28, %31 : vector<128x1xf32>
    %33 = math.exp %32 : vector<128x1xf32>
    %34 = vector.broadcast %31 : vector<128x1xf32> to vector<128x128xf32>
    %35 = arith.subf %27, %34 : vector<128x128xf32>
    %36 = arith.truncf %35 : vector<128x128xf32> to vector<128x128xbf16>
    %37 = math.exp %36 : vector<128x128xbf16>
    %c0_21 = arith.constant 0 : index
    %c0_22 = arith.constant 0 : index
    %38 = vector.load %arg8[%c0_21, %c0_22] : memref<128x1xf32, #tpu.memory_space<vmem>>, vector<128x1xf32>
    %39 = arith.mulf %33, %38 : vector<128x1xf32>
    %40 = arith.extf %37 : vector<128x128xbf16> to vector<128x128xf32>
    %cst_23 = arith.constant dense<0.000000e+00> : vector<128xf32>
    %41 = vector.multi_reduction <add>, %40, %cst_23 [1] : vector<128x128xf32> to vector<128xf32>
    %42 = vector.shape_cast %41 : vector<128xf32> to vector<128x1xf32>
    %43 = arith.addf %39, %42 : vector<128x1xf32>
    %c0_24 = arith.constant 0 : index
    %c0_25 = arith.constant 0 : index
    %44 = vector.load %arg8[%c0_24, %c0_25] : memref<128x1xf32, #tpu.memory_space<vmem>>, vector<128x1xf32>
    tpu.vector_store %arg8[%c0_24, %c0_25], %43 {strides = array<i32>} : memref<128x1xf32, #tpu.memory_space<vmem>>, vector<128x1xf32>,
    %c0_26 = arith.constant 0 : index
    %45 = arith.index_cast %14 : i32 to index
    %c0_27 = arith.constant 0 : index
    %46 = vector.load %arg5[%c0_26, %45, %c0_27] : memref<1x256x128xbf16, #tpu.memory_space<vmem>>, vector<1x128x64xbf16>
    %47 = vector.shape_cast %46 : vector<1x128x64xbf16> to vector<128x64xbf16>
    %c0_28 = arith.constant 0 : index
    %c0_29 = arith.constant 0 : index
    %48 = vector.load %arg9[%c0_28, %c0_29] : memref<128x64xf32, #tpu.memory_space<vmem>>, vector<128x64xf32>
    %49 = vector.broadcast %33 : vector<128x1xf32> to vector<128x64xf32>
    %50 = arith.mulf %49, %48 : vector<128x64xf32>
    %cst_30 = arith.constant dense<0.000000e+00> : vector<128x64xf32>
    %51 = tpu.matmul %37, %47, %cst_30 {dimension_numbers = #tpu.dot_dimension_numbers<[1], [0], [0], [1], [0, 0, 1, 1], [], []>} : vector<128x128xbf16>, vector<128x64xbf16>, vector<128x64xf32> -> vector<128x64xf32>
    %52 = arith.addf %50, %51 : vector<128x64xf32>
    %c0_31 = arith.constant 0 : index
    %c0_32 = arith.constant 0 : index
    %53 = vector.load %arg9[%c0_31, %c0_32] : memref<128x64xf32, #tpu.memory_space<vmem>>, vector<128x64xf32>
    tpu.vector_store %arg9[%c0_31, %c0_32], %52 {strides = array<i32>} : memref<128x64xf32, #tpu.memory_space<vmem>>, vector<128x64xf32>,
    %c0_33 = arith.constant 0 : index
    %c0_34 = arith.constant 0 : index
    %54 = vector.load %arg7[%c0_33, %c0_34] : memref<128x1xf32, #tpu.memory_space<vmem>>, vector<128x1xf32>
    tpu.vector_store %arg7[%c0_33, %c0_34], %31 {strides = array<i32>} : memref<128x1xf32, #tpu.memory_space<vmem>>, vector<128x1xf32>,
    %c0_35 = arith.constant 0 : index
    %c0_36 = arith.constant 0 : index
    %55 = vector.load %arg8[%c0_35, %c0_36] : memref<128x1xf32, #tpu.memory_space<vmem>>, vector<128x1xf32>
    %56 = tpu.reciprocal %55 {approx = true} : vector<128x1xf32> -> vector<128x1xf32>
    %c0_37 = arith.constant 0 : index
    %c0_38 = arith.constant 0 : index
    %57 = vector.load %arg9[%c0_37, %c0_38] : memref<128x64xf32, #tpu.memory_space<vmem>>, vector<128x64xf32>
    %58 = vector.broadcast %56 : vector<128x1xf32> to vector<128x64xf32>
    %59 = arith.mulf %57, %58 : vector<128x64xf32>
    %60 = arith.truncf %59 : vector<128x64xf32> to vector<128x64xbf16>
    %c0_39 = arith.constant 0 : index
    %c0_40 = arith.constant 0 : index
    %c0_41 = arith.constant 0 : index
    %61 = vector.load %arg6[%c0_39, %c0_40, %c0_41] : memref<1x128x128xbf16, #tpu.memory_space<vmem>>, vector<1x128x64xbf16>
    %62 = vector.shape_cast %61 : vector<1x128x64xbf16> to vector<128x64xbf16>
    %63 = vector.shape_cast %60 : vector<128x64xbf16> to vector<1x128x64xbf16>
    tpu.vector_store %arg6[%c0_39, %c0_40, %c0_41], %63 {strides = array<i32>} : memref<1x128x128xbf16, #tpu.memory_space<vmem>>, vector<1x128x64xbf16>,
    %c0_42 = arith.constant 0 : index
    %c0_43 = arith.constant 0 : index
    %c64 = arith.constant 64 : index
    %64 = vector.load %arg3[%c0_42, %c0_43, %c64] : memref<1x128x128xbf16, #tpu.memory_space<vmem>>, vector<1x128x64xbf16>
    %65 = vector.shape_cast %64 : vector<1x128x64xbf16> to vector<128x64xbf16>
    %cst_44 = arith.constant -1.000000e+30 : f32
    %66 = vector.broadcast %cst_44 : f32 to vector<128x1xf32>
    %c0_45 = arith.constant 0 : index
    %c0_46 = arith.constant 0 : index
    %67 = vector.load %arg7[%c0_45, %c0_46] : memref<128x1xf32, #tpu.memory_space<vmem>>, vector<128x1xf32>
    tpu.vector_store %arg7[%c0_45, %c0_46], %66 {strides = array<i32>} : memref<128x1xf32, #tpu.memory_space<vmem>>, vector<128x1xf32>,
    %cst_47 = arith.constant 0.000000e+00 : f32
    %68 = vector.broadcast %cst_47 : f32 to vector<128x1xf32>
    %c0_48 = arith.constant 0 : index
    %c0_49 = arith.constant 0 : index
    %69 = vector.load %arg8[%c0_48, %c0_49] : memref<128x1xf32, #tpu.memory_space<vmem>>, vector<128x1xf32>
    tpu.vector_store %arg8[%c0_48, %c0_49], %68 {strides = array<i32>} : memref<128x1xf32, #tpu.memory_space<vmem>>, vector<128x1xf32>,
    %cst_50 = arith.constant 0.000000e+00 : f32
    %70 = vector.broadcast %cst_50 : f32 to vector<128x64xf32>
    %c0_51 = arith.constant 0 : index
    %c0_52 = arith.constant 0 : index
    %71 = vector.load %arg9[%c0_51, %c0_52] : memref<128x64xf32, #tpu.memory_space<vmem>>, vector<128x64xf32>
    tpu.vector_store %arg9[%c0_51, %c0_52], %70 {strides = array<i32>} : memref<128x64xf32, #tpu.memory_space<vmem>>, vector<128x64xf32>,
    %c0_i32_53 = arith.constant 0 : i32
    %c0_i32_54 = arith.constant 0 : i32
    %72 = arith.subi %0, %c0_i32_54 : i32
    %73 = arith.addi %c0_i32_54, %72 : i32
    %c1_i32_55 = arith.constant 1 : i32
    scf.for %arg10 = %c0_i32_54 to %73 step %c1_i32_55  : i32 {
      %c128_i32_86 = arith.constant 128 : i32
      %126 = arith.muli %arg10, %c128_i32_86 : i32
      %127 = tpu.assume_multiple %126, 128 : i32
      %c0_87 = arith.constant 0 : index
      %128 = arith.index_cast %127 : i32 to index
      %c64_88 = arith.constant 64 : index
      %129 = vector.load %arg4[%c0_87, %128, %c64_88] : memref<1x256x128xbf16, #tpu.memory_space<vmem>>, vector<1x128x64xbf16>
      %130 = vector.shape_cast %129 : vector<1x128x64xbf16> to vector<128x64xbf16>
      %cst_89 = arith.constant dense<0.000000e+00> : vector<128x128xf32>
      %131 = tpu.matmul %65, %130, %cst_89 {dimension_numbers = #tpu.dot_dimension_numbers<[1], [1], [0], [0], [0, 0, 1, 0], [], []>} : vector<128x64xbf16>, vector<128x64xbf16>, vector<128x128xf32> -> vector<128x128xf32>
      %c0_90 = arith.constant 0 : index
      %c0_91 = arith.constant 0 : index
      %132 = vector.load %arg7[%c0_90, %c0_91] : memref<128x1xf32, #tpu.memory_space<vmem>>, vector<128x1xf32>
      %cst_92 = arith.constant dense<0xFF800000> : vector<128xf32>
      %133 = vector.multi_reduction <maximumf>, %131, %cst_92 [1] : vector<128x128xf32> to vector<128xf32>
      %134 = vector.shape_cast %133 : vector<128xf32> to vector<128x1xf32>
      %135 = arith.maximumf %132, %134 : vector<128x1xf32>
      %136 = arith.subf %132, %135 : vector<128x1xf32>
      %137 = math.exp %136 : vector<128x1xf32>
      %138 = vector.broadcast %135 : vector<128x1xf32> to vector<128x128xf32>
      %139 = arith.subf %131, %138 : vector<128x128xf32>
      %140 = arith.truncf %139 : vector<128x128xf32> to vector<128x128xbf16>
      %141 = math.exp %140 : vector<128x128xbf16>
      %c0_93 = arith.constant 0 : index
      %c0_94 = arith.constant 0 : index
      %142 = vector.load %arg8[%c0_93, %c0_94] : memref<128x1xf32, #tpu.memory_space<vmem>>, vector<128x1xf32>
      %143 = arith.mulf %137, %142 : vector<128x1xf32>
      %144 = arith.extf %141 : vector<128x128xbf16> to vector<128x128xf32>
      %cst_95 = arith.constant dense<0.000000e+00> : vector<128xf32>
      %145 = vector.multi_reduction <add>, %144, %cst_95 [1] : vector<128x128xf32> to vector<128xf32>
      %146 = vector.shape_cast %145 : vector<128xf32> to vector<128x1xf32>
      %147 = arith.addf %143, %146 : vector<128x1xf32>
      %c0_96 = arith.constant 0 : index
      %c0_97 = arith.constant 0 : index
      %148 = vector.load %arg8[%c0_96, %c0_97] : memref<128x1xf32, #tpu.memory_space<vmem>>, vector<128x1xf32>
      tpu.vector_store %arg8[%c0_96, %c0_97], %147 {strides = array<i32>} : memref<128x1xf32, #tpu.memory_space<vmem>>, vector<128x1xf32>,
      %c0_98 = arith.constant 0 : index
      %149 = arith.index_cast %127 : i32 to index
      %c64_99 = arith.constant 64 : index
      %150 = vector.load %arg5[%c0_98, %149, %c64_99] : memref<1x256x128xbf16, #tpu.memory_space<vmem>>, vector<1x128x64xbf16>
      %151 = vector.shape_cast %150 : vector<1x128x64xbf16> to vector<128x64xbf16>
      %c0_100 = arith.constant 0 : index
      %c0_101 = arith.constant 0 : index
      %152 = vector.load %arg9[%c0_100, %c0_101] : memref<128x64xf32, #tpu.memory_space<vmem>>, vector<128x64xf32>
      %153 = vector.broadcast %137 : vector<128x1xf32> to vector<128x64xf32>
      %154 = arith.mulf %153, %152 : vector<128x64xf32>
      %cst_102 = arith.constant dense<0.000000e+00> : vector<128x64xf32>
      %155 = tpu.matmul %141, %151, %cst_102 {dimension_numbers = #tpu.dot_dimension_numbers<[1], [0], [0], [1], [0, 0, 1, 1], [], []>} : vector<128x128xbf16>, vector<128x64xbf16>, vector<128x64xf32> -> vector<128x64xf32>
      %156 = arith.addf %154, %155 : vector<128x64xf32>
      %c0_103 = arith.constant 0 : index
      %c0_104 = arith.constant 0 : index
      %157 = vector.load %arg9[%c0_103, %c0_104] : memref<128x64xf32, #tpu.memory_space<vmem>>, vector<128x64xf32>
      tpu.vector_store %arg9[%c0_103, %c0_104], %156 {strides = array<i32>} : memref<128x64xf32, #tpu.memory_space<vmem>>, vector<128x64xf32>,
      %c0_105 = arith.constant 0 : index
      %c0_106 = arith.constant 0 : index
      %158 = vector.load %arg7[%c0_105, %c0_106] : memref<128x1xf32, #tpu.memory_space<vmem>>, vector<128x1xf32>
      tpu.vector_store %arg7[%c0_105, %c0_106], %135 {strides = array<i32>} : memref<128x1xf32, #tpu.memory_space<vmem>>, vector<128x1xf32>,
    }
    %c0_i32_56 = arith.constant 0 : i32
    %74 = arith.addi %0, %c0_i32_56 : i32
    %c128_i32_57 = arith.constant 128 : i32
    %75 = arith.muli %74, %c128_i32_57 : i32
    %76 = tpu.assume_multiple %75, 128 : i32
    %c0_58 = arith.constant 0 : index
    %77 = arith.index_cast %76 : i32 to index
    %c64_59 = arith.constant 64 : index
    %78 = vector.load %arg4[%c0_58, %77, %c64_59] : memref<1x256x128xbf16, #tpu.memory_space<vmem>>, vector<1x128x64xbf16>
    %79 = vector.shape_cast %78 : vector<1x128x64xbf16> to vector<128x64xbf16>
    %cst_60 = arith.constant dense<0.000000e+00> : vector<128x128xf32>
    %80 = tpu.matmul %65, %79, %cst_60 {dimension_numbers = #tpu.dot_dimension_numbers<[1], [1], [0], [0], [0, 0, 1, 0], [], []>} : vector<128x64xbf16>, vector<128x64xbf16>, vector<128x128xf32> -> vector<128x128xf32>
    %81 = tpu.iota {dimensions = array<i32: 0>} : vector<128x128xi32>
    %82 = vector.broadcast %1 : i32 to vector<128x128xi32>
    %83 = arith.addi %82, %81 : vector<128x128xi32>
    %84 = tpu.iota {dimensions = array<i32: 1>} : vector<128x128xi32>
    %85 = vector.broadcast %76 : i32 to vector<128x128xi32>
    %86 = arith.addi %85, %84 : vector<128x128xi32>
    %87 = arith.cmpi sle, %86, %83 : vector<128x128xi32>
    %cst_61 = arith.constant -1.000000e+30 : f32
    %88 = vector.broadcast %cst_61 : f32 to vector<128x128xf32>
    %89 = arith.select %87, %80, %88 : vector<128x128xi1>, vector<128x128xf32>
    %c0_62 = arith.constant 0 : index
    %c0_63 = arith.constant 0 : index
    %90 = vector.load %arg7[%c0_62, %c0_63] : memref<128x1xf32, #tpu.memory_space<vmem>>, vector<128x1xf32>
    %cst_64 = arith.constant dense<0xFF800000> : vector<128xf32>
    %91 = vector.multi_reduction <maximumf>, %89, %cst_64 [1] : vector<128x128xf32> to vector<128xf32>
    %92 = vector.shape_cast %91 : vector<128xf32> to vector<128x1xf32>
    %93 = arith.maximumf %90, %92 : vector<128x1xf32>
    %94 = arith.subf %90, %93 : vector<128x1xf32>
    %95 = math.exp %94 : vector<128x1xf32>
    %96 = vector.broadcast %93 : vector<128x1xf32> to vector<128x128xf32>
    %97 = arith.subf %89, %96 : vector<128x128xf32>
    %98 = arith.truncf %97 : vector<128x128xf32> to vector<128x128xbf16>
    %99 = math.exp %98 : vector<128x128xbf16>
    %c0_65 = arith.constant 0 : index
    %c0_66 = arith.constant 0 : index
    %100 = vector.load %arg8[%c0_65, %c0_66] : memref<128x1xf32, #tpu.memory_space<vmem>>, vector<128x1xf32>
    %101 = arith.mulf %95, %100 : vector<128x1xf32>
    %102 = arith.extf %99 : vector<128x128xbf16> to vector<128x128xf32>
    %cst_67 = arith.constant dense<0.000000e+00> : vector<128xf32>
    %103 = vector.multi_reduction <add>, %102, %cst_67 [1] : vector<128x128xf32> to vector<128xf32>
    %104 = vector.shape_cast %103 : vector<128xf32> to vector<128x1xf32>
    %105 = arith.addf %101, %104 : vector<128x1xf32>
    %c0_68 = arith.constant 0 : index
    %c0_69 = arith.constant 0 : index
    %106 = vector.load %arg8[%c0_68, %c0_69] : memref<128x1xf32, #tpu.memory_space<vmem>>, vector<128x1xf32>
    tpu.vector_store %arg8[%c0_68, %c0_69], %105 {strides = array<i32>} : memref<128x1xf32, #tpu.memory_space<vmem>>, vector<128x1xf32>,
    %c0_70 = arith.constant 0 : index
    %107 = arith.index_cast %76 : i32 to index
    %c64_71 = arith.constant 64 : index
    %108 = vector.load %arg5[%c0_70, %107, %c64_71] : memref<1x256x128xbf16, #tpu.memory_space<vmem>>, vector<1x128x64xbf16>
    %109 = vector.shape_cast %108 : vector<1x128x64xbf16> to vector<128x64xbf16>
    %c0_72 = arith.constant 0 : index
    %c0_73 = arith.constant 0 : index
    %110 = vector.load %arg9[%c0_72, %c0_73] : memref<128x64xf32, #tpu.memory_space<vmem>>, vector<128x64xf32>
    %111 = vector.broadcast %95 : vector<128x1xf32> to vector<128x64xf32>
    %112 = arith.mulf %111, %110 : vector<128x64xf32>
    %cst_74 = arith.constant dense<0.000000e+00> : vector<128x64xf32>
    %113 = tpu.matmul %99, %109, %cst_74 {dimension_numbers = #tpu.dot_dimension_numbers<[1], [0], [0], [1], [0, 0, 1, 1], [], []>} : vector<128x128xbf16>, vector<128x64xbf16>, vector<128x64xf32> -> vector<128x64xf32>
    %114 = arith.addf %112, %113 : vector<128x64xf32>
    %c0_75 = arith.constant 0 : index
    %c0_76 = arith.constant 0 : index
    %115 = vector.load %arg9[%c0_75, %c0_76] : memref<128x64xf32, #tpu.memory_space<vmem>>, vector<128x64xf32>
    tpu.vector_store %arg9[%c0_75, %c0_76], %114 {strides = array<i32>} : memref<128x64xf32, #tpu.memory_space<vmem>>, vector<128x64xf32>,
    %c0_77 = arith.constant 0 : index
    %c0_78 = arith.constant 0 : index
    %116 = vector.load %arg7[%c0_77, %c0_78] : memref<128x1xf32, #tpu.memory_space<vmem>>, vector<128x1xf32>
    tpu.vector_store %arg7[%c0_77, %c0_78], %93 {strides = array<i32>} : memref<128x1xf32, #tpu.memory_space<vmem>>, vector<128x1xf32>,
    %c0_79 = arith.constant 0 : index
    %c0_80 = arith.constant 0 : index
    %117 = vector.load %arg8[%c0_79, %c0_80] : memref<128x1xf32, #tpu.memory_space<vmem>>, vector<128x1xf32>
    %118 = tpu.reciprocal %117 {approx = true} : vector<128x1xf32> -> vector<128x1xf32>
    %c0_81 = arith.constant 0 : index
    %c0_82 = arith.constant 0 : index
    %119 = vector.load %arg9[%c0_81, %c0_82] : memref<128x64xf32, #tpu.memory_space<vmem>>, vector<128x64xf32>
    %120 = vector.broadcast %118 : vector<128x1xf32> to vector<128x64xf32>
    %121 = arith.mulf %119, %120 : vector<128x64xf32>
    %122 = arith.truncf %121 : vector<128x64xf32> to vector<128x64xbf16>
    %c0_83 = arith.constant 0 : index
    %c0_84 = arith.constant 0 : index
    %c64_85 = arith.constant 64 : index
    %123 = vector.load %arg6[%c0_83, %c0_84, %c64_85] : memref<1x128x128xbf16, #tpu.memory_space<vmem>>, vector<1x128x64xbf16>
    %124 = vector.shape_cast %123 : vector<1x128x64xbf16> to vector<128x64xbf16>
    %125 = vector.shape_cast %122 : vector<128x64xbf16> to vector<1x128x64xbf16>
    tpu.vector_store %arg6[%c0_83, %c0_84, %c64_85], %125 {strides = array<i32>} : memref<1x128x128xbf16, #tpu.memory_space<vmem>>, vector<1x128x64xbf16>,
    return
  }
  func.func @transform_0(%arg0: i32, %arg1: i32, %arg2: i32) -> (i32, i32, i32) {
    %c0_i32 = arith.constant 0 : i32
    return %arg0, %arg2, %arg1 : i32, i32, i32
  }
  func.func @transform_1(%arg0: i32, %arg1: i32, %arg2: i32) -> (i32, i32, i32) {
    %c2_i32 = arith.constant 2 : i32
    %0 = arith.addi %c2_i32, %arg1 : i32
    %c0_i32 = arith.constant 0 : i32
    %c0_i32_0 = arith.constant 0 : i32
    return %arg0, %c0_i32, %0 : i32, i32, i32
  }
  func.func @transform_2(%arg0: i32, %arg1: i32, %arg2: i32) -> (i32, i32, i32) {
    %c4_i32 = arith.constant 4 : i32
    %0 = arith.addi %c4_i32, %arg1 : i32
    %c0_i32 = arith.constant 0 : i32
    %c0_i32_0 = arith.constant 0 : i32
    return %arg0, %c0_i32, %0 : i32, i32, i32
  }
  func.func @transform_3(%arg0: i32, %arg1: i32, %arg2: i32) -> (i32, i32, i32) {
    %c0_i32 = arith.constant 0 : i32
    return %arg0, %arg2, %arg1 : i32, i32, i32
  }
}

module attributes {stable_mosaic.version = 11 : i64} {
  func.func @_linear_fullk_kernel(%arg0: i32, %arg1: i32, %arg2: memref<512x256xbf16, #tpu.memory_space<vmem>>, %arg3: memref<256x256xbf16, #tpu.memory_space<vmem>>, %arg4: memref<1x256xf32, #tpu.memory_space<vmem>>, %arg5: memref<512x256xbf16, #tpu.memory_space<vmem>>) attributes {dimension_semantics = [#tpu.dimension_semantics<parallel>, #tpu.dimension_semantics<parallel>], iteration_bounds = array<i64: 1, 1>, scalar_prefetch = 0 : i64, scratch_operands = 0 : i64, tpu.core_type = #tpu.core_type<tc>, window_params = [{transform_indices = @transform_0, window_bounds = array<i64: 512, 256>}, {transform_indices = @transform_1, window_bounds = array<i64: 256, 256>}, {transform_indices = @transform_2, window_bounds = array<i64: 1, 256>}, {transform_indices = @transform_3, window_bounds = array<i64: 512, 256>}]} {
    %c0 = arith.constant 0 : index
    %c0_0 = arith.constant 0 : index
    %0 = vector.load %arg2[%c0, %c0_0] : memref<512x256xbf16, #tpu.memory_space<vmem>>, vector<512x256xbf16>
    %c0_1 = arith.constant 0 : index
    %c0_2 = arith.constant 0 : index
    %1 = vector.load %arg3[%c0_1, %c0_2] : memref<256x256xbf16, #tpu.memory_space<vmem>>, vector<256x256xbf16>
    %cst = arith.constant dense<0.000000e+00> : vector<512x256xf32>
    %2 = tpu.matmul %0, %1, %cst {dimension_numbers = #tpu.dot_dimension_numbers<[1], [0], [0], [1], [0, 0, 1, 1], [], []>} : vector<512x256xbf16>, vector<256x256xbf16>, vector<512x256xf32> -> vector<512x256xf32>
    %c0_3 = arith.constant 0 : index
    %c0_4 = arith.constant 0 : index
    %3 = vector.load %arg4[%c0_3, %c0_4] : memref<1x256xf32, #tpu.memory_space<vmem>>, vector<1x256xf32>
    %4 = vector.broadcast %3 : vector<1x256xf32> to vector<512x256xf32>
    %5 = arith.addf %2, %4 : vector<512x256xf32>
    %6 = arith.truncf %5 : vector<512x256xf32> to vector<512x256xbf16>
    %c0_5 = arith.constant 0 : index
    %c0_6 = arith.constant 0 : index
    %7 = vector.load %arg5[%c0_5, %c0_6] : memref<512x256xbf16, #tpu.memory_space<vmem>>, vector<512x256xbf16>
    tpu.vector_store %arg5[%c0_5, %c0_6], %6 {strides = array<i32>} : memref<512x256xbf16, #tpu.memory_space<vmem>>, vector<512x256xbf16>,
    return
  }
  func.func @transform_0(%arg0: i32, %arg1: i32) -> (i32, i32) {
    %c0_i32 = arith.constant 0 : i32
    %c0_i32_0 = arith.constant 0 : i32
    return %arg0, %c0_i32 : i32, i32
  }
  func.func @transform_1(%arg0: i32, %arg1: i32) -> (i32, i32) {
    %c0_i32 = arith.constant 0 : i32
    %c0_i32_0 = arith.constant 0 : i32
    return %c0_i32, %arg1 : i32, i32
  }
  func.func @transform_2(%arg0: i32, %arg1: i32) -> (i32, i32) {
    %c0_i32 = arith.constant 0 : i32
    %c0_i32_0 = arith.constant 0 : i32
    return %c0_i32, %arg1 : i32, i32
  }
  func.func @transform_3(%arg0: i32, %arg1: i32) -> (i32, i32) {
    %c0_i32 = arith.constant 0 : i32
    return %arg0, %arg1 : i32, i32
  }
}

</mosaic_0001>

<llo_original>
// kernel: causal_self_attention.5
$region0: #{causal_self_attention.5}
  #allocation0 [shape = 'u32[]', space=smem, size = 0x4, offset = 0x4, fixed_abs, tag = 'smem constant byte address 0x4 - core index']
  #allocation1 [shape = 'u32[72,128]{1,0:T(1,128)}', space=vmem, size = 0x9000, scoped, tag = 'internal scratch']
  %s0 = inlined_call_operand.vmem [shape: bf16[512,256], index: 0, kind: input, shape index: {}]
  %s1 = inlined_call_operand.vmem [shape: bf16[256,256], index: 1, kind: input, shape index: {}]
  %s2 = inlined_call_operand.vmem [shape: f32[1,256], index: 2, kind: input, shape index: {}]
  %s3 = inlined_call_operand.hbm [shape: bf16[512,256], index: 3, kind: output, shape index: {}]
  %s4 = sld [smem:[#allocation0]]
  $region22: #{causal_self_attention.5} parent=0
    _
  %s6 = ssub.s32 1, %s4
  %s7 = scalar_select 0, %s6, %s4
  $region1: #{causal_self_attention.5} parent=0
    #allocation2 [shape = 'u8[262144]{0}', space=vmem, size = 0x40000, scoped, tag = 'output window, operand 0, single buffered']
    #allocation3 [shape = 's32[1]{0}', space=sflag, size = 0x4, scoped, tag = 'scoped memory for causal_self_attention.5']
    %8 = vsyncpa [#allocation3], 0
    // Predicated region
    $region2: #{causal_self_attention.5} parent=1 // pred_check
      _
    $region3: #{causal_self_attention.5} parent=1 // pred_check_branch
      %10 = sbr.rel (0) target = $region5
    $region4: #{causal_self_attention.5} parent=1 // pred_region
      _
    $region5: #{causal_self_attention.5} parent=1 // pred_fallthru
      _
    // Predicated region
    $region6: #{causal_self_attention.5} parent=1 // pred_check
      _
    $region7: #{causal_self_attention.5} parent=1 // pred_check_branch
      %12 = sbr.rel (0) target = $region9
    $region8: #{causal_self_attention.5} parent=1 // pred_region
      _
    $region9: #{causal_self_attention.5} parent=1 // pred_fallthru
      _
    // Predicated region
    $region10: #{causal_self_attention.5} parent=1 // pred_check
      _
    $region11: #{causal_self_attention.5} parent=1 // pred_check_branch
      %14 = sbr.rel (0) target = $region13
    $region12: #{causal_self_attention.5} parent=1 // pred_region
      _
    $region13: #{causal_self_attention.5} parent=1 // pred_fallthru
      _
    %v15 = vld [vmem:[%s0] sm:$0xff]
    %v16 = vld [vmem:[%s0 + $0x8] sm:$0xff]
    %v17 = vld [vmem:[%s0 + $0x10] sm:$0xff]
    %v18 = vld [vmem:[%s0 + $0x18] sm:$0xff]
    %v19 = vld [vmem:[%s0 + $0x20] sm:$0xff]
    %v20 = vld [vmem:[%s0 + $0x28] sm:$0xff]
    %v21 = vld [vmem:[%s0 + $0x30] sm:$0xff]
    %v22 = vld [vmem:[%s0 + $0x38] sm:$0xff]
    %v23 = vld [vmem:[%s0 + $0x40] sm:$0xff]
    %v24 = vld [vmem:[%s0 + $0x48] sm:$0xff]
    %v25 = vld [vmem:[%s0 + $0x50] sm:$0xff]
    %v26 = vld [vmem:[%s0 + $0x58] sm:$0xff]
    %v27 = vld [vmem:[%s0 + $0x60] sm:$0xff]
    %v28 = vld [vmem:[%s0 + $0x68] sm:$0xff]
    %v29 = vld [vmem:[%s0 + $0x70] sm:$0xff]
    %v30 = vld [vmem:[%s0 + $0x78] sm:$0xff]
    %v31 = vld [vmem:[%s0 + $0x80] sm:$0xff]
    %v32 = vld [vmem:[%s0 + $0x88] sm:$0xff]
    %v33 = vld [vmem:[%s0 + $0x90] sm:$0xff]
    %v34 = vld [vmem:[%s0 + $0x98] sm:$0xff]
    %v35 = vld [vmem:[%s0 + $0xa0] sm:$0xff]
    %v36 = vld [vmem:[%s0 + $0xa8] sm:$0xff]
    %v37 = vld [vmem:[%s0 + $0xb0] sm:$0xff]
    %v38 = vld [vmem:[%s0 + $0xb8] sm:$0xff]
    %v39 = vld [vmem:[%s0 + $0xc0] sm:$0xff]
    %v40 = vld [vmem:[%s0 + $0xc8] sm:$0xff]
    %v41 = vld [vmem:[%s0 + $0xd0] sm:$0xff]
    %v42 = vld [vmem:[%s0 + $0xd8] sm:$0xff]
    %v43 = vld [vmem:[%s0 + $0xe0] sm:$0xff]
    %v44 = vld [vmem:[%s0 + $0xe8] sm:$0xff]
    %v45 = vld [vmem:[%s0 + $0xf0] sm:$0xff]
    %v46 = vld [vmem:[%s0 + $0xf8] sm:$0xff]
    %v47 = vld [vmem:[%s0 + $0x100] sm:$0xff]
    %v48 = vld [vmem:[%s0 + $0x108] sm:$0xff]
    %v49 = vld [vmem:[%s0 + $0x110] sm:$0xff]
    %v50 = vld [vmem:[%s0 + $0x118] sm:$0xff]
    %v51 = vld [vmem:[%s0 + $0x120] sm:$0xff]
    %v52 = vld [vmem:[%s0 + $0x128] sm:$0xff]
    %v53 = vld [vmem:[%s0 + $0x130] sm:$0xff]
    %v54 = vld [vmem:[%s0 + $0x138] sm:$0xff]
    %v55 = vld [vmem:[%s0 + $0x140] sm:$0xff]
    %v56 = vld [vmem:[%s0 + $0x148] sm:$0xff]
    %v57 = vld [vmem:[%s0 + $0x150] sm:$0xff]
    %v58 = vld [vmem:[%s0 + $0x158] sm:$0xff]
    %v59 = vld [vmem:[%s0 + $0x160] sm:$0xff]
    %v60 = vld [vmem:[%s0 + $0x168] sm:$0xff]
    %v61 = vld [vmem:[%s0 + $0x170] sm:$0xff]
    %v62 = vld [vmem:[%s0 + $0x178] sm:$0xff]
    %v63 = vld [vmem:[%s0 + $0x180] sm:$0xff]
    %v64 = vld [vmem:[%s0 + $0x188] sm:$0xff]
    %v65 = vld [vmem:[%s0 + $0x190] sm:$0xff]
    %v66 = vld [vmem:[%s0 + $0x198] sm:$0xff]
    %v67 = vld [vmem:[%s0 + $0x1a0] sm:$0xff]
    %v68 = vld [vmem:[%s0 + $0x1a8] sm:$0xff]
    %v69 = vld [vmem:[%s0 + $0x1b0] sm:$0xff]
    %v70 = vld [vmem:[%s0 + $0x1b8] sm:$0xff]
    %v71 = vld [vmem:[%s0 + $0x1c0] sm:$0xff]
    %v72 = vld [vmem:[%s0 + $0x1c8] sm:$0xff]
    %v73 = vld [vmem:[%s0 + $0x1d0] sm:$0xff]
    %v74 = vld [vmem:[%s0 + $0x1d8] sm:$0xff]
    %v75 = vld [vmem:[%s0 + $0x1e0] sm:$0xff]
    %v76 = vld [vmem:[%s0 + $0x1e8] sm:$0xff]
    %v77 = vld [vmem:[%s0 + $0x1f0] sm:$0xff]
    %v78 = vld [vmem:[%s0 + $0x1f8] sm:$0xff]
    %v79 = vld [vmem:[%s1] sm:$0xff]
    %v80 = vld [vmem:[%s1 + $0x8] sm:$0xff]
    %v81 = vld [vmem:[%s1 + $0x10] sm:$0xff]
    %v82 = vld [vmem:[%s1 + $0x18] sm:$0xff]
    %v83 = vld [vmem:[%s1 + $0x20] sm:$0xff]
    %v84 = vld [vmem:[%s1 + $0x28] sm:$0xff]
    %v85 = vld [vmem:[%s1 + $0x30] sm:$0xff]
    %v86 = vld [vmem:[%s1 + $0x38] sm:$0xff]
    %v87 = vld [vmem:[%s1 + $0x40] sm:$0xff]
    %v88 = vld [vmem:[%s1 + $0x48] sm:$0xff]
    %v89 = vld [vmem:[%s1 + $0x50] sm:$0xff]
    %v90 = vld [vmem:[%s1 + $0x58] sm:$0xff]
    %v91 = vld [vmem:[%s1 + $0x60] sm:$0xff]
    %v92 = vld [vmem:[%s1 + $0x68] sm:$0xff]
    %v93 = vld [vmem:[%s1 + $0x70] sm:$0xff]
    %v94 = vld [vmem:[%s1 + $0x78] sm:$0xff]
    %v95 = vld [vmem:[%s1 + $0x80] sm:$0xff]
    %v96 = vld [vmem:[%s1 + $0x88] sm:$0xff]
    %v97 = vld [vmem:[%s1 + $0x90] sm:$0xff]
    %v98 = vld [vmem:[%s1 + $0x98] sm:$0xff]
    %v99 = vld [vmem:[%s1 + $0xa0] sm:$0xff]
    %v100 = vld [vmem:[%s1 + $0xa8] sm:$0xff]
    %v101 = vld [vmem:[%s1 + $0xb0] sm:$0xff]
    %v102 = vld [vmem:[%s1 + $0xb8] sm:$0xff]
    %v103 = vld [vmem:[%s1 + $0xc0] sm:$0xff]
    %v104 = vld [vmem:[%s1 + $0xc8] sm:$0xff]
    %v105 = vld [vmem:[%s1 + $0xd0] sm:$0xff]
    %v106 = vld [vmem:[%s1 + $0xd8] sm:$0xff]
    %v107 = vld [vmem:[%s1 + $0xe0] sm:$0xff]
    %v108 = vld [vmem:[%s1 + $0xe8] sm:$0xff]
    %v109 = vld [vmem:[%s1 + $0xf0] sm:$0xff]
    %v110 = vld [vmem:[%s1 + $0xf8] sm:$0xff]
    %v111 = vld [vmem:[%s2] sm:$0x3]
    %v113 = vperm.slane %v111, 0
    %v114 = vperm.slane %v111, 1
    %v181 = vunpack.c.l.b16 %v15
    %v182 = vunpack.c.h.b16 %v15
    %v183 = vunpack.c.l.b16 %v16
    %v184 = vunpack.c.h.b16 %v16
    %v185 = vunpack.c.l.b16 %v17
    %v186 = vunpack.c.h.b16 %v17
    %v187 = vunpack.c.l.b16 %v18
    %v188 = vunpack.c.h.b16 %v18
    %v189 = vunpack.c.l.b16 %v19
    %v190 = vunpack.c.h.b16 %v19
    %v191 = vunpack.c.l.b16 %v20
    %v192 = vunpack.c.h.b16 %v20
    %v193 = vunpack.c.l.b16 %v21
    %v194 = vunpack.c.h.b16 %v21
    %v195 = vunpack.c.l.b16 %v22
    %v196 = vunpack.c.h.b16 %v22
    %v197 = vunpack.c.l.b16 %v23
    %v198 = vunpack.c.h.b16 %v23
    %v199 = vunpack.c.l.b16 %v24
    %v200 = vunpack.c.h.b16 %v24
    %v201 = vunpack.c.l.b16 %v25
    %v202 = vunpack.c.h.b16 %v25
    %v203 = vunpack.c.l.b16 %v26
    %v204 = vunpack.c.h.b16 %v26
    %v205 = vunpack.c.l.b16 %v27
    %v206 = vunpack.c.h.b16 %v27
    %v207 = vunpack.c.l.b16 %v28
    %v208 = vunpack.c.h.b16 %v28
    %v209 = vunpack.c.l.b16 %v29
    %v210 = vunpack.c.h.b16 %v29
    %v211 = vunpack.c.l.b16 %v30
    %v212 = vunpack.c.h.b16 %v30
    %v213 = vunpack.c.l.b16 %v31
    %v214 = vunpack.c.h.b16 %v31
    %v215 = vunpack.c.l.b16 %v32
    %v216 = vunpack.c.h.b16 %v32
    %v217 = vunpack.c.l.b16 %v33
    %v218 = vunpack.c.h.b16 %v33
    %v219 = vunpack.c.l.b16 %v34
    %v220 = vunpack.c.h.b16 %v34
    %v221 = vunpack.c.l.b16 %v35
    %v222 = vunpack.c.h.b16 %v35
    %v223 = vunpack.c.l.b16 %v36
    %v224 = vunpack.c.h.b16 %v36
    %v225 = vunpack.c.l.b16 %v37
    %v226 = vunpack.c.h.b16 %v37
    %v227 = vunpack.c.l.b16 %v38
    %v228 = vunpack.c.h.b16 %v38
    %v229 = vunpack.c.l.b16 %v39
    %v230 = vunpack.c.h.b16 %v39
    %v231 = vunpack.c.l.b16 %v40
    %v232 = vunpack.c.h.b16 %v40
    %v233 = vunpack.c.l.b16 %v41
    %v234 = vunpack.c.h.b16 %v41
    %v235 = vunpack.c.l.b16 %v42
    %v236 = vunpack.c.h.b16 %v42
    %v237 = vunpack.c.l.b16 %v43
    %v238 = vunpack.c.h.b16 %v43
    %v239 = vunpack.c.l.b16 %v44
    %v240 = vunpack.c.h.b16 %v44
    %v241 = vunpack.c.l.b16 %v45
    %v242 = vunpack.c.h.b16 %v45
    %v243 = vunpack.c.l.b16 %v46
    %v244 = vunpack.c.h.b16 %v46
    %v245 = vunpack.c.l.b16 %v47
    %v246 = vunpack.c.h.b16 %v47
    %v247 = vunpack.c.l.b16 %v48
    %v248 = vunpack.c.h.b16 %v48
    %v249 = vunpack.c.l.b16 %v49
    %v250 = vunpack.c.h.b16 %v49
    %v251 = vunpack.c.l.b16 %v50
    %v252 = vunpack.c.h.b16 %v50
    %v253 = vunpack.c.l.b16 %v51
    %v254 = vunpack.c.h.b16 %v51
    %v255 = vunpack.c.l.b16 %v52
    %v256 = vunpack.c.h.b16 %v52
    %v257 = vunpack.c.l.b16 %v53
    %v258 = vunpack.c.h.b16 %v53
    %v259 = vunpack.c.l.b16 %v54
    %v260 = vunpack.c.h.b16 %v54
    %v261 = vunpack.c.l.b16 %v55
    %v262 = vunpack.c.h.b16 %v55
    %v263 = vunpack.c.l.b16 %v56
    %v264 = vunpack.c.h.b16 %v56
    %v265 = vunpack.c.l.b16 %v57
    %v266 = vunpack.c.h.b16 %v57
    %v267 = vunpack.c.l.b16 %v58
    %v268 = vunpack.c.h.b16 %v58
    %v269 = vunpack.c.l.b16 %v59
    %v270 = vunpack.c.h.b16 %v59
    %v271 = vunpack.c.l.b16 %v60
    %v272 = vunpack.c.h.b16 %v60
    %v273 = vunpack.c.l.b16 %v61
    %v274 = vunpack.c.h.b16 %v61
    %v275 = vunpack.c.l.b16 %v62
    %v276 = vunpack.c.h.b16 %v62
    %v277 = vunpack.c.l.b16 %v63
    %v278 = vunpack.c.h.b16 %v63
    %v279 = vunpack.c.l.b16 %v64
    %v280 = vunpack.c.h.b16 %v64
    %v281 = vunpack.c.l.b16 %v65
    %v282 = vunpack.c.h.b16 %v65
    %v283 = vunpack.c.l.b16 %v66
    %v284 = vunpack.c.h.b16 %v66
    %v285 = vunpack.c.l.b16 %v67
    %v286 = vunpack.c.h.b16 %v67
    %v287 = vunpack.c.l.b16 %v68
    %v288 = vunpack.c.h.b16 %v68
    %v289 = vunpack.c.l.b16 %v69
    %v290 = vunpack.c.h.b16 %v69
    %v291 = vunpack.c.l.b16 %v70
    %v292 = vunpack.c.h.b16 %v70
    %v293 = vunpack.c.l.b16 %v71
    %v294 = vunpack.c.h.b16 %v71
    %v295 = vunpack.c.l.b16 %v72
    %v296 = vunpack.c.h.b16 %v72
    %v297 = vunpack.c.l.b16 %v73
    %v298 = vunpack.c.h.b16 %v73
    %v299 = vunpack.c.l.b16 %v74
    %v300 = vunpack.c.h.b16 %v74
    %v301 = vunpack.c.l.b16 %v75
    %v302 = vunpack.c.h.b16 %v75
    %v303 = vunpack.c.l.b16 %v76
    %v304 = vunpack.c.h.b16 %v76
    %v305 = vunpack.c.l.b16 %v77
    %v306 = vunpack.c.h.b16 %v77
    %v307 = vunpack.c.l.b16 %v78
    %v308 = vunpack.c.h.b16 %v78
    %v309 = vpack.c.b16 %v183, %v181
    %v310 = vpack.c.b16 %v184, %v182
    %v311 = vpack.c.b16 %v187, %v185
    %v312 = vpack.c.b16 %v188, %v186
    %v313 = vpack.c.b16 %v191, %v189
    %v314 = vpack.c.b16 %v192, %v190
    %v315 = vpack.c.b16 %v195, %v193
    %v316 = vpack.c.b16 %v196, %v194
    %v317 = vpack.c.b16 %v199, %v197
    %v318 = vpack.c.b16 %v200, %v198
    %v319 = vpack.c.b16 %v203, %v201
    %v320 = vpack.c.b16 %v204, %v202
    %v321 = vpack.c.b16 %v207, %v205
    %v322 = vpack.c.b16 %v208, %v206
    %v323 = vpack.c.b16 %v211, %v209
    %v324 = vpack.c.b16 %v212, %v210
    %v325 = vpack.c.b16 %v215, %v213
    %v326 = vpack.c.b16 %v216, %v214
    %v327 = vpack.c.b16 %v219, %v217
    %v328 = vpack.c.b16 %v220, %v218
    %v329 = vpack.c.b16 %v223, %v221
    %v330 = vpack.c.b16 %v224, %v222
    %v331 = vpack.c.b16 %v227, %v225
    %v332 = vpack.c.b16 %v228, %v226
    %v333 = vpack.c.b16 %v231, %v229
    %v334 = vpack.c.b16 %v232, %v230
    %v335 = vpack.c.b16 %v235, %v233
    %v336 = vpack.c.b16 %v236, %v234
    %v337 = vpack.c.b16 %v239, %v237
    %v338 = vpack.c.b16 %v240, %v238
    %v339 = vpack.c.b16 %v243, %v241
    %v340 = vpack.c.b16 %v244, %v242
    %v341 = vpack.c.b16 %v247, %v245
    %v342 = vpack.c.b16 %v248, %v246
    %v343 = vpack.c.b16 %v251, %v249
    %v344 = vpack.c.b16 %v252, %v250
    %v345 = vpack.c.b16 %v255, %v253
    %v346 = vpack.c.b16 %v256, %v254
    %v347 = vpack.c.b16 %v259, %v257
    %v348 = vpack.c.b16 %v260, %v258
    %v349 = vpack.c.b16 %v263, %v261
    %v350 = vpack.c.b16 %v264, %v262
    %v351 = vpack.c.b16 %v267, %v265
    %v352 = vpack.c.b16 %v268, %v266
    %v353 = vpack.c.b16 %v271, %v269
    %v354 = vpack.c.b16 %v272, %v270
    %v355 = vpack.c.b16 %v275, %v273
    %v356 = vpack.c.b16 %v276, %v274
    %v357 = vpack.c.b16 %v279, %v277
    %v358 = vpack.c.b16 %v280, %v278
    %v359 = vpack.c.b16 %v283, %v281
    %v360 = vpack.c.b16 %v284, %v282
    %v361 = vpack.c.b16 %v287, %v285
    %v362 = vpack.c.b16 %v288, %v286
    %v363 = vpack.c.b16 %v291, %v289
    %v364 = vpack.c.b16 %v292, %v290
    %v365 = vpack.c.b16 %v295, %v293
    %v366 = vpack.c.b16 %v296, %v294
    %v367 = vpack.c.b16 %v299, %v297
    %v368 = vpack.c.b16 %v300, %v298
    %v369 = vpack.c.b16 %v303, %v301
    %v370 = vpack.c.b16 %v304, %v302
    %v371 = vpack.c.b16 %v307, %v305
    %v372 = vpack.c.b16 %v308, %v306
    %v469 = vunpack.c.l.b16 %v79
    %v470 = vunpack.c.h.b16 %v79
    %v471 = vunpack.c.l.b16 %v80
    %v472 = vunpack.c.h.b16 %v80
    %v473 = vunpack.c.l.b16 %v81
    %v474 = vunpack.c.h.b16 %v81
    %v475 = vunpack.c.l.b16 %v82
    %v476 = vunpack.c.h.b16 %v82
    %v477 = vunpack.c.l.b16 %v83
    %v478 = vunpack.c.h.b16 %v83
    %v479 = vunpack.c.l.b16 %v84
    %v480 = vunpack.c.h.b16 %v84
    %v481 = vunpack.c.l.b16 %v85
    %v482 = vunpack.c.h.b16 %v85
    %v483 = vunpack.c.l.b16 %v86
    %v484 = vunpack.c.h.b16 %v86
    %v485 = vunpack.c.l.b16 %v87
    %v486 = vunpack.c.h.b16 %v87
    %v487 = vunpack.c.l.b16 %v88
    %v488 = vunpack.c.h.b16 %v88
    %v489 = vunpack.c.l.b16 %v89
    %v490 = vunpack.c.h.b16 %v89
    %v491 = vunpack.c.l.b16 %v90
    %v492 = vunpack.c.h.b16 %v90
    %v493 = vunpack.c.l.b16 %v91
    %v494 = vunpack.c.h.b16 %v91
    %v495 = vunpack.c.l.b16 %v92
    %v496 = vunpack.c.h.b16 %v92
    %v497 = vunpack.c.l.b16 %v93
    %v498 = vunpack.c.h.b16 %v93
    %v499 = vunpack.c.l.b16 %v94
    %v500 = vunpack.c.h.b16 %v94
    %v501 = vunpack.c.l.b16 %v95
    %v502 = vunpack.c.h.b16 %v95
    %v503 = vunpack.c.l.b16 %v96
    %v504 = vunpack.c.h.b16 %v96
    %v505 = vunpack.c.l.b16 %v97
    %v506 = vunpack.c.h.b16 %v97
    %v507 = vunpack.c.l.b16 %v98
    %v508 = vunpack.c.h.b16 %v98
    %v509 = vunpack.c.l.b16 %v99
    %v510 = vunpack.c.h.b16 %v99
    %v511 = vunpack.c.l.b16 %v100
    %v512 = vunpack.c.h.b16 %v100
    %v513 = vunpack.c.l.b16 %v101
    %v514 = vunpack.c.h.b16 %v101
    %v515 = vunpack.c.l.b16 %v102
    %v516 = vunpack.c.h.b16 %v102
    %v517 = vunpack.c.l.b16 %v103
    %v518 = vunpack.c.h.b16 %v103
    %v519 = vunpack.c.l.b16 %v104
    %v520 = vunpack.c.h.b16 %v104
    %v521 = vunpack.c.l.b16 %v105
    %v522 = vunpack.c.h.b16 %v105
    %v523 = vunpack.c.l.b16 %v106
    %v524 = vunpack.c.h.b16 %v106
    %v525 = vunpack.c.l.b16 %v107
    %v526 = vunpack.c.h.b16 %v107
    %v527 = vunpack.c.l.b16 %v108
    %v528 = vunpack.c.h.b16 %v108
    %v529 = vunpack.c.l.b16 %v109
    %v530 = vunpack.c.h.b16 %v109
    %v531 = vunpack.c.l.b16 %v110
    %v532 = vunpack.c.h.b16 %v110
    %v533 = vpack.c.b16 %v471, %v469
    %v534 = vpack.c.b16 %v472, %v470
    %v535 = vpack.c.b16 %v475, %v473
    %v536 = vpack.c.b16 %v476, %v474
    %v537 = vpack.c.b16 %v479, %v477
    %v538 = vpack.c.b16 %v480, %v478
    %v539 = vpack.c.b16 %v483, %v481
    %v540 = vpack.c.b16 %v484, %v482
    %v541 = vpack.c.b16 %v487, %v485
    %v542 = vpack.c.b16 %v488, %v486
    %v543 = vpack.c.b16 %v491, %v489
    %v544 = vpack.c.b16 %v492, %v490
    %v545 = vpack.c.b16 %v495, %v493
    %v546 = vpack.c.b16 %v496, %v494
    %v547 = vpack.c.b16 %v499, %v497
    %v548 = vpack.c.b16 %v500, %v498
    %v549 = vpack.c.b16 %v503, %v501
    %v550 = vpack.c.b16 %v504, %v502
    %v551 = vpack.c.b16 %v507, %v505
    %v552 = vpack.c.b16 %v508, %v506
    %v553 = vpack.c.b16 %v511, %v509
    %v554 = vpack.c.b16 %v512, %v510
    %v555 = vpack.c.b16 %v515, %v513
    %v556 = vpack.c.b16 %v516, %v514
    %v557 = vpack.c.b16 %v519, %v517
    %v558 = vpack.c.b16 %v520, %v518
    %v559 = vpack.c.b16 %v523, %v521
    %v560 = vpack.c.b16 %v524, %v522
    %v561 = vpack.c.b16 %v527, %v525
    %v562 = vpack.c.b16 %v528, %v526
    %v563 = vpack.c.b16 %v531, %v529
    %v564 = vpack.c.b16 %v532, %v530
    %597 = vmatpush.bf16.msra.mxu0 %v547
    %598 = vmatpush.bf16.msra.mxu0 %v545
    %599 = vmatpush.bf16.msra.mxu0 %v543
    %600 = vmatpush.bf16.msra.mxu0 %v541
    %601 = vmatpush.bf16.msra.mxu0 %v539
    %602 = vmatpush.bf16.msra.mxu0 %v537
    %603 = vmatpush.bf16.msra.mxu0 %v535
    %604 = vmatpush.bf16.msra.mxu0 %v533
    %605 = vmatmul.bf16.gmra.mxu0 %v309
    %v606 = vpop.f32.mrf.mxu0
    %v607 = vadd.f32 %v113, %v606
    %v608 = vpop.f32.mrf.mxu0
    %v609 = vadd.f32 %v113, %v608
    %610 = vmatmul.bf16.gmra.mxu0 %v311
    %v611 = vpop.f32.mrf.mxu0
    %v612 = vadd.f32 %v113, %v611
    %v613 = vpop.f32.mrf.mxu0
    %v614 = vadd.f32 %v113, %v613
    %615 = vmatmul.bf16.gmra.mxu0 %v313
    %v616 = vpop.f32.mrf.mxu0
    %v617 = vadd.f32 %v113, %v616
    %v618 = vpop.f32.mrf.mxu0
    %v619 = vadd.f32 %v113, %v618
    %620 = vmatmul.bf16.gmra.mxu0 %v315
    %v621 = vpop.f32.mrf.mxu0
    %v622 = vadd.f32 %v113, %v621
    %v623 = vpop.f32.mrf.mxu0
    %v624 = vadd.f32 %v113, %v623
    %625 = vmatmul.bf16.gmra.mxu0 %v317
    %v626 = vpop.f32.mrf.mxu0
    %v627 = vadd.f32 %v113, %v626
    %v628 = vpop.f32.mrf.mxu0
    %v629 = vadd.f32 %v113, %v628
    %630 = vmatmul.bf16.gmra.mxu0 %v319
    %v631 = vpop.f32.mrf.mxu0
    %v632 = vadd.f32 %v113, %v631
    %v633 = vpop.f32.mrf.mxu0
    %v634 = vadd.f32 %v113, %v633
    %635 = vmatmul.bf16.gmra.mxu0 %v321
    %v636 = vpop.f32.mrf.mxu0
    %v637 = vadd.f32 %v113, %v636
    %v638 = vpop.f32.mrf.mxu0
    %v639 = vadd.f32 %v113, %v638
    %640 = vmatmul.bf16.gmra.mxu0 %v323
    %v641 = vpop.f32.mrf.mxu0
    %v642 = vadd.f32 %v113, %v641
    %v643 = vpop.f32.mrf.mxu0
    %v644 = vadd.f32 %v113, %v643
    %645 = vmatmul.bf16.gmra.mxu0 %v325
    %v646 = vpop.f32.mrf.mxu0
    %v647 = vadd.f32 %v113, %v646
    %v648 = vpop.f32.mrf.mxu0
    %v649 = vadd.f32 %v113, %v648
    %650 = vmatmul.bf16.gmra.mxu0 %v327
    %v651 = vpop.f32.mrf.mxu0
    %v652 = vadd.f32 %v113, %v651
    %v653 = vpop.f32.mrf.mxu0
    %v654 = vadd.f32 %v113, %v653
    %655 = vmatmul.bf16.gmra.mxu0 %v329
    %v656 = vpop.f32.mrf.mxu0
    %v657 = vadd.f32 %v113, %v656
    %v658 = vpop.f32.mrf.mxu0
    %v659 = vadd.f32 %v113, %v658
    %660 = vmatmul.bf16.gmra.mxu0 %v331
    %v661 = vpop.f32.mrf.mxu0
    %v662 = vadd.f32 %v113, %v661
    %v663 = vpop.f32.mrf.mxu0
    %v664 = vadd.f32 %v113, %v663
    %665 = vmatmul.bf16.gmra.mxu0 %v333
    %v666 = vpop.f32.mrf.mxu0
    %v667 = vadd.f32 %v113, %v666
    %v668 = vpop.f32.mrf.mxu0
    %v669 = vadd.f32 %v113, %v668
    %670 = vmatmul.bf16.gmra.mxu0 %v335
    %v671 = vpop.f32.mrf.mxu0
    %v672 = vadd.f32 %v113, %v671
    %v673 = vpop.f32.mrf.mxu0
    %v674 = vadd.f32 %v113, %v673
    %675 = vmatmul.bf16.gmra.mxu0 %v337
    %v676 = vpop.f32.mrf.mxu0
    %v677 = vadd.f32 %v113, %v676
    %v678 = vpop.f32.mrf.mxu0
    %v679 = vadd.f32 %v113, %v678
    %680 = vmatmul.bf16.gmra.mxu0 %v339
    %v681 = vpop.f32.mrf.mxu0
    %v682 = vadd.f32 %v113, %v681
    %v683 = vpop.f32.mrf.mxu0
    %v684 = vadd.f32 %v113, %v683
    %685 = vmatmul.bf16.gmra.mxu0 %v341
    %v686 = vpop.f32.mrf.mxu0
    %v687 = vadd.f32 %v113, %v686
    %v688 = vpop.f32.mrf.mxu0
    %v689 = vadd.f32 %v113, %v688
    %690 = vmatmul.bf16.gmra.mxu0 %v343
    %v691 = vpop.f32.mrf.mxu0
    %v692 = vadd.f32 %v113, %v691
    %v693 = vpop.f32.mrf.mxu0
    %v694 = vadd.f32 %v113, %v693
    %695 = vmatmul.bf16.gmra.mxu0 %v345
    %v696 = vpop.f32.mrf.mxu0
    %v697 = vadd.f32 %v113, %v696
    %v698 = vpop.f32.mrf.mxu0
    %v699 = vadd.f32 %v113, %v698
    %700 = vmatmul.bf16.gmra.mxu0 %v347
    %v701 = vpop.f32.mrf.mxu0
    %v702 = vadd.f32 %v113, %v701
    %v703 = vpop.f32.mrf.mxu0
    %v704 = vadd.f32 %v113, %v703
    %705 = vmatmul.bf16.gmra.mxu0 %v349
    %v706 = vpop.f32.mrf.mxu0
    %v707 = vadd.f32 %v113, %v706
    %v708 = vpop.f32.mrf.mxu0
    %v709 = vadd.f32 %v113, %v708
    %710 = vmatmul.bf16.gmra.mxu0 %v351
    %v711 = vpop.f32.mrf.mxu0
    %v712 = vadd.f32 %v113, %v711
    %v713 = vpop.f32.mrf.mxu0
    %v714 = vadd.f32 %v113, %v713
    %715 = vmatmul.bf16.gmra.mxu0 %v353
    %v716 = vpop.f32.mrf.mxu0
    %v717 = vadd.f32 %v113, %v716
    %v718 = vpop.f32.mrf.mxu0
    %v719 = vadd.f32 %v113, %v718
    %720 = vmatmul.bf16.gmra.mxu0 %v355
    %v721 = vpop.f32.mrf.mxu0
    %v722 = vadd.f32 %v113, %v721
    %v723 = vpop.f32.mrf.mxu0
    %v724 = vadd.f32 %v113, %v723
    %725 = vmatmul.bf16.gmra.mxu0 %v357
    %v726 = vpop.f32.mrf.mxu0
    %v727 = vadd.f32 %v113, %v726
    %v728 = vpop.f32.mrf.mxu0
    %v729 = vadd.f32 %v113, %v728
    %730 = vmatmul.bf16.gmra.mxu0 %v359
    %v731 = vpop.f32.mrf.mxu0
    %v732 = vadd.f32 %v113, %v731
    %v733 = vpop.f32.mrf.mxu0
    %v734 = vadd.f32 %v113, %v733
    %735 = vmatmul.bf16.gmra.mxu0 %v361
    %v736 = vpop.f32.mrf.mxu0
    %v737 = vadd.f32 %v113, %v736
    %v738 = vpop.f32.mrf.mxu0
    %v739 = vadd.f32 %v113, %v738
    %740 = vmatmul.bf16.gmra.mxu0 %v363
    %v741 = vpop.f32.mrf.mxu0
    %v742 = vadd.f32 %v113, %v741
    %v743 = vpop.f32.mrf.mxu0
    %v744 = vadd.f32 %v113, %v743
    %745 = vmatmul.bf16.gmra.mxu0 %v365
    %v746 = vpop.f32.mrf.mxu0
    %v747 = vadd.f32 %v113, %v746
    %v748 = vpop.f32.mrf.mxu0
    %v749 = vadd.f32 %v113, %v748
    %750 = vmatmul.bf16.gmra.mxu0 %v367
    %v751 = vpop.f32.mrf.mxu0
    %v752 = vadd.f32 %v113, %v751
    %v753 = vpop.f32.mrf.mxu0
    %v754 = vadd.f32 %v113, %v753
    %755 = vmatmul.bf16.gmra.mxu0 %v369
    %v756 = vpop.f32.mrf.mxu0
    %v757 = vadd.f32 %v113, %v756
    %v758 = vpop.f32.mrf.mxu0
    %v759 = vadd.f32 %v113, %v758
    %760 = vmatmul.bf16.gmra.mxu0 %v371
    %v761 = vpop.f32.mrf.mxu0
    %v762 = vadd.f32 %v113, %v761
    %v763 = vpop.f32.mrf.mxu0
    %v764 = vadd.f32 %v113, %v763
    %765 = vdwg.mxu0
    %766 = vmatpush.bf16.msra.mxu0 %v563
    %767 = vmatpush.bf16.msra.mxu0 %v561
    %768 = vmatpush.bf16.msra.mxu0 %v559
    %769 = vmatpush.bf16.msra.mxu0 %v557
    %770 = vmatpush.bf16.msra.mxu0 %v555
    %771 = vmatpush.bf16.msra.mxu0 %v553
    %772 = vmatpush.bf16.msra.mxu0 %v551
    %773 = vmatpush.bf16.msra.mxu0 %v549
    %774 = vmatmul.bf16.gmra.mxu0 %v310
    %v775 = vpop.f32.mrf.mxu0
    %v776 = vadd.f32 %v607, %v775
    %v777 = vpop.f32.mrf.mxu0
    %v778 = vadd.f32 %v609, %v777
    %779 = vmatmul.bf16.gmra.mxu0 %v312
    %v780 = vpop.f32.mrf.mxu0
    %v781 = vadd.f32 %v612, %v780
    %v782 = vpop.f32.mrf.mxu0
    %v783 = vadd.f32 %v614, %v782
    %784 = vmatmul.bf16.gmra.mxu0 %v314
    %v785 = vpop.f32.mrf.mxu0
    %v786 = vadd.f32 %v617, %v785
    %v787 = vpop.f32.mrf.mxu0
    %v788 = vadd.f32 %v619, %v787
    %789 = vmatmul.bf16.gmra.mxu0 %v316
    %v790 = vpop.f32.mrf.mxu0
    %v791 = vadd.f32 %v622, %v790
    %v792 = vpop.f32.mrf.mxu0
    %v793 = vadd.f32 %v624, %v792
    %794 = vmatmul.bf16.gmra.mxu0 %v318
    %v795 = vpop.f32.mrf.mxu0
    %v796 = vadd.f32 %v627, %v795
    %v797 = vpop.f32.mrf.mxu0
    %v798 = vadd.f32 %v629, %v797
    %799 = vmatmul.bf16.gmra.mxu0 %v320
    %v800 = vpop.f32.mrf.mxu0
    %v801 = vadd.f32 %v632, %v800
    %v802 = vpop.f32.mrf.mxu0
    %v803 = vadd.f32 %v634, %v802
    %804 = vmatmul.bf16.gmra.mxu0 %v322
    %v805 = vpop.f32.mrf.mxu0
    %v806 = vadd.f32 %v637, %v805
    %v807 = vpop.f32.mrf.mxu0
    %v808 = vadd.f32 %v639, %v807
    %809 = vmatmul.bf16.gmra.mxu0 %v324
    %v810 = vpop.f32.mrf.mxu0
    %v811 = vadd.f32 %v642, %v810
    %v812 = vpop.f32.mrf.mxu0
    %v813 = vadd.f32 %v644, %v812
    %814 = vmatmul.bf16.gmra.mxu0 %v326
    %v815 = vpop.f32.mrf.mxu0
    %v816 = vadd.f32 %v647, %v815
    %v817 = vpop.f32.mrf.mxu0
    %v818 = vadd.f32 %v649, %v817
    %819 = vmatmul.bf16.gmra.mxu0 %v328
    %v820 = vpop.f32.mrf.mxu0
    %v821 = vadd.f32 %v652, %v820
    %v822 = vpop.f32.mrf.mxu0
    %v823 = vadd.f32 %v654, %v822
    %824 = vmatmul.bf16.gmra.mxu0 %v330
    %v825 = vpop.f32.mrf.mxu0
    %v826 = vadd.f32 %v657, %v825
    %v827 = vpop.f32.mrf.mxu0
    %v828 = vadd.f32 %v659, %v827
    %829 = vmatmul.bf16.gmra.mxu0 %v332
    %v830 = vpop.f32.mrf.mxu0
    %v831 = vadd.f32 %v662, %v830
    %v832 = vpop.f32.mrf.mxu0
    %v833 = vadd.f32 %v664, %v832
    %834 = vmatmul.bf16.gmra.mxu0 %v334
    %v835 = vpop.f32.mrf.mxu0
    %v836 = vadd.f32 %v667, %v835
    %v837 = vpop.f32.mrf.mxu0
    %v838 = vadd.f32 %v669, %v837
    %839 = vmatmul.bf16.gmra.mxu0 %v336
    %v840 = vpop.f32.mrf.mxu0
    %v841 = vadd.f32 %v672, %v840
    %v842 = vpop.f32.mrf.mxu0
    %v843 = vadd.f32 %v674, %v842
    %844 = vmatmul.bf16.gmra.mxu0 %v338
    %v845 = vpop.f32.mrf.mxu0
    %v846 = vadd.f32 %v677, %v845
    %v847 = vpop.f32.mrf.mxu0
    %v848 = vadd.f32 %v679, %v847
    %849 = vmatmul.bf16.gmra.mxu0 %v340
    %v850 = vpop.f32.mrf.mxu0
    %v851 = vadd.f32 %v682, %v850
    %v852 = vpop.f32.mrf.mxu0
    %v853 = vadd.f32 %v684, %v852
    %854 = vmatmul.bf16.gmra.mxu0 %v342
    %v855 = vpop.f32.mrf.mxu0
    %v856 = vadd.f32 %v687, %v855
    %v857 = vpop.f32.mrf.mxu0
    %v858 = vadd.f32 %v689, %v857
    %859 = vmatmul.bf16.gmra.mxu0 %v344
    %v860 = vpop.f32.mrf.mxu0
    %v861 = vadd.f32 %v692, %v860
    %v862 = vpop.f32.mrf.mxu0
    %v863 = vadd.f32 %v694, %v862
    %864 = vmatmul.bf16.gmra.mxu0 %v346
    %v865 = vpop.f32.mrf.mxu0
    %v866 = vadd.f32 %v697, %v865
    %v867 = vpop.f32.mrf.mxu0
    %v868 = vadd.f32 %v699, %v867
    %869 = vmatmul.bf16.gmra.mxu0 %v348
    %v870 = vpop.f32.mrf.mxu0
    %v871 = vadd.f32 %v702, %v870
    %v872 = vpop.f32.mrf.mxu0
    %v873 = vadd.f32 %v704, %v872
    %874 = vmatmul.bf16.gmra.mxu0 %v350
    %v875 = vpop.f32.mrf.mxu0
    %v876 = vadd.f32 %v707, %v875
    %v877 = vpop.f32.mrf.mxu0
    %v878 = vadd.f32 %v709, %v877
    %879 = vmatmul.bf16.gmra.mxu0 %v352
    %v880 = vpop.f32.mrf.mxu0
    %v881 = vadd.f32 %v712, %v880
    %v882 = vpop.f32.mrf.mxu0
    %v883 = vadd.f32 %v714, %v882
    %884 = vmatmul.bf16.gmra.mxu0 %v354
    %v885 = vpop.f32.mrf.mxu0
    %v886 = vadd.f32 %v717, %v885
    %v887 = vpop.f32.mrf.mxu0
    %v888 = vadd.f32 %v719, %v887
    %889 = vmatmul.bf16.gmra.mxu0 %v356
    %v890 = vpop.f32.mrf.mxu0
    %v891 = vadd.f32 %v722, %v890
    %v892 = vpop.f32.mrf.mxu0
    %v893 = vadd.f32 %v724, %v892
    %894 = vmatmul.bf16.gmra.mxu0 %v358
    %v895 = vpop.f32.mrf.mxu0
    %v896 = vadd.f32 %v727, %v895
    %v897 = vpop.f32.mrf.mxu0
    %v898 = vadd.f32 %v729, %v897
    %899 = vmatmul.bf16.gmra.mxu0 %v360
    %v900 = vpop.f32.mrf.mxu0
    %v901 = vadd.f32 %v732, %v900
    %v902 = vpop.f32.mrf.mxu0
    %v903 = vadd.f32 %v734, %v902
    %904 = vmatmul.bf16.gmra.mxu0 %v362
    %v905 = vpop.f32.mrf.mxu0
    %v906 = vadd.f32 %v737, %v905
    %v907 = vpop.f32.mrf.mxu0
    %v908 = vadd.f32 %v739, %v907
    %909 = vmatmul.bf16.gmra.mxu0 %v364
    %v910 = vpop.f32.mrf.mxu0
    %v911 = vadd.f32 %v742, %v910
    %v912 = vpop.f32.mrf.mxu0
    %v913 = vadd.f32 %v744, %v912
    %914 = vmatmul.bf16.gmra.mxu0 %v366
    %v915 = vpop.f32.mrf.mxu0
    %v916 = vadd.f32 %v747, %v915
    %v917 = vpop.f32.mrf.mxu0
    %v918 = vadd.f32 %v749, %v917
    %919 = vmatmul.bf16.gmra.mxu0 %v368
    %v920 = vpop.f32.mrf.mxu0
    %v921 = vadd.f32 %v752, %v920
    %v922 = vpop.f32.mrf.mxu0
    %v923 = vadd.f32 %v754, %v922
    %924 = vmatmul.bf16.gmra.mxu0 %v370
    %v925 = vpop.f32.mrf.mxu0
    %v926 = vadd.f32 %v757, %v925
    %v927 = vpop.f32.mrf.mxu0
    %v928 = vadd.f32 %v759, %v927
    %929 = vmatmul.bf16.gmra.mxu0 %v372
    %v930 = vpop.f32.mrf.mxu0
    %v931 = vadd.f32 %v762, %v930
    %v932 = vpop.f32.mrf.mxu0
    %v933 = vadd.f32 %v764, %v932
    %934 = vdwg.mxu0
    %935 = vmatpush.bf16.msra.mxu0 %v548
    %936 = vmatpush.bf16.msra.mxu0 %v546
    %937 = vmatpush.bf16.msra.mxu0 %v544
    %938 = vmatpush.bf16.msra.mxu0 %v542
    %939 = vmatpush.bf16.msra.mxu0 %v540
    %940 = vmatpush.bf16.msra.mxu0 %v538
    %941 = vmatpush.bf16.msra.mxu0 %v536
    %942 = vmatpush.bf16.msra.mxu0 %v534
    %943 = vmatmul.bf16.gmra.mxu0 %v309
    %v944 = vpop.f32.mrf.mxu0
    %v945 = vadd.f32 %v114, %v944
    %v946 = vpop.f32.mrf.mxu0
    %v947 = vadd.f32 %v114, %v946
    %948 = vmatmul.bf16.gmra.mxu0 %v311
    %v949 = vpop.f32.mrf.mxu0
    %v950 = vadd.f32 %v114, %v949
    %v951 = vpop.f32.mrf.mxu0
    %v952 = vadd.f32 %v114, %v951
    %953 = vmatmul.bf16.gmra.mxu0 %v313
    %v954 = vpop.f32.mrf.mxu0
    %v955 = vadd.f32 %v114, %v954
    %v956 = vpop.f32.mrf.mxu0
    %v957 = vadd.f32 %v114, %v956
    %958 = vmatmul.bf16.gmra.mxu0 %v315
    %v959 = vpop.f32.mrf.mxu0
    %v960 = vadd.f32 %v114, %v959
    %v961 = vpop.f32.mrf.mxu0
    %v962 = vadd.f32 %v114, %v961
    %963 = vmatmul.bf16.gmra.mxu0 %v317
    %v964 = vpop.f32.mrf.mxu0
    %v965 = vadd.f32 %v114, %v964
    %v966 = vpop.f32.mrf.mxu0
    %v967 = vadd.f32 %v114, %v966
    %968 = vmatmul.bf16.gmra.mxu0 %v319
    %v969 = vpop.f32.mrf.mxu0
    %v970 = vadd.f32 %v114, %v969
    %v971 = vpop.f32.mrf.mxu0
    %v972 = vadd.f32 %v114, %v971
    %973 = vmatmul.bf16.gmra.mxu0 %v321
    %v974 = vpop.f32.mrf.mxu0
    %v975 = vadd.f32 %v114, %v974
    %v976 = vpop.f32.mrf.mxu0
    %v977 = vadd.f32 %v114, %v976
    %978 = vmatmul.bf16.gmra.mxu0 %v323
    %v979 = vpop.f32.mrf.mxu0
    %v980 = vadd.f32 %v114, %v979
    %v981 = vpop.f32.mrf.mxu0
    %v982 = vadd.f32 %v114, %v981
    %983 = vmatmul.bf16.gmra.mxu0 %v325
    %v984 = vpop.f32.mrf.mxu0
    %v985 = vadd.f32 %v114, %v984
    %v986 = vpop.f32.mrf.mxu0
    %v987 = vadd.f32 %v114, %v986
    %988 = vmatmul.bf16.gmra.mxu0 %v327
    %v989 = vpop.f32.mrf.mxu0
    %v990 = vadd.f32 %v114, %v989
    %v991 = vpop.f32.mrf.mxu0
    %v992 = vadd.f32 %v114, %v991
    %993 = vmatmul.bf16.gmra.mxu0 %v329
    %v994 = vpop.f32.mrf.mxu0
    %v995 = vadd.f32 %v114, %v994
    %v996 = vpop.f32.mrf.mxu0
    %v997 = vadd.f32 %v114, %v996
    %998 = vmatmul.bf16.gmra.mxu0 %v331
    %v999 = vpop.f32.mrf.mxu0
    %v1000 = vadd.f32 %v114, %v999
    %v1001 = vpop.f32.mrf.mxu0
    %v1002 = vadd.f32 %v114, %v1001
    %1003 = vmatmul.bf16.gmra.mxu0 %v333
    %v1004 = vpop.f32.mrf.mxu0
    %v1005 = vadd.f32 %v114, %v1004
    %v1006 = vpop.f32.mrf.mxu0
    %v1007 = vadd.f32 %v114, %v1006
    %1008 = vmatmul.bf16.gmra.mxu0 %v335
    %v1009 = vpop.f32.mrf.mxu0
    %v1010 = vadd.f32 %v114, %v1009
    %v1011 = vpop.f32.mrf.mxu0
    %v1012 = vadd.f32 %v114, %v1011
    %1013 = vmatmul.bf16.gmra.mxu0 %v337
    %v1014 = vpop.f32.mrf.mxu0
    %v1015 = vadd.f32 %v114, %v1014
    %v1016 = vpop.f32.mrf.mxu0
    %v1017 = vadd.f32 %v114, %v1016
    %1018 = vmatmul.bf16.gmra.mxu0 %v339
    %v1019 = vpop.f32.mrf.mxu0
    %v1020 = vadd.f32 %v114, %v1019
    %v1021 = vpop.f32.mrf.mxu0
    %v1022 = vadd.f32 %v114, %v1021
    %1023 = vmatmul.bf16.gmra.mxu0 %v341
    %v1024 = vpop.f32.mrf.mxu0
    %v1025 = vadd.f32 %v114, %v1024
    %v1026 = vpop.f32.mrf.mxu0
    %v1027 = vadd.f32 %v114, %v1026
    %1028 = vmatmul.bf16.gmra.mxu0 %v343
    %v1029 = vpop.f32.mrf.mxu0
    %v1030 = vadd.f32 %v114, %v1029
    %v1031 = vpop.f32.mrf.mxu0
    %v1032 = vadd.f32 %v114, %v1031
    %1033 = vmatmul.bf16.gmra.mxu0 %v345
    %v1034 = vpop.f32.mrf.mxu0
    %v1035 = vadd.f32 %v114, %v1034
    %v1036 = vpop.f32.mrf.mxu0
    %v1037 = vadd.f32 %v114, %v1036
    %1038 = vmatmul.bf16.gmra.mxu0 %v347
    %v1039 = vpop.f32.mrf.mxu0
    %v1040 = vadd.f32 %v114, %v1039
    %v1041 = vpop.f32.mrf.mxu0
    %v1042 = vadd.f32 %v114, %v1041
    %1043 = vmatmul.bf16.gmra.mxu0 %v349
    %v1044 = vpop.f32.mrf.mxu0
    %v1045 = vadd.f32 %v114, %v1044
    %v1046 = vpop.f32.mrf.mxu0
    %v1047 = vadd.f32 %v114, %v1046
    %1048 = vmatmul.bf16.gmra.mxu0 %v351
    %v1049 = vpop.f32.mrf.mxu0
    %v1050 = vadd.f32 %v114, %v1049
    %v1051 = vpop.f32.mrf.mxu0
    %v1052 = vadd.f32 %v114, %v1051
    %1053 = vmatmul.bf16.gmra.mxu0 %v353
    %v1054 = vpop.f32.mrf.mxu0
    %v1055 = vadd.f32 %v114, %v1054
    %v1056 = vpop.f32.mrf.mxu0
    %v1057 = vadd.f32 %v114, %v1056
    %1058 = vmatmul.bf16.gmra.mxu0 %v355
    %v1059 = vpop.f32.mrf.mxu0
    %v1060 = vadd.f32 %v114, %v1059
    %v1061 = vpop.f32.mrf.mxu0
    %v1062 = vadd.f32 %v114, %v1061
    %1063 = vmatmul.bf16.gmra.mxu0 %v357
    %v1064 = vpop.f32.mrf.mxu0
    %v1065 = vadd.f32 %v114, %v1064
    %v1066 = vpop.f32.mrf.mxu0
    %v1067 = vadd.f32 %v114, %v1066
    %1068 = vmatmul.bf16.gmra.mxu0 %v359
    %v1069 = vpop.f32.mrf.mxu0
    %v1070 = vadd.f32 %v114, %v1069
    %v1071 = vpop.f32.mrf.mxu0
    %v1072 = vadd.f32 %v114, %v1071
    %1073 = vmatmul.bf16.gmra.mxu0 %v361
    %v1074 = vpop.f32.mrf.mxu0
    %v1075 = vadd.f32 %v114, %v1074
    %v1076 = vpop.f32.mrf.mxu0
    %v1077 = vadd.f32 %v114, %v1076
    %1078 = vmatmul.bf16.gmra.mxu0 %v363
    %v1079 = vpop.f32.mrf.mxu0
    %v1080 = vadd.f32 %v114, %v1079
    %v1081 = vpop.f32.mrf.mxu0
    %v1082 = vadd.f32 %v114, %v1081
    %1083 = vmatmul.bf16.gmra.mxu0 %v365
    %v1084 = vpop.f32.mrf.mxu0
    %v1085 = vadd.f32 %v114, %v1084
    %v1086 = vpop.f32.mrf.mxu0
    %v1087 = vadd.f32 %v114, %v1086
    %1088 = vmatmul.bf16.gmra.mxu0 %v367
    %v1089 = vpop.f32.mrf.mxu0
    %v1090 = vadd.f32 %v114, %v1089
    %v1091 = vpop.f32.mrf.mxu0
    %v1092 = vadd.f32 %v114, %v1091
    %1093 = vmatmul.bf16.gmra.mxu0 %v369
    %v1094 = vpop.f32.mrf.mxu0
    %v1095 = vadd.f32 %v114, %v1094
    %v1096 = vpop.f32.mrf.mxu0
    %v1097 = vadd.f32 %v114, %v1096
    %1098 = vmatmul.bf16.gmra.mxu0 %v371
    %v1099 = vpop.f32.mrf.mxu0
    %v1100 = vadd.f32 %v114, %v1099
    %v1101 = vpop.f32.mrf.mxu0
    %v1102 = vadd.f32 %v114, %v1101
    %1103 = vdwg.mxu0
    %1104 = vmatpush.bf16.msra.mxu0 %v564
    %1105 = vmatpush.bf16.msra.mxu0 %v562
    %1106 = vmatpush.bf16.msra.mxu0 %v560
    %1107 = vmatpush.bf16.msra.mxu0 %v558
    %1108 = vmatpush.bf16.msra.mxu0 %v556
    %1109 = vmatpush.bf16.msra.mxu0 %v554
    %1110 = vmatpush.bf16.msra.mxu0 %v552
    %1111 = vmatpush.bf16.msra.mxu0 %v550
    %1112 = vmatmul.bf16.gmra.mxu0 %v310
    %v1113 = vpop.f32.mrf.mxu0
    %v1114 = vadd.f32 %v945, %v1113
    %v1115 = vpop.f32.mrf.mxu0
    %v1116 = vadd.f32 %v947, %v1115
    %1117 = vmatmul.bf16.gmra.mxu0 %v312
    %v1118 = vpop.f32.mrf.mxu0
    %v1119 = vadd.f32 %v950, %v1118
    %v1120 = vpop.f32.mrf.mxu0
    %v1121 = vadd.f32 %v952, %v1120
    %1122 = vmatmul.bf16.gmra.mxu0 %v314
    %v1123 = vpop.f32.mrf.mxu0
    %v1124 = vadd.f32 %v955, %v1123
    %v1125 = vpop.f32.mrf.mxu0
    %v1126 = vadd.f32 %v957, %v1125
    %1127 = vmatmul.bf16.gmra.mxu0 %v316
    %v1128 = vpop.f32.mrf.mxu0
    %v1129 = vadd.f32 %v960, %v1128
    %v1130 = vpop.f32.mrf.mxu0
    %v1131 = vadd.f32 %v962, %v1130
    %1132 = vmatmul.bf16.gmra.mxu0 %v318
    %v1133 = vpop.f32.mrf.mxu0
    %v1134 = vadd.f32 %v965, %v1133
    %v1135 = vpop.f32.mrf.mxu0
    %v1136 = vadd.f32 %v967, %v1135
    %1137 = vmatmul.bf16.gmra.mxu0 %v320
    %v1138 = vpop.f32.mrf.mxu0
    %v1139 = vadd.f32 %v970, %v1138
    %v1140 = vpop.f32.mrf.mxu0
    %v1141 = vadd.f32 %v972, %v1140
    %1142 = vmatmul.bf16.gmra.mxu0 %v322
    %v1143 = vpop.f32.mrf.mxu0
    %v1144 = vadd.f32 %v975, %v1143
    %v1145 = vpop.f32.mrf.mxu0
    %v1146 = vadd.f32 %v977, %v1145
    %1147 = vmatmul.bf16.gmra.mxu0 %v324
    %v1148 = vpop.f32.mrf.mxu0
    %v1149 = vadd.f32 %v980, %v1148
    %v1150 = vpop.f32.mrf.mxu0
    %v1151 = vadd.f32 %v982, %v1150
    %1152 = vmatmul.bf16.gmra.mxu0 %v326
    %v1153 = vpop.f32.mrf.mxu0
    %v1154 = vadd.f32 %v985, %v1153
    %v1155 = vpop.f32.mrf.mxu0
    %v1156 = vadd.f32 %v987, %v1155
    %1157 = vmatmul.bf16.gmra.mxu0 %v328
    %v1158 = vpop.f32.mrf.mxu0
    %v1159 = vadd.f32 %v990, %v1158
    %v1160 = vpop.f32.mrf.mxu0
    %v1161 = vadd.f32 %v992, %v1160
    %1162 = vmatmul.bf16.gmra.mxu0 %v330
    %v1163 = vpop.f32.mrf.mxu0
    %v1164 = vadd.f32 %v995, %v1163
    %v1165 = vpop.f32.mrf.mxu0
    %v1166 = vadd.f32 %v997, %v1165
    %1167 = vmatmul.bf16.gmra.mxu0 %v332
    %v1168 = vpop.f32.mrf.mxu0
    %v1169 = vadd.f32 %v1000, %v1168
    %v1170 = vpop.f32.mrf.mxu0
    %v1171 = vadd.f32 %v1002, %v1170
    %1172 = vmatmul.bf16.gmra.mxu0 %v334
    %v1173 = vpop.f32.mrf.mxu0
    %v1174 = vadd.f32 %v1005, %v1173
    %v1175 = vpop.f32.mrf.mxu0
    %v1176 = vadd.f32 %v1007, %v1175
    %1177 = vmatmul.bf16.gmra.mxu0 %v336
    %v1178 = vpop.f32.mrf.mxu0
    %v1179 = vadd.f32 %v1010, %v1178
    %v1180 = vpop.f32.mrf.mxu0
    %v1181 = vadd.f32 %v1012, %v1180
    %1182 = vmatmul.bf16.gmra.mxu0 %v338
    %v1183 = vpop.f32.mrf.mxu0
    %v1184 = vadd.f32 %v1015, %v1183
    %v1185 = vpop.f32.mrf.mxu0
    %v1186 = vadd.f32 %v1017, %v1185
    %1187 = vmatmul.bf16.gmra.mxu0 %v340
    %v1188 = vpop.f32.mrf.mxu0
    %v1189 = vadd.f32 %v1020, %v1188
    %v1190 = vpop.f32.mrf.mxu0
    %v1191 = vadd.f32 %v1022, %v1190
    %1192 = vmatmul.bf16.gmra.mxu0 %v342
    %v1193 = vpop.f32.mrf.mxu0
    %v1194 = vadd.f32 %v1025, %v1193
    %v1195 = vpop.f32.mrf.mxu0
    %v1196 = vadd.f32 %v1027, %v1195
    %1197 = vmatmul.bf16.gmra.mxu0 %v344
    %v1198 = vpop.f32.mrf.mxu0
    %v1199 = vadd.f32 %v1030, %v1198
    %v1200 = vpop.f32.mrf.mxu0
    %v1201 = vadd.f32 %v1032, %v1200
    %1202 = vmatmul.bf16.gmra.mxu0 %v346
    %v1203 = vpop.f32.mrf.mxu0
    %v1204 = vadd.f32 %v1035, %v1203
    %v1205 = vpop.f32.mrf.mxu0
    %v1206 = vadd.f32 %v1037, %v1205
    %1207 = vmatmul.bf16.gmra.mxu0 %v348
    %v1208 = vpop.f32.mrf.mxu0
    %v1209 = vadd.f32 %v1040, %v1208
    %v1210 = vpop.f32.mrf.mxu0
    %v1211 = vadd.f32 %v1042, %v1210
    %1212 = vmatmul.bf16.gmra.mxu0 %v350
    %v1213 = vpop.f32.mrf.mxu0
    %v1214 = vadd.f32 %v1045, %v1213
    %v1215 = vpop.f32.mrf.mxu0
    %v1216 = vadd.f32 %v1047, %v1215
    %1217 = vmatmul.bf16.gmra.mxu0 %v352
    %v1218 = vpop.f32.mrf.mxu0
    %v1219 = vadd.f32 %v1050, %v1218
    %v1220 = vpop.f32.mrf.mxu0
    %v1221 = vadd.f32 %v1052, %v1220
    %1222 = vmatmul.bf16.gmra.mxu0 %v354
    %v1223 = vpop.f32.mrf.mxu0
    %v1224 = vadd.f32 %v1055, %v1223
    %v1225 = vpop.f32.mrf.mxu0
    %v1226 = vadd.f32 %v1057, %v1225
    %1227 = vmatmul.bf16.gmra.mxu0 %v356
    %v1228 = vpop.f32.mrf.mxu0
    %v1229 = vadd.f32 %v1060, %v1228
    %v1230 = vpop.f32.mrf.mxu0
    %v1231 = vadd.f32 %v1062, %v1230
    %1232 = vmatmul.bf16.gmra.mxu0 %v358
    %v1233 = vpop.f32.mrf.mxu0
    %v1234 = vadd.f32 %v1065, %v1233
    %v1235 = vpop.f32.mrf.mxu0
    %v1236 = vadd.f32 %v1067, %v1235
    %1237 = vmatmul.bf16.gmra.mxu0 %v360
    %v1238 = vpop.f32.mrf.mxu0
    %v1239 = vadd.f32 %v1070, %v1238
    %v1240 = vpop.f32.mrf.mxu0
    %v1241 = vadd.f32 %v1072, %v1240
    %1242 = vmatmul.bf16.gmra.mxu0 %v362
    %v1243 = vpop.f32.mrf.mxu0
    %v1244 = vadd.f32 %v1075, %v1243
    %v1245 = vpop.f32.mrf.mxu0
    %v1246 = vadd.f32 %v1077, %v1245
    %1247 = vmatmul.bf16.gmra.mxu0 %v364
    %v1248 = vpop.f32.mrf.mxu0
    %v1249 = vadd.f32 %v1080, %v1248
    %v1250 = vpop.f32.mrf.mxu0
    %v1251 = vadd.f32 %v1082, %v1250
    %1252 = vmatmul.bf16.gmra.mxu0 %v366
    %v1253 = vpop.f32.mrf.mxu0
    %v1254 = vadd.f32 %v1085, %v1253
    %v1255 = vpop.f32.mrf.mxu0
    %v1256 = vadd.f32 %v1087, %v1255
    %1257 = vmatmul.bf16.gmra.mxu0 %v368
    %v1258 = vpop.f32.mrf.mxu0
    %v1259 = vadd.f32 %v1090, %v1258
    %v1260 = vpop.f32.mrf.mxu0
    %v1261 = vadd.f32 %v1092, %v1260
    %1262 = vmatmul.bf16.gmra.mxu0 %v370
    %v1263 = vpop.f32.mrf.mxu0
    %v1264 = vadd.f32 %v1095, %v1263
    %v1265 = vpop.f32.mrf.mxu0
    %v1266 = vadd.f32 %v1097, %v1265
    %1267 = vmatmul.bf16.gmra.mxu0 %v372
    %v1268 = vpop.f32.mrf.mxu0
    %v1269 = vadd.f32 %v1100, %v1268
    %v1270 = vpop.f32.mrf.mxu0
    %v1271 = vadd.f32 %v1102, %v1270
    %1272 = vdwg.mxu0
    %v1273 = vpack.c.bf16 %v1114, %v776
    %v1274 = vpack.c.bf16 %v1116, %v778
    %v1275 = vpack.c.bf16 %v1119, %v781
    %v1276 = vpack.c.bf16 %v1121, %v783
    %v1277 = vpack.c.bf16 %v1124, %v786
    %v1278 = vpack.c.bf16 %v1126, %v788
    %v1279 = vpack.c.bf16 %v1129, %v791
    %v1280 = vpack.c.bf16 %v1131, %v793
    %v1281 = vpack.c.bf16 %v1134, %v796
    %v1282 = vpack.c.bf16 %v1136, %v798
    %v1283 = vpack.c.bf16 %v1139, %v801
    %v1284 = vpack.c.bf16 %v1141, %v803
    %v1285 = vpack.c.bf16 %v1144, %v806
    %v1286 = vpack.c.bf16 %v1146, %v808
    %v1287 = vpack.c.bf16 %v1149, %v811
    %v1288 = vpack.c.bf16 %v1151, %v813
    %v1289 = vpack.c.bf16 %v1154, %v816
    %v1290 = vpack.c.bf16 %v1156, %v818
    %v1291 = vpack.c.bf16 %v1159, %v821
    %v1292 = vpack.c.bf16 %v1161, %v823
    %v1293 = vpack.c.bf16 %v1164, %v826
    %v1294 = vpack.c.bf16 %v1166, %v828
    %v1295 = vpack.c.bf16 %v1169, %v831
    %v1296 = vpack.c.bf16 %v1171, %v833
    %v1297 = vpack.c.bf16 %v1174, %v836
    %v1298 = vpack.c.bf16 %v1176, %v838
    %v1299 = vpack.c.bf16 %v1179, %v841
    %v1300 = vpack.c.bf16 %v1181, %v843
    %v1301 = vpack.c.bf16 %v1184, %v846
    %v1302 = vpack.c.bf16 %v1186, %v848
    %v1303 = vpack.c.bf16 %v1189, %v851
    %v1304 = vpack.c.bf16 %v1191, %v853
    %v1305 = vpack.c.bf16 %v1194, %v856
    %v1306 = vpack.c.bf16 %v1196, %v858
    %v1307 = vpack.c.bf16 %v1199, %v861
    %v1308 = vpack.c.bf16 %v1201, %v863
    %v1309 = vpack.c.bf16 %v1204, %v866
    %v1310 = vpack.c.bf16 %v1206, %v868
    %v1311 = vpack.c.bf16 %v1209, %v871
    %v1312 = vpack.c.bf16 %v1211, %v873
    %v1313 = vpack.c.bf16 %v1214, %v876
    %v1314 = vpack.c.bf16 %v1216, %v878
    %v1315 = vpack.c.bf16 %v1219, %v881
    %v1316 = vpack.c.bf16 %v1221, %v883
    %v1317 = vpack.c.bf16 %v1224, %v886
    %v1318 = vpack.c.bf16 %v1226, %v888
    %v1319 = vpack.c.bf16 %v1229, %v891
    %v1320 = vpack.c.bf16 %v1231, %v893
    %v1321 = vpack.c.bf16 %v1234, %v896
    %v1322 = vpack.c.bf16 %v1236, %v898
    %v1323 = vpack.c.bf16 %v1239, %v901
    %v1324 = vpack.c.bf16 %v1241, %v903
    %v1325 = vpack.c.bf16 %v1244, %v906
    %v1326 = vpack.c.bf16 %v1246, %v908
    %v1327 = vpack.c.bf16 %v1249, %v911
    %v1328 = vpack.c.bf16 %v1251, %v913
    %v1329 = vpack.c.bf16 %v1254, %v916
    %v1330 = vpack.c.bf16 %v1256, %v918
    %v1331 = vpack.c.bf16 %v1259, %v921
    %v1332 = vpack.c.bf16 %v1261, %v923
    %v1333 = vpack.c.bf16 %v1264, %v926
    %v1334 = vpack.c.bf16 %v1266, %v928
    %v1335 = vpack.c.bf16 %v1269, %v931
    %v1336 = vpack.c.bf16 %v1271, %v933
    %1337 = vst [vmem:[#allocation2] sm:$0xff] %v1273
    %1338 = vst [vmem:[#allocation2 + $0x8] sm:$0xff] %v1274
    %1339 = vst [vmem:[#allocation2 + $0x10] sm:$0xff] %v1275
    %1340 = vst [vmem:[#allocation2 + $0x18] sm:$0xff] %v1276
    %1341 = vst [vmem:[#allocation2 + $0x20] sm:$0xff] %v1277
    %1342 = vst [vmem:[#allocation2 + $0x28] sm:$0xff] %v1278
    %1343 = vst [vmem:[#allocation2 + $0x30] sm:$0xff] %v1279
    %1344 = vst [vmem:[#allocation2 + $0x38] sm:$0xff] %v1280
    %1345 = vst [vmem:[#allocation2 + $0x40] sm:$0xff] %v1281
    %1346 = vst [vmem:[#allocation2 + $0x48] sm:$0xff] %v1282
    %1347 = vst [vmem:[#allocation2 + $0x50] sm:$0xff] %v1283
    %1348 = vst [vmem:[#allocation2 + $0x58] sm:$0xff] %v1284
    %1349 = vst [vmem:[#allocation2 + $0x60] sm:$0xff] %v1285
    %1350 = vst [vmem:[#allocation2 + $0x68] sm:$0xff] %v1286
    %1351 = vst [vmem:[#allocation2 + $0x70] sm:$0xff] %v1287
    %1352 = vst [vmem:[#allocation2 + $0x78] sm:$0xff] %v1288
    %1353 = vst [vmem:[#allocation2 + $0x80] sm:$0xff] %v1289
    %1354 = vst [vmem:[#allocation2 + $0x88] sm:$0xff] %v1290
    %1355 = vst [vmem:[#allocation2 + $0x90] sm:$0xff] %v1291
    %1356 = vst [vmem:[#allocation2 + $0x98] sm:$0xff] %v1292
    %1357 = vst [vmem:[#allocation2 + $0xa0] sm:$0xff] %v1293
    %1358 = vst [vmem:[#allocation2 + $0xa8] sm:$0xff] %v1294
    %1359 = vst [vmem:[#allocation2 + $0xb0] sm:$0xff] %v1295
    %1360 = vst [vmem:[#allocation2 + $0xb8] sm:$0xff] %v1296
    %1361 = vst [vmem:[#allocation2 + $0xc0] sm:$0xff] %v1297
    %1362 = vst [vmem:[#allocation2 + $0xc8] sm:$0xff] %v1298
    %1363 = vst [vmem:[#allocation2 + $0xd0] sm:$0xff] %v1299
    %1364 = vst [vmem:[#allocation2 + $0xd8] sm:$0xff] %v1300
    %1365 = vst [vmem:[#allocation2 + $0xe0] sm:$0xff] %v1301
    %1366 = vst [vmem:[#allocation2 + $0xe8] sm:$0xff] %v1302
    %1367 = vst [vmem:[#allocation2 + $0xf0] sm:$0xff] %v1303
    %1368 = vst [vmem:[#allocation2 + $0xf8] sm:$0xff] %v1304
    %1369 = vst [vmem:[#allocation2 + $0x100] sm:$0xff] %v1305
    %1370 = vst [vmem:[#allocation2 + $0x108] sm:$0xff] %v1306
    %1371 = vst [vmem:[#allocation2 + $0x110] sm:$0xff] %v1307
    %1372 = vst [vmem:[#allocation2 + $0x118] sm:$0xff] %v1308
    %1373 = vst [vmem:[#allocation2 + $0x120] sm:$0xff] %v1309
    %1374 = vst [vmem:[#allocation2 + $0x128] sm:$0xff] %v1310
    %1375 = vst [vmem:[#allocation2 + $0x130] sm:$0xff] %v1311
    %1376 = vst [vmem:[#allocation2 + $0x138] sm:$0xff] %v1312
    %1377 = vst [vmem:[#allocation2 + $0x140] sm:$0xff] %v1313
    %1378 = vst [vmem:[#allocation2 + $0x148] sm:$0xff] %v1314
    %1379 = vst [vmem:[#allocation2 + $0x150] sm:$0xff] %v1315
    %1380 = vst [vmem:[#allocation2 + $0x158] sm:$0xff] %v1316
    %1381 = vst [vmem:[#allocation2 + $0x160] sm:$0xff] %v1317
    %1382 = vst [vmem:[#allocation2 + $0x168] sm:$0xff] %v1318
    %1383 = vst [vmem:[#allocation2 + $0x170] sm:$0xff] %v1319
    %1384 = vst [vmem:[#allocation2 + $0x178] sm:$0xff] %v1320
    %1385 = vst [vmem:[#allocation2 + $0x180] sm:$0xff] %v1321
    %1386 = vst [vmem:[#allocation2 + $0x188] sm:$0xff] %v1322
    %1387 = vst [vmem:[#allocation2 + $0x190] sm:$0xff] %v1323
    %1388 = vst [vmem:[#allocation2 + $0x198] sm:$0xff] %v1324
    %1389 = vst [vmem:[#allocation2 + $0x1a0] sm:$0xff] %v1325
    %1390 = vst [vmem:[#allocation2 + $0x1a8] sm:$0xff] %v1326
    %1391 = vst [vmem:[#allocation2 + $0x1b0] sm:$0xff] %v1327
    %1392 = vst [vmem:[#allocation2 + $0x1b8] sm:$0xff] %v1328
    %1393 = vst [vmem:[#allocation2 + $0x1c0] sm:$0xff] %v1329
    %1394 = vst [vmem:[#allocation2 + $0x1c8] sm:$0xff] %v1330
    %1395 = vst [vmem:[#allocation2 + $0x1d0] sm:$0xff] %v1331
    %1396 = vst [vmem:[#allocation2 + $0x1d8] sm:$0xff] %v1332
    %1397 = vst [vmem:[#allocation2 + $0x1e0] sm:$0xff] %v1333
    %1398 = vst [vmem:[#allocation2 + $0x1e8] sm:$0xff] %v1334
    %1399 = vst [vmem:[#allocation2 + $0x1f0] sm:$0xff] %v1335
    %1400 = vst [vmem:[#allocation2 + $0x1f8] sm:$0xff] %v1336
    // Predicated region
    $region14: #{causal_self_attention.5} parent=1 // pred_check
      _
    $region15: #{causal_self_attention.5} parent=1 // pred_check_branch
      %1402 = sbr.rel (0) target = $region17
    $region16: #{causal_self_attention.5} parent=1 // pred_region
      %1404 = vsyncadd [#allocation3], 0
      %s1405 = sshll.u32 [#allocation2], 4
      %s1406 = int_to_ptr.vmem [resolvable:$true] %s1405
      %s1407 = sshll.u32 %s3, 4
      %s1408 = int_to_ptr.hbm [resolvable:$true] %s1407
      %1413 = dma.vmem_to_hbm [thread:$0]  %s1406, 8192, %s1408, [#allocation3], 128, 128, 8
    $region17: #{causal_self_attention.5} parent=1 // pred_fallthru
      _
    // Predicated region
    $region18: #{causal_self_attention.5} parent=1 // pred_check
      _
    $region19: #{causal_self_attention.5} parent=1 // pred_check_branch
      %1415 = sbr.rel (0) target = $region21
    $region20: #{causal_self_attention.5} parent=1 // pred_region
      %1417 = dma.done [#allocation3], 8192
    $region21: #{causal_self_attention.5} parent=1 // pred_fallthru
      _
    %1418 = vsyncpa [#allocation3], 1

// kernel: causal_self_attention.3
$region0: #{causal_self_attention.3}
  #allocation0 [shape = 'u32[]', space=smem, size = 0x4, offset = 0x4, fixed_abs, tag = 'smem constant byte address 0x4 - core index']
  #allocation1 [shape = 'u32[72,128]{1,0:T(1,128)}', space=vmem, size = 0x9000, scoped, tag = 'internal scratch']
  %s0 = inlined_call_operand.vmem [shape: bf16[512,256], index: 0, kind: input, shape index: {}]
  %s1 = inlined_call_operand.vmem [shape: bf16[256,768], index: 1, kind: input, shape index: {}]
  %s2 = inlined_call_operand.vmem [shape: f32[1,768], index: 2, kind: input, shape index: {}]
  %s3 = inlined_call_operand.vmem [shape: bf16[512,768], index: 3, kind: output, shape index: {}]
  %s4 = sld [smem:[#allocation0]]
  $region93: #{causal_self_attention.3} parent=0
    _
  %s6 = ssub.s32 1, %s4
  %s7 = scalar_select 0, %s6, %s4
  $region1: #{causal_self_attention.3} parent=0
    #allocation2 [shape = 'u8[393216]{0}', space=vmem, size = 0x60000, scoped, tag = 'input window, operand 1']
    #allocation3 [shape = 'u8[786432]{0}', space=vmem, size = 0xc0000, scoped, tag = 'output window, operand 0']
    loop: start=0, step=1, limit=4
    $region2: #{causal_self_attention.3} parent=1 // loop_pre_header
      _
    $region3: #{causal_self_attention.3} parent=1 // loop_header
      %s9 = sphi 0, %s13
      %p10 = scmp.ge.s32.totalorder %s9, 4
      %s16 = sphi 0, %s28
      %s17 = sphi 0, %s24
      %s18 = sphi 0, %s16
      %s19 = sphi 0, %s17
      %s20 = sphi 0, %s18
      %s21 = sphi 0, %s19
      %s31 = sphi 0, %s33
      %s34 = sphi 0, %s31
      %s35 = sphi 0, %s34
      %s51 = sphi 0, %s35
      %s57 = sphi 0, %s59
      %s60 = sphi 0, %s57
      %s61 = sphi 0, %s60
      %s77 = sphi 0, %s61
      %s83 = sphi 0, %s85
      %s86 = sphi 0, %s83
      %s87 = sphi 0, %s86
      %s103 = sphi 0, %s87
      %s111 = sphi 0, %s113
      %s114 = sphi 0, %s111
      %s115 = sphi 0, %s114
      %s131 = sphi 0, %s115
    $region4: #{causal_self_attention.3} parent=1 // loop_header_branch
      %12 = sbr.rel (%p10) target = $region8
    $region5: #{causal_self_attention.3} parent=1 // loop_body
      %s14 = ssub.s32 %s9, 1
      %s15 = ssub.s32 %s9, 2
      %s22 = sadd.s32 1, %s17
      %p23 = scmp.ge.s32.totalorder %s22, 2
      %s24 = scalar_select %p23, 0, %s22
      %s25 = sadd.s32 1, %s16
      %s26 = scalar_select %p23, %s25, %s16
      %p27 = scmp.ge.s32.totalorder %s26, 1
      %s28 = scalar_select %p27, 0, %s26
      %s29 = ssub.s32 %s16, %s28
      %p30 = scmp.eq.s32.totalorder %s29, 0
      %s32 = sadd.s32 %s31, 1
      %s33 = scalar_select %p30, %s31, %s32
      %p36 = pneg %p30
      %p37 = scmp.eq.s32.totalorder %s9, 1
      %p38 = por %p36, %p37
      %p39 = scmp.ne.s32.totalorder %s31, %s34
      %p40 = scmp.eq.s32.totalorder %s9, 0
      %p41 = por %p39, %p40
      %p42 = scmp.ne.s32.totalorder %s31, %s34
      %p43 = scmp.eq.s32.totalorder %s14, 1
      %p44 = por %p42, %p43
      %p45 = scmp.ne.s32.totalorder %s34, %s35
      %p46 = scmp.eq.s32.totalorder %s14, 0
      %p47 = por %p45, %p46
      %p48 = scmp.ne.s32.totalorder %s34, %s35
      %p49 = scmp.eq.s32.totalorder %s15, 1
      %p50 = por %p48, %p49
      %p52 = scmp.ne.s32.totalorder %s35, %s51
      %p53 = scmp.eq.s32.totalorder %s15, 0
      %p54 = por %p52, %p53
      %s55 = ssub.s32 %s17, %s24
      %p56 = scmp.eq.s32.totalorder %s55, 0
      %s58 = sadd.s32 %s57, 1
      %s59 = scalar_select %p56, %s57, %s58
      %p62 = pneg %p56
      %p63 = scmp.eq.s32.totalorder %s9, 1
      %p64 = por %p62, %p63
      %p65 = scmp.ne.s32.totalorder %s57, %s60
      %p66 = scmp.eq.s32.totalorder %s9, 0
      %p67 = por %p65, %p66
      %p68 = scmp.ne.s32.totalorder %s57, %s60
      %p69 = scmp.eq.s32.totalorder %s14, 1
      %p70 = por %p68, %p69
      %p71 = scmp.ne.s32.totalorder %s60, %s61
      %p72 = scmp.eq.s32.totalorder %s14, 0
      %p73 = por %p71, %p72
      %p74 = scmp.ne.s32.totalorder %s60, %s61
      %p75 = scmp.eq.s32.totalorder %s15, 1
      %p76 = por %p74, %p75
      %p78 = scmp.ne.s32.totalorder %s61, %s77
      %p79 = scmp.eq.s32.totalorder %s15, 0
      %p80 = por %p78, %p79
      %s81 = ssub.s32 %s17, %s24
      %p82 = scmp.eq.s32.totalorder %s81, 0
      %s84 = sadd.s32 %s83, 1
      %s85 = scalar_select %p82, %s83, %s84
      %p88 = pneg %p82
      %p89 = scmp.eq.s32.totalorder %s9, 1
      %p90 = por %p88, %p89
      %p91 = scmp.ne.s32.totalorder %s83, %s86
      %p92 = scmp.eq.s32.totalorder %s9, 0
      %p93 = por %p91, %p92
      %p94 = scmp.ne.s32.totalorder %s83, %s86
      %p95 = scmp.eq.s32.totalorder %s14, 1
      %p96 = por %p94, %p95
      %p97 = scmp.ne.s32.totalorder %s86, %s87
      %p98 = scmp.eq.s32.totalorder %s14, 0
      %p99 = por %p97, %p98
      %p100 = scmp.ne.s32.totalorder %s86, %s87
      %p101 = scmp.eq.s32.totalorder %s15, 1
      %p102 = por %p100, %p101
      %p104 = scmp.ne.s32.totalorder %s87, %s103
      %p105 = scmp.eq.s32.totalorder %s15, 0
      %p106 = por %p104, %p105
      %s107 = ssub.s32 %s16, %s28
      %s108 = ssub.s32 %s17, %s24
      %s109 = sor.u32 %s107, %s108
      %p110 = scmp.eq.s32.totalorder %s109, 0
      %s112 = sadd.s32 %s111, 1
      %s113 = scalar_select %p110, %s111, %s112
      %p116 = pneg %p110
      %p117 = scmp.eq.s32.totalorder %s9, 1
      %p118 = por %p116, %p117
      %p119 = scmp.ne.s32.totalorder %s111, %s114
      %p120 = scmp.eq.s32.totalorder %s9, 0
      %p121 = por %p119, %p120
      %p122 = scmp.ne.s32.totalorder %s111, %s114
      %p123 = scmp.eq.s32.totalorder %s14, 1
      %p124 = por %p122, %p123
      %p125 = scmp.ne.s32.totalorder %s114, %s115
      %p126 = scmp.eq.s32.totalorder %s14, 0
      %p127 = por %p125, %p126
      %p128 = scmp.ne.s32.totalorder %s114, %s115
      %p129 = scmp.eq.s32.totalorder %s15, 1
      %p130 = por %p128, %p129
      %p132 = scmp.ne.s32.totalorder %s115, %s131
      %p133 = scmp.eq.s32.totalorder %s15, 0
      %p134 = por %p132, %p133
      %p135 = scmp.le.s32.totalorder 1, %s9
      %p136 = scmp.lt.s32.totalorder %s9, 3
      %p137 = pnand %p135, %p136
      %p138 = pneg %p137
      // Predicated region
      $region9: #{causal_self_attention.3} parent=5 // pred_check
        _
      $region10: #{causal_self_attention.3} parent=5 // pred_check_branch
        %140 = sbr.rel (%p137) target = $region12
      $region11: #{causal_self_attention.3} parent=5 // pred_region
        %s141 = ssub.s32 %s9, 1
        // Predicated region
        $region13: #{causal_self_attention.3} parent=11 // pred_check
          %p142 = pneg %p47
        $region14: #{causal_self_attention.3} parent=11 // pred_check_branch
          %144 = sbr.rel (%p142) target = $region16
        $region15: #{causal_self_attention.3} parent=11 // pred_region
          %s145 = smul.u32 64, %s18
          %p146 = scmp.lt.s32.totalorder %s145, 63
          %s147 = scalar_select %p146, %s145, 63
          %s148 = smul.addr %s147, 2
          %s149 = smul.addr %s148, 4
          %s150 = scalar_lea.vmem %s0, %s149
          %s151 = smul.u32 64, %s18
        $region16: #{causal_self_attention.3} parent=11 // pred_fallthru
          _
      $region12: #{causal_self_attention.3} parent=5 // pred_fallthru
        _
      %p152 = scmp.lt.s32.totalorder %s9, 2
      // Predicated region
      $region17: #{causal_self_attention.3} parent=5 // pred_check
        %p153 = pneg %p152
      $region18: #{causal_self_attention.3} parent=5 // pred_check_branch
        %155 = sbr.rel (%p153) target = $region20
      $region19: #{causal_self_attention.3} parent=5 // pred_region
        // Predicated region
        $region21: #{causal_self_attention.3} parent=19 // pred_check
          %p156 = pneg %p67
        $region22: #{causal_self_attention.3} parent=19 // pred_check_branch
          %158 = sbr.rel (%p156) target = $region24
        $region23: #{causal_self_attention.3} parent=19 // pred_region
          %s159 = sand.u32 %s57, 1
          %s160 = sand.u32 %s57, 1
          %s161 = smul.addr %s160, 384
          %s162 = scalar_lea.vmem [#allocation2], %s161
          %s163 = smul.u32 3, %s17
          %s164 = smul.addr %s163, 4
          %s165 = scalar_lea.vmem %s1, %s164
          // Predicated region
          $region25: #{causal_self_attention.3} parent=23 // pred_check
            _
          $region26: #{causal_self_attention.3} parent=23 // pred_check_branch
            %167 = sbr.rel (0) target = $region28
          $region27: #{causal_self_attention.3} parent=23 // pred_region
            // Predicated region
            $region29: #{causal_self_attention.3} parent=27 // pred_check
              _
            $region30: #{causal_self_attention.3} parent=27 // pred_check_branch
              %169 = sbr.rel (0) target = $region32
            $region31: #{causal_self_attention.3} parent=27 // pred_region
              %s170 = scalar_lea.vmem %s165, 8
              %s171 = scalar_lea.vmem %s162, 8 [#allocation2]
              loop: start=0, step=1, limit=1
              $region33: #{causal_self_attention.3} parent=31 // loop_pre_header
                _
              $region34: #{causal_self_attention.3} parent=31 // loop_header
                %s173 = sphi 0, %s177
                %p174 = scmp.ge.s32.totalorder %s173, 1
                %s178 = sphi %s165, %s165
                %s179 = sphi %s162, %s162
              $region35: #{causal_self_attention.3} parent=31 // loop_header_branch
                %176 = sbr.rel (%p174) target = $region39
              $region36: #{causal_self_attention.3} parent=31 // loop_body
                %v180 = vld [vmem:[%s178] sm:$0xff]
                %181 = vst [vmem:[%s179] sm:$0xff] %v180
                %v182 = vld [vmem:[%s178 + $0x18] sm:$0xff]
                %183 = vst [vmem:[%s179 + $0xc] sm:$0xff] %v182
                %v184 = vld [vmem:[%s178 + $0x30] sm:$0xff]
                %185 = vst [vmem:[%s179 + $0x18] sm:$0xff] %v184
                %v186 = vld [vmem:[%s178 + $0x48] sm:$0xff]
                %187 = vst [vmem:[%s179 + $0x24] sm:$0xff] %v186
                %v188 = vld [vmem:[%s178 + $0x60] sm:$0xff]
                %189 = vst [vmem:[%s179 + $0x30] sm:$0xff] %v188
                %v190 = vld [vmem:[%s178 + $0x78] sm:$0xff]
                %191 = vst [vmem:[%s179 + $0x3c] sm:$0xff] %v190
                %v192 = vld [vmem:[%s178 + $0x90] sm:$0xff]
                %193 = vst [vmem:[%s179 + $0x48] sm:$0xff] %v192
                %v194 = vld [vmem:[%s178 + $0xa8] sm:$0xff]
                %195 = vst [vmem:[%s179 + $0x54] sm:$0xff] %v194
                %v196 = vld [vmem:[%s178 + $0xc0] sm:$0xff]
                %197 = vst [vmem:[%s179 + $0x60] sm:$0xff] %v196
                %v198 = vld [vmem:[%s178 + $0xd8] sm:$0xff]
                %199 = vst [vmem:[%s179 + $0x6c] sm:$0xff] %v198
                %v200 = vld [vmem:[%s178 + $0xf0] sm:$0xff]
                %201 = vst [vmem:[%s179 + $0x78] sm:$0xff] %v200
                %v202 = vld [vmem:[%s178 + $0x108] sm:$0xff]
                %203 = vst [vmem:[%s179 + $0x84] sm:$0xff] %v202
                %v204 = vld [vmem:[%s178 + $0x120] sm:$0xff]
                %205 = vst [vmem:[%s179 + $0x90] sm:$0xff] %v204
                %v206 = vld [vmem:[%s178 + $0x138] sm:$0xff]
                %207 = vst [vmem:[%s179 + $0x9c] sm:$0xff] %v206
                %v208 = vld [vmem:[%s178 + $0x150] sm:$0xff]
                %209 = vst [vmem:[%s179 + $0xa8] sm:$0xff] %v208
                %v210 = vld [vmem:[%s178 + $0x168] sm:$0xff]
                %211 = vst [vmem:[%s179 + $0xb4] sm:$0xff] %v210
                %v212 = vld [vmem:[%s178 + $0x180] sm:$0xff]
                %213 = vst [vmem:[%s179 + $0xc0] sm:$0xff] %v212
                %v214 = vld [vmem:[%s178 + $0x198] sm:$0xff]
                %215 = vst [vmem:[%s179 + $0xcc] sm:$0xff] %v214
                %v216 = vld [vmem:[%s178 + $0x1b0] sm:$0xff]
                %217 = vst [vmem:[%s179 + $0xd8] sm:$0xff] %v216
                %v218 = vld [vmem:[%s178 + $0x1c8] sm:$0xff]
                %219 = vst [vmem:[%s179 + $0xe4] sm:$0xff] %v218
                %v220 = vld [vmem:[%s178 + $0x1e0] sm:$0xff]
                %221 = vst [vmem:[%s179 + $0xf0] sm:$0xff] %v220
                %v222 = vld [vmem:[%s178 + $0x1f8] sm:$0xff]
                %223 = vst [vmem:[%s179 + $0xfc] sm:$0xff] %v222
                %v224 = vld [vmem:[%s178 + $0x210] sm:$0xff]
                %225 = vst [vmem:[%s179 + $0x108] sm:$0xff] %v224
                %v226 = vld [vmem:[%s178 + $0x228] sm:$0xff]
                %227 = vst [vmem:[%s179 + $0x114] sm:$0xff] %v226
                %v228 = vld [vmem:[%s178 + $0x240] sm:$0xff]
                %229 = vst [vmem:[%s179 + $0x120] sm:$0xff] %v228
                %v230 = vld [vmem:[%s178 + $0x258] sm:$0xff]
                %231 = vst [vmem:[%s179 + $0x12c] sm:$0xff] %v230
                %v232 = vld [vmem:[%s178 + $0x270] sm:$0xff]
                %233 = vst [vmem:[%s179 + $0x138] sm:$0xff] %v232
                %v234 = vld [vmem:[%s178 + $0x288] sm:$0xff]
                %235 = vst [vmem:[%s179 + $0x144] sm:$0xff] %v234
                %v236 = vld [vmem:[%s178 + $0x2a0] sm:$0xff]
                %237 = vst [vmem:[%s179 + $0x150] sm:$0xff] %v236
                %v238 = vld [vmem:[%s178 + $0x2b8] sm:$0xff]
                %239 = vst [vmem:[%s179 + $0x15c] sm:$0xff] %v238
                %v240 = vld [vmem:[%s178 + $0x2d0] sm:$0xff]
                %241 = vst [vmem:[%s179 + $0x168] sm:$0xff] %v240
                %v242 = vld [vmem:[%s178 + $0x2e8] sm:$0xff]
                %243 = vst [vmem:[%s179 + $0x174] sm:$0xff] %v242
              $region37: #{causal_self_attention.3} parent=31 // loop_footer
                %s177 = sadd.s32 1, %s173
              $region38: #{causal_self_attention.3} parent=31 // loop_footer_branch
                %172 = sbr.rel target = $region34
              $region39: #{causal_self_attention.3} parent=31 // loop_exit
                _
              %s245 = ssub.s32 16, 1
              loop: start=0, step=1, limit=1
              $region40: #{causal_self_attention.3} parent=31 // loop_pre_header
                _
              $region41: #{causal_self_attention.3} parent=31 // loop_header
                %s247 = sphi 0, %s251
                %p248 = scmp.ge.s32.totalorder %s247, 1
                %s252 = sphi %s170, %s170
                %s253 = sphi %s171, %s171
              $region42: #{causal_self_attention.3} parent=31 // loop_header_branch
                %250 = sbr.rel (%p248) target = $region46
              $region43: #{causal_self_attention.3} parent=31 // loop_body
                %v254 = vld [vmem:[%s252] sm:%s245]
                %255 = vst [vmem:[%s253] sm:%s245] %v254
                %v256 = vld [vmem:[%s252 + $0x18] sm:%s245]
                %257 = vst [vmem:[%s253 + $0xc] sm:%s245] %v256
                %v258 = vld [vmem:[%s252 + $0x30] sm:%s245]
                %259 = vst [vmem:[%s253 + $0x18] sm:%s245] %v258
                %v260 = vld [vmem:[%s252 + $0x48] sm:%s245]
                %261 = vst [vmem:[%s253 + $0x24] sm:%s245] %v260
                %v262 = vld [vmem:[%s252 + $0x60] sm:%s245]
                %263 = vst [vmem:[%s253 + $0x30] sm:%s245] %v262
                %v264 = vld [vmem:[%s252 + $0x78] sm:%s245]
                %265 = vst [vmem:[%s253 + $0x3c] sm:%s245] %v264
                %v266 = vld [vmem:[%s252 + $0x90] sm:%s245]
                %267 = vst [vmem:[%s253 + $0x48] sm:%s245] %v266
                %v268 = vld [vmem:[%s252 + $0xa8] sm:%s245]
                %269 = vst [vmem:[%s253 + $0x54] sm:%s245] %v268
                %v270 = vld [vmem:[%s252 + $0xc0] sm:%s245]
                %271 = vst [vmem:[%s253 + $0x60] sm:%s245] %v270
                %v272 = vld [vmem:[%s252 + $0xd8] sm:%s245]
                %273 = vst [vmem:[%s253 + $0x6c] sm:%s245] %v272
                %v274 = vld [vmem:[%s252 + $0xf0] sm:%s245]
                %275 = vst [vmem:[%s253 + $0x78] sm:%s245] %v274
                %v276 = vld [vmem:[%s252 + $0x108] sm:%s245]
                %277 = vst [vmem:[%s253 + $0x84] sm:%s245] %v276
                %v278 = vld [vmem:[%s252 + $0x120] sm:%s245]
                %279 = vst [vmem:[%s253 + $0x90] sm:%s245] %v278
                %v280 = vld [vmem:[%s252 + $0x138] sm:%s245]
                %281 = vst [vmem:[%s253 + $0x9c] sm:%s245] %v280
                %v282 = vld [vmem:[%s252 + $0x150] sm:%s245]
                %283 = vst [vmem:[%s253 + $0xa8] sm:%s245] %v282
                %v284 = vld [vmem:[%s252 + $0x168] sm:%s245]
                %285 = vst [vmem:[%s253 + $0xb4] sm:%s245] %v284
                %v286 = vld [vmem:[%s252 + $0x180] sm:%s245]
                %287 = vst [vmem:[%s253 + $0xc0] sm:%s245] %v286
                %v288 = vld [vmem:[%s252 + $0x198] sm:%s245]
                %289 = vst [vmem:[%s253 + $0xcc] sm:%s245] %v288
                %v290 = vld [vmem:[%s252 + $0x1b0] sm:%s245]
                %291 = vst [vmem:[%s253 + $0xd8] sm:%s245] %v290
                %v292 = vld [vmem:[%s252 + $0x1c8] sm:%s245]
                %293 = vst [vmem:[%s253 + $0xe4] sm:%s245] %v292
                %v294 = vld [vmem:[%s252 + $0x1e0] sm:%s245]
                %295 = vst [vmem:[%s253 + $0xf0] sm:%s245] %v294
                %v296 = vld [vmem:[%s252 + $0x1f8] sm:%s245]
                %297 = vst [vmem:[%s253 + $0xfc] sm:%s245] %v296
                %v298 = vld [vmem:[%s252 + $0x210] sm:%s245]
                %299 = vst [vmem:[%s253 + $0x108] sm:%s245] %v298
                %v300 = vld [vmem:[%s252 + $0x228] sm:%s245]
                %301 = vst [vmem:[%s253 + $0x114] sm:%s245] %v300
                %v302 = vld [vmem:[%s252 + $0x240] sm:%s245]
                %303 = vst [vmem:[%s253 + $0x120] sm:%s245] %v302
                %v304 = vld [vmem:[%s252 + $0x258] sm:%s245]
                %305 = vst [vmem:[%s253 + $0x12c] sm:%s245] %v304
                %v306 = vld [vmem:[%s252 + $0x270] sm:%s245]
                %307 = vst [vmem:[%s253 + $0x138] sm:%s245] %v306
                %v308 = vld [vmem:[%s252 + $0x288] sm:%s245]
                %309 = vst [vmem:[%s253 + $0x144] sm:%s245] %v308
                %v310 = vld [vmem:[%s252 + $0x2a0] sm:%s245]
                %311 = vst [vmem:[%s253 + $0x150] sm:%s245] %v310
                %v312 = vld [vmem:[%s252 + $0x2b8] sm:%s245]
                %313 = vst [vmem:[%s253 + $0x15c] sm:%s245] %v312
                %v314 = vld [vmem:[%s252 + $0x2d0] sm:%s245]
                %315 = vst [vmem:[%s253 + $0x168] sm:%s245] %v314
                %v316 = vld [vmem:[%s252 + $0x2e8] sm:%s245]
                %317 = vst [vmem:[%s253 + $0x174] sm:%s245] %v316
              $region44: #{causal_self_attention.3} parent=31 // loop_footer
                %s251 = sadd.s32 1, %s247
              $region45: #{causal_self_attention.3} parent=31 // loop_footer_branch
                %246 = sbr.rel target = $region41
              $region46: #{causal_self_attention.3} parent=31 // loop_exit
                _
            $region32: #{causal_self_attention.3} parent=27 // pred_fallthru
              _
          $region28: #{causal_self_attention.3} parent=23 // pred_fallthru
            _
          %318 = vnop
        $region24: #{causal_self_attention.3} parent=19 // pred_fallthru
          _
        // Predicated region
        $region47: #{causal_self_attention.3} parent=19 // pred_check
          %p319 = pneg %p93
        $region48: #{causal_self_attention.3} parent=19 // pred_check_branch
          %321 = sbr.rel (%p319) target = $region50
        $region49: #{causal_self_attention.3} parent=19 // pred_region
          %s322 = smul.u32 3, %s17
          %p323 = scmp.lt.s32.totalorder %s322, 5
          %s324 = scalar_select %p323, %s322, 5
          %s325 = scalar_lea.vmem %s2, %s324
          %s326 = smul.u32 3, %s17
        $region50: #{causal_self_attention.3} parent=19 // pred_fallthru
          _
      $region20: #{causal_self_attention.3} parent=5 // pred_fallthru
        _
      %p327 = scmp.le.s32.totalorder 1, %s9
      %p328 = scmp.lt.s32.totalorder %s9, 3
      %p329 = pnand %p327, %p328
      %p330 = pneg %p329
      // Predicated region
      $region51: #{causal_self_attention.3} parent=5 // pred_check
        _
      $region52: #{causal_self_attention.3} parent=5 // pred_check_branch
        %332 = sbr.rel (%p329) target = $region54
      $region53: #{causal_self_attention.3} parent=5 // pred_region
        %s333 = ssub.s32 %s9, 1
        %s334 = sand.u32 %s60, 1
        %s335 = sand.u32 %s60, 1
        %s336 = smul.addr %s335, 384
        %s337 = scalar_lea.vmem [#allocation2], %s336
        // Predicated region
        $region55: #{causal_self_attention.3} parent=53 // pred_check
          %p338 = pneg %p73
        $region56: #{causal_self_attention.3} parent=53 // pred_check_branch
          %340 = sbr.rel (%p338) target = $region58
        $region57: #{causal_self_attention.3} parent=53 // pred_region
          _
        $region58: #{causal_self_attention.3} parent=53 // pred_fallthru
          _
        %s341 = smul.u32 64, %s18
        %p342 = scmp.lt.s32.totalorder %s341, 63
        %s343 = scalar_select %p342, %s341, 63
        %s344 = smul.addr %s343, 2
        %s345 = smul.addr %s344, 4
        %s346 = scalar_lea.vmem %s0, %s345
        %p347 = pneg %p47
        %p348 = pneg %p44
        %s349 = sand.u32 %s60, 1
        %s350 = sand.u32 %s60, 1
        %s351 = smul.addr %s350, 384
        %s352 = scalar_lea.vmem [#allocation2], %s351
        %p353 = pneg %p73
        %p354 = pneg %p70
        %s355 = smul.u32 3, %s19
        %p356 = scmp.lt.s32.totalorder %s355, 5
        %s357 = scalar_select %p356, %s355, 5
        %s358 = scalar_lea.vmem %s2, %s357
        %p359 = pneg %p99
        %p360 = pneg %p96
        %p361 = pneg %p127
        %p362 = pneg %p124
        %s363 = sand.u32 %s114, 1
        %s364 = sand.u32 %s114, 1
        %s365 = smul.addr %s364, 768
        %s366 = scalar_lea.vmem [#allocation3], %s365
        %s367 = smul.u32 64, %s18
        %p368 = scmp.lt.s32.totalorder %s367, 63
        %s369 = scalar_select %p368, %s367, 63
        %s370 = smul.addr %s369, 2
        %s371 = smul.addr %s370, 4
        %s372 = scalar_lea.vmem %s0, %s371
        %s373 = smul.u32 64, %s18
        %s374 = smul.u32 3, %s19
        %s375 = smul.u32 3, %s19
        %p376 = scmp.lt.s32.totalorder %s375, 5
        %s377 = scalar_select %p376, %s375, 5
        %s378 = scalar_lea.vmem %s2, %s377
        %s379 = smul.u32 3, %s19
        %s380 = smul.u32 64, %s18
        %s381 = smul.u32 3, %s19
        %v382 = vld [vmem:[%s372] sm:$0xff]
        %v383 = vld [vmem:[%s372 + $0x8] sm:$0xff]
        %v384 = vld [vmem:[%s372 + $0x10] sm:$0xff]
        %v385 = vld [vmem:[%s372 + $0x18] sm:$0xff]
        %v386 = vld [vmem:[%s372 + $0x20] sm:$0xff]
        %v387 = vld [vmem:[%s372 + $0x28] sm:$0xff]
        %v388 = vld [vmem:[%s372 + $0x30] sm:$0xff]
        %v389 = vld [vmem:[%s372 + $0x38] sm:$0xff]
        %v390 = vld [vmem:[%s372 + $0x40] sm:$0xff]
        %v391 = vld [vmem:[%s372 + $0x48] sm:$0xff]
        %v392 = vld [vmem:[%s372 + $0x50] sm:$0xff]
        %v393 = vld [vmem:[%s372 + $0x58] sm:$0xff]
        %v394 = vld [vmem:[%s372 + $0x60] sm:$0xff]
        %v395 = vld [vmem:[%s372 + $0x68] sm:$0xff]
        %v396 = vld [vmem:[%s372 + $0x70] sm:$0xff]
        %v397 = vld [vmem:[%s372 + $0x78] sm:$0xff]
        %v398 = vld [vmem:[%s372 + $0x80] sm:$0xff]
        %v399 = vld [vmem:[%s372 + $0x88] sm:$0xff]
        %v400 = vld [vmem:[%s372 + $0x90] sm:$0xff]
        %v401 = vld [vmem:[%s372 + $0x98] sm:$0xff]
        %v402 = vld [vmem:[%s372 + $0xa0] sm:$0xff]
        %v403 = vld [vmem:[%s372 + $0xa8] sm:$0xff]
        %v404 = vld [vmem:[%s372 + $0xb0] sm:$0xff]
        %v405 = vld [vmem:[%s372 + $0xb8] sm:$0xff]
        %v406 = vld [vmem:[%s372 + $0xc0] sm:$0xff]
        %v407 = vld [vmem:[%s372 + $0xc8] sm:$0xff]
        %v408 = vld [vmem:[%s372 + $0xd0] sm:$0xff]
        %v409 = vld [vmem:[%s372 + $0xd8] sm:$0xff]
        %v410 = vld [vmem:[%s372 + $0xe0] sm:$0xff]
        %v411 = vld [vmem:[%s372 + $0xe8] sm:$0xff]
        %v412 = vld [vmem:[%s372 + $0xf0] sm:$0xff]
        %v413 = vld [vmem:[%s372 + $0xf8] sm:$0xff]
        %v414 = vld [vmem:[%s372 + $0x100] sm:$0xff]
        %v415 = vld [vmem:[%s372 + $0x108] sm:$0xff]
        %v416 = vld [vmem:[%s372 + $0x110] sm:$0xff]
        %v417 = vld [vmem:[%s372 + $0x118] sm:$0xff]
        %v418 = vld [vmem:[%s372 + $0x120] sm:$0xff]
        %v419 = vld [vmem:[%s372 + $0x128] sm:$0xff]
        %v420 = vld [vmem:[%s372 + $0x130] sm:$0xff]
        %v421 = vld [vmem:[%s372 + $0x138] sm:$0xff]
        %v422 = vld [vmem:[%s372 + $0x140] sm:$0xff]
        %v423 = vld [vmem:[%s372 + $0x148] sm:$0xff]
        %v424 = vld [vmem:[%s372 + $0x150] sm:$0xff]
        %v425 = vld [vmem:[%s372 + $0x158] sm:$0xff]
        %v426 = vld [vmem:[%s372 + $0x160] sm:$0xff]
        %v427 = vld [vmem:[%s372 + $0x168] sm:$0xff]
        %v428 = vld [vmem:[%s372 + $0x170] sm:$0xff]
        %v429 = vld [vmem:[%s372 + $0x178] sm:$0xff]
        %v430 = vld [vmem:[%s372 + $0x180] sm:$0xff]
        %v431 = vld [vmem:[%s372 + $0x188] sm:$0xff]
        %v432 = vld [vmem:[%s372 + $0x190] sm:$0xff]
        %v433 = vld [vmem:[%s372 + $0x198] sm:$0xff]
        %v434 = vld [vmem:[%s372 + $0x1a0] sm:$0xff]
        %v435 = vld [vmem:[%s372 + $0x1a8] sm:$0xff]
        %v436 = vld [vmem:[%s372 + $0x1b0] sm:$0xff]
        %v437 = vld [vmem:[%s372 + $0x1b8] sm:$0xff]
        %v438 = vld [vmem:[%s372 + $0x1c0] sm:$0xff]
        %v439 = vld [vmem:[%s372 + $0x1c8] sm:$0xff]
        %v440 = vld [vmem:[%s372 + $0x1d0] sm:$0xff]
        %v441 = vld [vmem:[%s372 + $0x1d8] sm:$0xff]
        %v442 = vld [vmem:[%s372 + $0x1e0] sm:$0xff]
        %v443 = vld [vmem:[%s372 + $0x1e8] sm:$0xff]
        %v444 = vld [vmem:[%s372 + $0x1f0] sm:$0xff]
        %v445 = vld [vmem:[%s372 + $0x1f8] sm:$0xff]
        %v446 = vld [vmem:[%s337] sm:$0xff]
        %v447 = vld [vmem:[%s337 + $0x8] sm:$0xf]
        %v448 = vld [vmem:[%s337 + $0xc] sm:$0xff]
        %v449 = vld [vmem:[%s337 + $0x14] sm:$0xf]
        %v450 = vld [vmem:[%s337 + $0x18] sm:$0xff]
        %v451 = vld [vmem:[%s337 + $0x20] sm:$0xf]
        %v452 = vld [vmem:[%s337 + $0x24] sm:$0xff]
        %v453 = vld [vmem:[%s337 + $0x2c] sm:$0xf]
        %v454 = vld [vmem:[%s337 + $0x30] sm:$0xff]
        %v455 = vld [vmem:[%s337 + $0x38] sm:$0xf]
        %v456 = vld [vmem:[%s337 + $0x3c] sm:$0xff]
        %v457 = vld [vmem:[%s337 + $0x44] sm:$0xf]
        %v458 = vld [vmem:[%s337 + $0x48] sm:$0xff]
        %v459 = vld [vmem:[%s337 + $0x50] sm:$0xf]
        %v460 = vld [vmem:[%s337 + $0x54] sm:$0xff]
        %v461 = vld [vmem:[%s337 + $0x5c] sm:$0xf]
        %v462 = vld [vmem:[%s337 + $0x60] sm:$0xff]
        %v463 = vld [vmem:[%s337 + $0x68] sm:$0xf]
        %v464 = vld [vmem:[%s337 + $0x6c] sm:$0xff]
        %v465 = vld [vmem:[%s337 + $0x74] sm:$0xf]
        %v466 = vld [vmem:[%s337 + $0x78] sm:$0xff]
        %v467 = vld [vmem:[%s337 + $0x80] sm:$0xf]
        %v468 = vld [vmem:[%s337 + $0x84] sm:$0xff]
        %v469 = vld [vmem:[%s337 + $0x8c] sm:$0xf]
        %v470 = vld [vmem:[%s337 + $0x90] sm:$0xff]
        %v471 = vld [vmem:[%s337 + $0x98] sm:$0xf]
        %v472 = vld [vmem:[%s337 + $0x9c] sm:$0xff]
        %v473 = vld [vmem:[%s337 + $0xa4] sm:$0xf]
        %v474 = vld [vmem:[%s337 + $0xa8] sm:$0xff]
        %v475 = vld [vmem:[%s337 + $0xb0] sm:$0xf]
        %v476 = vld [vmem:[%s337 + $0xb4] sm:$0xff]
        %v477 = vld [vmem:[%s337 + $0xbc] sm:$0xf]
        %v478 = vld [vmem:[%s337 + $0xc0] sm:$0xff]
        %v479 = vld [vmem:[%s337 + $0xc8] sm:$0xf]
        %v480 = vld [vmem:[%s337 + $0xcc] sm:$0xff]
        %v481 = vld [vmem:[%s337 + $0xd4] sm:$0xf]
        %v482 = vld [vmem:[%s337 + $0xd8] sm:$0xff]
        %v483 = vld [vmem:[%s337 + $0xe0] sm:$0xf]
        %v484 = vld [vmem:[%s337 + $0xe4] sm:$0xff]
        %v485 = vld [vmem:[%s337 + $0xec] sm:$0xf]
        %v486 = vld [vmem:[%s337 + $0xf0] sm:$0xff]
        %v487 = vld [vmem:[%s337 + $0xf8] sm:$0xf]
        %v488 = vld [vmem:[%s337 + $0xfc] sm:$0xff]
        %v489 = vld [vmem:[%s337 + $0x104] sm:$0xf]
        %v490 = vld [vmem:[%s337 + $0x108] sm:$0xff]
        %v491 = vld [vmem:[%s337 + $0x110] sm:$0xf]
        %v492 = vld [vmem:[%s337 + $0x114] sm:$0xff]
        %v493 = vld [vmem:[%s337 + $0x11c] sm:$0xf]
        %v494 = vld [vmem:[%s337 + $0x120] sm:$0xff]
        %v495 = vld [vmem:[%s337 + $0x128] sm:$0xf]
        %v496 = vld [vmem:[%s337 + $0x12c] sm:$0xff]
        %v497 = vld [vmem:[%s337 + $0x134] sm:$0xf]
        %v498 = vld [vmem:[%s337 + $0x138] sm:$0xff]
        %v499 = vld [vmem:[%s337 + $0x140] sm:$0xf]
        %v500 = vld [vmem:[%s337 + $0x144] sm:$0xff]
        %v501 = vld [vmem:[%s337 + $0x14c] sm:$0xf]
        %v502 = vld [vmem:[%s337 + $0x150] sm:$0xff]
        %v503 = vld [vmem:[%s337 + $0x158] sm:$0xf]
        %v504 = vld [vmem:[%s337 + $0x15c] sm:$0xff]
        %v505 = vld [vmem:[%s337 + $0x164] sm:$0xf]
        %v506 = vld [vmem:[%s337 + $0x168] sm:$0xff]
        %v507 = vld [vmem:[%s337 + $0x170] sm:$0xf]
        %v508 = vld [vmem:[%s337 + $0x174] sm:$0xff]
        %v509 = vld [vmem:[%s337 + $0x17c] sm:$0xf]
        %v510 = vld [vmem:[%s378] sm:$0x7]
        %v512 = vperm.slane %v510, 0
        %v513 = vperm.slane %v510, 1
        %v514 = vperm.slane %v510, 2
        %v582 = vunpack.c.l.b16 %v382
        %v583 = vunpack.c.h.b16 %v382
        %v584 = vunpack.c.l.b16 %v383
        %v585 = vunpack.c.h.b16 %v383
        %v586 = vunpack.c.l.b16 %v384
        %v587 = vunpack.c.h.b16 %v384
        %v588 = vunpack.c.l.b16 %v385
        %v589 = vunpack.c.h.b16 %v385
        %v590 = vunpack.c.l.b16 %v386
        %v591 = vunpack.c.h.b16 %v386
        %v592 = vunpack.c.l.b16 %v387
        %v593 = vunpack.c.h.b16 %v387
        %v594 = vunpack.c.l.b16 %v388
        %v595 = vunpack.c.h.b16 %v388
        %v596 = vunpack.c.l.b16 %v389
        %v597 = vunpack.c.h.b16 %v389
        %v598 = vunpack.c.l.b16 %v390
        %v599 = vunpack.c.h.b16 %v390
        %v600 = vunpack.c.l.b16 %v391
        %v601 = vunpack.c.h.b16 %v391
        %v602 = vunpack.c.l.b16 %v392
        %v603 = vunpack.c.h.b16 %v392
        %v604 = vunpack.c.l.b16 %v393
        %v605 = vunpack.c.h.b16 %v393
        %v606 = vunpack.c.l.b16 %v394
        %v607 = vunpack.c.h.b16 %v394
        %v608 = vunpack.c.l.b16 %v395
        %v609 = vunpack.c.h.b16 %v395
        %v610 = vunpack.c.l.b16 %v396
        %v611 = vunpack.c.h.b16 %v396
        %v612 = vunpack.c.l.b16 %v397
        %v613 = vunpack.c.h.b16 %v397
        %v614 = vunpack.c.l.b16 %v398
        %v615 = vunpack.c.h.b16 %v398
        %v616 = vunpack.c.l.b16 %v399
        %v617 = vunpack.c.h.b16 %v399
        %v618 = vunpack.c.l.b16 %v400
        %v619 = vunpack.c.h.b16 %v400
        %v620 = vunpack.c.l.b16 %v401
        %v621 = vunpack.c.h.b16 %v401
        %v622 = vunpack.c.l.b16 %v402
        %v623 = vunpack.c.h.b16 %v402
        %v624 = vunpack.c.l.b16 %v403
        %v625 = vunpack.c.h.b16 %v403
        %v626 = vunpack.c.l.b16 %v404
        %v627 = vunpack.c.h.b16 %v404
        %v628 = vunpack.c.l.b16 %v405
        %v629 = vunpack.c.h.b16 %v405
        %v630 = vunpack.c.l.b16 %v406
        %v631 = vunpack.c.h.b16 %v406
        %v632 = vunpack.c.l.b16 %v407
        %v633 = vunpack.c.h.b16 %v407
        %v634 = vunpack.c.l.b16 %v408
        %v635 = vunpack.c.h.b16 %v408
        %v636 = vunpack.c.l.b16 %v409
        %v637 = vunpack.c.h.b16 %v409
        %v638 = vunpack.c.l.b16 %v410
        %v639 = vunpack.c.h.b16 %v410
        %v640 = vunpack.c.l.b16 %v411
        %v641 = vunpack.c.h.b16 %v411
        %v642 = vunpack.c.l.b16 %v412
        %v643 = vunpack.c.h.b16 %v412
        %v644 = vunpack.c.l.b16 %v413
        %v645 = vunpack.c.h.b16 %v413
        %v646 = vunpack.c.l.b16 %v414
        %v647 = vunpack.c.h.b16 %v414
        %v648 = vunpack.c.l.b16 %v415
        %v649 = vunpack.c.h.b16 %v415
        %v650 = vunpack.c.l.b16 %v416
        %v651 = vunpack.c.h.b16 %v416
        %v652 = vunpack.c.l.b16 %v417
        %v653 = vunpack.c.h.b16 %v417
        %v654 = vunpack.c.l.b16 %v418
        %v655 = vunpack.c.h.b16 %v418
        %v656 = vunpack.c.l.b16 %v419
        %v657 = vunpack.c.h.b16 %v419
        %v658 = vunpack.c.l.b16 %v420
        %v659 = vunpack.c.h.b16 %v420
        %v660 = vunpack.c.l.b16 %v421
        %v661 = vunpack.c.h.b16 %v421
        %v662 = vunpack.c.l.b16 %v422
        %v663 = vunpack.c.h.b16 %v422
        %v664 = vunpack.c.l.b16 %v423
        %v665 = vunpack.c.h.b16 %v423
        %v666 = vunpack.c.l.b16 %v424
        %v667 = vunpack.c.h.b16 %v424
        %v668 = vunpack.c.l.b16 %v425
        %v669 = vunpack.c.h.b16 %v425
        %v670 = vunpack.c.l.b16 %v426
        %v671 = vunpack.c.h.b16 %v426
        %v672 = vunpack.c.l.b16 %v427
        %v673 = vunpack.c.h.b16 %v427
        %v674 = vunpack.c.l.b16 %v428
        %v675 = vunpack.c.h.b16 %v428
        %v676 = vunpack.c.l.b16 %v429
        %v677 = vunpack.c.h.b16 %v429
        %v678 = vunpack.c.l.b16 %v430
        %v679 = vunpack.c.h.b16 %v430
        %v680 = vunpack.c.l.b16 %v431
        %v681 = vunpack.c.h.b16 %v431
        %v682 = vunpack.c.l.b16 %v432
        %v683 = vunpack.c.h.b16 %v432
        %v684 = vunpack.c.l.b16 %v433
        %v685 = vunpack.c.h.b16 %v433
        %v686 = vunpack.c.l.b16 %v434
        %v687 = vunpack.c.h.b16 %v434
        %v688 = vunpack.c.l.b16 %v435
        %v689 = vunpack.c.h.b16 %v435
        %v690 = vunpack.c.l.b16 %v436
        %v691 = vunpack.c.h.b16 %v436
        %v692 = vunpack.c.l.b16 %v437
        %v693 = vunpack.c.h.b16 %v437
        %v694 = vunpack.c.l.b16 %v438
        %v695 = vunpack.c.h.b16 %v438
        %v696 = vunpack.c.l.b16 %v439
        %v697 = vunpack.c.h.b16 %v439
        %v698 = vunpack.c.l.b16 %v440
        %v699 = vunpack.c.h.b16 %v440
        %v700 = vunpack.c.l.b16 %v441
        %v701 = vunpack.c.h.b16 %v441
        %v702 = vunpack.c.l.b16 %v442
        %v703 = vunpack.c.h.b16 %v442
        %v704 = vunpack.c.l.b16 %v443
        %v705 = vunpack.c.h.b16 %v443
        %v706 = vunpack.c.l.b16 %v444
        %v707 = vunpack.c.h.b16 %v444
        %v708 = vunpack.c.l.b16 %v445
        %v709 = vunpack.c.h.b16 %v445
        %v710 = vpack.c.b16 %v584, %v582
        %v711 = vpack.c.b16 %v585, %v583
        %v712 = vpack.c.b16 %v588, %v586
        %v713 = vpack.c.b16 %v589, %v587
        %v714 = vpack.c.b16 %v592, %v590
        %v715 = vpack.c.b16 %v593, %v591
        %v716 = vpack.c.b16 %v596, %v594
        %v717 = vpack.c.b16 %v597, %v595
        %v718 = vpack.c.b16 %v600, %v598
        %v719 = vpack.c.b16 %v601, %v599
        %v720 = vpack.c.b16 %v604, %v602
        %v721 = vpack.c.b16 %v605, %v603
        %v722 = vpack.c.b16 %v608, %v606
        %v723 = vpack.c.b16 %v609, %v607
        %v724 = vpack.c.b16 %v612, %v610
        %v725 = vpack.c.b16 %v613, %v611
        %v726 = vpack.c.b16 %v616, %v614
        %v727 = vpack.c.b16 %v617, %v615
        %v728 = vpack.c.b16 %v620, %v618
        %v729 = vpack.c.b16 %v621, %v619
        %v730 = vpack.c.b16 %v624, %v622
        %v731 = vpack.c.b16 %v625, %v623
        %v732 = vpack.c.b16 %v628, %v626
        %v733 = vpack.c.b16 %v629, %v627
        %v734 = vpack.c.b16 %v632, %v630
        %v735 = vpack.c.b16 %v633, %v631
        %v736 = vpack.c.b16 %v636, %v634
        %v737 = vpack.c.b16 %v637, %v635
        %v738 = vpack.c.b16 %v640, %v638
        %v739 = vpack.c.b16 %v641, %v639
        %v740 = vpack.c.b16 %v644, %v642
        %v741 = vpack.c.b16 %v645, %v643
        %v742 = vpack.c.b16 %v648, %v646
        %v743 = vpack.c.b16 %v649, %v647
        %v744 = vpack.c.b16 %v652, %v650
        %v745 = vpack.c.b16 %v653, %v651
        %v746 = vpack.c.b16 %v656, %v654
        %v747 = vpack.c.b16 %v657, %v655
        %v748 = vpack.c.b16 %v660, %v658
        %v749 = vpack.c.b16 %v661, %v659
        %v750 = vpack.c.b16 %v664, %v662
        %v751 = vpack.c.b16 %v665, %v663
        %v752 = vpack.c.b16 %v668, %v666
        %v753 = vpack.c.b16 %v669, %v667
        %v754 = vpack.c.b16 %v672, %v670
        %v755 = vpack.c.b16 %v673, %v671
        %v756 = vpack.c.b16 %v676, %v674
        %v757 = vpack.c.b16 %v677, %v675
        %v758 = vpack.c.b16 %v680, %v678
        %v759 = vpack.c.b16 %v681, %v679
        %v760 = vpack.c.b16 %v684, %v682
        %v761 = vpack.c.b16 %v685, %v683
        %v762 = vpack.c.b16 %v688, %v686
        %v763 = vpack.c.b16 %v689, %v687
        %v764 = vpack.c.b16 %v692, %v690
        %v765 = vpack.c.b16 %v693, %v691
        %v766 = vpack.c.b16 %v696, %v694
        %v767 = vpack.c.b16 %v697, %v695
        %v768 = vpack.c.b16 %v700, %v698
        %v769 = vpack.c.b16 %v701, %v699
        %v770 = vpack.c.b16 %v704, %v702
        %v771 = vpack.c.b16 %v705, %v703
        %v772 = vpack.c.b16 %v708, %v706
        %v773 = vpack.c.b16 %v709, %v707
        %v902 = vunpack.c.l.b16 %v446
        %v903 = vunpack.c.h.b16 %v446
        %v904 = vunpack.c.l.b16 %v447
        %v905 = vunpack.c.l.b16 %v448
        %v906 = vunpack.c.h.b16 %v448
        %v907 = vunpack.c.l.b16 %v449
        %v908 = vunpack.c.l.b16 %v450
        %v909 = vunpack.c.h.b16 %v450
        %v910 = vunpack.c.l.b16 %v451
        %v911 = vunpack.c.l.b16 %v452
        %v912 = vunpack.c.h.b16 %v452
        %v913 = vunpack.c.l.b16 %v453
        %v914 = vunpack.c.l.b16 %v454
        %v915 = vunpack.c.h.b16 %v454
        %v916 = vunpack.c.l.b16 %v455
        %v917 = vunpack.c.l.b16 %v456
        %v918 = vunpack.c.h.b16 %v456
        %v919 = vunpack.c.l.b16 %v457
        %v920 = vunpack.c.l.b16 %v458
        %v921 = vunpack.c.h.b16 %v458
        %v922 = vunpack.c.l.b16 %v459
        %v923 = vunpack.c.l.b16 %v460
        %v924 = vunpack.c.h.b16 %v460
        %v925 = vunpack.c.l.b16 %v461
        %v926 = vunpack.c.l.b16 %v462
        %v927 = vunpack.c.h.b16 %v462
        %v928 = vunpack.c.l.b16 %v463
        %v929 = vunpack.c.l.b16 %v464
        %v930 = vunpack.c.h.b16 %v464
        %v931 = vunpack.c.l.b16 %v465
        %v932 = vunpack.c.l.b16 %v466
        %v933 = vunpack.c.h.b16 %v466
        %v934 = vunpack.c.l.b16 %v467
        %v935 = vunpack.c.l.b16 %v468
        %v936 = vunpack.c.h.b16 %v468
        %v937 = vunpack.c.l.b16 %v469
        %v938 = vunpack.c.l.b16 %v470
        %v939 = vunpack.c.h.b16 %v470
        %v940 = vunpack.c.l.b16 %v471
        %v941 = vunpack.c.l.b16 %v472
        %v942 = vunpack.c.h.b16 %v472
        %v943 = vunpack.c.l.b16 %v473
        %v944 = vunpack.c.l.b16 %v474
        %v945 = vunpack.c.h.b16 %v474
        %v946 = vunpack.c.l.b16 %v475
        %v947 = vunpack.c.l.b16 %v476
        %v948 = vunpack.c.h.b16 %v476
        %v949 = vunpack.c.l.b16 %v477
        %v950 = vunpack.c.l.b16 %v478
        %v951 = vunpack.c.h.b16 %v478
        %v952 = vunpack.c.l.b16 %v479
        %v953 = vunpack.c.l.b16 %v480
        %v954 = vunpack.c.h.b16 %v480
        %v955 = vunpack.c.l.b16 %v481
        %v956 = vunpack.c.l.b16 %v482
        %v957 = vunpack.c.h.b16 %v482
        %v958 = vunpack.c.l.b16 %v483
        %v959 = vunpack.c.l.b16 %v484
        %v960 = vunpack.c.h.b16 %v484
        %v961 = vunpack.c.l.b16 %v485
        %v962 = vunpack.c.l.b16 %v486
        %v963 = vunpack.c.h.b16 %v486
        %v964 = vunpack.c.l.b16 %v487
        %v965 = vunpack.c.l.b16 %v488
        %v966 = vunpack.c.h.b16 %v488
        %v967 = vunpack.c.l.b16 %v489
        %v968 = vunpack.c.l.b16 %v490
        %v969 = vunpack.c.h.b16 %v490
        %v970 = vunpack.c.l.b16 %v491
        %v971 = vunpack.c.l.b16 %v492
        %v972 = vunpack.c.h.b16 %v492
        %v973 = vunpack.c.l.b16 %v493
        %v974 = vunpack.c.l.b16 %v494
        %v975 = vunpack.c.h.b16 %v494
        %v976 = vunpack.c.l.b16 %v495
        %v977 = vunpack.c.l.b16 %v496
        %v978 = vunpack.c.h.b16 %v496
        %v979 = vunpack.c.l.b16 %v497
        %v980 = vunpack.c.l.b16 %v498
        %v981 = vunpack.c.h.b16 %v498
        %v982 = vunpack.c.l.b16 %v499
        %v983 = vunpack.c.l.b16 %v500
        %v984 = vunpack.c.h.b16 %v500
        %v985 = vunpack.c.l.b16 %v501
        %v986 = vunpack.c.l.b16 %v502
        %v987 = vunpack.c.h.b16 %v502
        %v988 = vunpack.c.l.b16 %v503
        %v989 = vunpack.c.l.b16 %v504
        %v990 = vunpack.c.h.b16 %v504
        %v991 = vunpack.c.l.b16 %v505
        %v992 = vunpack.c.l.b16 %v506
        %v993 = vunpack.c.h.b16 %v506
        %v994 = vunpack.c.l.b16 %v507
        %v995 = vunpack.c.l.b16 %v508
        %v996 = vunpack.c.h.b16 %v508
        %v997 = vunpack.c.l.b16 %v509
        %v998 = vpack.c.b16 %v905, %v902
        %v999 = vpack.c.b16 %v906, %v903
        %v1000 = vpack.c.b16 %v907, %v904
        %v1001 = vpack.c.b16 %v911, %v908
        %v1002 = vpack.c.b16 %v912, %v909
        %v1003 = vpack.c.b16 %v913, %v910
        %v1004 = vpack.c.b16 %v917, %v914
        %v1005 = vpack.c.b16 %v918, %v915
        %v1006 = vpack.c.b16 %v919, %v916
        %v1007 = vpack.c.b16 %v923, %v920
        %v1008 = vpack.c.b16 %v924, %v921
        %v1009 = vpack.c.b16 %v925, %v922
        %v1010 = vpack.c.b16 %v929, %v926
        %v1011 = vpack.c.b16 %v930, %v927
        %v1012 = vpack.c.b16 %v931, %v928
        %v1013 = vpack.c.b16 %v935, %v932
        %v1014 = vpack.c.b16 %v936, %v933
        %v1015 = vpack.c.b16 %v937, %v934
        %v1016 = vpack.c.b16 %v941, %v938
        %v1017 = vpack.c.b16 %v942, %v939
        %v1018 = vpack.c.b16 %v943, %v940
        %v1019 = vpack.c.b16 %v947, %v944
        %v1020 = vpack.c.b16 %v948, %v945
        %v1021 = vpack.c.b16 %v949, %v946
        %v1022 = vpack.c.b16 %v953, %v950
        %v1023 = vpack.c.b16 %v954, %v951
        %v1024 = vpack.c.b16 %v955, %v952
        %v1025 = vpack.c.b16 %v959, %v956
        %v1026 = vpack.c.b16 %v960, %v957
        %v1027 = vpack.c.b16 %v961, %v958
        %v1028 = vpack.c.b16 %v965, %v962
        %v1029 = vpack.c.b16 %v966, %v963
        %v1030 = vpack.c.b16 %v967, %v964
        %v1031 = vpack.c.b16 %v971, %v968
        %v1032 = vpack.c.b16 %v972, %v969
        %v1033 = vpack.c.b16 %v973, %v970
        %v1034 = vpack.c.b16 %v977, %v974
        %v1035 = vpack.c.b16 %v978, %v975
        %v1036 = vpack.c.b16 %v979, %v976
        %v1037 = vpack.c.b16 %v983, %v980
        %v1038 = vpack.c.b16 %v984, %v981
        %v1039 = vpack.c.b16 %v985, %v982
        %v1040 = vpack.c.b16 %v989, %v986
        %v1041 = vpack.c.b16 %v990, %v987
        %v1042 = vpack.c.b16 %v991, %v988
        %v1043 = vpack.c.b16 %v995, %v992
        %v1044 = vpack.c.b16 %v996, %v993
        %v1045 = vpack.c.b16 %v997, %v994
        %1094 = vmatpush.bf16.msra.mxu0 %v1019
        %1095 = vmatpush.bf16.msra.mxu0 %v1016
        %1096 = vmatpush.bf16.msra.mxu0 %v1013
        %1097 = vmatpush.bf16.msra.mxu0 %v1010
        %1098 = vmatpush.bf16.msra.mxu0 %v1007
        %1099 = vmatpush.bf16.msra.mxu0 %v1004
        %1100 = vmatpush.bf16.msra.mxu0 %v1001
        %1101 = vmatpush.bf16.msra.mxu0 %v998
        %1102 = vmatmul.bf16.gmra.mxu0 %v710
        %v1103 = vpop.f32.mrf.mxu0
        %v1104 = vadd.f32 %v512, %v1103
        %v1105 = vpop.f32.mrf.mxu0
        %v1106 = vadd.f32 %v512, %v1105
        %1107 = vmatmul.bf16.gmra.mxu0 %v712
        %v1108 = vpop.f32.mrf.mxu0
        %v1109 = vadd.f32 %v512, %v1108
        %v1110 = vpop.f32.mrf.mxu0
        %v1111 = vadd.f32 %v512, %v1110
        %1112 = vmatmul.bf16.gmra.mxu0 %v714
        %v1113 = vpop.f32.mrf.mxu0
        %v1114 = vadd.f32 %v512, %v1113
        %v1115 = vpop.f32.mrf.mxu0
        %v1116 = vadd.f32 %v512, %v1115
        %1117 = vmatmul.bf16.gmra.mxu0 %v716
        %v1118 = vpop.f32.mrf.mxu0
        %v1119 = vadd.f32 %v512, %v1118
        %v1120 = vpop.f32.mrf.mxu0
        %v1121 = vadd.f32 %v512, %v1120
        %1122 = vmatmul.bf16.gmra.mxu0 %v718
        %v1123 = vpop.f32.mrf.mxu0
        %v1124 = vadd.f32 %v512, %v1123
        %v1125 = vpop.f32.mrf.mxu0
        %v1126 = vadd.f32 %v512, %v1125
        %1127 = vmatmul.bf16.gmra.mxu0 %v720
        %v1128 = vpop.f32.mrf.mxu0
        %v1129 = vadd.f32 %v512, %v1128
        %v1130 = vpop.f32.mrf.mxu0
        %v1131 = vadd.f32 %v512, %v1130
        %1132 = vmatmul.bf16.gmra.mxu0 %v722
        %v1133 = vpop.f32.mrf.mxu0
        %v1134 = vadd.f32 %v512, %v1133
        %v1135 = vpop.f32.mrf.mxu0
        %v1136 = vadd.f32 %v512, %v1135
        %1137 = vmatmul.bf16.gmra.mxu0 %v724
        %v1138 = vpop.f32.mrf.mxu0
        %v1139 = vadd.f32 %v512, %v1138
        %v1140 = vpop.f32.mrf.mxu0
        %v1141 = vadd.f32 %v512, %v1140
        %1142 = vmatmul.bf16.gmra.mxu0 %v726
        %v1143 = vpop.f32.mrf.mxu0
        %v1144 = vadd.f32 %v512, %v1143
        %v1145 = vpop.f32.mrf.mxu0
        %v1146 = vadd.f32 %v512, %v1145
        %1147 = vmatmul.bf16.gmra.mxu0 %v728
        %v1148 = vpop.f32.mrf.mxu0
        %v1149 = vadd.f32 %v512, %v1148
        %v1150 = vpop.f32.mrf.mxu0
        %v1151 = vadd.f32 %v512, %v1150
        %1152 = vmatmul.bf16.gmra.mxu0 %v730
        %v1153 = vpop.f32.mrf.mxu0
        %v1154 = vadd.f32 %v512, %v1153
        %v1155 = vpop.f32.mrf.mxu0
        %v1156 = vadd.f32 %v512, %v1155
        %1157 = vmatmul.bf16.gmra.mxu0 %v732
        %v1158 = vpop.f32.mrf.mxu0
        %v1159 = vadd.f32 %v512, %v1158
        %v1160 = vpop.f32.mrf.mxu0
        %v1161 = vadd.f32 %v512, %v1160
        %1162 = vmatmul.bf16.gmra.mxu0 %v734
        %v1163 = vpop.f32.mrf.mxu0
        %v1164 = vadd.f32 %v512, %v1163
        %v1165 = vpop.f32.mrf.mxu0
        %v1166 = vadd.f32 %v512, %v1165
        %1167 = vmatmul.bf16.gmra.mxu0 %v736
        %v1168 = vpop.f32.mrf.mxu0
        %v1169 = vadd.f32 %v512, %v1168
        %v1170 = vpop.f32.mrf.mxu0
        %v1171 = vadd.f32 %v512, %v1170
        %1172 = vmatmul.bf16.gmra.mxu0 %v738
        %v1173 = vpop.f32.mrf.mxu0
        %v1174 = vadd.f32 %v512, %v1173
        %v1175 = vpop.f32.mrf.mxu0
        %v1176 = vadd.f32 %v512, %v1175
        %1177 = vmatmul.bf16.gmra.mxu0 %v740
        %v1178 = vpop.f32.mrf.mxu0
        %v1179 = vadd.f32 %v512, %v1178
        %v1180 = vpop.f32.mrf.mxu0
        %v1181 = vadd.f32 %v512, %v1180
        %1182 = vmatmul.bf16.gmra.mxu0 %v742
        %v1183 = vpop.f32.mrf.mxu0
        %v1184 = vadd.f32 %v512, %v1183
        %v1185 = vpop.f32.mrf.mxu0
        %v1186 = vadd.f32 %v512, %v1185
        %1187 = vmatmul.bf16.gmra.mxu0 %v744
        %v1188 = vpop.f32.mrf.mxu0
        %v1189 = vadd.f32 %v512, %v1188
        %v1190 = vpop.f32.mrf.mxu0
        %v1191 = vadd.f32 %v512, %v1190
        %1192 = vmatmul.bf16.gmra.mxu0 %v746
        %v1193 = vpop.f32.mrf.mxu0
        %v1194 = vadd.f32 %v512, %v1193
        %v1195 = vpop.f32.mrf.mxu0
        %v1196 = vadd.f32 %v512, %v1195
        %1197 = vmatmul.bf16.gmra.mxu0 %v748
        %v1198 = vpop.f32.mrf.mxu0
        %v1199 = vadd.f32 %v512, %v1198
        %v1200 = vpop.f32.mrf.mxu0
        %v1201 = vadd.f32 %v512, %v1200
        %1202 = vmatmul.bf16.gmra.mxu0 %v750
        %v1203 = vpop.f32.mrf.mxu0
        %v1204 = vadd.f32 %v512, %v1203
        %v1205 = vpop.f32.mrf.mxu0
        %v1206 = vadd.f32 %v512, %v1205
        %1207 = vmatmul.bf16.gmra.mxu0 %v752
        %v1208 = vpop.f32.mrf.mxu0
        %v1209 = vadd.f32 %v512, %v1208
        %v1210 = vpop.f32.mrf.mxu0
        %v1211 = vadd.f32 %v512, %v1210
        %1212 = vmatmul.bf16.gmra.mxu0 %v754
        %v1213 = vpop.f32.mrf.mxu0
        %v1214 = vadd.f32 %v512, %v1213
        %v1215 = vpop.f32.mrf.mxu0
        %v1216 = vadd.f32 %v512, %v1215
        %1217 = vmatmul.bf16.gmra.mxu0 %v756
        %v1218 = vpop.f32.mrf.mxu0
        %v1219 = vadd.f32 %v512, %v1218
        %v1220 = vpop.f32.mrf.mxu0
        %v1221 = vadd.f32 %v512, %v1220
        %1222 = vmatmul.bf16.gmra.mxu0 %v758
        %v1223 = vpop.f32.mrf.mxu0
        %v1224 = vadd.f32 %v512, %v1223
        %v1225 = vpop.f32.mrf.mxu0
        %v1226 = vadd.f32 %v512, %v1225
        %1227 = vmatmul.bf16.gmra.mxu0 %v760
        %v1228 = vpop.f32.mrf.mxu0
        %v1229 = vadd.f32 %v512, %v1228
        %v1230 = vpop.f32.mrf.mxu0
        %v1231 = vadd.f32 %v512, %v1230
        %1232 = vmatmul.bf16.gmra.mxu0 %v762
        %v1233 = vpop.f32.mrf.mxu0
        %v1234 = vadd.f32 %v512, %v1233
        %v1235 = vpop.f32.mrf.mxu0
        %v1236 = vadd.f32 %v512, %v1235
        %1237 = vmatmul.bf16.gmra.mxu0 %v764
        %v1238 = vpop.f32.mrf.mxu0
        %v1239 = vadd.f32 %v512, %v1238
        %v1240 = vpop.f32.mrf.mxu0
        %v1241 = vadd.f32 %v512, %v1240
        %1242 = vmatmul.bf16.gmra.mxu0 %v766
        %v1243 = vpop.f32.mrf.mxu0
        %v1244 = vadd.f32 %v512, %v1243
        %v1245 = vpop.f32.mrf.mxu0
        %v1246 = vadd.f32 %v512, %v1245
        %1247 = vmatmul.bf16.gmra.mxu0 %v768
        %v1248 = vpop.f32.mrf.mxu0
        %v1249 = vadd.f32 %v512, %v1248
        %v1250 = vpop.f32.mrf.mxu0
        %v1251 = vadd.f32 %v512, %v1250
        %1252 = vmatmul.bf16.gmra.mxu0 %v770
        %v1253 = vpop.f32.mrf.mxu0
        %v1254 = vadd.f32 %v512, %v1253
        %v1255 = vpop.f32.mrf.mxu0
        %v1256 = vadd.f32 %v512, %v1255
        %1257 = vmatmul.bf16.gmra.mxu0 %v772
        %v1258 = vpop.f32.mrf.mxu0
        %v1259 = vadd.f32 %v512, %v1258
        %v1260 = vpop.f32.mrf.mxu0
        %v1261 = vadd.f32 %v512, %v1260
        %1262 = vdwg.mxu0
        %1263 = vmatpush.bf16.msra.mxu0 %v1043
        %1264 = vmatpush.bf16.msra.mxu0 %v1040
        %1265 = vmatpush.bf16.msra.mxu0 %v1037
        %1266 = vmatpush.bf16.msra.mxu0 %v1034
        %1267 = vmatpush.bf16.msra.mxu0 %v1031
        %1268 = vmatpush.bf16.msra.mxu0 %v1028
        %1269 = vmatpush.bf16.msra.mxu0 %v1025
        %1270 = vmatpush.bf16.msra.mxu0 %v1022
        %1271 = vmatmul.bf16.gmra.mxu0 %v711
        %v1272 = vpop.f32.mrf.mxu0
        %v1273 = vadd.f32 %v1104, %v1272
        %v1274 = vpop.f32.mrf.mxu0
        %v1275 = vadd.f32 %v1106, %v1274
        %1276 = vmatmul.bf16.gmra.mxu0 %v713
        %v1277 = vpop.f32.mrf.mxu0
        %v1278 = vadd.f32 %v1109, %v1277
        %v1279 = vpop.f32.mrf.mxu0
        %v1280 = vadd.f32 %v1111, %v1279
        %1281 = vmatmul.bf16.gmra.mxu0 %v715
        %v1282 = vpop.f32.mrf.mxu0
        %v1283 = vadd.f32 %v1114, %v1282
        %v1284 = vpop.f32.mrf.mxu0
        %v1285 = vadd.f32 %v1116, %v1284
        %1286 = vmatmul.bf16.gmra.mxu0 %v717
        %v1287 = vpop.f32.mrf.mxu0
        %v1288 = vadd.f32 %v1119, %v1287
        %v1289 = vpop.f32.mrf.mxu0
        %v1290 = vadd.f32 %v1121, %v1289
        %1291 = vmatmul.bf16.gmra.mxu0 %v719
        %v1292 = vpop.f32.mrf.mxu0
        %v1293 = vadd.f32 %v1124, %v1292
        %v1294 = vpop.f32.mrf.mxu0
        %v1295 = vadd.f32 %v1126, %v1294
        %1296 = vmatmul.bf16.gmra.mxu0 %v721
        %v1297 = vpop.f32.mrf.mxu0
        %v1298 = vadd.f32 %v1129, %v1297
        %v1299 = vpop.f32.mrf.mxu0
        %v1300 = vadd.f32 %v1131, %v1299
        %1301 = vmatmul.bf16.gmra.mxu0 %v723
        %v1302 = vpop.f32.mrf.mxu0
        %v1303 = vadd.f32 %v1134, %v1302
        %v1304 = vpop.f32.mrf.mxu0
        %v1305 = vadd.f32 %v1136, %v1304
        %1306 = vmatmul.bf16.gmra.mxu0 %v725
        %v1307 = vpop.f32.mrf.mxu0
        %v1308 = vadd.f32 %v1139, %v1307
        %v1309 = vpop.f32.mrf.mxu0
        %v1310 = vadd.f32 %v1141, %v1309
        %1311 = vmatmul.bf16.gmra.mxu0 %v727
        %v1312 = vpop.f32.mrf.mxu0
        %v1313 = vadd.f32 %v1144, %v1312
        %v1314 = vpop.f32.mrf.mxu0
        %v1315 = vadd.f32 %v1146, %v1314
        %1316 = vmatmul.bf16.gmra.mxu0 %v729
        %v1317 = vpop.f32.mrf.mxu0
        %v1318 = vadd.f32 %v1149, %v1317
        %v1319 = vpop.f32.mrf.mxu0
        %v1320 = vadd.f32 %v1151, %v1319
        %1321 = vmatmul.bf16.gmra.mxu0 %v731
        %v1322 = vpop.f32.mrf.mxu0
        %v1323 = vadd.f32 %v1154, %v1322
        %v1324 = vpop.f32.mrf.mxu0
        %v1325 = vadd.f32 %v1156, %v1324
        %1326 = vmatmul.bf16.gmra.mxu0 %v733
        %v1327 = vpop.f32.mrf.mxu0
        %v1328 = vadd.f32 %v1159, %v1327
        %v1329 = vpop.f32.mrf.mxu0
        %v1330 = vadd.f32 %v1161, %v1329
        %1331 = vmatmul.bf16.gmra.mxu0 %v735
        %v1332 = vpop.f32.mrf.mxu0
        %v1333 = vadd.f32 %v1164, %v1332
        %v1334 = vpop.f32.mrf.mxu0
        %v1335 = vadd.f32 %v1166, %v1334
        %1336 = vmatmul.bf16.gmra.mxu0 %v737
        %v1337 = vpop.f32.mrf.mxu0
        %v1338 = vadd.f32 %v1169, %v1337
        %v1339 = vpop.f32.mrf.mxu0
        %v1340 = vadd.f32 %v1171, %v1339
        %1341 = vmatmul.bf16.gmra.mxu0 %v739
        %v1342 = vpop.f32.mrf.mxu0
        %v1343 = vadd.f32 %v1174, %v1342
        %v1344 = vpop.f32.mrf.mxu0
        %v1345 = vadd.f32 %v1176, %v1344
        %1346 = vmatmul.bf16.gmra.mxu0 %v741
        %v1347 = vpop.f32.mrf.mxu0
        %v1348 = vadd.f32 %v1179, %v1347
        %v1349 = vpop.f32.mrf.mxu0
        %v1350 = vadd.f32 %v1181, %v1349
        %1351 = vmatmul.bf16.gmra.mxu0 %v743
        %v1352 = vpop.f32.mrf.mxu0
        %v1353 = vadd.f32 %v1184, %v1352
        %v1354 = vpop.f32.mrf.mxu0
        %v1355 = vadd.f32 %v1186, %v1354
        %1356 = vmatmul.bf16.gmra.mxu0 %v745
        %v1357 = vpop.f32.mrf.mxu0
        %v1358 = vadd.f32 %v1189, %v1357
        %v1359 = vpop.f32.mrf.mxu0
        %v1360 = vadd.f32 %v1191, %v1359
        %1361 = vmatmul.bf16.gmra.mxu0 %v747
        %v1362 = vpop.f32.mrf.mxu0
        %v1363 = vadd.f32 %v1194, %v1362
        %v1364 = vpop.f32.mrf.mxu0
        %v1365 = vadd.f32 %v1196, %v1364
        %1366 = vmatmul.bf16.gmra.mxu0 %v749
        %v1367 = vpop.f32.mrf.mxu0
        %v1368 = vadd.f32 %v1199, %v1367
        %v1369 = vpop.f32.mrf.mxu0
        %v1370 = vadd.f32 %v1201, %v1369
        %1371 = vmatmul.bf16.gmra.mxu0 %v751
        %v1372 = vpop.f32.mrf.mxu0
        %v1373 = vadd.f32 %v1204, %v1372
        %v1374 = vpop.f32.mrf.mxu0
        %v1375 = vadd.f32 %v1206, %v1374
        %1376 = vmatmul.bf16.gmra.mxu0 %v753
        %v1377 = vpop.f32.mrf.mxu0
        %v1378 = vadd.f32 %v1209, %v1377
        %v1379 = vpop.f32.mrf.mxu0
        %v1380 = vadd.f32 %v1211, %v1379
        %1381 = vmatmul.bf16.gmra.mxu0 %v755
        %v1382 = vpop.f32.mrf.mxu0
        %v1383 = vadd.f32 %v1214, %v1382
        %v1384 = vpop.f32.mrf.mxu0
        %v1385 = vadd.f32 %v1216, %v1384
        %1386 = vmatmul.bf16.gmra.mxu0 %v757
        %v1387 = vpop.f32.mrf.mxu0
        %v1388 = vadd.f32 %v1219, %v1387
        %v1389 = vpop.f32.mrf.mxu0
        %v1390 = vadd.f32 %v1221, %v1389
        %1391 = vmatmul.bf16.gmra.mxu0 %v759
        %v1392 = vpop.f32.mrf.mxu0
        %v1393 = vadd.f32 %v1224, %v1392
        %v1394 = vpop.f32.mrf.mxu0
        %v1395 = vadd.f32 %v1226, %v1394
        %1396 = vmatmul.bf16.gmra.mxu0 %v761
        %v1397 = vpop.f32.mrf.mxu0
        %v1398 = vadd.f32 %v1229, %v1397
        %v1399 = vpop.f32.mrf.mxu0
        %v1400 = vadd.f32 %v1231, %v1399
        %1401 = vmatmul.bf16.gmra.mxu0 %v763
        %v1402 = vpop.f32.mrf.mxu0
        %v1403 = vadd.f32 %v1234, %v1402
        %v1404 = vpop.f32.mrf.mxu0
        %v1405 = vadd.f32 %v1236, %v1404
        %1406 = vmatmul.bf16.gmra.mxu0 %v765
        %v1407 = vpop.f32.mrf.mxu0
        %v1408 = vadd.f32 %v1239, %v1407
        %v1409 = vpop.f32.mrf.mxu0
        %v1410 = vadd.f32 %v1241, %v1409
        %1411 = vmatmul.bf16.gmra.mxu0 %v767
        %v1412 = vpop.f32.mrf.mxu0
        %v1413 = vadd.f32 %v1244, %v1412
        %v1414 = vpop.f32.mrf.mxu0
        %v1415 = vadd.f32 %v1246, %v1414
        %1416 = vmatmul.bf16.gmra.mxu0 %v769
        %v1417 = vpop.f32.mrf.mxu0
        %v1418 = vadd.f32 %v1249, %v1417
        %v1419 = vpop.f32.mrf.mxu0
        %v1420 = vadd.f32 %v1251, %v1419
        %1421 = vmatmul.bf16.gmra.mxu0 %v771
        %v1422 = vpop.f32.mrf.mxu0
        %v1423 = vadd.f32 %v1254, %v1422
        %v1424 = vpop.f32.mrf.mxu0
        %v1425 = vadd.f32 %v1256, %v1424
        %1426 = vmatmul.bf16.gmra.mxu0 %v773
        %v1427 = vpop.f32.mrf.mxu0
        %v1428 = vadd.f32 %v1259, %v1427
        %v1429 = vpop.f32.mrf.mxu0
        %v1430 = vadd.f32 %v1261, %v1429
        %1431 = vdwg.mxu0
        %1432 = vmatpush.bf16.msra.mxu0 %v1020
        %1433 = vmatpush.bf16.msra.mxu0 %v1017
        %1434 = vmatpush.bf16.msra.mxu0 %v1014
        %1435 = vmatpush.bf16.msra.mxu0 %v1011
        %1436 = vmatpush.bf16.msra.mxu0 %v1008
        %1437 = vmatpush.bf16.msra.mxu0 %v1005
        %1438 = vmatpush.bf16.msra.mxu0 %v1002
        %1439 = vmatpush.bf16.msra.mxu0 %v999
        %1440 = vmatmul.bf16.gmra.mxu0 %v710
        %v1441 = vpop.f32.mrf.mxu0
        %v1442 = vadd.f32 %v513, %v1441
        %v1443 = vpop.f32.mrf.mxu0
        %v1444 = vadd.f32 %v513, %v1443
        %1445 = vmatmul.bf16.gmra.mxu0 %v712
        %v1446 = vpop.f32.mrf.mxu0
        %v1447 = vadd.f32 %v513, %v1446
        %v1448 = vpop.f32.mrf.mxu0
        %v1449 = vadd.f32 %v513, %v1448
        %1450 = vmatmul.bf16.gmra.mxu0 %v714
        %v1451 = vpop.f32.mrf.mxu0
        %v1452 = vadd.f32 %v513, %v1451
        %v1453 = vpop.f32.mrf.mxu0
        %v1454 = vadd.f32 %v513, %v1453
        %1455 = vmatmul.bf16.gmra.mxu0 %v716
        %v1456 = vpop.f32.mrf.mxu0
        %v1457 = vadd.f32 %v513, %v1456
        %v1458 = vpop.f32.mrf.mxu0
        %v1459 = vadd.f32 %v513, %v1458
        %1460 = vmatmul.bf16.gmra.mxu0 %v718
        %v1461 = vpop.f32.mrf.mxu0
        %v1462 = vadd.f32 %v513, %v1461
        %v1463 = vpop.f32.mrf.mxu0
        %v1464 = vadd.f32 %v513, %v1463
        %1465 = vmatmul.bf16.gmra.mxu0 %v720
        %v1466 = vpop.f32.mrf.mxu0
        %v1467 = vadd.f32 %v513, %v1466
        %v1468 = vpop.f32.mrf.mxu0
        %v1469 = vadd.f32 %v513, %v1468
        %1470 = vmatmul.bf16.gmra.mxu0 %v722
        %v1471 = vpop.f32.mrf.mxu0
        %v1472 = vadd.f32 %v513, %v1471
        %v1473 = vpop.f32.mrf.mxu0
        %v1474 = vadd.f32 %v513, %v1473
        %1475 = vmatmul.bf16.gmra.mxu0 %v724
        %v1476 = vpop.f32.mrf.mxu0
        %v1477 = vadd.f32 %v513, %v1476
        %v1478 = vpop.f32.mrf.mxu0
        %v1479 = vadd.f32 %v513, %v1478
        %1480 = vmatmul.bf16.gmra.mxu0 %v726
        %v1481 = vpop.f32.mrf.mxu0
        %v1482 = vadd.f32 %v513, %v1481
        %v1483 = vpop.f32.mrf.mxu0
        %v1484 = vadd.f32 %v513, %v1483
        %1485 = vmatmul.bf16.gmra.mxu0 %v728
        %v1486 = vpop.f32.mrf.mxu0
        %v1487 = vadd.f32 %v513, %v1486
        %v1488 = vpop.f32.mrf.mxu0
        %v1489 = vadd.f32 %v513, %v1488
        %1490 = vmatmul.bf16.gmra.mxu0 %v730
        %v1491 = vpop.f32.mrf.mxu0
        %v1492 = vadd.f32 %v513, %v1491
        %v1493 = vpop.f32.mrf.mxu0
        %v1494 = vadd.f32 %v513, %v1493
        %1495 = vmatmul.bf16.gmra.mxu0 %v732
        %v1496 = vpop.f32.mrf.mxu0
        %v1497 = vadd.f32 %v513, %v1496
        %v1498 = vpop.f32.mrf.mxu0
        %v1499 = vadd.f32 %v513, %v1498
        %1500 = vmatmul.bf16.gmra.mxu0 %v734
        %v1501 = vpop.f32.mrf.mxu0
        %v1502 = vadd.f32 %v513, %v1501
        %v1503 = vpop.f32.mrf.mxu0
        %v1504 = vadd.f32 %v513, %v1503
        %1505 = vmatmul.bf16.gmra.mxu0 %v736
        %v1506 = vpop.f32.mrf.mxu0
        %v1507 = vadd.f32 %v513, %v1506
        %v1508 = vpop.f32.mrf.mxu0
        %v1509 = vadd.f32 %v513, %v1508
        %1510 = vmatmul.bf16.gmra.mxu0 %v738
        %v1511 = vpop.f32.mrf.mxu0
        %v1512 = vadd.f32 %v513, %v1511
        %v1513 = vpop.f32.mrf.mxu0
        %v1514 = vadd.f32 %v513, %v1513
        %1515 = vmatmul.bf16.gmra.mxu0 %v740
        %v1516 = vpop.f32.mrf.mxu0
        %v1517 = vadd.f32 %v513, %v1516
        %v1518 = vpop.f32.mrf.mxu0
        %v1519 = vadd.f32 %v513, %v1518
        %1520 = vmatmul.bf16.gmra.mxu0 %v742
        %v1521 = vpop.f32.mrf.mxu0
        %v1522 = vadd.f32 %v513, %v1521
        %v1523 = vpop.f32.mrf.mxu0
        %v1524 = vadd.f32 %v513, %v1523
        %1525 = vmatmul.bf16.gmra.mxu0 %v744
        %v1526 = vpop.f32.mrf.mxu0
        %v1527 = vadd.f32 %v513, %v1526
        %v1528 = vpop.f32.mrf.mxu0
        %v1529 = vadd.f32 %v513, %v1528
        %1530 = vmatmul.bf16.gmra.mxu0 %v746
        %v1531 = vpop.f32.mrf.mxu0
        %v1532 = vadd.f32 %v513, %v1531
        %v1533 = vpop.f32.mrf.mxu0
        %v1534 = vadd.f32 %v513, %v1533
        %1535 = vmatmul.bf16.gmra.mxu0 %v748
        %v1536 = vpop.f32.mrf.mxu0
        %v1537 = vadd.f32 %v513, %v1536
        %v1538 = vpop.f32.mrf.mxu0
        %v1539 = vadd.f32 %v513, %v1538
        %1540 = vmatmul.bf16.gmra.mxu0 %v750
        %v1541 = vpop.f32.mrf.mxu0
        %v1542 = vadd.f32 %v513, %v1541
        %v1543 = vpop.f32.mrf.mxu0
        %v1544 = vadd.f32 %v513, %v1543
        %1545 = vmatmul.bf16.gmra.mxu0 %v752
        %v1546 = vpop.f32.mrf.mxu0
        %v1547 = vadd.f32 %v513, %v1546
        %v1548 = vpop.f32.mrf.mxu0
        %v1549 = vadd.f32 %v513, %v1548
        %1550 = vmatmul.bf16.gmra.mxu0 %v754
        %v1551 = vpop.f32.mrf.mxu0
        %v1552 = vadd.f32 %v513, %v1551
        %v1553 = vpop.f32.mrf.mxu0
        %v1554 = vadd.f32 %v513, %v1553
        %1555 = vmatmul.bf16.gmra.mxu0 %v756
        %v1556 = vpop.f32.mrf.mxu0
        %v1557 = vadd.f32 %v513, %v1556
        %v1558 = vpop.f32.mrf.mxu0
        %v1559 = vadd.f32 %v513, %v1558
        %1560 = vmatmul.bf16.gmra.mxu0 %v758
        %v1561 = vpop.f32.mrf.mxu0
        %v1562 = vadd.f32 %v513, %v1561
        %v1563 = vpop.f32.mrf.mxu0
        %v1564 = vadd.f32 %v513, %v1563
        %1565 = vmatmul.bf16.gmra.mxu0 %v760
        %v1566 = vpop.f32.mrf.mxu0
        %v1567 = vadd.f32 %v513, %v1566
        %v1568 = vpop.f32.mrf.mxu0
        %v1569 = vadd.f32 %v513, %v1568
        %1570 = vmatmul.bf16.gmra.mxu0 %v762
        %v1571 = vpop.f32.mrf.mxu0
        %v1572 = vadd.f32 %v513, %v1571
        %v1573 = vpop.f32.mrf.mxu0
        %v1574 = vadd.f32 %v513, %v1573
        %1575 = vmatmul.bf16.gmra.mxu0 %v764
        %v1576 = vpop.f32.mrf.mxu0
        %v1577 = vadd.f32 %v513, %v1576
        %v1578 = vpop.f32.mrf.mxu0
        %v1579 = vadd.f32 %v513, %v1578
        %1580 = vmatmul.bf16.gmra.mxu0 %v766
        %v1581 = vpop.f32.mrf.mxu0
        %v1582 = vadd.f32 %v513, %v1581
        %v1583 = vpop.f32.mrf.mxu0
        %v1584 = vadd.f32 %v513, %v1583
        %1585 = vmatmul.bf16.gmra.mxu0 %v768
        %v1586 = vpop.f32.mrf.mxu0
        %v1587 = vadd.f32 %v513, %v1586
        %v1588 = vpop.f32.mrf.mxu0
        %v1589 = vadd.f32 %v513, %v1588
        %1590 = vmatmul.bf16.gmra.mxu0 %v770
        %v1591 = vpop.f32.mrf.mxu0
        %v1592 = vadd.f32 %v513, %v1591
        %v1593 = vpop.f32.mrf.mxu0
        %v1594 = vadd.f32 %v513, %v1593
        %1595 = vmatmul.bf16.gmra.mxu0 %v772
        %v1596 = vpop.f32.mrf.mxu0
        %v1597 = vadd.f32 %v513, %v1596
        %v1598 = vpop.f32.mrf.mxu0
        %v1599 = vadd.f32 %v513, %v1598
        %1600 = vdwg.mxu0
        %1601 = vmatpush.bf16.msra.mxu0 %v1044
        %1602 = vmatpush.bf16.msra.mxu0 %v1041
        %1603 = vmatpush.bf16.msra.mxu0 %v1038
        %1604 = vmatpush.bf16.msra.mxu0 %v1035
        %1605 = vmatpush.bf16.msra.mxu0 %v1032
        %1606 = vmatpush.bf16.msra.mxu0 %v1029
        %1607 = vmatpush.bf16.msra.mxu0 %v1026
        %1608 = vmatpush.bf16.msra.mxu0 %v1023
        %1609 = vmatmul.bf16.gmra.mxu0 %v711
        %v1610 = vpop.f32.mrf.mxu0
        %v1611 = vadd.f32 %v1442, %v1610
        %v1612 = vpop.f32.mrf.mxu0
        %v1613 = vadd.f32 %v1444, %v1612
        %1614 = vmatmul.bf16.gmra.mxu0 %v713
        %v1615 = vpop.f32.mrf.mxu0
        %v1616 = vadd.f32 %v1447, %v1615
        %v1617 = vpop.f32.mrf.mxu0
        %v1618 = vadd.f32 %v1449, %v1617
        %1619 = vmatmul.bf16.gmra.mxu0 %v715
        %v1620 = vpop.f32.mrf.mxu0
        %v1621 = vadd.f32 %v1452, %v1620
        %v1622 = vpop.f32.mrf.mxu0
        %v1623 = vadd.f32 %v1454, %v1622
        %1624 = vmatmul.bf16.gmra.mxu0 %v717
        %v1625 = vpop.f32.mrf.mxu0
        %v1626 = vadd.f32 %v1457, %v1625
        %v1627 = vpop.f32.mrf.mxu0
        %v1628 = vadd.f32 %v1459, %v1627
        %1629 = vmatmul.bf16.gmra.mxu0 %v719
        %v1630 = vpop.f32.mrf.mxu0
        %v1631 = vadd.f32 %v1462, %v1630
        %v1632 = vpop.f32.mrf.mxu0
        %v1633 = vadd.f32 %v1464, %v1632
        %1634 = vmatmul.bf16.gmra.mxu0 %v721
        %v1635 = vpop.f32.mrf.mxu0
        %v1636 = vadd.f32 %v1467, %v1635
        %v1637 = vpop.f32.mrf.mxu0
        %v1638 = vadd.f32 %v1469, %v1637
        %1639 = vmatmul.bf16.gmra.mxu0 %v723
        %v1640 = vpop.f32.mrf.mxu0
        %v1641 = vadd.f32 %v1472, %v1640
        %v1642 = vpop.f32.mrf.mxu0
        %v1643 = vadd.f32 %v1474, %v1642
        %1644 = vmatmul.bf16.gmra.mxu0 %v725
        %v1645 = vpop.f32.mrf.mxu0
        %v1646 = vadd.f32 %v1477, %v1645
        %v1647 = vpop.f32.mrf.mxu0
        %v1648 = vadd.f32 %v1479, %v1647
        %1649 = vmatmul.bf16.gmra.mxu0 %v727
        %v1650 = vpop.f32.mrf.mxu0
        %v1651 = vadd.f32 %v1482, %v1650
        %v1652 = vpop.f32.mrf.mxu0
        %v1653 = vadd.f32 %v1484, %v1652
        %1654 = vmatmul.bf16.gmra.mxu0 %v729
        %v1655 = vpop.f32.mrf.mxu0
        %v1656 = vadd.f32 %v1487, %v1655
        %v1657 = vpop.f32.mrf.mxu0
        %v1658 = vadd.f32 %v1489, %v1657
        %1659 = vmatmul.bf16.gmra.mxu0 %v731
        %v1660 = vpop.f32.mrf.mxu0
        %v1661 = vadd.f32 %v1492, %v1660
        %v1662 = vpop.f32.mrf.mxu0
        %v1663 = vadd.f32 %v1494, %v1662
        %1664 = vmatmul.bf16.gmra.mxu0 %v733
        %v1665 = vpop.f32.mrf.mxu0
        %v1666 = vadd.f32 %v1497, %v1665
        %v1667 = vpop.f32.mrf.mxu0
        %v1668 = vadd.f32 %v1499, %v1667
        %1669 = vmatmul.bf16.gmra.mxu0 %v735
        %v1670 = vpop.f32.mrf.mxu0
        %v1671 = vadd.f32 %v1502, %v1670
        %v1672 = vpop.f32.mrf.mxu0
        %v1673 = vadd.f32 %v1504, %v1672
        %1674 = vmatmul.bf16.gmra.mxu0 %v737
        %v1675 = vpop.f32.mrf.mxu0
        %v1676 = vadd.f32 %v1507, %v1675
        %v1677 = vpop.f32.mrf.mxu0
        %v1678 = vadd.f32 %v1509, %v1677
        %1679 = vmatmul.bf16.gmra.mxu0 %v739
        %v1680 = vpop.f32.mrf.mxu0
        %v1681 = vadd.f32 %v1512, %v1680
        %v1682 = vpop.f32.mrf.mxu0
        %v1683 = vadd.f32 %v1514, %v1682
        %1684 = vmatmul.bf16.gmra.mxu0 %v741
        %v1685 = vpop.f32.mrf.mxu0
        %v1686 = vadd.f32 %v1517, %v1685
        %v1687 = vpop.f32.mrf.mxu0
        %v1688 = vadd.f32 %v1519, %v1687
        %1689 = vmatmul.bf16.gmra.mxu0 %v743
        %v1690 = vpop.f32.mrf.mxu0
        %v1691 = vadd.f32 %v1522, %v1690
        %v1692 = vpop.f32.mrf.mxu0
        %v1693 = vadd.f32 %v1524, %v1692
        %1694 = vmatmul.bf16.gmra.mxu0 %v745
        %v1695 = vpop.f32.mrf.mxu0
        %v1696 = vadd.f32 %v1527, %v1695
        %v1697 = vpop.f32.mrf.mxu0
        %v1698 = vadd.f32 %v1529, %v1697
        %1699 = vmatmul.bf16.gmra.mxu0 %v747
        %v1700 = vpop.f32.mrf.mxu0
        %v1701 = vadd.f32 %v1532, %v1700
        %v1702 = vpop.f32.mrf.mxu0
        %v1703 = vadd.f32 %v1534, %v1702
        %1704 = vmatmul.bf16.gmra.mxu0 %v749
        %v1705 = vpop.f32.mrf.mxu0
        %v1706 = vadd.f32 %v1537, %v1705
        %v1707 = vpop.f32.mrf.mxu0
        %v1708 = vadd.f32 %v1539, %v1707
        %1709 = vmatmul.bf16.gmra.mxu0 %v751
        %v1710 = vpop.f32.mrf.mxu0
        %v1711 = vadd.f32 %v1542, %v1710
        %v1712 = vpop.f32.mrf.mxu0
        %v1713 = vadd.f32 %v1544, %v1712
        %1714 = vmatmul.bf16.gmra.mxu0 %v753
        %v1715 = vpop.f32.mrf.mxu0
        %v1716 = vadd.f32 %v1547, %v1715
        %v1717 = vpop.f32.mrf.mxu0
        %v1718 = vadd.f32 %v1549, %v1717
        %1719 = vmatmul.bf16.gmra.mxu0 %v755
        %v1720 = vpop.f32.mrf.mxu0
        %v1721 = vadd.f32 %v1552, %v1720
        %v1722 = vpop.f32.mrf.mxu0
        %v1723 = vadd.f32 %v1554, %v1722
        %1724 = vmatmul.bf16.gmra.mxu0 %v757
        %v1725 = vpop.f32.mrf.mxu0
        %v1726 = vadd.f32 %v1557, %v1725
        %v1727 = vpop.f32.mrf.mxu0
        %v1728 = vadd.f32 %v1559, %v1727
        %1729 = vmatmul.bf16.gmra.mxu0 %v759
        %v1730 = vpop.f32.mrf.mxu0
        %v1731 = vadd.f32 %v1562, %v1730
        %v1732 = vpop.f32.mrf.mxu0
        %v1733 = vadd.f32 %v1564, %v1732
        %1734 = vmatmul.bf16.gmra.mxu0 %v761
        %v1735 = vpop.f32.mrf.mxu0
        %v1736 = vadd.f32 %v1567, %v1735
        %v1737 = vpop.f32.mrf.mxu0
        %v1738 = vadd.f32 %v1569, %v1737
        %1739 = vmatmul.bf16.gmra.mxu0 %v763
        %v1740 = vpop.f32.mrf.mxu0
        %v1741 = vadd.f32 %v1572, %v1740
        %v1742 = vpop.f32.mrf.mxu0
        %v1743 = vadd.f32 %v1574, %v1742
        %1744 = vmatmul.bf16.gmra.mxu0 %v765
        %v1745 = vpop.f32.mrf.mxu0
        %v1746 = vadd.f32 %v1577, %v1745
        %v1747 = vpop.f32.mrf.mxu0
        %v1748 = vadd.f32 %v1579, %v1747
        %1749 = vmatmul.bf16.gmra.mxu0 %v767
        %v1750 = vpop.f32.mrf.mxu0
        %v1751 = vadd.f32 %v1582, %v1750
        %v1752 = vpop.f32.mrf.mxu0
        %v1753 = vadd.f32 %v1584, %v1752
        %1754 = vmatmul.bf16.gmra.mxu0 %v769
        %v1755 = vpop.f32.mrf.mxu0
        %v1756 = vadd.f32 %v1587, %v1755
        %v1757 = vpop.f32.mrf.mxu0
        %v1758 = vadd.f32 %v1589, %v1757
        %1759 = vmatmul.bf16.gmra.mxu0 %v771
        %v1760 = vpop.f32.mrf.mxu0
        %v1761 = vadd.f32 %v1592, %v1760
        %v1762 = vpop.f32.mrf.mxu0
        %v1763 = vadd.f32 %v1594, %v1762
        %1764 = vmatmul.bf16.gmra.mxu0 %v773
        %v1765 = vpop.f32.mrf.mxu0
        %v1766 = vadd.f32 %v1597, %v1765
        %v1767 = vpop.f32.mrf.mxu0
        %v1768 = vadd.f32 %v1599, %v1767
        %1769 = vdwg.mxu0
        %1770 = vmatpush.bf16.msra.mxu0 %v1021
        %1771 = vmatpush.bf16.msra.mxu0 %v1018
        %1772 = vmatpush.bf16.msra.mxu0 %v1015
        %1773 = vmatpush.bf16.msra.mxu0 %v1012
        %1774 = vmatpush.bf16.msra.mxu0 %v1009
        %1775 = vmatpush.bf16.msra.mxu0 %v1006
        %1776 = vmatpush.bf16.msra.mxu0 %v1003
        %1777 = vmatpush.bf16.msra.mxu0 %v1000
        %1778 = vmatmul.bf16.gmra.mxu0 %v710
        %v1779 = vpop.f32.mrf.mxu0
        %v1780 = vadd.f32 %v514, %v1779
        %v1781 = vpop.f32.mrf.mxu0
        %v1782 = vadd.f32 %v514, %v1781
        %1783 = vmatmul.bf16.gmra.mxu0 %v712
        %v1784 = vpop.f32.mrf.mxu0
        %v1785 = vadd.f32 %v514, %v1784
        %v1786 = vpop.f32.mrf.mxu0
        %v1787 = vadd.f32 %v514, %v1786
        %1788 = vmatmul.bf16.gmra.mxu0 %v714
        %v1789 = vpop.f32.mrf.mxu0
        %v1790 = vadd.f32 %v514, %v1789
        %v1791 = vpop.f32.mrf.mxu0
        %v1792 = vadd.f32 %v514, %v1791
        %1793 = vmatmul.bf16.gmra.mxu0 %v716
        %v1794 = vpop.f32.mrf.mxu0
        %v1795 = vadd.f32 %v514, %v1794
        %v1796 = vpop.f32.mrf.mxu0
        %v1797 = vadd.f32 %v514, %v1796
        %1798 = vmatmul.bf16.gmra.mxu0 %v718
        %v1799 = vpop.f32.mrf.mxu0
        %v1800 = vadd.f32 %v514, %v1799
        %v1801 = vpop.f32.mrf.mxu0
        %v1802 = vadd.f32 %v514, %v1801
        %1803 = vmatmul.bf16.gmra.mxu0 %v720
        %v1804 = vpop.f32.mrf.mxu0
        %v1805 = vadd.f32 %v514, %v1804
        %v1806 = vpop.f32.mrf.mxu0
        %v1807 = vadd.f32 %v514, %v1806
        %1808 = vmatmul.bf16.gmra.mxu0 %v722
        %v1809 = vpop.f32.mrf.mxu0
        %v1810 = vadd.f32 %v514, %v1809
        %v1811 = vpop.f32.mrf.mxu0
        %v1812 = vadd.f32 %v514, %v1811
        %1813 = vmatmul.bf16.gmra.mxu0 %v724
        %v1814 = vpop.f32.mrf.mxu0
        %v1815 = vadd.f32 %v514, %v1814
        %v1816 = vpop.f32.mrf.mxu0
        %v1817 = vadd.f32 %v514, %v1816
        %1818 = vmatmul.bf16.gmra.mxu0 %v726
        %v1819 = vpop.f32.mrf.mxu0
        %v1820 = vadd.f32 %v514, %v1819
        %v1821 = vpop.f32.mrf.mxu0
        %v1822 = vadd.f32 %v514, %v1821
        %1823 = vmatmul.bf16.gmra.mxu0 %v728
        %v1824 = vpop.f32.mrf.mxu0
        %v1825 = vadd.f32 %v514, %v1824
        %v1826 = vpop.f32.mrf.mxu0
        %v1827 = vadd.f32 %v514, %v1826
        %1828 = vmatmul.bf16.gmra.mxu0 %v730
        %v1829 = vpop.f32.mrf.mxu0
        %v1830 = vadd.f32 %v514, %v1829
        %v1831 = vpop.f32.mrf.mxu0
        %v1832 = vadd.f32 %v514, %v1831
        %1833 = vmatmul.bf16.gmra.mxu0 %v732
        %v1834 = vpop.f32.mrf.mxu0
        %v1835 = vadd.f32 %v514, %v1834
        %v1836 = vpop.f32.mrf.mxu0
        %v1837 = vadd.f32 %v514, %v1836
        %1838 = vmatmul.bf16.gmra.mxu0 %v734
        %v1839 = vpop.f32.mrf.mxu0
        %v1840 = vadd.f32 %v514, %v1839
        %v1841 = vpop.f32.mrf.mxu0
        %v1842 = vadd.f32 %v514, %v1841
        %1843 = vmatmul.bf16.gmra.mxu0 %v736
        %v1844 = vpop.f32.mrf.mxu0
        %v1845 = vadd.f32 %v514, %v1844
        %v1846 = vpop.f32.mrf.mxu0
        %v1847 = vadd.f32 %v514, %v1846
        %1848 = vmatmul.bf16.gmra.mxu0 %v738
        %v1849 = vpop.f32.mrf.mxu0
        %v1850 = vadd.f32 %v514, %v1849
        %v1851 = vpop.f32.mrf.mxu0
        %v1852 = vadd.f32 %v514, %v1851
        %1853 = vmatmul.bf16.gmra.mxu0 %v740
        %v1854 = vpop.f32.mrf.mxu0
        %v1855 = vadd.f32 %v514, %v1854
        %v1856 = vpop.f32.mrf.mxu0
        %v1857 = vadd.f32 %v514, %v1856
        %1858 = vmatmul.bf16.gmra.mxu0 %v742
        %v1859 = vpop.f32.mrf.mxu0
        %v1860 = vadd.f32 %v514, %v1859
        %v1861 = vpop.f32.mrf.mxu0
        %v1862 = vadd.f32 %v514, %v1861
        %1863 = vmatmul.bf16.gmra.mxu0 %v744
        %v1864 = vpop.f32.mrf.mxu0
        %v1865 = vadd.f32 %v514, %v1864
        %v1866 = vpop.f32.mrf.mxu0
        %v1867 = vadd.f32 %v514, %v1866
        %1868 = vmatmul.bf16.gmra.mxu0 %v746
        %v1869 = vpop.f32.mrf.mxu0
        %v1870 = vadd.f32 %v514, %v1869
        %v1871 = vpop.f32.mrf.mxu0
        %v1872 = vadd.f32 %v514, %v1871
        %1873 = vmatmul.bf16.gmra.mxu0 %v748
        %v1874 = vpop.f32.mrf.mxu0
        %v1875 = vadd.f32 %v514, %v1874
        %v1876 = vpop.f32.mrf.mxu0
        %v1877 = vadd.f32 %v514, %v1876
        %1878 = vmatmul.bf16.gmra.mxu0 %v750
        %v1879 = vpop.f32.mrf.mxu0
        %v1880 = vadd.f32 %v514, %v1879
        %v1881 = vpop.f32.mrf.mxu0
        %v1882 = vadd.f32 %v514, %v1881
        %1883 = vmatmul.bf16.gmra.mxu0 %v752
        %v1884 = vpop.f32.mrf.mxu0
        %v1885 = vadd.f32 %v514, %v1884
        %v1886 = vpop.f32.mrf.mxu0
        %v1887 = vadd.f32 %v514, %v1886
        %1888 = vmatmul.bf16.gmra.mxu0 %v754
        %v1889 = vpop.f32.mrf.mxu0
        %v1890 = vadd.f32 %v514, %v1889
        %v1891 = vpop.f32.mrf.mxu0
        %v1892 = vadd.f32 %v514, %v1891
        %1893 = vmatmul.bf16.gmra.mxu0 %v756
        %v1894 = vpop.f32.mrf.mxu0
        %v1895 = vadd.f32 %v514, %v1894
        %v1896 = vpop.f32.mrf.mxu0
        %v1897 = vadd.f32 %v514, %v1896
        %1898 = vmatmul.bf16.gmra.mxu0 %v758
        %v1899 = vpop.f32.mrf.mxu0
        %v1900 = vadd.f32 %v514, %v1899
        %v1901 = vpop.f32.mrf.mxu0
        %v1902 = vadd.f32 %v514, %v1901
        %1903 = vmatmul.bf16.gmra.mxu0 %v760
        %v1904 = vpop.f32.mrf.mxu0
        %v1905 = vadd.f32 %v514, %v1904
        %v1906 = vpop.f32.mrf.mxu0
        %v1907 = vadd.f32 %v514, %v1906
        %1908 = vmatmul.bf16.gmra.mxu0 %v762
        %v1909 = vpop.f32.mrf.mxu0
        %v1910 = vadd.f32 %v514, %v1909
        %v1911 = vpop.f32.mrf.mxu0
        %v1912 = vadd.f32 %v514, %v1911
        %1913 = vmatmul.bf16.gmra.mxu0 %v764
        %v1914 = vpop.f32.mrf.mxu0
        %v1915 = vadd.f32 %v514, %v1914
        %v1916 = vpop.f32.mrf.mxu0
        %v1917 = vadd.f32 %v514, %v1916
        %1918 = vmatmul.bf16.gmra.mxu0 %v766
        %v1919 = vpop.f32.mrf.mxu0
        %v1920 = vadd.f32 %v514, %v1919
        %v1921 = vpop.f32.mrf.mxu0
        %v1922 = vadd.f32 %v514, %v1921
        %1923 = vmatmul.bf16.gmra.mxu0 %v768
        %v1924 = vpop.f32.mrf.mxu0
        %v1925 = vadd.f32 %v514, %v1924
        %v1926 = vpop.f32.mrf.mxu0
        %v1927 = vadd.f32 %v514, %v1926
        %1928 = vmatmul.bf16.gmra.mxu0 %v770
        %v1929 = vpop.f32.mrf.mxu0
        %v1930 = vadd.f32 %v514, %v1929
        %v1931 = vpop.f32.mrf.mxu0
        %v1932 = vadd.f32 %v514, %v1931
        %1933 = vmatmul.bf16.gmra.mxu0 %v772
        %v1934 = vpop.f32.mrf.mxu0
        %v1935 = vadd.f32 %v514, %v1934
        %v1936 = vpop.f32.mrf.mxu0
        %v1937 = vadd.f32 %v514, %v1936
        %1938 = vdwg.mxu0
        %1939 = vmatpush.bf16.msra.mxu0 %v1045
        %1940 = vmatpush.bf16.msra.mxu0 %v1042
        %1941 = vmatpush.bf16.msra.mxu0 %v1039
        %1942 = vmatpush.bf16.msra.mxu0 %v1036
        %1943 = vmatpush.bf16.msra.mxu0 %v1033
        %1944 = vmatpush.bf16.msra.mxu0 %v1030
        %1945 = vmatpush.bf16.msra.mxu0 %v1027
        %1946 = vmatpush.bf16.msra.mxu0 %v1024
        %1947 = vmatmul.bf16.gmra.mxu0 %v711
        %v1948 = vpop.f32.mrf.mxu0
        %v1949 = vadd.f32 %v1780, %v1948
        %v1950 = vpop.f32.mrf.mxu0
        %v1951 = vadd.f32 %v1782, %v1950
        %1952 = vmatmul.bf16.gmra.mxu0 %v713
        %v1953 = vpop.f32.mrf.mxu0
        %v1954 = vadd.f32 %v1785, %v1953
        %v1955 = vpop.f32.mrf.mxu0
        %v1956 = vadd.f32 %v1787, %v1955
        %1957 = vmatmul.bf16.gmra.mxu0 %v715
        %v1958 = vpop.f32.mrf.mxu0
        %v1959 = vadd.f32 %v1790, %v1958
        %v1960 = vpop.f32.mrf.mxu0
        %v1961 = vadd.f32 %v1792, %v1960
        %1962 = vmatmul.bf16.gmra.mxu0 %v717
        %v1963 = vpop.f32.mrf.mxu0
        %v1964 = vadd.f32 %v1795, %v1963
        %v1965 = vpop.f32.mrf.mxu0
        %v1966 = vadd.f32 %v1797, %v1965
        %1967 = vmatmul.bf16.gmra.mxu0 %v719
        %v1968 = vpop.f32.mrf.mxu0
        %v1969 = vadd.f32 %v1800, %v1968
        %v1970 = vpop.f32.mrf.mxu0
        %v1971 = vadd.f32 %v1802, %v1970
        %1972 = vmatmul.bf16.gmra.mxu0 %v721
        %v1973 = vpop.f32.mrf.mxu0
        %v1974 = vadd.f32 %v1805, %v1973
        %v1975 = vpop.f32.mrf.mxu0
        %v1976 = vadd.f32 %v1807, %v1975
        %1977 = vmatmul.bf16.gmra.mxu0 %v723
        %v1978 = vpop.f32.mrf.mxu0
        %v1979 = vadd.f32 %v1810, %v1978
        %v1980 = vpop.f32.mrf.mxu0
        %v1981 = vadd.f32 %v1812, %v1980
        %1982 = vmatmul.bf16.gmra.mxu0 %v725
        %v1983 = vpop.f32.mrf.mxu0
        %v1984 = vadd.f32 %v1815, %v1983
        %v1985 = vpop.f32.mrf.mxu0
        %v1986 = vadd.f32 %v1817, %v1985
        %1987 = vmatmul.bf16.gmra.mxu0 %v727
        %v1988 = vpop.f32.mrf.mxu0
        %v1989 = vadd.f32 %v1820, %v1988
        %v1990 = vpop.f32.mrf.mxu0
        %v1991 = vadd.f32 %v1822, %v1990
        %1992 = vmatmul.bf16.gmra.mxu0 %v729
        %v1993 = vpop.f32.mrf.mxu0
        %v1994 = vadd.f32 %v1825, %v1993
        %v1995 = vpop.f32.mrf.mxu0
        %v1996 = vadd.f32 %v1827, %v1995
        %1997 = vmatmul.bf16.gmra.mxu0 %v731
        %v1998 = vpop.f32.mrf.mxu0
        %v1999 = vadd.f32 %v1830, %v1998
        %v2000 = vpop.f32.mrf.mxu0
        %v2001 = vadd.f32 %v1832, %v2000
        %2002 = vmatmul.bf16.gmra.mxu0 %v733
        %v2003 = vpop.f32.mrf.mxu0
        %v2004 = vadd.f32 %v1835, %v2003
        %v2005 = vpop.f32.mrf.mxu0
        %v2006 = vadd.f32 %v1837, %v2005
        %2007 = vmatmul.bf16.gmra.mxu0 %v735
        %v2008 = vpop.f32.mrf.mxu0
        %v2009 = vadd.f32 %v1840, %v2008
        %v2010 = vpop.f32.mrf.mxu0
        %v2011 = vadd.f32 %v1842, %v2010
        %2012 = vmatmul.bf16.gmra.mxu0 %v737
        %v2013 = vpop.f32.mrf.mxu0
        %v2014 = vadd.f32 %v1845, %v2013
        %v2015 = vpop.f32.mrf.mxu0
        %v2016 = vadd.f32 %v1847, %v2015
        %2017 = vmatmul.bf16.gmra.mxu0 %v739
        %v2018 = vpop.f32.mrf.mxu0
        %v2019 = vadd.f32 %v1850, %v2018
        %v2020 = vpop.f32.mrf.mxu0
        %v2021 = vadd.f32 %v1852, %v2020
        %2022 = vmatmul.bf16.gmra.mxu0 %v741
        %v2023 = vpop.f32.mrf.mxu0
        %v2024 = vadd.f32 %v1855, %v2023
        %v2025 = vpop.f32.mrf.mxu0
        %v2026 = vadd.f32 %v1857, %v2025
        %2027 = vmatmul.bf16.gmra.mxu0 %v743
        %v2028 = vpop.f32.mrf.mxu0
        %v2029 = vadd.f32 %v1860, %v2028
        %v2030 = vpop.f32.mrf.mxu0
        %v2031 = vadd.f32 %v1862, %v2030
        %2032 = vmatmul.bf16.gmra.mxu0 %v745
        %v2033 = vpop.f32.mrf.mxu0
        %v2034 = vadd.f32 %v1865, %v2033
        %v2035 = vpop.f32.mrf.mxu0
        %v2036 = vadd.f32 %v1867, %v2035
        %2037 = vmatmul.bf16.gmra.mxu0 %v747
        %v2038 = vpop.f32.mrf.mxu0
        %v2039 = vadd.f32 %v1870, %v2038
        %v2040 = vpop.f32.mrf.mxu0
        %v2041 = vadd.f32 %v1872, %v2040
        %2042 = vmatmul.bf16.gmra.mxu0 %v749
        %v2043 = vpop.f32.mrf.mxu0
        %v2044 = vadd.f32 %v1875, %v2043
        %v2045 = vpop.f32.mrf.mxu0
        %v2046 = vadd.f32 %v1877, %v2045
        %2047 = vmatmul.bf16.gmra.mxu0 %v751
        %v2048 = vpop.f32.mrf.mxu0
        %v2049 = vadd.f32 %v1880, %v2048
        %v2050 = vpop.f32.mrf.mxu0
        %v2051 = vadd.f32 %v1882, %v2050
        %2052 = vmatmul.bf16.gmra.mxu0 %v753
        %v2053 = vpop.f32.mrf.mxu0
        %v2054 = vadd.f32 %v1885, %v2053
        %v2055 = vpop.f32.mrf.mxu0
        %v2056 = vadd.f32 %v1887, %v2055
        %2057 = vmatmul.bf16.gmra.mxu0 %v755
        %v2058 = vpop.f32.mrf.mxu0
        %v2059 = vadd.f32 %v1890, %v2058
        %v2060 = vpop.f32.mrf.mxu0
        %v2061 = vadd.f32 %v1892, %v2060
        %2062 = vmatmul.bf16.gmra.mxu0 %v757
        %v2063 = vpop.f32.mrf.mxu0
        %v2064 = vadd.f32 %v1895, %v2063
        %v2065 = vpop.f32.mrf.mxu0
        %v2066 = vadd.f32 %v1897, %v2065
        %2067 = vmatmul.bf16.gmra.mxu0 %v759
        %v2068 = vpop.f32.mrf.mxu0
        %v2069 = vadd.f32 %v1900, %v2068
        %v2070 = vpop.f32.mrf.mxu0
        %v2071 = vadd.f32 %v1902, %v2070
        %2072 = vmatmul.bf16.gmra.mxu0 %v761
        %v2073 = vpop.f32.mrf.mxu0
        %v2074 = vadd.f32 %v1905, %v2073
        %v2075 = vpop.f32.mrf.mxu0
        %v2076 = vadd.f32 %v1907, %v2075
        %2077 = vmatmul.bf16.gmra.mxu0 %v763
        %v2078 = vpop.f32.mrf.mxu0
        %v2079 = vadd.f32 %v1910, %v2078
        %v2080 = vpop.f32.mrf.mxu0
        %v2081 = vadd.f32 %v1912, %v2080
        %2082 = vmatmul.bf16.gmra.mxu0 %v765
        %v2083 = vpop.f32.mrf.mxu0
        %v2084 = vadd.f32 %v1915, %v2083
        %v2085 = vpop.f32.mrf.mxu0
        %v2086 = vadd.f32 %v1917, %v2085
        %2087 = vmatmul.bf16.gmra.mxu0 %v767
        %v2088 = vpop.f32.mrf.mxu0
        %v2089 = vadd.f32 %v1920, %v2088
        %v2090 = vpop.f32.mrf.mxu0
        %v2091 = vadd.f32 %v1922, %v2090
        %2092 = vmatmul.bf16.gmra.mxu0 %v769
        %v2093 = vpop.f32.mrf.mxu0
        %v2094 = vadd.f32 %v1925, %v2093
        %v2095 = vpop.f32.mrf.mxu0
        %v2096 = vadd.f32 %v1927, %v2095
        %2097 = vmatmul.bf16.gmra.mxu0 %v771
        %v2098 = vpop.f32.mrf.mxu0
        %v2099 = vadd.f32 %v1930, %v2098
        %v2100 = vpop.f32.mrf.mxu0
        %v2101 = vadd.f32 %v1932, %v2100
        %2102 = vmatmul.bf16.gmra.mxu0 %v773
        %v2103 = vpop.f32.mrf.mxu0
        %v2104 = vadd.f32 %v1935, %v2103
        %v2105 = vpop.f32.mrf.mxu0
        %v2106 = vadd.f32 %v1937, %v2105
        %2107 = vdwg.mxu0
        %v2108 = vpack.c.bf16 %v1611, %v1273
        %v2109 = vpack.c.bf16 %v1949, %v1949
        %v2110 = vpack.c.bf16 %v1613, %v1275
        %v2111 = vpack.c.bf16 %v1951, %v1951
        %v2112 = vpack.c.bf16 %v1616, %v1278
        %v2113 = vpack.c.bf16 %v1954, %v1954
        %v2114 = vpack.c.bf16 %v1618, %v1280
        %v2115 = vpack.c.bf16 %v1956, %v1956
        %v2116 = vpack.c.bf16 %v1621, %v1283
        %v2117 = vpack.c.bf16 %v1959, %v1959
        %v2118 = vpack.c.bf16 %v1623, %v1285
        %v2119 = vpack.c.bf16 %v1961, %v1961
        %v2120 = vpack.c.bf16 %v1626, %v1288
        %v2121 = vpack.c.bf16 %v1964, %v1964
        %v2122 = vpack.c.bf16 %v1628, %v1290
        %v2123 = vpack.c.bf16 %v1966, %v1966
        %v2124 = vpack.c.bf16 %v1631, %v1293
        %v2125 = vpack.c.bf16 %v1969, %v1969
        %v2126 = vpack.c.bf16 %v1633, %v1295
        %v2127 = vpack.c.bf16 %v1971, %v1971
        %v2128 = vpack.c.bf16 %v1636, %v1298
        %v2129 = vpack.c.bf16 %v1974, %v1974
        %v2130 = vpack.c.bf16 %v1638, %v1300
        %v2131 = vpack.c.bf16 %v1976, %v1976
        %v2132 = vpack.c.bf16 %v1641, %v1303
        %v2133 = vpack.c.bf16 %v1979, %v1979
        %v2134 = vpack.c.bf16 %v1643, %v1305
        %v2135 = vpack.c.bf16 %v1981, %v1981
        %v2136 = vpack.c.bf16 %v1646, %v1308
        %v2137 = vpack.c.bf16 %v1984, %v1984
        %v2138 = vpack.c.bf16 %v1648, %v1310
        %v2139 = vpack.c.bf16 %v1986, %v1986
        %v2140 = vpack.c.bf16 %v1651, %v1313
        %v2141 = vpack.c.bf16 %v1989, %v1989
        %v2142 = vpack.c.bf16 %v1653, %v1315
        %v2143 = vpack.c.bf16 %v1991, %v1991
        %v2144 = vpack.c.bf16 %v1656, %v1318
        %v2145 = vpack.c.bf16 %v1994, %v1994
        %v2146 = vpack.c.bf16 %v1658, %v1320
        %v2147 = vpack.c.bf16 %v1996, %v1996
        %v2148 = vpack.c.bf16 %v1661, %v1323
        %v2149 = vpack.c.bf16 %v1999, %v1999
        %v2150 = vpack.c.bf16 %v1663, %v1325
        %v2151 = vpack.c.bf16 %v2001, %v2001
        %v2152 = vpack.c.bf16 %v1666, %v1328
        %v2153 = vpack.c.bf16 %v2004, %v2004
        %v2154 = vpack.c.bf16 %v1668, %v1330
        %v2155 = vpack.c.bf16 %v2006, %v2006
        %v2156 = vpack.c.bf16 %v1671, %v1333
        %v2157 = vpack.c.bf16 %v2009, %v2009
        %v2158 = vpack.c.bf16 %v1673, %v1335
        %v2159 = vpack.c.bf16 %v2011, %v2011
        %v2160 = vpack.c.bf16 %v1676, %v1338
        %v2161 = vpack.c.bf16 %v2014, %v2014
        %v2162 = vpack.c.bf16 %v1678, %v1340
        %v2163 = vpack.c.bf16 %v2016, %v2016
        %v2164 = vpack.c.bf16 %v1681, %v1343
        %v2165 = vpack.c.bf16 %v2019, %v2019
        %v2166 = vpack.c.bf16 %v1683, %v1345
        %v2167 = vpack.c.bf16 %v2021, %v2021
        %v2168 = vpack.c.bf16 %v1686, %v1348
        %v2169 = vpack.c.bf16 %v2024, %v2024
        %v2170 = vpack.c.bf16 %v1688, %v1350
        %v2171 = vpack.c.bf16 %v2026, %v2026
        %v2172 = vpack.c.bf16 %v1691, %v1353
        %v2173 = vpack.c.bf16 %v2029, %v2029
        %v2174 = vpack.c.bf16 %v1693, %v1355
        %v2175 = vpack.c.bf16 %v2031, %v2031
        %v2176 = vpack.c.bf16 %v1696, %v1358
        %v2177 = vpack.c.bf16 %v2034, %v2034
        %v2178 = vpack.c.bf16 %v1698, %v1360
        %v2179 = vpack.c.bf16 %v2036, %v2036
        %v2180 = vpack.c.bf16 %v1701, %v1363
        %v2181 = vpack.c.bf16 %v2039, %v2039
        %v2182 = vpack.c.bf16 %v1703, %v1365
        %v2183 = vpack.c.bf16 %v2041, %v2041
        %v2184 = vpack.c.bf16 %v1706, %v1368
        %v2185 = vpack.c.bf16 %v2044, %v2044
        %v2186 = vpack.c.bf16 %v1708, %v1370
        %v2187 = vpack.c.bf16 %v2046, %v2046
        %v2188 = vpack.c.bf16 %v1711, %v1373
        %v2189 = vpack.c.bf16 %v2049, %v2049
        %v2190 = vpack.c.bf16 %v1713, %v1375
        %v2191 = vpack.c.bf16 %v2051, %v2051
        %v2192 = vpack.c.bf16 %v1716, %v1378
        %v2193 = vpack.c.bf16 %v2054, %v2054
        %v2194 = vpack.c.bf16 %v1718, %v1380
        %v2195 = vpack.c.bf16 %v2056, %v2056
        %v2196 = vpack.c.bf16 %v1721, %v1383
        %v2197 = vpack.c.bf16 %v2059, %v2059
        %v2198 = vpack.c.bf16 %v1723, %v1385
        %v2199 = vpack.c.bf16 %v2061, %v2061
        %v2200 = vpack.c.bf16 %v1726, %v1388
        %v2201 = vpack.c.bf16 %v2064, %v2064
        %v2202 = vpack.c.bf16 %v1728, %v1390
        %v2203 = vpack.c.bf16 %v2066, %v2066
        %v2204 = vpack.c.bf16 %v1731, %v1393
        %v2205 = vpack.c.bf16 %v2069, %v2069
        %v2206 = vpack.c.bf16 %v1733, %v1395
        %v2207 = vpack.c.bf16 %v2071, %v2071
        %v2208 = vpack.c.bf16 %v1736, %v1398
        %v2209 = vpack.c.bf16 %v2074, %v2074
        %v2210 = vpack.c.bf16 %v1738, %v1400
        %v2211 = vpack.c.bf16 %v2076, %v2076
        %v2212 = vpack.c.bf16 %v1741, %v1403
        %v2213 = vpack.c.bf16 %v2079, %v2079
        %v2214 = vpack.c.bf16 %v1743, %v1405
        %v2215 = vpack.c.bf16 %v2081, %v2081
        %v2216 = vpack.c.bf16 %v1746, %v1408
        %v2217 = vpack.c.bf16 %v2084, %v2084
        %v2218 = vpack.c.bf16 %v1748, %v1410
        %v2219 = vpack.c.bf16 %v2086, %v2086
        %v2220 = vpack.c.bf16 %v1751, %v1413
        %v2221 = vpack.c.bf16 %v2089, %v2089
        %v2222 = vpack.c.bf16 %v1753, %v1415
        %v2223 = vpack.c.bf16 %v2091, %v2091
        %v2224 = vpack.c.bf16 %v1756, %v1418
        %v2225 = vpack.c.bf16 %v2094, %v2094
        %v2226 = vpack.c.bf16 %v1758, %v1420
        %v2227 = vpack.c.bf16 %v2096, %v2096
        %v2228 = vpack.c.bf16 %v1761, %v1423
        %v2229 = vpack.c.bf16 %v2099, %v2099
        %v2230 = vpack.c.bf16 %v1763, %v1425
        %v2231 = vpack.c.bf16 %v2101, %v2101
        %v2232 = vpack.c.bf16 %v1766, %v1428
        %v2233 = vpack.c.bf16 %v2104, %v2104
        %v2234 = vpack.c.bf16 %v1768, %v1430
        %v2235 = vpack.c.bf16 %v2106, %v2106
        %2236 = vst [vmem:[%s366] sm:$0xff] %v2108
        %2237 = vst [vmem:[%s366 + $0x8] sm:$0xf] %v2109
        %2238 = vst [vmem:[%s366 + $0xc] sm:$0xff] %v2110
        %2239 = vst [vmem:[%s366 + $0x14] sm:$0xf] %v2111
        %2240 = vst [vmem:[%s366 + $0x18] sm:$0xff] %v2112
        %2241 = vst [vmem:[%s366 + $0x20] sm:$0xf] %v2113
        %2242 = vst [vmem:[%s366 + $0x24] sm:$0xff] %v2114
        %2243 = vst [vmem:[%s366 + $0x2c] sm:$0xf] %v2115
        %2244 = vst [vmem:[%s366 + $0x30] sm:$0xff] %v2116
        %2245 = vst [vmem:[%s366 + $0x38] sm:$0xf] %v2117
        %2246 = vst [vmem:[%s366 + $0x3c] sm:$0xff] %v2118
        %2247 = vst [vmem:[%s366 + $0x44] sm:$0xf] %v2119
        %2248 = vst [vmem:[%s366 + $0x48] sm:$0xff] %v2120
        %2249 = vst [vmem:[%s366 + $0x50] sm:$0xf] %v2121
        %2250 = vst [vmem:[%s366 + $0x54] sm:$0xff] %v2122
        %2251 = vst [vmem:[%s366 + $0x5c] sm:$0xf] %v2123
        %2252 = vst [vmem:[%s366 + $0x60] sm:$0xff] %v2124
        %2253 = vst [vmem:[%s366 + $0x68] sm:$0xf] %v2125
        %2254 = vst [vmem:[%s366 + $0x6c] sm:$0xff] %v2126
        %2255 = vst [vmem:[%s366 + $0x74] sm:$0xf] %v2127
        %2256 = vst [vmem:[%s366 + $0x78] sm:$0xff] %v2128
        %2257 = vst [vmem:[%s366 + $0x80] sm:$0xf] %v2129
        %2258 = vst [vmem:[%s366 + $0x84] sm:$0xff] %v2130
        %2259 = vst [vmem:[%s366 + $0x8c] sm:$0xf] %v2131
        %2260 = vst [vmem:[%s366 + $0x90] sm:$0xff] %v2132
        %2261 = vst [vmem:[%s366 + $0x98] sm:$0xf] %v2133
        %2262 = vst [vmem:[%s366 + $0x9c] sm:$0xff] %v2134
        %2263 = vst [vmem:[%s366 + $0xa4] sm:$0xf] %v2135
        %2264 = vst [vmem:[%s366 + $0xa8] sm:$0xff] %v2136
        %2265 = vst [vmem:[%s366 + $0xb0] sm:$0xf] %v2137
        %2266 = vst [vmem:[%s366 + $0xb4] sm:$0xff] %v2138
        %2267 = vst [vmem:[%s366 + $0xbc] sm:$0xf] %v2139
        %2268 = vst [vmem:[%s366 + $0xc0] sm:$0xff] %v2140
        %2269 = vst [vmem:[%s366 + $0xc8] sm:$0xf] %v2141
        %2270 = vst [vmem:[%s366 + $0xcc] sm:$0xff] %v2142
        %2271 = vst [vmem:[%s366 + $0xd4] sm:$0xf] %v2143
        %2272 = vst [vmem:[%s366 + $0xd8] sm:$0xff] %v2144
        %2273 = vst [vmem:[%s366 + $0xe0] sm:$0xf] %v2145
        %2274 = vst [vmem:[%s366 + $0xe4] sm:$0xff] %v2146
        %2275 = vst [vmem:[%s366 + $0xec] sm:$0xf] %v2147
        %2276 = vst [vmem:[%s366 + $0xf0] sm:$0xff] %v2148
        %2277 = vst [vmem:[%s366 + $0xf8] sm:$0xf] %v2149
        %2278 = vst [vmem:[%s366 + $0xfc] sm:$0xff] %v2150
        %2279 = vst [vmem:[%s366 + $0x104] sm:$0xf] %v2151
        %2280 = vst [vmem:[%s366 + $0x108] sm:$0xff] %v2152
        %2281 = vst [vmem:[%s366 + $0x110] sm:$0xf] %v2153
        %2282 = vst [vmem:[%s366 + $0x114] sm:$0xff] %v2154
        %2283 = vst [vmem:[%s366 + $0x11c] sm:$0xf] %v2155
        %2284 = vst [vmem:[%s366 + $0x120] sm:$0xff] %v2156
        %2285 = vst [vmem:[%s366 + $0x128] sm:$0xf] %v2157
        %2286 = vst [vmem:[%s366 + $0x12c] sm:$0xff] %v2158
        %2287 = vst [vmem:[%s366 + $0x134] sm:$0xf] %v2159
        %2288 = vst [vmem:[%s366 + $0x138] sm:$0xff] %v2160
        %2289 = vst [vmem:[%s366 + $0x140] sm:$0xf] %v2161
        %2290 = vst [vmem:[%s366 + $0x144] sm:$0xff] %v2162
        %2291 = vst [vmem:[%s366 + $0x14c] sm:$0xf] %v2163
        %2292 = vst [vmem:[%s366 + $0x150] sm:$0xff] %v2164
        %2293 = vst [vmem:[%s366 + $0x158] sm:$0xf] %v2165
        %2294 = vst [vmem:[%s366 + $0x15c] sm:$0xff] %v2166
        %2295 = vst [vmem:[%s366 + $0x164] sm:$0xf] %v2167
        %2296 = vst [vmem:[%s366 + $0x168] sm:$0xff] %v2168
        %2297 = vst [vmem:[%s366 + $0x170] sm:$0xf] %v2169
        %2298 = vst [vmem:[%s366 + $0x174] sm:$0xff] %v2170
        %2299 = vst [vmem:[%s366 + $0x17c] sm:$0xf] %v2171
        %2300 = vst [vmem:[%s366 + $0x180] sm:$0xff] %v2172
        %2301 = vst [vmem:[%s366 + $0x188] sm:$0xf] %v2173
        %2302 = vst [vmem:[%s366 + $0x18c] sm:$0xff] %v2174
        %2303 = vst [vmem:[%s366 + $0x194] sm:$0xf] %v2175
        %2304 = vst [vmem:[%s366 + $0x198] sm:$0xff] %v2176
        %2305 = vst [vmem:[%s366 + $0x1a0] sm:$0xf] %v2177
        %2306 = vst [vmem:[%s366 + $0x1a4] sm:$0xff] %v2178
        %2307 = vst [vmem:[%s366 + $0x1ac] sm:$0xf] %v2179
        %2308 = vst [vmem:[%s366 + $0x1b0] sm:$0xff] %v2180
        %2309 = vst [vmem:[%s366 + $0x1b8] sm:$0xf] %v2181
        %2310 = vst [vmem:[%s366 + $0x1bc] sm:$0xff] %v2182
        %2311 = vst [vmem:[%s366 + $0x1c4] sm:$0xf] %v2183
        %2312 = vst [vmem:[%s366 + $0x1c8] sm:$0xff] %v2184
        %2313 = vst [vmem:[%s366 + $0x1d0] sm:$0xf] %v2185
        %2314 = vst [vmem:[%s366 + $0x1d4] sm:$0xff] %v2186
        %2315 = vst [vmem:[%s366 + $0x1dc] sm:$0xf] %v2187
        %2316 = vst [vmem:[%s366 + $0x1e0] sm:$0xff] %v2188
        %2317 = vst [vmem:[%s366 + $0x1e8] sm:$0xf] %v2189
        %2318 = vst [vmem:[%s366 + $0x1ec] sm:$0xff] %v2190
        %2319 = vst [vmem:[%s366 + $0x1f4] sm:$0xf] %v2191
        %2320 = vst [vmem:[%s366 + $0x1f8] sm:$0xff] %v2192
        %2321 = vst [vmem:[%s366 + $0x200] sm:$0xf] %v2193
        %2322 = vst [vmem:[%s366 + $0x204] sm:$0xff] %v2194
        %2323 = vst [vmem:[%s366 + $0x20c] sm:$0xf] %v2195
        %2324 = vst [vmem:[%s366 + $0x210] sm:$0xff] %v2196
        %2325 = vst [vmem:[%s366 + $0x218] sm:$0xf] %v2197
        %2326 = vst [vmem:[%s366 + $0x21c] sm:$0xff] %v2198
        %2327 = vst [vmem:[%s366 + $0x224] sm:$0xf] %v2199
        %2328 = vst [vmem:[%s366 + $0x228] sm:$0xff] %v2200
        %2329 = vst [vmem:[%s366 + $0x230] sm:$0xf] %v2201
        %2330 = vst [vmem:[%s366 + $0x234] sm:$0xff] %v2202
        %2331 = vst [vmem:[%s366 + $0x23c] sm:$0xf] %v2203
        %2332 = vst [vmem:[%s366 + $0x240] sm:$0xff] %v2204
        %2333 = vst [vmem:[%s366 + $0x248] sm:$0xf] %v2205
        %2334 = vst [vmem:[%s366 + $0x24c] sm:$0xff] %v2206
        %2335 = vst [vmem:[%s366 + $0x254] sm:$0xf] %v2207
        %2336 = vst [vmem:[%s366 + $0x258] sm:$0xff] %v2208
        %2337 = vst [vmem:[%s366 + $0x260] sm:$0xf] %v2209
        %2338 = vst [vmem:[%s366 + $0x264] sm:$0xff] %v2210
        %2339 = vst [vmem:[%s366 + $0x26c] sm:$0xf] %v2211
        %2340 = vst [vmem:[%s366 + $0x270] sm:$0xff] %v2212
        %2341 = vst [vmem:[%s366 + $0x278] sm:$0xf] %v2213
        %2342 = vst [vmem:[%s366 + $0x27c] sm:$0xff] %v2214
        %2343 = vst [vmem:[%s366 + $0x284] sm:$0xf] %v2215
        %2344 = vst [vmem:[%s366 + $0x288] sm:$0xff] %v2216
        %2345 = vst [vmem:[%s366 + $0x290] sm:$0xf] %v2217
        %2346 = vst [vmem:[%s366 + $0x294] sm:$0xff] %v2218
        %2347 = vst [vmem:[%s366 + $0x29c] sm:$0xf] %v2219
        %2348 = vst [vmem:[%s366 + $0x2a0] sm:$0xff] %v2220
        %2349 = vst [vmem:[%s366 + $0x2a8] sm:$0xf] %v2221
        %2350 = vst [vmem:[%s366 + $0x2ac] sm:$0xff] %v2222
        %2351 = vst [vmem:[%s366 + $0x2b4] sm:$0xf] %v2223
        %2352 = vst [vmem:[%s366 + $0x2b8] sm:$0xff] %v2224
        %2353 = vst [vmem:[%s366 + $0x2c0] sm:$0xf] %v2225
        %2354 = vst [vmem:[%s366 + $0x2c4] sm:$0xff] %v2226
        %2355 = vst [vmem:[%s366 + $0x2cc] sm:$0xf] %v2227
        %2356 = vst [vmem:[%s366 + $0x2d0] sm:$0xff] %v2228
        %2357 = vst [vmem:[%s366 + $0x2d8] sm:$0xf] %v2229
        %2358 = vst [vmem:[%s366 + $0x2dc] sm:$0xff] %v2230
        %2359 = vst [vmem:[%s366 + $0x2e4] sm:$0xf] %v2231
        %2360 = vst [vmem:[%s366 + $0x2e8] sm:$0xff] %v2232
        %2361 = vst [vmem:[%s366 + $0x2f0] sm:$0xf] %v2233
        %2362 = vst [vmem:[%s366 + $0x2f4] sm:$0xff] %v2234
        %2363 = vst [vmem:[%s366 + $0x2fc] sm:$0xf] %v2235
        %s2364 = sand.u32 %s114, 1
        %s2365 = sand.u32 %s114, 1
        %s2366 = smul.addr %s2365, 768
        %s2367 = scalar_lea.vmem [#allocation3], %s2366
        // Predicated region
        $region59: #{causal_self_attention.3} parent=53 // pred_check
          %p2368 = pneg %p124
        $region60: #{causal_self_attention.3} parent=53 // pred_check_branch
          %2370 = sbr.rel (%p2368) target = $region62
        $region61: #{causal_self_attention.3} parent=53 // pred_region
          %s2371 = smul.u32 64, %s18
          %s2372 = smul.u32 3, %s19
          %s2373 = smul.addr %s2371, 6
          %s2374 = sadd.s32 %s2372, %s2373
          %s2375 = smul.addr %s2374, 4
          %s2376 = scalar_lea.vmem %s3, %s2375
          // Predicated region
          $region63: #{causal_self_attention.3} parent=61 // pred_check
            _
          $region64: #{causal_self_attention.3} parent=61 // pred_check_branch
            %2378 = sbr.rel (0) target = $region66
          $region65: #{causal_self_attention.3} parent=61 // pred_region
            // Predicated region
            $region67: #{causal_self_attention.3} parent=65 // pred_check
              _
            $region68: #{causal_self_attention.3} parent=65 // pred_check_branch
              %2380 = sbr.rel (0) target = $region70
            $region69: #{causal_self_attention.3} parent=65 // pred_region
              %s2381 = scalar_lea.vmem %s2367, 8 [#allocation3]
              %s2382 = scalar_lea.vmem %s2376, 8
              loop: start=0, step=1, limit=1
              $region71: #{causal_self_attention.3} parent=69 // loop_pre_header
                _
              $region72: #{causal_self_attention.3} parent=69 // loop_header
                %s2384 = sphi 0, %s2388
                %p2385 = scmp.ge.s32.totalorder %s2384, 1
                %s2389 = sphi %s2367, %s2367
                %s2390 = sphi %s2376, %s2376
              $region73: #{causal_self_attention.3} parent=69 // loop_header_branch
                %2387 = sbr.rel (%p2385) target = $region77
              $region74: #{causal_self_attention.3} parent=69 // loop_body
                %v2391 = vld [vmem:[%s2389] sm:$0xff]
                %2392 = vst [vmem:[%s2390] sm:$0xff] %v2391
                %v2393 = vld [vmem:[%s2389 + $0xc] sm:$0xff]
                %2394 = vst [vmem:[%s2390 + $0x18] sm:$0xff] %v2393
                %v2395 = vld [vmem:[%s2389 + $0x18] sm:$0xff]
                %2396 = vst [vmem:[%s2390 + $0x30] sm:$0xff] %v2395
                %v2397 = vld [vmem:[%s2389 + $0x24] sm:$0xff]
                %2398 = vst [vmem:[%s2390 + $0x48] sm:$0xff] %v2397
                %v2399 = vld [vmem:[%s2389 + $0x30] sm:$0xff]
                %2400 = vst [vmem:[%s2390 + $0x60] sm:$0xff] %v2399
                %v2401 = vld [vmem:[%s2389 + $0x3c] sm:$0xff]
                %2402 = vst [vmem:[%s2390 + $0x78] sm:$0xff] %v2401
                %v2403 = vld [vmem:[%s2389 + $0x48] sm:$0xff]
                %2404 = vst [vmem:[%s2390 + $0x90] sm:$0xff] %v2403
                %v2405 = vld [vmem:[%s2389 + $0x54] sm:$0xff]
                %2406 = vst [vmem:[%s2390 + $0xa8] sm:$0xff] %v2405
                %v2407 = vld [vmem:[%s2389 + $0x60] sm:$0xff]
                %2408 = vst [vmem:[%s2390 + $0xc0] sm:$0xff] %v2407
                %v2409 = vld [vmem:[%s2389 + $0x6c] sm:$0xff]
                %2410 = vst [vmem:[%s2390 + $0xd8] sm:$0xff] %v2409
                %v2411 = vld [vmem:[%s2389 + $0x78] sm:$0xff]
                %2412 = vst [vmem:[%s2390 + $0xf0] sm:$0xff] %v2411
                %v2413 = vld [vmem:[%s2389 + $0x84] sm:$0xff]
                %2414 = vst [vmem:[%s2390 + $0x108] sm:$0xff] %v2413
                %v2415 = vld [vmem:[%s2389 + $0x90] sm:$0xff]
                %2416 = vst [vmem:[%s2390 + $0x120] sm:$0xff] %v2415
                %v2417 = vld [vmem:[%s2389 + $0x9c] sm:$0xff]
                %2418 = vst [vmem:[%s2390 + $0x138] sm:$0xff] %v2417
                %v2419 = vld [vmem:[%s2389 + $0xa8] sm:$0xff]
                %2420 = vst [vmem:[%s2390 + $0x150] sm:$0xff] %v2419
                %v2421 = vld [vmem:[%s2389 + $0xb4] sm:$0xff]
                %2422 = vst [vmem:[%s2390 + $0x168] sm:$0xff] %v2421
                %v2423 = vld [vmem:[%s2389 + $0xc0] sm:$0xff]
                %2424 = vst [vmem:[%s2390 + $0x180] sm:$0xff] %v2423
                %v2425 = vld [vmem:[%s2389 + $0xcc] sm:$0xff]
                %2426 = vst [vmem:[%s2390 + $0x198] sm:$0xff] %v2425
                %v2427 = vld [vmem:[%s2389 + $0xd8] sm:$0xff]
                %2428 = vst [vmem:[%s2390 + $0x1b0] sm:$0xff] %v2427
                %v2429 = vld [vmem:[%s2389 + $0xe4] sm:$0xff]
                %2430 = vst [vmem:[%s2390 + $0x1c8] sm:$0xff] %v2429
                %v2431 = vld [vmem:[%s2389 + $0xf0] sm:$0xff]
                %2432 = vst [vmem:[%s2390 + $0x1e0] sm:$0xff] %v2431
                %v2433 = vld [vmem:[%s2389 + $0xfc] sm:$0xff]
                %2434 = vst [vmem:[%s2390 + $0x1f8] sm:$0xff] %v2433
                %v2435 = vld [vmem:[%s2389 + $0x108] sm:$0xff]
                %2436 = vst [vmem:[%s2390 + $0x210] sm:$0xff] %v2435
                %v2437 = vld [vmem:[%s2389 + $0x114] sm:$0xff]
                %2438 = vst [vmem:[%s2390 + $0x228] sm:$0xff] %v2437
                %v2439 = vld [vmem:[%s2389 + $0x120] sm:$0xff]
                %2440 = vst [vmem:[%s2390 + $0x240] sm:$0xff] %v2439
                %v2441 = vld [vmem:[%s2389 + $0x12c] sm:$0xff]
                %2442 = vst [vmem:[%s2390 + $0x258] sm:$0xff] %v2441
                %v2443 = vld [vmem:[%s2389 + $0x138] sm:$0xff]
                %2444 = vst [vmem:[%s2390 + $0x270] sm:$0xff] %v2443
                %v2445 = vld [vmem:[%s2389 + $0x144] sm:$0xff]
                %2446 = vst [vmem:[%s2390 + $0x288] sm:$0xff] %v2445
                %v2447 = vld [vmem:[%s2389 + $0x150] sm:$0xff]
                %2448 = vst [vmem:[%s2390 + $0x2a0] sm:$0xff] %v2447
                %v2449 = vld [vmem:[%s2389 + $0x15c] sm:$0xff]
                %2450 = vst [vmem:[%s2390 + $0x2b8] sm:$0xff] %v2449
                %v2451 = vld [vmem:[%s2389 + $0x168] sm:$0xff]
                %2452 = vst [vmem:[%s2390 + $0x2d0] sm:$0xff] %v2451
                %v2453 = vld [vmem:[%s2389 + $0x174] sm:$0xff]
                %2454 = vst [vmem:[%s2390 + $0x2e8] sm:$0xff] %v2453
                %v2455 = vld [vmem:[%s2389 + $0x180] sm:$0xff]
                %2456 = vst [vmem:[%s2390 + $0x300] sm:$0xff] %v2455
                %v2457 = vld [vmem:[%s2389 + $0x18c] sm:$0xff]
                %2458 = vst [vmem:[%s2390 + $0x318] sm:$0xff] %v2457
                %v2459 = vld [vmem:[%s2389 + $0x198] sm:$0xff]
                %2460 = vst [vmem:[%s2390 + $0x330] sm:$0xff] %v2459
                %v2461 = vld [vmem:[%s2389 + $0x1a4] sm:$0xff]
                %2462 = vst [vmem:[%s2390 + $0x348] sm:$0xff] %v2461
                %v2463 = vld [vmem:[%s2389 + $0x1b0] sm:$0xff]
                %2464 = vst [vmem:[%s2390 + $0x360] sm:$0xff] %v2463
                %v2465 = vld [vmem:[%s2389 + $0x1bc] sm:$0xff]
                %2466 = vst [vmem:[%s2390 + $0x378] sm:$0xff] %v2465
                %v2467 = vld [vmem:[%s2389 + $0x1c8] sm:$0xff]
                %2468 = vst [vmem:[%s2390 + $0x390] sm:$0xff] %v2467
                %v2469 = vld [vmem:[%s2389 + $0x1d4] sm:$0xff]
                %2470 = vst [vmem:[%s2390 + $0x3a8] sm:$0xff] %v2469
                %v2471 = vld [vmem:[%s2389 + $0x1e0] sm:$0xff]
                %2472 = vst [vmem:[%s2390 + $0x3c0] sm:$0xff] %v2471
                %v2473 = vld [vmem:[%s2389 + $0x1ec] sm:$0xff]
                %2474 = vst [vmem:[%s2390 + $0x3d8] sm:$0xff] %v2473
                %v2475 = vld [vmem:[%s2389 + $0x1f8] sm:$0xff]
                %2476 = vst [vmem:[%s2390 + $0x3f0] sm:$0xff] %v2475
                %v2477 = vld [vmem:[%s2389 + $0x204] sm:$0xff]
                %2478 = vst [vmem:[%s2390 + $0x408] sm:$0xff] %v2477
                %v2479 = vld [vmem:[%s2389 + $0x210] sm:$0xff]
                %2480 = vst [vmem:[%s2390 + $0x420] sm:$0xff] %v2479
                %v2481 = vld [vmem:[%s2389 + $0x21c] sm:$0xff]
                %2482 = vst [vmem:[%s2390 + $0x438] sm:$0xff] %v2481
                %v2483 = vld [vmem:[%s2389 + $0x228] sm:$0xff]
                %2484 = vst [vmem:[%s2390 + $0x450] sm:$0xff] %v2483
                %v2485 = vld [vmem:[%s2389 + $0x234] sm:$0xff]
                %2486 = vst [vmem:[%s2390 + $0x468] sm:$0xff] %v2485
                %v2487 = vld [vmem:[%s2389 + $0x240] sm:$0xff]
                %2488 = vst [vmem:[%s2390 + $0x480] sm:$0xff] %v2487
                %v2489 = vld [vmem:[%s2389 + $0x24c] sm:$0xff]
                %2490 = vst [vmem:[%s2390 + $0x498] sm:$0xff] %v2489
                %v2491 = vld [vmem:[%s2389 + $0x258] sm:$0xff]
                %2492 = vst [vmem:[%s2390 + $0x4b0] sm:$0xff] %v2491
                %v2493 = vld [vmem:[%s2389 + $0x264] sm:$0xff]
                %2494 = vst [vmem:[%s2390 + $0x4c8] sm:$0xff] %v2493
                %v2495 = vld [vmem:[%s2389 + $0x270] sm:$0xff]
                %2496 = vst [vmem:[%s2390 + $0x4e0] sm:$0xff] %v2495
                %v2497 = vld [vmem:[%s2389 + $0x27c] sm:$0xff]
                %2498 = vst [vmem:[%s2390 + $0x4f8] sm:$0xff] %v2497
                %v2499 = vld [vmem:[%s2389 + $0x288] sm:$0xff]
                %2500 = vst [vmem:[%s2390 + $0x510] sm:$0xff] %v2499
                %v2501 = vld [vmem:[%s2389 + $0x294] sm:$0xff]
                %2502 = vst [vmem:[%s2390 + $0x528] sm:$0xff] %v2501
                %v2503 = vld [vmem:[%s2389 + $0x2a0] sm:$0xff]
                %2504 = vst [vmem:[%s2390 + $0x540] sm:$0xff] %v2503
                %v2505 = vld [vmem:[%s2389 + $0x2ac] sm:$0xff]
                %2506 = vst [vmem:[%s2390 + $0x558] sm:$0xff] %v2505
                %v2507 = vld [vmem:[%s2389 + $0x2b8] sm:$0xff]
                %2508 = vst [vmem:[%s2390 + $0x570] sm:$0xff] %v2507
                %v2509 = vld [vmem:[%s2389 + $0x2c4] sm:$0xff]
                %2510 = vst [vmem:[%s2390 + $0x588] sm:$0xff] %v2509
                %v2511 = vld [vmem:[%s2389 + $0x2d0] sm:$0xff]
                %2512 = vst [vmem:[%s2390 + $0x5a0] sm:$0xff] %v2511
                %v2513 = vld [vmem:[%s2389 + $0x2dc] sm:$0xff]
                %2514 = vst [vmem:[%s2390 + $0x5b8] sm:$0xff] %v2513
                %v2515 = vld [vmem:[%s2389 + $0x2e8] sm:$0xff]
                %2516 = vst [vmem:[%s2390 + $0x5d0] sm:$0xff] %v2515
                %v2517 = vld [vmem:[%s2389 + $0x2f4] sm:$0xff]
                %2518 = vst [vmem:[%s2390 + $0x5e8] sm:$0xff] %v2517
              $region75: #{causal_self_attention.3} parent=69 // loop_footer
                %s2388 = sadd.s32 1, %s2384
              $region76: #{causal_self_attention.3} parent=69 // loop_footer_branch
                %2383 = sbr.rel target = $region72
              $region77: #{causal_self_attention.3} parent=69 // loop_exit
                _
              %s2520 = ssub.s32 16, 1
              loop: start=0, step=1, limit=1
              $region78: #{causal_self_attention.3} parent=69 // loop_pre_header
                _
              $region79: #{causal_self_attention.3} parent=69 // loop_header
                %s2522 = sphi 0, %s2526
                %p2523 = scmp.ge.s32.totalorder %s2522, 1
                %s2527 = sphi %s2381, %s2381
                %s2528 = sphi %s2382, %s2382
              $region80: #{causal_self_attention.3} parent=69 // loop_header_branch
                %2525 = sbr.rel (%p2523) target = $region84
              $region81: #{causal_self_attention.3} parent=69 // loop_body
                %v2529 = vld [vmem:[%s2527] sm:%s2520]
                %2530 = vst [vmem:[%s2528] sm:%s2520] %v2529
                %v2531 = vld [vmem:[%s2527 + $0xc] sm:%s2520]
                %2532 = vst [vmem:[%s2528 + $0x18] sm:%s2520] %v2531
                %v2533 = vld [vmem:[%s2527 + $0x18] sm:%s2520]
                %2534 = vst [vmem:[%s2528 + $0x30] sm:%s2520] %v2533
                %v2535 = vld [vmem:[%s2527 + $0x24] sm:%s2520]
                %2536 = vst [vmem:[%s2528 + $0x48] sm:%s2520] %v2535
                %v2537 = vld [vmem:[%s2527 + $0x30] sm:%s2520]
                %2538 = vst [vmem:[%s2528 + $0x60] sm:%s2520] %v2537
                %v2539 = vld [vmem:[%s2527 + $0x3c] sm:%s2520]
                %2540 = vst [vmem:[%s2528 + $0x78] sm:%s2520] %v2539
                %v2541 = vld [vmem:[%s2527 + $0x48] sm:%s2520]
                %2542 = vst [vmem:[%s2528 + $0x90] sm:%s2520] %v2541
                %v2543 = vld [vmem:[%s2527 + $0x54] sm:%s2520]
                %2544 = vst [vmem:[%s2528 + $0xa8] sm:%s2520] %v2543
                %v2545 = vld [vmem:[%s2527 + $0x60] sm:%s2520]
                %2546 = vst [vmem:[%s2528 + $0xc0] sm:%s2520] %v2545
                %v2547 = vld [vmem:[%s2527 + $0x6c] sm:%s2520]
                %2548 = vst [vmem:[%s2528 + $0xd8] sm:%s2520] %v2547
                %v2549 = vld [vmem:[%s2527 + $0x78] sm:%s2520]
                %2550 = vst [vmem:[%s2528 + $0xf0] sm:%s2520] %v2549
                %v2551 = vld [vmem:[%s2527 + $0x84] sm:%s2520]
                %2552 = vst [vmem:[%s2528 + $0x108] sm:%s2520] %v2551
                %v2553 = vld [vmem:[%s2527 + $0x90] sm:%s2520]
                %2554 = vst [vmem:[%s2528 + $0x120] sm:%s2520] %v2553
                %v2555 = vld [vmem:[%s2527 + $0x9c] sm:%s2520]
                %2556 = vst [vmem:[%s2528 + $0x138] sm:%s2520] %v2555
                %v2557 = vld [vmem:[%s2527 + $0xa8] sm:%s2520]
                %2558 = vst [vmem:[%s2528 + $0x150] sm:%s2520] %v2557
                %v2559 = vld [vmem:[%s2527 + $0xb4] sm:%s2520]
                %2560 = vst [vmem:[%s2528 + $0x168] sm:%s2520] %v2559
                %v2561 = vld [vmem:[%s2527 + $0xc0] sm:%s2520]
                %2562 = vst [vmem:[%s2528 + $0x180] sm:%s2520] %v2561
                %v2563 = vld [vmem:[%s2527 + $0xcc] sm:%s2520]
                %2564 = vst [vmem:[%s2528 + $0x198] sm:%s2520] %v2563
                %v2565 = vld [vmem:[%s2527 + $0xd8] sm:%s2520]
                %2566 = vst [vmem:[%s2528 + $0x1b0] sm:%s2520] %v2565
                %v2567 = vld [vmem:[%s2527 + $0xe4] sm:%s2520]
                %2568 = vst [vmem:[%s2528 + $0x1c8] sm:%s2520] %v2567
                %v2569 = vld [vmem:[%s2527 + $0xf0] sm:%s2520]
                %2570 = vst [vmem:[%s2528 + $0x1e0] sm:%s2520] %v2569
                %v2571 = vld [vmem:[%s2527 + $0xfc] sm:%s2520]
                %2572 = vst [vmem:[%s2528 + $0x1f8] sm:%s2520] %v2571
                %v2573 = vld [vmem:[%s2527 + $0x108] sm:%s2520]
                %2574 = vst [vmem:[%s2528 + $0x210] sm:%s2520] %v2573
                %v2575 = vld [vmem:[%s2527 + $0x114] sm:%s2520]
                %2576 = vst [vmem:[%s2528 + $0x228] sm:%s2520] %v2575
                %v2577 = vld [vmem:[%s2527 + $0x120] sm:%s2520]
                %2578 = vst [vmem:[%s2528 + $0x240] sm:%s2520] %v2577
                %v2579 = vld [vmem:[%s2527 + $0x12c] sm:%s2520]
                %2580 = vst [vmem:[%s2528 + $0x258] sm:%s2520] %v2579
                %v2581 = vld [vmem:[%s2527 + $0x138] sm:%s2520]
                %2582 = vst [vmem:[%s2528 + $0x270] sm:%s2520] %v2581
                %v2583 = vld [vmem:[%s2527 + $0x144] sm:%s2520]
                %2584 = vst [vmem:[%s2528 + $0x288] sm:%s2520] %v2583
                %v2585 = vld [vmem:[%s2527 + $0x150] sm:%s2520]
                %2586 = vst [vmem:[%s2528 + $0x2a0] sm:%s2520] %v2585
                %v2587 = vld [vmem:[%s2527 + $0x15c] sm:%s2520]
                %2588 = vst [vmem:[%s2528 + $0x2b8] sm:%s2520] %v2587
                %v2589 = vld [vmem:[%s2527 + $0x168] sm:%s2520]
                %2590 = vst [vmem:[%s2528 + $0x2d0] sm:%s2520] %v2589
                %v2591 = vld [vmem:[%s2527 + $0x174] sm:%s2520]
                %2592 = vst [vmem:[%s2528 + $0x2e8] sm:%s2520] %v2591
                %v2593 = vld [vmem:[%s2527 + $0x180] sm:%s2520]
                %2594 = vst [vmem:[%s2528 + $0x300] sm:%s2520] %v2593
                %v2595 = vld [vmem:[%s2527 + $0x18c] sm:%s2520]
                %2596 = vst [vmem:[%s2528 + $0x318] sm:%s2520] %v2595
                %v2597 = vld [vmem:[%s2527 + $0x198] sm:%s2520]
                %2598 = vst [vmem:[%s2528 + $0x330] sm:%s2520] %v2597
                %v2599 = vld [vmem:[%s2527 + $0x1a4] sm:%s2520]
                %2600 = vst [vmem:[%s2528 + $0x348] sm:%s2520] %v2599
                %v2601 = vld [vmem:[%s2527 + $0x1b0] sm:%s2520]
                %2602 = vst [vmem:[%s2528 + $0x360] sm:%s2520] %v2601
                %v2603 = vld [vmem:[%s2527 + $0x1bc] sm:%s2520]
                %2604 = vst [vmem:[%s2528 + $0x378] sm:%s2520] %v2603
                %v2605 = vld [vmem:[%s2527 + $0x1c8] sm:%s2520]
                %2606 = vst [vmem:[%s2528 + $0x390] sm:%s2520] %v2605
                %v2607 = vld [vmem:[%s2527 + $0x1d4] sm:%s2520]
                %2608 = vst [vmem:[%s2528 + $0x3a8] sm:%s2520] %v2607
                %v2609 = vld [vmem:[%s2527 + $0x1e0] sm:%s2520]
                %2610 = vst [vmem:[%s2528 + $0x3c0] sm:%s2520] %v2609
                %v2611 = vld [vmem:[%s2527 + $0x1ec] sm:%s2520]
                %2612 = vst [vmem:[%s2528 + $0x3d8] sm:%s2520] %v2611
                %v2613 = vld [vmem:[%s2527 + $0x1f8] sm:%s2520]
                %2614 = vst [vmem:[%s2528 + $0x3f0] sm:%s2520] %v2613
                %v2615 = vld [vmem:[%s2527 + $0x204] sm:%s2520]
                %2616 = vst [vmem:[%s2528 + $0x408] sm:%s2520] %v2615
                %v2617 = vld [vmem:[%s2527 + $0x210] sm:%s2520]
                %2618 = vst [vmem:[%s2528 + $0x420] sm:%s2520] %v2617
                %v2619 = vld [vmem:[%s2527 + $0x21c] sm:%s2520]
                %2620 = vst [vmem:[%s2528 + $0x438] sm:%s2520] %v2619
                %v2621 = vld [vmem:[%s2527 + $0x228] sm:%s2520]
                %2622 = vst [vmem:[%s2528 + $0x450] sm:%s2520] %v2621
                %v2623 = vld [vmem:[%s2527 + $0x234] sm:%s2520]
                %2624 = vst [vmem:[%s2528 + $0x468] sm:%s2520] %v2623
                %v2625 = vld [vmem:[%s2527 + $0x240] sm:%s2520]
                %2626 = vst [vmem:[%s2528 + $0x480] sm:%s2520] %v2625
                %v2627 = vld [vmem:[%s2527 + $0x24c] sm:%s2520]
                %2628 = vst [vmem:[%s2528 + $0x498] sm:%s2520] %v2627
                %v2629 = vld [vmem:[%s2527 + $0x258] sm:%s2520]
                %2630 = vst [vmem:[%s2528 + $0x4b0] sm:%s2520] %v2629
                %v2631 = vld [vmem:[%s2527 + $0x264] sm:%s2520]
                %2632 = vst [vmem:[%s2528 + $0x4c8] sm:%s2520] %v2631
                %v2633 = vld [vmem:[%s2527 + $0x270] sm:%s2520]
                %2634 = vst [vmem:[%s2528 + $0x4e0] sm:%s2520] %v2633
                %v2635 = vld [vmem:[%s2527 + $0x27c] sm:%s2520]
                %2636 = vst [vmem:[%s2528 + $0x4f8] sm:%s2520] %v2635
                %v2637 = vld [vmem:[%s2527 + $0x288] sm:%s2520]
                %2638 = vst [vmem:[%s2528 + $0x510] sm:%s2520] %v2637
                %v2639 = vld [vmem:[%s2527 + $0x294] sm:%s2520]
                %2640 = vst [vmem:[%s2528 + $0x528] sm:%s2520] %v2639
                %v2641 = vld [vmem:[%s2527 + $0x2a0] sm:%s2520]
                %2642 = vst [vmem:[%s2528 + $0x540] sm:%s2520] %v2641
                %v2643 = vld [vmem:[%s2527 + $0x2ac] sm:%s2520]
                %2644 = vst [vmem:[%s2528 + $0x558] sm:%s2520] %v2643
                %v2645 = vld [vmem:[%s2527 + $0x2b8] sm:%s2520]
                %2646 = vst [vmem:[%s2528 + $0x570] sm:%s2520] %v2645
                %v2647 = vld [vmem:[%s2527 + $0x2c4] sm:%s2520]
                %2648 = vst [vmem:[%s2528 + $0x588] sm:%s2520] %v2647
                %v2649 = vld [vmem:[%s2527 + $0x2d0] sm:%s2520]
                %2650 = vst [vmem:[%s2528 + $0x5a0] sm:%s2520] %v2649
                %v2651 = vld [vmem:[%s2527 + $0x2dc] sm:%s2520]
                %2652 = vst [vmem:[%s2528 + $0x5b8] sm:%s2520] %v2651
                %v2653 = vld [vmem:[%s2527 + $0x2e8] sm:%s2520]
                %2654 = vst [vmem:[%s2528 + $0x5d0] sm:%s2520] %v2653
                %v2655 = vld [vmem:[%s2527 + $0x2f4] sm:%s2520]
                %2656 = vst [vmem:[%s2528 + $0x5e8] sm:%s2520] %v2655
              $region82: #{causal_self_attention.3} parent=69 // loop_footer
                %s2526 = sadd.s32 1, %s2522
              $region83: #{causal_self_attention.3} parent=69 // loop_footer_branch
                %2521 = sbr.rel target = $region79
              $region84: #{causal_self_attention.3} parent=69 // loop_exit
                _
            $region70: #{causal_self_attention.3} parent=65 // pred_fallthru
              _
          $region66: #{causal_self_attention.3} parent=61 // pred_fallthru
            _
          %2657 = vnop
        $region62: #{causal_self_attention.3} parent=53 // pred_fallthru
          _
      $region54: #{causal_self_attention.3} parent=5 // pred_fallthru
        _
      %p2658 = scmp.le.s32.totalorder 2, %s9
      // Predicated region
      $region85: #{causal_self_attention.3} parent=5 // pred_check
        %p2659 = pneg %p2658
      $region86: #{causal_self_attention.3} parent=5 // pred_check_branch
        %2661 = sbr.rel (%p2659) target = $region88
      $region87: #{causal_self_attention.3} parent=5 // pred_region
        %s2662 = ssub.s32 %s9, 2
        // Predicated region
        $region89: #{causal_self_attention.3} parent=87 // pred_check
          %p2663 = pneg %p130
        $region90: #{causal_self_attention.3} parent=87 // pred_check_branch
          %2665 = sbr.rel (%p2663) target = $region92
        $region91: #{causal_self_attention.3} parent=87 // pred_region
          %s2666 = sand.u32 %s115, 1
          %s2667 = sand.u32 %s115, 1
          %s2668 = smul.addr %s2667, 768
          %s2669 = scalar_lea.vmem [#allocation3], %s2668
        $region92: #{causal_self_attention.3} parent=87 // pred_fallthru
          _
      $region88: #{causal_self_attention.3} parent=5 // pred_fallthru
        _
    $region6: #{causal_self_attention.3} parent=1 // loop_footer
      %s13 = sadd.s32 1, %s9
    $region7: #{causal_self_attention.3} parent=1 // loop_footer_branch
      %8 = sbr.rel target = $region3
    $region8: #{causal_self_attention.3} parent=1 // loop_exit
      _

// kernel: causal_self_attention.4
$region0: #{causal_self_attention.4}
  #allocation0 [shape = 'u32[]', space=smem, size = 0x4, offset = 0x4, fixed_abs, tag = 'smem constant byte address 0x4 - core index']
  #allocation1 [shape = 'u32[72,128]{1,0:T(1,128)}', space=vmem, size = 0x9000, scoped, tag = 'internal scratch']
  #allocation2 [shape = 'f32[128,1]{1,0:T(8,128)}', space=vmem, size = 0x10000, scoped, tag = 'scratch operand']
  #allocation3 [shape = 'f32[128,1]{1,0:T(8,128)}', space=vmem, size = 0x10000, scoped, tag = 'scratch operand']
  #allocation4 [shape = 'f32[128,64]{1,0:T(8,128)}', space=vmem, size = 0x10000, scoped, tag = 'scratch operand']
  %s0 = inlined_call_operand.vmem [shape: bf16[2,256,768], index: 0, kind: input, shape index: {}, may-alias: {0,1,2}]
  %s1 = inlined_call_operand.vmem [shape: bf16[2,256,768], index: 1, kind: input, shape index: {}, may-alias: {0,1,2}]
  %s2 = inlined_call_operand.vmem [shape: bf16[2,256,768], index: 2, kind: input, shape index: {}, may-alias: {0,1,2}]
  %s3 = inlined_call_operand.vmem [shape: bf16[2,256,256], index: 3, kind: output, shape index: {}]
  %s4 = sld [smem:[#allocation0]]
  $region219: #{causal_self_attention.4} parent=0
    _
  %s6 = ssub.s32 1, %s4
  %s7 = scalar_select 0, %s6, %s4
  $region1: #{causal_self_attention.4} parent=0
    #allocation5 [shape = 'u8[65536]{0}', space=vmem, size = 0x10000, scoped, tag = 'input window, operand 0']
    #allocation6 [shape = 'u8[131072]{0}', space=vmem, size = 0x20000, scoped, tag = 'input window, operand 1']
    #allocation7 [shape = 'u8[131072]{0}', space=vmem, size = 0x20000, scoped, tag = 'input window, operand 2']
    #allocation8 [shape = 'u8[65536]{0}', space=vmem, size = 0x10000, scoped, tag = 'output window, operand 0']
    loop: start=0, step=1, limit=10
    $region2: #{causal_self_attention.4} parent=1 // loop_pre_header
      _
    $region3: #{causal_self_attention.4} parent=1 // loop_header
      %s9 = sphi 0, %s13
      %p10 = scmp.ge.s32.totalorder %s9, 10
      %s16 = sphi 0, %s35
      %s17 = sphi 0, %s31
      %s18 = sphi 0, %s27
      %s19 = sphi 0, %s16
      %s20 = sphi 0, %s17
      %s21 = sphi 0, %s18
      %s22 = sphi 0, %s19
      %s23 = sphi 0, %s20
      %s24 = sphi 0, %s21
      %s42 = sphi 0, %s44
      %s45 = sphi 0, %s42
      %s46 = sphi 0, %s45
      %s62 = sphi 0, %s46
      %s72 = sphi 0, %s74
      %s75 = sphi 0, %s72
      %s76 = sphi 0, %s75
      %s92 = sphi 0, %s76
      %s102 = sphi 0, %s104
      %s105 = sphi 0, %s102
      %s106 = sphi 0, %s105
      %s122 = sphi 0, %s106
      %s132 = sphi 0, %s134
      %s135 = sphi 0, %s132
      %s136 = sphi 0, %s135
      %s152 = sphi 0, %s136
    $region4: #{causal_self_attention.4} parent=1 // loop_header_branch
      %12 = sbr.rel (%p10) target = $region8
    $region5: #{causal_self_attention.4} parent=1 // loop_body
      %s14 = ssub.s32 %s9, 1
      %s15 = ssub.s32 %s9, 2
      %s25 = sadd.s32 1, %s18
      %p26 = scmp.ge.s32.totalorder %s25, 2
      %s27 = scalar_select %p26, 0, %s25
      %s28 = sadd.s32 1, %s17
      %s29 = scalar_select %p26, %s28, %s17
      %p30 = scmp.ge.s32.totalorder %s29, 2
      %s31 = scalar_select %p30, 0, %s29
      %s32 = sadd.s32 1, %s16
      %s33 = scalar_select %p30, %s32, %s16
      %p34 = scmp.ge.s32.totalorder %s33, 2
      %s35 = scalar_select %p34, 0, %s33
      %s36 = ssub.s32 %s16, %s35
      %s37 = ssub.s32 %s18, %s27
      %s38 = sor.u32 %s36, %s37
      %s39 = ssub.s32 %s17, %s31
      %s40 = sor.u32 %s38, %s39
      %p41 = scmp.eq.s32.totalorder %s40, 0
      %s43 = sadd.s32 %s42, 1
      %s44 = scalar_select %p41, %s42, %s43
      %p47 = pneg %p41
      %p48 = scmp.eq.s32.totalorder %s9, 7
      %p49 = por %p47, %p48
      %p50 = scmp.ne.s32.totalorder %s42, %s45
      %p51 = scmp.eq.s32.totalorder %s9, 0
      %p52 = por %p50, %p51
      %p53 = scmp.ne.s32.totalorder %s42, %s45
      %p54 = scmp.eq.s32.totalorder %s14, 7
      %p55 = por %p53, %p54
      %p56 = scmp.ne.s32.totalorder %s45, %s46
      %p57 = scmp.eq.s32.totalorder %s14, 0
      %p58 = por %p56, %p57
      %p59 = scmp.ne.s32.totalorder %s45, %s46
      %p60 = scmp.eq.s32.totalorder %s15, 7
      %p61 = por %p59, %p60
      %p63 = scmp.ne.s32.totalorder %s46, %s62
      %p64 = scmp.eq.s32.totalorder %s15, 0
      %p65 = por %p63, %p64
      %s66 = sadd.s32 %s17, 2
      %s67 = sadd.s32 %s31, 2
      %s68 = ssub.s32 %s16, %s35
      %s69 = ssub.s32 %s66, %s67
      %s70 = sor.u32 %s68, %s69
      %p71 = scmp.eq.s32.totalorder %s70, 0
      %s73 = sadd.s32 %s72, 1
      %s74 = scalar_select %p71, %s72, %s73
      %p77 = pneg %p71
      %p78 = scmp.eq.s32.totalorder %s9, 7
      %p79 = por %p77, %p78
      %p80 = scmp.ne.s32.totalorder %s72, %s75
      %p81 = scmp.eq.s32.totalorder %s9, 0
      %p82 = por %p80, %p81
      %p83 = scmp.ne.s32.totalorder %s72, %s75
      %p84 = scmp.eq.s32.totalorder %s14, 7
      %p85 = por %p83, %p84
      %p86 = scmp.ne.s32.totalorder %s75, %s76
      %p87 = scmp.eq.s32.totalorder %s14, 0
      %p88 = por %p86, %p87
      %p89 = scmp.ne.s32.totalorder %s75, %s76
      %p90 = scmp.eq.s32.totalorder %s15, 7
      %p91 = por %p89, %p90
      %p93 = scmp.ne.s32.totalorder %s76, %s92
      %p94 = scmp.eq.s32.totalorder %s15, 0
      %p95 = por %p93, %p94
      %s96 = sadd.s32 %s17, 4
      %s97 = sadd.s32 %s31, 4
      %s98 = ssub.s32 %s16, %s35
      %s99 = ssub.s32 %s96, %s97
      %s100 = sor.u32 %s98, %s99
      %p101 = scmp.eq.s32.totalorder %s100, 0
      %s103 = sadd.s32 %s102, 1
      %s104 = scalar_select %p101, %s102, %s103
      %p107 = pneg %p101
      %p108 = scmp.eq.s32.totalorder %s9, 7
      %p109 = por %p107, %p108
      %p110 = scmp.ne.s32.totalorder %s102, %s105
      %p111 = scmp.eq.s32.totalorder %s9, 0
      %p112 = por %p110, %p111
      %p113 = scmp.ne.s32.totalorder %s102, %s105
      %p114 = scmp.eq.s32.totalorder %s14, 7
      %p115 = por %p113, %p114
      %p116 = scmp.ne.s32.totalorder %s105, %s106
      %p117 = scmp.eq.s32.totalorder %s14, 0
      %p118 = por %p116, %p117
      %p119 = scmp.ne.s32.totalorder %s105, %s106
      %p120 = scmp.eq.s32.totalorder %s15, 7
      %p121 = por %p119, %p120
      %p123 = scmp.ne.s32.totalorder %s106, %s122
      %p124 = scmp.eq.s32.totalorder %s15, 0
      %p125 = por %p123, %p124
      %s126 = ssub.s32 %s16, %s35
      %s127 = ssub.s32 %s18, %s27
      %s128 = sor.u32 %s126, %s127
      %s129 = ssub.s32 %s17, %s31
      %s130 = sor.u32 %s128, %s129
      %p131 = scmp.eq.s32.totalorder %s130, 0
      %s133 = sadd.s32 %s132, 1
      %s134 = scalar_select %p131, %s132, %s133
      %p137 = pneg %p131
      %p138 = scmp.eq.s32.totalorder %s9, 7
      %p139 = por %p137, %p138
      %p140 = scmp.ne.s32.totalorder %s132, %s135
      %p141 = scmp.eq.s32.totalorder %s9, 0
      %p142 = por %p140, %p141
      %p143 = scmp.ne.s32.totalorder %s132, %s135
      %p144 = scmp.eq.s32.totalorder %s14, 7
      %p145 = por %p143, %p144
      %p146 = scmp.ne.s32.totalorder %s135, %s136
      %p147 = scmp.eq.s32.totalorder %s14, 0
      %p148 = por %p146, %p147
      %p149 = scmp.ne.s32.totalorder %s135, %s136
      %p150 = scmp.eq.s32.totalorder %s15, 7
      %p151 = por %p149, %p150
      %p153 = scmp.ne.s32.totalorder %s136, %s152
      %p154 = scmp.eq.s32.totalorder %s15, 0
      %p155 = por %p153, %p154
      %p156 = scmp.le.s32.totalorder 1, %s9
      %p157 = scmp.lt.s32.totalorder %s9, 9
      %p158 = pnand %p156, %p157
      %p159 = pneg %p158
      // Predicated region
      $region9: #{causal_self_attention.4} parent=5 // pred_check
        _
      $region10: #{causal_self_attention.4} parent=5 // pred_check_branch
        %161 = sbr.rel (%p158) target = $region12
      $region11: #{causal_self_attention.4} parent=5 // pred_region
        %s162 = ssub.s32 %s9, 1
      $region12: #{causal_self_attention.4} parent=5 // pred_fallthru
        _
      %p163 = scmp.lt.s32.totalorder %s9, 8
      // Predicated region
      $region13: #{causal_self_attention.4} parent=5 // pred_check
        %p164 = pneg %p163
      $region14: #{causal_self_attention.4} parent=5 // pred_check_branch
        %166 = sbr.rel (%p164) target = $region16
      $region15: #{causal_self_attention.4} parent=5 // pred_region
        // Predicated region
        $region17: #{causal_self_attention.4} parent=15 // pred_check
          %p167 = pneg %p52
        $region18: #{causal_self_attention.4} parent=15 // pred_check_branch
          %169 = sbr.rel (%p167) target = $region20
        $region19: #{causal_self_attention.4} parent=15 // pred_region
          %s170 = sand.u32 %s42, 1
          %s171 = sand.u32 %s42, 1
          %s172 = smul.addr %s171, 64
          %s173 = scalar_lea.vmem [#allocation5], %s172
          %s174 = smul.u32 16, %s18
          %s175 = smul.addr %s174, 6
          %s176 = sadd.s32 %s17, %s175
          %s177 = smul.addr %s16, 192
          %s178 = sadd.s32 %s176, %s177
          %s179 = smul.addr %s178, 4
          %s180 = scalar_lea.vmem %s0, %s179
          // Predicated region
          $region21: #{causal_self_attention.4} parent=19 // pred_check
            _
          $region22: #{causal_self_attention.4} parent=19 // pred_check_branch
            %182 = sbr.rel (0) target = $region24
          $region23: #{causal_self_attention.4} parent=19 // pred_region
            // Predicated region
            $region25: #{causal_self_attention.4} parent=23 // pred_check
              _
            $region26: #{causal_self_attention.4} parent=23 // pred_check_branch
              %184 = sbr.rel target = $region28
            $region27: #{causal_self_attention.4} parent=23 // pred_region
              // Predicated region
              $region40: #{causal_self_attention.4} parent=27 // pred_check
                _
              $region41: #{causal_self_attention.4} parent=27 // pred_check_branch
                %230 = sbr.rel (0) target = $region43
              $region42: #{causal_self_attention.4} parent=27 // pred_region
                loop: start=0, step=1, limit=1
                $region44: #{causal_self_attention.4} parent=42 // loop_pre_header
                  _
                $region45: #{causal_self_attention.4} parent=42 // loop_header
                  %s232 = sphi 0, %s236
                  %p233 = scmp.ge.s32.totalorder %s232, 1
                  %s237 = sphi %s180, %s180
                  %s238 = sphi %s173, %s173
                $region46: #{causal_self_attention.4} parent=42 // loop_header_branch
                  %235 = sbr.rel (%p233) target = $region50
                $region47: #{causal_self_attention.4} parent=42 // loop_body
                  _
                $region48: #{causal_self_attention.4} parent=42 // loop_footer
                  %s236 = sadd.s32 1, %s232
                $region49: #{causal_self_attention.4} parent=42 // loop_footer_branch
                  %231 = sbr.rel target = $region45
                $region50: #{causal_self_attention.4} parent=42 // loop_exit
                  _
                %s240 = ssub.s32 16, 1
                loop: start=0, step=1, limit=1
                $region51: #{causal_self_attention.4} parent=42 // loop_pre_header
                  _
                $region52: #{causal_self_attention.4} parent=42 // loop_header
                  %s242 = sphi 0, %s246
                  %p243 = scmp.ge.s32.totalorder %s242, 1
                  %s247 = sphi %s180, %s180
                  %s248 = sphi %s173, %s173
                $region53: #{causal_self_attention.4} parent=42 // loop_header_branch
                  %245 = sbr.rel (%p243) target = $region57
                $region54: #{causal_self_attention.4} parent=42 // loop_body
                  %v249 = vld [vmem:[%s247] sm:%s240]
                  %250 = vst [vmem:[%s248] sm:%s240] %v249
                  %v251 = vld [vmem:[%s247 + $0x18] sm:%s240]
                  %252 = vst [vmem:[%s248 + $0x4] sm:%s240] %v251
                  %v253 = vld [vmem:[%s247 + $0x30] sm:%s240]
                  %254 = vst [vmem:[%s248 + $0x8] sm:%s240] %v253
                  %v255 = vld [vmem:[%s247 + $0x48] sm:%s240]
                  %256 = vst [vmem:[%s248 + $0xc] sm:%s240] %v255
                  %v257 = vld [vmem:[%s247 + $0x60] sm:%s240]
                  %258 = vst [vmem:[%s248 + $0x10] sm:%s240] %v257
                  %v259 = vld [vmem:[%s247 + $0x78] sm:%s240]
                  %260 = vst [vmem:[%s248 + $0x14] sm:%s240] %v259
                  %v261 = vld [vmem:[%s247 + $0x90] sm:%s240]
                  %262 = vst [vmem:[%s248 + $0x18] sm:%s240] %v261
                  %v263 = vld [vmem:[%s247 + $0xa8] sm:%s240]
                  %264 = vst [vmem:[%s248 + $0x1c] sm:%s240] %v263
                  %v265 = vld [vmem:[%s247 + $0xc0] sm:%s240]
                  %266 = vst [vmem:[%s248 + $0x20] sm:%s240] %v265
                  %v267 = vld [vmem:[%s247 + $0xd8] sm:%s240]
                  %268 = vst [vmem:[%s248 + $0x24] sm:%s240] %v267
                  %v269 = vld [vmem:[%s247 + $0xf0] sm:%s240]
                  %270 = vst [vmem:[%s248 + $0x28] sm:%s240] %v269
                  %v271 = vld [vmem:[%s247 + $0x108] sm:%s240]
                  %272 = vst [vmem:[%s248 + $0x2c] sm:%s240] %v271
                  %v273 = vld [vmem:[%s247 + $0x120] sm:%s240]
                  %274 = vst [vmem:[%s248 + $0x30] sm:%s240] %v273
                  %v275 = vld [vmem:[%s247 + $0x138] sm:%s240]
                  %276 = vst [vmem:[%s248 + $0x34] sm:%s240] %v275
                  %v277 = vld [vmem:[%s247 + $0x150] sm:%s240]
                  %278 = vst [vmem:[%s248 + $0x38] sm:%s240] %v277
                  %v279 = vld [vmem:[%s247 + $0x168] sm:%s240]
                  %280 = vst [vmem:[%s248 + $0x3c] sm:%s240] %v279
                $region55: #{causal_self_attention.4} parent=42 // loop_footer
                  %s246 = sadd.s32 1, %s242
                $region56: #{causal_self_attention.4} parent=42 // loop_footer_branch
                  %241 = sbr.rel target = $region52
                $region57: #{causal_self_attention.4} parent=42 // loop_exit
                  _
              $region43: #{causal_self_attention.4} parent=27 // pred_fallthru
                _
            $region28: #{causal_self_attention.4} parent=23 // pred_fallthru
              _
            // Predicated region
            $region29: #{causal_self_attention.4} parent=23 // pred_check
              _
            $region30: #{causal_self_attention.4} parent=23 // pred_check_branch
              %186 = sbr.rel (0) target = $region32
            $region31: #{causal_self_attention.4} parent=23 // pred_region
              %s188 = ssub.s32 16, 1
              loop: start=0, step=1, limit=1
              $region33: #{causal_self_attention.4} parent=31 // loop_pre_header
                _
              $region34: #{causal_self_attention.4} parent=31 // loop_header
                %s190 = sphi 0, %s194
                %p191 = scmp.ge.s32.totalorder %s190, 1
                %s195 = sphi %s180, %s180
                %s196 = sphi %s173, %s173
              $region35: #{causal_self_attention.4} parent=31 // loop_header_branch
                %193 = sbr.rel (%p191) target = $region39
              $region36: #{causal_self_attention.4} parent=31 // loop_body
                %v197 = vld [vmem:[%s195] sm:%s188]
                %198 = vst [vmem:[%s196] sm:%s188] %v197
                %v199 = vld [vmem:[%s195 + $0x18] sm:%s188]
                %200 = vst [vmem:[%s196 + $0x4] sm:%s188] %v199
                %v201 = vld [vmem:[%s195 + $0x30] sm:%s188]
                %202 = vst [vmem:[%s196 + $0x8] sm:%s188] %v201
                %v203 = vld [vmem:[%s195 + $0x48] sm:%s188]
                %204 = vst [vmem:[%s196 + $0xc] sm:%s188] %v203
                %v205 = vld [vmem:[%s195 + $0x60] sm:%s188]
                %206 = vst [vmem:[%s196 + $0x10] sm:%s188] %v205
                %v207 = vld [vmem:[%s195 + $0x78] sm:%s188]
                %208 = vst [vmem:[%s196 + $0x14] sm:%s188] %v207
                %v209 = vld [vmem:[%s195 + $0x90] sm:%s188]
                %210 = vst [vmem:[%s196 + $0x18] sm:%s188] %v209
                %v211 = vld [vmem:[%s195 + $0xa8] sm:%s188]
                %212 = vst [vmem:[%s196 + $0x1c] sm:%s188] %v211
                %v213 = vld [vmem:[%s195 + $0xc0] sm:%s188]
                %214 = vst [vmem:[%s196 + $0x20] sm:%s188] %v213
                %v215 = vld [vmem:[%s195 + $0xd8] sm:%s188]
                %216 = vst [vmem:[%s196 + $0x24] sm:%s188] %v215
                %v217 = vld [vmem:[%s195 + $0xf0] sm:%s188]
                %218 = vst [vmem:[%s196 + $0x28] sm:%s188] %v217
                %v219 = vld [vmem:[%s195 + $0x108] sm:%s188]
                %220 = vst [vmem:[%s196 + $0x2c] sm:%s188] %v219
                %v221 = vld [vmem:[%s195 + $0x120] sm:%s188]
                %222 = vst [vmem:[%s196 + $0x30] sm:%s188] %v221
                %v223 = vld [vmem:[%s195 + $0x138] sm:%s188]
                %224 = vst [vmem:[%s196 + $0x34] sm:%s188] %v223
                %v225 = vld [vmem:[%s195 + $0x150] sm:%s188]
                %226 = vst [vmem:[%s196 + $0x38] sm:%s188] %v225
                %v227 = vld [vmem:[%s195 + $0x168] sm:%s188]
                %228 = vst [vmem:[%s196 + $0x3c] sm:%s188] %v227
              $region37: #{causal_self_attention.4} parent=31 // loop_footer
                %s194 = sadd.s32 1, %s190
              $region38: #{causal_self_attention.4} parent=31 // loop_footer_branch
                %189 = sbr.rel target = $region34
              $region39: #{causal_self_attention.4} parent=31 // loop_exit
                _
            $region32: #{causal_self_attention.4} parent=23 // pred_fallthru
              _
          $region24: #{causal_self_attention.4} parent=19 // pred_fallthru
            _
          %281 = vnop
        $region20: #{causal_self_attention.4} parent=15 // pred_fallthru
          _
        // Predicated region
        $region58: #{causal_self_attention.4} parent=15 // pred_check
          %p282 = pneg %p82
        $region59: #{causal_self_attention.4} parent=15 // pred_check_branch
          %284 = sbr.rel (%p282) target = $region61
        $region60: #{causal_self_attention.4} parent=15 // pred_region
          %s285 = sand.u32 %s72, 1
          %s286 = sand.u32 %s72, 1
          %s287 = smul.addr %s286, 128
          %s288 = scalar_lea.vmem [#allocation6], %s287
          %s289 = sadd.s32 %s17, 2
          %s290 = smul.addr %s16, 192
          %s291 = sadd.s32 %s289, %s290
          %s292 = smul.addr %s291, 4
          %s293 = scalar_lea.vmem %s1, %s292
          // Predicated region
          $region62: #{causal_self_attention.4} parent=60 // pred_check
            _
          $region63: #{causal_self_attention.4} parent=60 // pred_check_branch
            %295 = sbr.rel (0) target = $region65
          $region64: #{causal_self_attention.4} parent=60 // pred_region
            // Predicated region
            $region66: #{causal_self_attention.4} parent=64 // pred_check
              _
            $region67: #{causal_self_attention.4} parent=64 // pred_check_branch
              %297 = sbr.rel target = $region69
            $region68: #{causal_self_attention.4} parent=64 // pred_region
              // Predicated region
              $region81: #{causal_self_attention.4} parent=68 // pred_check
                _
              $region82: #{causal_self_attention.4} parent=68 // pred_check_branch
                %375 = sbr.rel (0) target = $region84
              $region83: #{causal_self_attention.4} parent=68 // pred_region
                loop: start=0, step=1, limit=1
                $region85: #{causal_self_attention.4} parent=83 // loop_pre_header
                  _
                $region86: #{causal_self_attention.4} parent=83 // loop_header
                  %s377 = sphi 0, %s381
                  %p378 = scmp.ge.s32.totalorder %s377, 1
                  %s382 = sphi %s293, %s293
                  %s383 = sphi %s288, %s288
                $region87: #{causal_self_attention.4} parent=83 // loop_header_branch
                  %380 = sbr.rel (%p378) target = $region91
                $region88: #{causal_self_attention.4} parent=83 // loop_body
                  _
                $region89: #{causal_self_attention.4} parent=83 // loop_footer
                  %s381 = sadd.s32 1, %s377
                $region90: #{causal_self_attention.4} parent=83 // loop_footer_branch
                  %376 = sbr.rel target = $region86
                $region91: #{causal_self_attention.4} parent=83 // loop_exit
                  _
                %s385 = ssub.s32 16, 1
                loop: start=0, step=1, limit=1
                $region92: #{causal_self_attention.4} parent=83 // loop_pre_header
                  _
                $region93: #{causal_self_attention.4} parent=83 // loop_header
                  %s387 = sphi 0, %s391
                  %p388 = scmp.ge.s32.totalorder %s387, 1
                  %s392 = sphi %s293, %s293
                  %s393 = sphi %s288, %s288
                $region94: #{causal_self_attention.4} parent=83 // loop_header_branch
                  %390 = sbr.rel (%p388) target = $region98
                $region95: #{causal_self_attention.4} parent=83 // loop_body
                  %v394 = vld [vmem:[%s392] sm:%s385]
                  %395 = vst [vmem:[%s393] sm:%s385] %v394
                  %v396 = vld [vmem:[%s392 + $0x18] sm:%s385]
                  %397 = vst [vmem:[%s393 + $0x4] sm:%s385] %v396
                  %v398 = vld [vmem:[%s392 + $0x30] sm:%s385]
                  %399 = vst [vmem:[%s393 + $0x8] sm:%s385] %v398
                  %v400 = vld [vmem:[%s392 + $0x48] sm:%s385]
                  %401 = vst [vmem:[%s393 + $0xc] sm:%s385] %v400
                  %v402 = vld [vmem:[%s392 + $0x60] sm:%s385]
                  %403 = vst [vmem:[%s393 + $0x10] sm:%s385] %v402
                  %v404 = vld [vmem:[%s392 + $0x78] sm:%s385]
                  %405 = vst [vmem:[%s393 + $0x14] sm:%s385] %v404
                  %v406 = vld [vmem:[%s392 + $0x90] sm:%s385]
                  %407 = vst [vmem:[%s393 + $0x18] sm:%s385] %v406
                  %v408 = vld [vmem:[%s392 + $0xa8] sm:%s385]
                  %409 = vst [vmem:[%s393 + $0x1c] sm:%s385] %v408
                  %v410 = vld [vmem:[%s392 + $0xc0] sm:%s385]
                  %411 = vst [vmem:[%s393 + $0x20] sm:%s385] %v410
                  %v412 = vld [vmem:[%s392 + $0xd8] sm:%s385]
                  %413 = vst [vmem:[%s393 + $0x24] sm:%s385] %v412
                  %v414 = vld [vmem:[%s392 + $0xf0] sm:%s385]
                  %415 = vst [vmem:[%s393 + $0x28] sm:%s385] %v414
                  %v416 = vld [vmem:[%s392 + $0x108] sm:%s385]
                  %417 = vst [vmem:[%s393 + $0x2c] sm:%s385] %v416
                  %v418 = vld [vmem:[%s392 + $0x120] sm:%s385]
                  %419 = vst [vmem:[%s393 + $0x30] sm:%s385] %v418
                  %v420 = vld [vmem:[%s392 + $0x138] sm:%s385]
                  %421 = vst [vmem:[%s393 + $0x34] sm:%s385] %v420
                  %v422 = vld [vmem:[%s392 + $0x150] sm:%s385]
                  %423 = vst [vmem:[%s393 + $0x38] sm:%s385] %v422
                  %v424 = vld [vmem:[%s392 + $0x168] sm:%s385]
                  %425 = vst [vmem:[%s393 + $0x3c] sm:%s385] %v424
                  %v426 = vld [vmem:[%s392 + $0x180] sm:%s385]
                  %427 = vst [vmem:[%s393 + $0x40] sm:%s385] %v426
                  %v428 = vld [vmem:[%s392 + $0x198] sm:%s385]
                  %429 = vst [vmem:[%s393 + $0x44] sm:%s385] %v428
                  %v430 = vld [vmem:[%s392 + $0x1b0] sm:%s385]
                  %431 = vst [vmem:[%s393 + $0x48] sm:%s385] %v430
                  %v432 = vld [vmem:[%s392 + $0x1c8] sm:%s385]
                  %433 = vst [vmem:[%s393 + $0x4c] sm:%s385] %v432
                  %v434 = vld [vmem:[%s392 + $0x1e0] sm:%s385]
                  %435 = vst [vmem:[%s393 + $0x50] sm:%s385] %v434
                  %v436 = vld [vmem:[%s392 + $0x1f8] sm:%s385]
                  %437 = vst [vmem:[%s393 + $0x54] sm:%s385] %v436
                  %v438 = vld [vmem:[%s392 + $0x210] sm:%s385]
                  %439 = vst [vmem:[%s393 + $0x58] sm:%s385] %v438
                  %v440 = vld [vmem:[%s392 + $0x228] sm:%s385]
                  %441 = vst [vmem:[%s393 + $0x5c] sm:%s385] %v440
                  %v442 = vld [vmem:[%s392 + $0x240] sm:%s385]
                  %443 = vst [vmem:[%s393 + $0x60] sm:%s385] %v442
                  %v444 = vld [vmem:[%s392 + $0x258] sm:%s385]
                  %445 = vst [vmem:[%s393 + $0x64] sm:%s385] %v444
                  %v446 = vld [vmem:[%s392 + $0x270] sm:%s385]
                  %447 = vst [vmem:[%s393 + $0x68] sm:%s385] %v446
                  %v448 = vld [vmem:[%s392 + $0x288] sm:%s385]
                  %449 = vst [vmem:[%s393 + $0x6c] sm:%s385] %v448
                  %v450 = vld [vmem:[%s392 + $0x2a0] sm:%s385]
                  %451 = vst [vmem:[%s393 + $0x70] sm:%s385] %v450
                  %v452 = vld [vmem:[%s392 + $0x2b8] sm:%s385]
                  %453 = vst [vmem:[%s393 + $0x74] sm:%s385] %v452
                  %v454 = vld [vmem:[%s392 + $0x2d0] sm:%s385]
                  %455 = vst [vmem:[%s393 + $0x78] sm:%s385] %v454
                  %v456 = vld [vmem:[%s392 + $0x2e8] sm:%s385]
                  %457 = vst [vmem:[%s393 + $0x7c] sm:%s385] %v456
                $region96: #{causal_self_attention.4} parent=83 // loop_footer
                  %s391 = sadd.s32 1, %s387
                $region97: #{causal_self_attention.4} parent=83 // loop_footer_branch
                  %386 = sbr.rel target = $region93
                $region98: #{causal_self_attention.4} parent=83 // loop_exit
                  _
              $region84: #{causal_self_attention.4} parent=68 // pred_fallthru
                _
            $region69: #{causal_self_attention.4} parent=64 // pred_fallthru
              _
            // Predicated region
            $region70: #{causal_self_attention.4} parent=64 // pred_check
              _
            $region71: #{causal_self_attention.4} parent=64 // pred_check_branch
              %299 = sbr.rel (0) target = $region73
            $region72: #{causal_self_attention.4} parent=64 // pred_region
              %s301 = ssub.s32 16, 1
              loop: start=0, step=1, limit=1
              $region74: #{causal_self_attention.4} parent=72 // loop_pre_header
                _
              $region75: #{causal_self_attention.4} parent=72 // loop_header
                %s303 = sphi 0, %s307
                %p304 = scmp.ge.s32.totalorder %s303, 1
                %s308 = sphi %s293, %s293
                %s309 = sphi %s288, %s288
              $region76: #{causal_self_attention.4} parent=72 // loop_header_branch
                %306 = sbr.rel (%p304) target = $region80
              $region77: #{causal_self_attention.4} parent=72 // loop_body
                %v310 = vld [vmem:[%s308] sm:%s301]
                %311 = vst [vmem:[%s309] sm:%s301] %v310
                %v312 = vld [vmem:[%s308 + $0x18] sm:%s301]
                %313 = vst [vmem:[%s309 + $0x4] sm:%s301] %v312
                %v314 = vld [vmem:[%s308 + $0x30] sm:%s301]
                %315 = vst [vmem:[%s309 + $0x8] sm:%s301] %v314
                %v316 = vld [vmem:[%s308 + $0x48] sm:%s301]
                %317 = vst [vmem:[%s309 + $0xc] sm:%s301] %v316
                %v318 = vld [vmem:[%s308 + $0x60] sm:%s301]
                %319 = vst [vmem:[%s309 + $0x10] sm:%s301] %v318
                %v320 = vld [vmem:[%s308 + $0x78] sm:%s301]
                %321 = vst [vmem:[%s309 + $0x14] sm:%s301] %v320
                %v322 = vld [vmem:[%s308 + $0x90] sm:%s301]
                %323 = vst [vmem:[%s309 + $0x18] sm:%s301] %v322
                %v324 = vld [vmem:[%s308 + $0xa8] sm:%s301]
                %325 = vst [vmem:[%s309 + $0x1c] sm:%s301] %v324
                %v326 = vld [vmem:[%s308 + $0xc0] sm:%s301]
                %327 = vst [vmem:[%s309 + $0x20] sm:%s301] %v326
                %v328 = vld [vmem:[%s308 + $0xd8] sm:%s301]
                %329 = vst [vmem:[%s309 + $0x24] sm:%s301] %v328
                %v330 = vld [vmem:[%s308 + $0xf0] sm:%s301]
                %331 = vst [vmem:[%s309 + $0x28] sm:%s301] %v330
                %v332 = vld [vmem:[%s308 + $0x108] sm:%s301]
                %333 = vst [vmem:[%s309 + $0x2c] sm:%s301] %v332
                %v334 = vld [vmem:[%s308 + $0x120] sm:%s301]
                %335 = vst [vmem:[%s309 + $0x30] sm:%s301] %v334
                %v336 = vld [vmem:[%s308 + $0x138] sm:%s301]
                %337 = vst [vmem:[%s309 + $0x34] sm:%s301] %v336
                %v338 = vld [vmem:[%s308 + $0x150] sm:%s301]
                %339 = vst [vmem:[%s309 + $0x38] sm:%s301] %v338
                %v340 = vld [vmem:[%s308 + $0x168] sm:%s301]
                %341 = vst [vmem:[%s309 + $0x3c] sm:%s301] %v340
                %v342 = vld [vmem:[%s308 + $0x180] sm:%s301]
                %343 = vst [vmem:[%s309 + $0x40] sm:%s301] %v342
                %v344 = vld [vmem:[%s308 + $0x198] sm:%s301]
                %345 = vst [vmem:[%s309 + $0x44] sm:%s301] %v344
                %v346 = vld [vmem:[%s308 + $0x1b0] sm:%s301]
                %347 = vst [vmem:[%s309 + $0x48] sm:%s301] %v346
                %v348 = vld [vmem:[%s308 + $0x1c8] sm:%s301]
                %349 = vst [vmem:[%s309 + $0x4c] sm:%s301] %v348
                %v350 = vld [vmem:[%s308 + $0x1e0] sm:%s301]
                %351 = vst [vmem:[%s309 + $0x50] sm:%s301] %v350
                %v352 = vld [vmem:[%s308 + $0x1f8] sm:%s301]
                %353 = vst [vmem:[%s309 + $0x54] sm:%s301] %v352
                %v354 = vld [vmem:[%s308 + $0x210] sm:%s301]
                %355 = vst [vmem:[%s309 + $0x58] sm:%s301] %v354
                %v356 = vld [vmem:[%s308 + $0x228] sm:%s301]
                %357 = vst [vmem:[%s309 + $0x5c] sm:%s301] %v356
                %v358 = vld [vmem:[%s308 + $0x240] sm:%s301]
                %359 = vst [vmem:[%s309 + $0x60] sm:%s301] %v358
                %v360 = vld [vmem:[%s308 + $0x258] sm:%s301]
                %361 = vst [vmem:[%s309 + $0x64] sm:%s301] %v360
                %v362 = vld [vmem:[%s308 + $0x270] sm:%s301]
                %363 = vst [vmem:[%s309 + $0x68] sm:%s301] %v362
                %v364 = vld [vmem:[%s308 + $0x288] sm:%s301]
                %365 = vst [vmem:[%s309 + $0x6c] sm:%s301] %v364
                %v366 = vld [vmem:[%s308 + $0x2a0] sm:%s301]
                %367 = vst [vmem:[%s309 + $0x70] sm:%s301] %v366
                %v368 = vld [vmem:[%s308 + $0x2b8] sm:%s301]
                %369 = vst [vmem:[%s309 + $0x74] sm:%s301] %v368
                %v370 = vld [vmem:[%s308 + $0x2d0] sm:%s301]
                %371 = vst [vmem:[%s309 + $0x78] sm:%s301] %v370
                %v372 = vld [vmem:[%s308 + $0x2e8] sm:%s301]
                %373 = vst [vmem:[%s309 + $0x7c] sm:%s301] %v372
              $region78: #{causal_self_attention.4} parent=72 // loop_footer
                %s307 = sadd.s32 1, %s303
              $region79: #{causal_self_attention.4} parent=72 // loop_footer_branch
                %302 = sbr.rel target = $region75
              $region80: #{causal_self_attention.4} parent=72 // loop_exit
                _
            $region73: #{causal_self_attention.4} parent=64 // pred_fallthru
              _
          $region65: #{causal_self_attention.4} parent=60 // pred_fallthru
            _
          %458 = vnop
        $region61: #{causal_self_attention.4} parent=15 // pred_fallthru
          _
        // Predicated region
        $region99: #{causal_self_attention.4} parent=15 // pred_check
          %p459 = pneg %p112
        $region100: #{causal_self_attention.4} parent=15 // pred_check_branch
          %461 = sbr.rel (%p459) target = $region102
        $region101: #{causal_self_attention.4} parent=15 // pred_region
          %s462 = sand.u32 %s102, 1
          %s463 = sand.u32 %s102, 1
          %s464 = smul.addr %s463, 128
          %s465 = scalar_lea.vmem [#allocation7], %s464
          %s466 = sadd.s32 %s17, 4
          %s467 = smul.addr %s16, 192
          %s468 = sadd.s32 %s466, %s467
          %s469 = smul.addr %s468, 4
          %s470 = scalar_lea.vmem %s2, %s469
          // Predicated region
          $region103: #{causal_self_attention.4} parent=101 // pred_check
            _
          $region104: #{causal_self_attention.4} parent=101 // pred_check_branch
            %472 = sbr.rel (0) target = $region106
          $region105: #{causal_self_attention.4} parent=101 // pred_region
            // Predicated region
            $region107: #{causal_self_attention.4} parent=105 // pred_check
              _
            $region108: #{causal_self_attention.4} parent=105 // pred_check_branch
              %474 = sbr.rel target = $region110
            $region109: #{causal_self_attention.4} parent=105 // pred_region
              // Predicated region
              $region122: #{causal_self_attention.4} parent=109 // pred_check
                _
              $region123: #{causal_self_attention.4} parent=109 // pred_check_branch
                %552 = sbr.rel (0) target = $region125
              $region124: #{causal_self_attention.4} parent=109 // pred_region
                loop: start=0, step=1, limit=1
                $region126: #{causal_self_attention.4} parent=124 // loop_pre_header
                  _
                $region127: #{causal_self_attention.4} parent=124 // loop_header
                  %s554 = sphi 0, %s558
                  %p555 = scmp.ge.s32.totalorder %s554, 1
                  %s559 = sphi %s470, %s470
                  %s560 = sphi %s465, %s465
                $region128: #{causal_self_attention.4} parent=124 // loop_header_branch
                  %557 = sbr.rel (%p555) target = $region132
                $region129: #{causal_self_attention.4} parent=124 // loop_body
                  _
                $region130: #{causal_self_attention.4} parent=124 // loop_footer
                  %s558 = sadd.s32 1, %s554
                $region131: #{causal_self_attention.4} parent=124 // loop_footer_branch
                  %553 = sbr.rel target = $region127
                $region132: #{causal_self_attention.4} parent=124 // loop_exit
                  _
                %s562 = ssub.s32 16, 1
                loop: start=0, step=1, limit=1
                $region133: #{causal_self_attention.4} parent=124 // loop_pre_header
                  _
                $region134: #{causal_self_attention.4} parent=124 // loop_header
                  %s564 = sphi 0, %s568
                  %p565 = scmp.ge.s32.totalorder %s564, 1
                  %s569 = sphi %s470, %s470
                  %s570 = sphi %s465, %s465
                $region135: #{causal_self_attention.4} parent=124 // loop_header_branch
                  %567 = sbr.rel (%p565) target = $region139
                $region136: #{causal_self_attention.4} parent=124 // loop_body
                  %v571 = vld [vmem:[%s569] sm:%s562]
                  %572 = vst [vmem:[%s570] sm:%s562] %v571
                  %v573 = vld [vmem:[%s569 + $0x18] sm:%s562]
                  %574 = vst [vmem:[%s570 + $0x4] sm:%s562] %v573
                  %v575 = vld [vmem:[%s569 + $0x30] sm:%s562]
                  %576 = vst [vmem:[%s570 + $0x8] sm:%s562] %v575
                  %v577 = vld [vmem:[%s569 + $0x48] sm:%s562]
                  %578 = vst [vmem:[%s570 + $0xc] sm:%s562] %v577
                  %v579 = vld [vmem:[%s569 + $0x60] sm:%s562]
                  %580 = vst [vmem:[%s570 + $0x10] sm:%s562] %v579
                  %v581 = vld [vmem:[%s569 + $0x78] sm:%s562]
                  %582 = vst [vmem:[%s570 + $0x14] sm:%s562] %v581
                  %v583 = vld [vmem:[%s569 + $0x90] sm:%s562]
                  %584 = vst [vmem:[%s570 + $0x18] sm:%s562] %v583
                  %v585 = vld [vmem:[%s569 + $0xa8] sm:%s562]
                  %586 = vst [vmem:[%s570 + $0x1c] sm:%s562] %v585
                  %v587 = vld [vmem:[%s569 + $0xc0] sm:%s562]
                  %588 = vst [vmem:[%s570 + $0x20] sm:%s562] %v587
                  %v589 = vld [vmem:[%s569 + $0xd8] sm:%s562]
                  %590 = vst [vmem:[%s570 + $0x24] sm:%s562] %v589
                  %v591 = vld [vmem:[%s569 + $0xf0] sm:%s562]
                  %592 = vst [vmem:[%s570 + $0x28] sm:%s562] %v591
                  %v593 = vld [vmem:[%s569 + $0x108] sm:%s562]
                  %594 = vst [vmem:[%s570 + $0x2c] sm:%s562] %v593
                  %v595 = vld [vmem:[%s569 + $0x120] sm:%s562]
                  %596 = vst [vmem:[%s570 + $0x30] sm:%s562] %v595
                  %v597 = vld [vmem:[%s569 + $0x138] sm:%s562]
                  %598 = vst [vmem:[%s570 + $0x34] sm:%s562] %v597
                  %v599 = vld [vmem:[%s569 + $0x150] sm:%s562]
                  %600 = vst [vmem:[%s570 + $0x38] sm:%s562] %v599
                  %v601 = vld [vmem:[%s569 + $0x168] sm:%s562]
                  %602 = vst [vmem:[%s570 + $0x3c] sm:%s562] %v601
                  %v603 = vld [vmem:[%s569 + $0x180] sm:%s562]
                  %604 = vst [vmem:[%s570 + $0x40] sm:%s562] %v603
                  %v605 = vld [vmem:[%s569 + $0x198] sm:%s562]
                  %606 = vst [vmem:[%s570 + $0x44] sm:%s562] %v605
                  %v607 = vld [vmem:[%s569 + $0x1b0] sm:%s562]
                  %608 = vst [vmem:[%s570 + $0x48] sm:%s562] %v607
                  %v609 = vld [vmem:[%s569 + $0x1c8] sm:%s562]
                  %610 = vst [vmem:[%s570 + $0x4c] sm:%s562] %v609
                  %v611 = vld [vmem:[%s569 + $0x1e0] sm:%s562]
                  %612 = vst [vmem:[%s570 + $0x50] sm:%s562] %v611
                  %v613 = vld [vmem:[%s569 + $0x1f8] sm:%s562]
                  %614 = vst [vmem:[%s570 + $0x54] sm:%s562] %v613
                  %v615 = vld [vmem:[%s569 + $0x210] sm:%s562]
                  %616 = vst [vmem:[%s570 + $0x58] sm:%s562] %v615
                  %v617 = vld [vmem:[%s569 + $0x228] sm:%s562]
                  %618 = vst [vmem:[%s570 + $0x5c] sm:%s562] %v617
                  %v619 = vld [vmem:[%s569 + $0x240] sm:%s562]
                  %620 = vst [vmem:[%s570 + $0x60] sm:%s562] %v619
                  %v621 = vld [vmem:[%s569 + $0x258] sm:%s562]
                  %622 = vst [vmem:[%s570 + $0x64] sm:%s562] %v621
                  %v623 = vld [vmem:[%s569 + $0x270] sm:%s562]
                  %624 = vst [vmem:[%s570 + $0x68] sm:%s562] %v623
                  %v625 = vld [vmem:[%s569 + $0x288] sm:%s562]
                  %626 = vst [vmem:[%s570 + $0x6c] sm:%s562] %v625
                  %v627 = vld [vmem:[%s569 + $0x2a0] sm:%s562]
                  %628 = vst [vmem:[%s570 + $0x70] sm:%s562] %v627
                  %v629 = vld [vmem:[%s569 + $0x2b8] sm:%s562]
                  %630 = vst [vmem:[%s570 + $0x74] sm:%s562] %v629
                  %v631 = vld [vmem:[%s569 + $0x2d0] sm:%s562]
                  %632 = vst [vmem:[%s570 + $0x78] sm:%s562] %v631
                  %v633 = vld [vmem:[%s569 + $0x2e8] sm:%s562]
                  %634 = vst [vmem:[%s570 + $0x7c] sm:%s562] %v633
                $region137: #{causal_self_attention.4} parent=124 // loop_footer
                  %s568 = sadd.s32 1, %s564
                $region138: #{causal_self_attention.4} parent=124 // loop_footer_branch
                  %563 = sbr.rel target = $region134
                $region139: #{causal_self_attention.4} parent=124 // loop_exit
                  _
              $region125: #{causal_self_attention.4} parent=109 // pred_fallthru
                _
            $region110: #{causal_self_attention.4} parent=105 // pred_fallthru
              _
            // Predicated region
            $region111: #{causal_self_attention.4} parent=105 // pred_check
              _
            $region112: #{causal_self_attention.4} parent=105 // pred_check_branch
              %476 = sbr.rel (0) target = $region114
            $region113: #{causal_self_attention.4} parent=105 // pred_region
              %s478 = ssub.s32 16, 1
              loop: start=0, step=1, limit=1
              $region115: #{causal_self_attention.4} parent=113 // loop_pre_header
                _
              $region116: #{causal_self_attention.4} parent=113 // loop_header
                %s480 = sphi 0, %s484
                %p481 = scmp.ge.s32.totalorder %s480, 1
                %s485 = sphi %s470, %s470
                %s486 = sphi %s465, %s465
              $region117: #{causal_self_attention.4} parent=113 // loop_header_branch
                %483 = sbr.rel (%p481) target = $region121
              $region118: #{causal_self_attention.4} parent=113 // loop_body
                %v487 = vld [vmem:[%s485] sm:%s478]
                %488 = vst [vmem:[%s486] sm:%s478] %v487
                %v489 = vld [vmem:[%s485 + $0x18] sm:%s478]
                %490 = vst [vmem:[%s486 + $0x4] sm:%s478] %v489
                %v491 = vld [vmem:[%s485 + $0x30] sm:%s478]
                %492 = vst [vmem:[%s486 + $0x8] sm:%s478] %v491
                %v493 = vld [vmem:[%s485 + $0x48] sm:%s478]
                %494 = vst [vmem:[%s486 + $0xc] sm:%s478] %v493
                %v495 = vld [vmem:[%s485 + $0x60] sm:%s478]
                %496 = vst [vmem:[%s486 + $0x10] sm:%s478] %v495
                %v497 = vld [vmem:[%s485 + $0x78] sm:%s478]
                %498 = vst [vmem:[%s486 + $0x14] sm:%s478] %v497
                %v499 = vld [vmem:[%s485 + $0x90] sm:%s478]
                %500 = vst [vmem:[%s486 + $0x18] sm:%s478] %v499
                %v501 = vld [vmem:[%s485 + $0xa8] sm:%s478]
                %502 = vst [vmem:[%s486 + $0x1c] sm:%s478] %v501
                %v503 = vld [vmem:[%s485 + $0xc0] sm:%s478]
                %504 = vst [vmem:[%s486 + $0x20] sm:%s478] %v503
                %v505 = vld [vmem:[%s485 + $0xd8] sm:%s478]
                %506 = vst [vmem:[%s486 + $0x24] sm:%s478] %v505
                %v507 = vld [vmem:[%s485 + $0xf0] sm:%s478]
                %508 = vst [vmem:[%s486 + $0x28] sm:%s478] %v507
                %v509 = vld [vmem:[%s485 + $0x108] sm:%s478]
                %510 = vst [vmem:[%s486 + $0x2c] sm:%s478] %v509
                %v511 = vld [vmem:[%s485 + $0x120] sm:%s478]
                %512 = vst [vmem:[%s486 + $0x30] sm:%s478] %v511
                %v513 = vld [vmem:[%s485 + $0x138] sm:%s478]
                %514 = vst [vmem:[%s486 + $0x34] sm:%s478] %v513
                %v515 = vld [vmem:[%s485 + $0x150] sm:%s478]
                %516 = vst [vmem:[%s486 + $0x38] sm:%s478] %v515
                %v517 = vld [vmem:[%s485 + $0x168] sm:%s478]
                %518 = vst [vmem:[%s486 + $0x3c] sm:%s478] %v517
                %v519 = vld [vmem:[%s485 + $0x180] sm:%s478]
                %520 = vst [vmem:[%s486 + $0x40] sm:%s478] %v519
                %v521 = vld [vmem:[%s485 + $0x198] sm:%s478]
                %522 = vst [vmem:[%s486 + $0x44] sm:%s478] %v521
                %v523 = vld [vmem:[%s485 + $0x1b0] sm:%s478]
                %524 = vst [vmem:[%s486 + $0x48] sm:%s478] %v523
                %v525 = vld [vmem:[%s485 + $0x1c8] sm:%s478]
                %526 = vst [vmem:[%s486 + $0x4c] sm:%s478] %v525
                %v527 = vld [vmem:[%s485 + $0x1e0] sm:%s478]
                %528 = vst [vmem:[%s486 + $0x50] sm:%s478] %v527
                %v529 = vld [vmem:[%s485 + $0x1f8] sm:%s478]
                %530 = vst [vmem:[%s486 + $0x54] sm:%s478] %v529
                %v531 = vld [vmem:[%s485 + $0x210] sm:%s478]
                %532 = vst [vmem:[%s486 + $0x58] sm:%s478] %v531
                %v533 = vld [vmem:[%s485 + $0x228] sm:%s478]
                %534 = vst [vmem:[%s486 + $0x5c] sm:%s478] %v533
                %v535 = vld [vmem:[%s485 + $0x240] sm:%s478]
                %536 = vst [vmem:[%s486 + $0x60] sm:%s478] %v535
                %v537 = vld [vmem:[%s485 + $0x258] sm:%s478]
                %538 = vst [vmem:[%s486 + $0x64] sm:%s478] %v537
                %v539 = vld [vmem:[%s485 + $0x270] sm:%s478]
                %540 = vst [vmem:[%s486 + $0x68] sm:%s478] %v539
                %v541 = vld [vmem:[%s485 + $0x288] sm:%s478]
                %542 = vst [vmem:[%s486 + $0x6c] sm:%s478] %v541
                %v543 = vld [vmem:[%s485 + $0x2a0] sm:%s478]
                %544 = vst [vmem:[%s486 + $0x70] sm:%s478] %v543
                %v545 = vld [vmem:[%s485 + $0x2b8] sm:%s478]
                %546 = vst [vmem:[%s486 + $0x74] sm:%s478] %v545
                %v547 = vld [vmem:[%s485 + $0x2d0] sm:%s478]
                %548 = vst [vmem:[%s486 + $0x78] sm:%s478] %v547
                %v549 = vld [vmem:[%s485 + $0x2e8] sm:%s478]
                %550 = vst [vmem:[%s486 + $0x7c] sm:%s478] %v549
              $region119: #{causal_self_attention.4} parent=113 // loop_footer
                %s484 = sadd.s32 1, %s480
              $region120: #{causal_self_attention.4} parent=113 // loop_footer_branch
                %479 = sbr.rel target = $region116
              $region121: #{causal_self_attention.4} parent=113 // loop_exit
                _
            $region114: #{causal_self_attention.4} parent=105 // pred_fallthru
              _
          $region106: #{causal_self_attention.4} parent=101 // pred_fallthru
            _
          %635 = vnop
        $region102: #{causal_self_attention.4} parent=15 // pred_fallthru
          _
      $region16: #{causal_self_attention.4} parent=5 // pred_fallthru
        _
      %p636 = scmp.le.s32.totalorder 1, %s9
      %p637 = scmp.lt.s32.totalorder %s9, 9
      %p638 = pnand %p636, %p637
      %p639 = pneg %p638
      // Predicated region
      $region140: #{causal_self_attention.4} parent=5 // pred_check
        _
      $region141: #{causal_self_attention.4} parent=5 // pred_check_branch
        %641 = sbr.rel (%p638) target = $region143
      $region142: #{causal_self_attention.4} parent=5 // pred_region
        %s642 = ssub.s32 %s9, 1
        %s643 = sand.u32 %s45, 1
        %s644 = sand.u32 %s45, 1
        %s645 = smul.addr %s644, 64
        %s646 = scalar_lea.vmem [#allocation5], %s645
        // Predicated region
        $region144: #{causal_self_attention.4} parent=142 // pred_check
          %p647 = pneg %p58
        $region145: #{causal_self_attention.4} parent=142 // pred_check_branch
          %649 = sbr.rel (%p647) target = $region147
        $region146: #{causal_self_attention.4} parent=142 // pred_region
          _
        $region147: #{causal_self_attention.4} parent=142 // pred_fallthru
          _
        %s650 = sand.u32 %s75, 1
        %s651 = sand.u32 %s75, 1
        %s652 = smul.addr %s651, 128
        %s653 = scalar_lea.vmem [#allocation6], %s652
        // Predicated region
        $region148: #{causal_self_attention.4} parent=142 // pred_check
          %p654 = pneg %p88
        $region149: #{causal_self_attention.4} parent=142 // pred_check_branch
          %656 = sbr.rel (%p654) target = $region151
        $region150: #{causal_self_attention.4} parent=142 // pred_region
          _
        $region151: #{causal_self_attention.4} parent=142 // pred_fallthru
          _
        %s657 = sand.u32 %s105, 1
        %s658 = sand.u32 %s105, 1
        %s659 = smul.addr %s658, 128
        %s660 = scalar_lea.vmem [#allocation7], %s659
        // Predicated region
        $region152: #{causal_self_attention.4} parent=142 // pred_check
          %p661 = pneg %p118
        $region153: #{causal_self_attention.4} parent=142 // pred_check_branch
          %663 = sbr.rel (%p661) target = $region155
        $region154: #{causal_self_attention.4} parent=142 // pred_region
          _
        $region155: #{causal_self_attention.4} parent=142 // pred_fallthru
          _
        %s664 = sand.u32 %s45, 1
        %s665 = sand.u32 %s45, 1
        %s666 = smul.addr %s665, 64
        %s667 = scalar_lea.vmem [#allocation5], %s666
        %p668 = pneg %p58
        %p669 = pneg %p55
        %s670 = sand.u32 %s75, 1
        %s671 = sand.u32 %s75, 1
        %s672 = smul.addr %s671, 128
        %s673 = scalar_lea.vmem [#allocation6], %s672
        %p674 = pneg %p88
        %p675 = pneg %p85
        %s676 = sand.u32 %s105, 1
        %s677 = sand.u32 %s105, 1
        %s678 = smul.addr %s677, 128
        %s679 = scalar_lea.vmem [#allocation7], %s678
        %p680 = pneg %p118
        %p681 = pneg %p115
        %p682 = pneg %p148
        %p683 = pneg %p145
        %s684 = sand.u32 %s135, 1
        %s685 = sand.u32 %s135, 1
        %s686 = smul.addr %s685, 64
        %s687 = scalar_lea.vmem [#allocation8], %s686
        %s688 = smul.u32 16, %s21
        %s689 = sadd.s32 %s20, 2
        %s690 = sadd.s32 %s20, 4
        %s691 = smul.u32 16, %s21
        %s692 = smul.u32 %s21, 128
        %v693 = vld [vmem:[%s646] sm:$0xf]
        %v694 = vld [vmem:[%s646 + $0x4] sm:$0xf]
        %v695 = vld [vmem:[%s646 + $0x8] sm:$0xf]
        %v696 = vld [vmem:[%s646 + $0xc] sm:$0xf]
        %v697 = vld [vmem:[%s646 + $0x10] sm:$0xf]
        %v698 = vld [vmem:[%s646 + $0x14] sm:$0xf]
        %v699 = vld [vmem:[%s646 + $0x18] sm:$0xf]
        %v700 = vld [vmem:[%s646 + $0x1c] sm:$0xf]
        %v701 = vld [vmem:[%s646 + $0x20] sm:$0xf]
        %v702 = vld [vmem:[%s646 + $0x24] sm:$0xf]
        %v703 = vld [vmem:[%s646 + $0x28] sm:$0xf]
        %v704 = vld [vmem:[%s646 + $0x2c] sm:$0xf]
        %v705 = vld [vmem:[%s646 + $0x30] sm:$0xf]
        %v706 = vld [vmem:[%s646 + $0x34] sm:$0xf]
        %v707 = vld [vmem:[%s646 + $0x38] sm:$0xf]
        %v708 = vld [vmem:[%s646 + $0x3c] sm:$0xf]
        %vm709 = vcmask 7168
        %710 = vst.msk [vmem:[#allocation2] sm:$0xff] %vm709, -1e+30
        %711 = vst.msk [vmem:[#allocation2 + $0x8] sm:$0xff] %vm709, -1e+30
        %712 = vst.msk [vmem:[#allocation2 + $0x10] sm:$0xff] %vm709, -1e+30
        %713 = vst.msk [vmem:[#allocation2 + $0x18] sm:$0xff] %vm709, -1e+30
        %714 = vst.msk [vmem:[#allocation2 + $0x20] sm:$0xff] %vm709, -1e+30
        %715 = vst.msk [vmem:[#allocation2 + $0x28] sm:$0xff] %vm709, -1e+30
        %716 = vst.msk [vmem:[#allocation2 + $0x30] sm:$0xff] %vm709, -1e+30
        %717 = vst.msk [vmem:[#allocation2 + $0x38] sm:$0xff] %vm709, -1e+30
        %718 = vst.msk [vmem:[#allocation2 + $0x40] sm:$0xff] %vm709, -1e+30
        %719 = vst.msk [vmem:[#allocation2 + $0x48] sm:$0xff] %vm709, -1e+30
        %720 = vst.msk [vmem:[#allocation2 + $0x50] sm:$0xff] %vm709, -1e+30
        %721 = vst.msk [vmem:[#allocation2 + $0x58] sm:$0xff] %vm709, -1e+30
        %722 = vst.msk [vmem:[#allocation2 + $0x60] sm:$0xff] %vm709, -1e+30
        %723 = vst.msk [vmem:[#allocation2 + $0x68] sm:$0xff] %vm709, -1e+30
        %724 = vst.msk [vmem:[#allocation2 + $0x70] sm:$0xff] %vm709, -1e+30
        %725 = vst.msk [vmem:[#allocation2 + $0x78] sm:$0xff] %vm709, -1e+30
        %726 = vst.msk [vmem:[#allocation3] sm:$0xff] %vm709, 0.0
        %727 = vst.msk [vmem:[#allocation3 + $0x8] sm:$0xff] %vm709, 0.0
        %728 = vst.msk [vmem:[#allocation3 + $0x10] sm:$0xff] %vm709, 0.0
        %729 = vst.msk [vmem:[#allocation3 + $0x18] sm:$0xff] %vm709, 0.0
        %730 = vst.msk [vmem:[#allocation3 + $0x20] sm:$0xff] %vm709, 0.0
        %731 = vst.msk [vmem:[#allocation3 + $0x28] sm:$0xff] %vm709, 0.0
        %732 = vst.msk [vmem:[#allocation3 + $0x30] sm:$0xff] %vm709, 0.0
        %733 = vst.msk [vmem:[#allocation3 + $0x38] sm:$0xff] %vm709, 0.0
        %734 = vst.msk [vmem:[#allocation3 + $0x40] sm:$0xff] %vm709, 0.0
        %735 = vst.msk [vmem:[#allocation3 + $0x48] sm:$0xff] %vm709, 0.0
        %736 = vst.msk [vmem:[#allocation3 + $0x50] sm:$0xff] %vm709, 0.0
        %737 = vst.msk [vmem:[#allocation3 + $0x58] sm:$0xff] %vm709, 0.0
        %738 = vst.msk [vmem:[#allocation3 + $0x60] sm:$0xff] %vm709, 0.0
        %739 = vst.msk [vmem:[#allocation3 + $0x68] sm:$0xff] %vm709, 0.0
        %740 = vst.msk [vmem:[#allocation3 + $0x70] sm:$0xff] %vm709, 0.0
        %741 = vst.msk [vmem:[#allocation3 + $0x78] sm:$0xff] %vm709, 0.0
        %vm742 = vcmask 523264
        %743 = vst.msk [vmem:[#allocation4] sm:$0xff] %vm742, 0.0
        %744 = vst.msk [vmem:[#allocation4 + $0x8] sm:$0xff] %vm742, 0.0
        %745 = vst.msk [vmem:[#allocation4 + $0x10] sm:$0xff] %vm742, 0.0
        %746 = vst.msk [vmem:[#allocation4 + $0x18] sm:$0xff] %vm742, 0.0
        %747 = vst.msk [vmem:[#allocation4 + $0x20] sm:$0xff] %vm742, 0.0
        %748 = vst.msk [vmem:[#allocation4 + $0x28] sm:$0xff] %vm742, 0.0
        %749 = vst.msk [vmem:[#allocation4 + $0x30] sm:$0xff] %vm742, 0.0
        %750 = vst.msk [vmem:[#allocation4 + $0x38] sm:$0xff] %vm742, 0.0
        %751 = vst.msk [vmem:[#allocation4 + $0x40] sm:$0xff] %vm742, 0.0
        %752 = vst.msk [vmem:[#allocation4 + $0x48] sm:$0xff] %vm742, 0.0
        %753 = vst.msk [vmem:[#allocation4 + $0x50] sm:$0xff] %vm742, 0.0
        %754 = vst.msk [vmem:[#allocation4 + $0x58] sm:$0xff] %vm742, 0.0
        %755 = vst.msk [vmem:[#allocation4 + $0x60] sm:$0xff] %vm742, 0.0
        %756 = vst.msk [vmem:[#allocation4 + $0x68] sm:$0xff] %vm742, 0.0
        %757 = vst.msk [vmem:[#allocation4 + $0x70] sm:$0xff] %vm742, 0.0
        %758 = vst.msk [vmem:[#allocation4 + $0x78] sm:$0xff] %vm742, 0.0
        // While loop
        $region156: #{causal_self_attention.4} parent=142 // loop_pre_header
          _
        $region157: #{causal_self_attention.4} parent=142 // loop_header
          %s760 = sphi 0, %s762
          %p761 = scmp.ge.s32.totalorder %s760, %s21
        $region158: #{causal_self_attention.4} parent=142 // loop_header_branch
          %764 = sbr.rel (%p761) target = $region162
        $region159: #{causal_self_attention.4} parent=142 // loop_body
          %s765 = smul.u32 %s760, 128
          %s766 = sshra.s32 %s765, 3
          %s767 = sand.u32 %s765, 7
          %s768 = smul.addr %s766, 4
          %s769 = scalar_lea.vmem %s653, %s768 [#allocation6]
          %v770 = vld [vmem:[%s769] sm:$0xf]
          %v771 = vld [vmem:[%s769 + $0x4] sm:$0xf]
          %v772 = vld [vmem:[%s769 + $0x8] sm:$0xf]
          %v773 = vld [vmem:[%s769 + $0xc] sm:$0xf]
          %v774 = vld [vmem:[%s769 + $0x10] sm:$0xf]
          %v775 = vld [vmem:[%s769 + $0x14] sm:$0xf]
          %v776 = vld [vmem:[%s769 + $0x18] sm:$0xf]
          %v777 = vld [vmem:[%s769 + $0x1c] sm:$0xf]
          %v778 = vld [vmem:[%s769 + $0x20] sm:$0xf]
          %v779 = vld [vmem:[%s769 + $0x24] sm:$0xf]
          %v780 = vld [vmem:[%s769 + $0x28] sm:$0xf]
          %v781 = vld [vmem:[%s769 + $0x2c] sm:$0xf]
          %v782 = vld [vmem:[%s769 + $0x30] sm:$0xf]
          %v783 = vld [vmem:[%s769 + $0x34] sm:$0xf]
          %v784 = vld [vmem:[%s769 + $0x38] sm:$0xf]
          %v785 = vld [vmem:[%s769 + $0x3c] sm:$0xf]
          %v802 = vunpack.c.l.b16 %v693
          %v803 = vunpack.c.l.b16 %v694
          %v804 = vunpack.c.l.b16 %v695
          %v805 = vunpack.c.l.b16 %v696
          %v806 = vunpack.c.l.b16 %v697
          %v807 = vunpack.c.l.b16 %v698
          %v808 = vunpack.c.l.b16 %v699
          %v809 = vunpack.c.l.b16 %v700
          %v810 = vunpack.c.l.b16 %v701
          %v811 = vunpack.c.l.b16 %v702
          %v812 = vunpack.c.l.b16 %v703
          %v813 = vunpack.c.l.b16 %v704
          %v814 = vunpack.c.l.b16 %v705
          %v815 = vunpack.c.l.b16 %v706
          %v816 = vunpack.c.l.b16 %v707
          %v817 = vunpack.c.l.b16 %v708
          %v818 = vpack.c.b16 %v803, %v802
          %v819 = vpack.c.b16 %v805, %v804
          %v820 = vpack.c.b16 %v807, %v806
          %v821 = vpack.c.b16 %v809, %v808
          %v822 = vpack.c.b16 %v811, %v810
          %v823 = vpack.c.b16 %v813, %v812
          %v824 = vpack.c.b16 %v815, %v814
          %v825 = vpack.c.b16 %v817, %v816
          %v842 = vunpack.c.l.b16 %v770
          %v843 = vunpack.c.l.b16 %v771
          %v844 = vunpack.c.l.b16 %v772
          %v845 = vunpack.c.l.b16 %v773
          %v846 = vunpack.c.l.b16 %v774
          %v847 = vunpack.c.l.b16 %v775
          %v848 = vunpack.c.l.b16 %v776
          %v849 = vunpack.c.l.b16 %v777
          %v850 = vunpack.c.l.b16 %v778
          %v851 = vunpack.c.l.b16 %v779
          %v852 = vunpack.c.l.b16 %v780
          %v853 = vunpack.c.l.b16 %v781
          %v854 = vunpack.c.l.b16 %v782
          %v855 = vunpack.c.l.b16 %v783
          %v856 = vunpack.c.l.b16 %v784
          %v857 = vunpack.c.l.b16 %v785
          %v858 = vpack.c.b16 %v843, %v842
          %v859 = vpack.c.b16 %v845, %v844
          %v860 = vpack.c.b16 %v847, %v846
          %v861 = vpack.c.b16 %v849, %v848
          %v862 = vpack.c.b16 %v851, %v850
          %v863 = vpack.c.b16 %v853, %v852
          %v864 = vpack.c.b16 %v855, %v854
          %v865 = vpack.c.b16 %v857, %v856
          %v867 = vsel %vm742, %v818, 0
          %v870 = vsel %vm742, %v819, 0
          %v873 = vsel %vm742, %v820, 0
          %v876 = vsel %vm742, %v821, 0
          %v879 = vsel %vm742, %v822, 0
          %v882 = vsel %vm742, %v823, 0
          %v885 = vsel %vm742, %v824, 0
          %v888 = vsel %vm742, %v825, 0
          %v891 = vsel %vm742, %v858, 0
          %v894 = vsel %vm742, %v859, 0
          %v897 = vsel %vm742, %v860, 0
          %v900 = vsel %vm742, %v861, 0
          %v903 = vsel %vm742, %v862, 0
          %v906 = vsel %vm742, %v863, 0
          %v909 = vsel %vm742, %v864, 0
          %v912 = vsel %vm742, %v865, 0
          %914 = vmatpush.bf16.xpose.msra.mxu0 %v912
          %915 = vmatpush.bf16.xpose.msra.mxu0 %v909
          %916 = vmatpush.bf16.xpose.msra.mxu0 %v906
          %917 = vmatpush.bf16.xpose.msra.mxu0 %v903
          %918 = vmatpush.bf16.xpose.msra.mxu0 %v900
          %919 = vmatpush.bf16.xpose.msra.mxu0 %v897
          %920 = vmatpush.bf16.xpose.msra.mxu0 %v894
          %921 = vmatpush.bf16.xpose.msra.mxu0 %v891
          %922 = vmatmul.bf16.gmra.mxu0 %v867
          %v923 = vpop.f32.mrf.mxu0
          %v924 = vadd.f32 0.0, %v923
          %v925 = vpop.f32.mrf.mxu0
          %v926 = vadd.f32 0.0, %v925
          %927 = vmatmul.bf16.gmra.mxu0 %v870
          %v928 = vpop.f32.mrf.mxu0
          %v929 = vadd.f32 0.0, %v928
          %v930 = vpop.f32.mrf.mxu0
          %v931 = vadd.f32 0.0, %v930
          %932 = vmatmul.bf16.gmra.mxu0 %v873
          %v933 = vpop.f32.mrf.mxu0
          %v934 = vadd.f32 0.0, %v933
          %v935 = vpop.f32.mrf.mxu0
          %v936 = vadd.f32 0.0, %v935
          %937 = vmatmul.bf16.gmra.mxu0 %v876
          %v938 = vpop.f32.mrf.mxu0
          %v939 = vadd.f32 0.0, %v938
          %v940 = vpop.f32.mrf.mxu0
          %v941 = vadd.f32 0.0, %v940
          %942 = vmatmul.bf16.gmra.mxu0 %v879
          %v943 = vpop.f32.mrf.mxu0
          %v944 = vadd.f32 0.0, %v943
          %v945 = vpop.f32.mrf.mxu0
          %v946 = vadd.f32 0.0, %v945
          %947 = vmatmul.bf16.gmra.mxu0 %v882
          %v948 = vpop.f32.mrf.mxu0
          %v949 = vadd.f32 0.0, %v948
          %v950 = vpop.f32.mrf.mxu0
          %v951 = vadd.f32 0.0, %v950
          %952 = vmatmul.bf16.gmra.mxu0 %v885
          %v953 = vpop.f32.mrf.mxu0
          %v954 = vadd.f32 0.0, %v953
          %v955 = vpop.f32.mrf.mxu0
          %v956 = vadd.f32 0.0, %v955
          %957 = vmatmul.bf16.gmra.mxu0 %v888
          %v958 = vpop.f32.mrf.mxu0
          %v959 = vadd.f32 0.0, %v958
          %v960 = vpop.f32.mrf.mxu0
          %v961 = vadd.f32 0.0, %v960
          %962 = vdwg.mxu0
          %v963 = vld [vmem:[#allocation2] sm:$0xff]
          %v964 = vld [vmem:[#allocation2 + $0x8] sm:$0xff]
          %v965 = vld [vmem:[#allocation2 + $0x10] sm:$0xff]
          %v966 = vld [vmem:[#allocation2 + $0x18] sm:$0xff]
          %v967 = vld [vmem:[#allocation2 + $0x20] sm:$0xff]
          %v968 = vld [vmem:[#allocation2 + $0x28] sm:$0xff]
          %v969 = vld [vmem:[#allocation2 + $0x30] sm:$0xff]
          %v970 = vld [vmem:[#allocation2 + $0x38] sm:$0xff]
          %v971 = vld [vmem:[#allocation2 + $0x40] sm:$0xff]
          %v972 = vld [vmem:[#allocation2 + $0x48] sm:$0xff]
          %v973 = vld [vmem:[#allocation2 + $0x50] sm:$0xff]
          %v974 = vld [vmem:[#allocation2 + $0x58] sm:$0xff]
          %v975 = vld [vmem:[#allocation2 + $0x60] sm:$0xff]
          %v976 = vld [vmem:[#allocation2 + $0x68] sm:$0xff]
          %v977 = vld [vmem:[#allocation2 + $0x70] sm:$0xff]
          %v978 = vld [vmem:[#allocation2 + $0x78] sm:$0xff]
          %979 = vmax.xlane.f32.xlu0 %v924
          %v980 = vpop.xlane.xlu0 %979
          %981 = vmax.xlane.f32.xlu0 %v926
          %v982 = vpop.xlane.xlu0 %981
          %983 = vmax.xlane.f32.xlu0 %v929
          %v984 = vpop.xlane.xlu0 %983
          %985 = vmax.xlane.f32.xlu0 %v931
          %v986 = vpop.xlane.xlu0 %985
          %987 = vmax.xlane.f32.xlu0 %v934
          %v988 = vpop.xlane.xlu0 %987
          %989 = vmax.xlane.f32.xlu0 %v936
          %v990 = vpop.xlane.xlu0 %989
          %991 = vmax.xlane.f32.xlu0 %v939
          %v992 = vpop.xlane.xlu0 %991
          %993 = vmax.xlane.f32.xlu0 %v941
          %v994 = vpop.xlane.xlu0 %993
          %995 = vmax.xlane.f32.xlu0 %v944
          %v996 = vpop.xlane.xlu0 %995
          %997 = vmax.xlane.f32.xlu0 %v946
          %v998 = vpop.xlane.xlu0 %997
          %999 = vmax.xlane.f32.xlu0 %v949
          %v1000 = vpop.xlane.xlu0 %999
          %1001 = vmax.xlane.f32.xlu0 %v951
          %v1002 = vpop.xlane.xlu0 %1001
          %1003 = vmax.xlane.f32.xlu0 %v954
          %v1004 = vpop.xlane.xlu0 %1003
          %1005 = vmax.xlane.f32.xlu0 %v956
          %v1006 = vpop.xlane.xlu0 %1005
          %1007 = vmax.xlane.f32.xlu0 %v959
          %v1008 = vpop.xlane.xlu0 %1007
          %1009 = vmax.xlane.f32.xlu0 %v961
          %v1010 = vpop.xlane.xlu0 %1009
          %v1011 = vmax.f32 %v963, %v980
          %v1012 = vmax.f32 %v964, %v982
          %v1013 = vmax.f32 %v965, %v984
          %v1014 = vmax.f32 %v966, %v986
          %v1015 = vmax.f32 %v967, %v988
          %v1016 = vmax.f32 %v968, %v990
          %v1017 = vmax.f32 %v969, %v992
          %v1018 = vmax.f32 %v970, %v994
          %v1019 = vmax.f32 %v971, %v996
          %v1020 = vmax.f32 %v972, %v998
          %v1021 = vmax.f32 %v973, %v1000
          %v1022 = vmax.f32 %v974, %v1002
          %v1023 = vmax.f32 %v975, %v1004
          %v1024 = vmax.f32 %v976, %v1006
          %v1025 = vmax.f32 %v977, %v1008
          %v1026 = vmax.f32 %v978, %v1010
          %v1027 = vsub.f32 %v963, %v1011
          %v1028 = vsub.f32 %v964, %v1012
          %v1029 = vsub.f32 %v965, %v1013
          %v1030 = vsub.f32 %v966, %v1014
          %v1031 = vsub.f32 %v967, %v1015
          %v1032 = vsub.f32 %v968, %v1016
          %v1033 = vsub.f32 %v969, %v1017
          %v1034 = vsub.f32 %v970, %v1018
          %v1035 = vsub.f32 %v971, %v1019
          %v1036 = vsub.f32 %v972, %v1020
          %v1037 = vsub.f32 %v973, %v1021
          %v1038 = vsub.f32 %v974, %v1022
          %v1039 = vsub.f32 %v975, %v1023
          %v1040 = vsub.f32 %v976, %v1024
          %v1041 = vsub.f32 %v977, %v1025
          %v1042 = vsub.f32 %v978, %v1026
          %v1043 = vmul.f32 %v1027, 1.442695
          %v1044 = vpow.pop %v1043
          %v1045 = vmul.f32 %v1028, 1.442695
          %v1046 = vpow.pop %v1045
          %v1047 = vmul.f32 %v1029, 1.442695
          %v1048 = vpow.pop %v1047
          %v1049 = vmul.f32 %v1030, 1.442695
          %v1050 = vpow.pop %v1049
          %v1051 = vmul.f32 %v1031, 1.442695
          %v1052 = vpow.pop %v1051
          %v1053 = vmul.f32 %v1032, 1.442695
          %v1054 = vpow.pop %v1053
          %v1055 = vmul.f32 %v1033, 1.442695
          %v1056 = vpow.pop %v1055
          %v1057 = vmul.f32 %v1034, 1.442695
          %v1058 = vpow.pop %v1057
          %v1059 = vmul.f32 %v1035, 1.442695
          %v1060 = vpow.pop %v1059
          %v1061 = vmul.f32 %v1036, 1.442695
          %v1062 = vpow.pop %v1061
          %v1063 = vmul.f32 %v1037, 1.442695
          %v1064 = vpow.pop %v1063
          %v1065 = vmul.f32 %v1038, 1.442695
          %v1066 = vpow.pop %v1065
          %v1067 = vmul.f32 %v1039, 1.442695
          %v1068 = vpow.pop %v1067
          %v1069 = vmul.f32 %v1040, 1.442695
          %v1070 = vpow.pop %v1069
          %v1071 = vmul.f32 %v1041, 1.442695
          %v1072 = vpow.pop %v1071
          %v1073 = vmul.f32 %v1042, 1.442695
          %v1074 = vpow.pop %v1073
          %1076 = vset.pattern.permute.xlu0 0
          %1077 = vperm.xlu0 %1076, %v1011
          %v1078 = vpop.permute.xlu0 %1077
          %1081 = vset.pattern.permute.xlu0 0
          %1082 = vperm.xlu0 %1081, %v1012
          %v1083 = vpop.permute.xlu0 %1082
          %1086 = vset.pattern.permute.xlu0 0
          %1087 = vperm.xlu0 %1086, %v1013
          %v1088 = vpop.permute.xlu0 %1087
          %1091 = vset.pattern.permute.xlu0 0
          %1092 = vperm.xlu0 %1091, %v1014
          %v1093 = vpop.permute.xlu0 %1092
          %1096 = vset.pattern.permute.xlu0 0
          %1097 = vperm.xlu0 %1096, %v1015
          %v1098 = vpop.permute.xlu0 %1097
          %1101 = vset.pattern.permute.xlu0 0
          %1102 = vperm.xlu0 %1101, %v1016
          %v1103 = vpop.permute.xlu0 %1102
          %1106 = vset.pattern.permute.xlu0 0
          %1107 = vperm.xlu0 %1106, %v1017
          %v1108 = vpop.permute.xlu0 %1107
          %1111 = vset.pattern.permute.xlu0 0
          %1112 = vperm.xlu0 %1111, %v1018
          %v1113 = vpop.permute.xlu0 %1112
          %1116 = vset.pattern.permute.xlu0 0
          %1117 = vperm.xlu0 %1116, %v1019
          %v1118 = vpop.permute.xlu0 %1117
          %1121 = vset.pattern.permute.xlu0 0
          %1122 = vperm.xlu0 %1121, %v1020
          %v1123 = vpop.permute.xlu0 %1122
          %1126 = vset.pattern.permute.xlu0 0
          %1127 = vperm.xlu0 %1126, %v1021
          %v1128 = vpop.permute.xlu0 %1127
          %1131 = vset.pattern.permute.xlu0 0
          %1132 = vperm.xlu0 %1131, %v1022
          %v1133 = vpop.permute.xlu0 %1132
          %1136 = vset.pattern.permute.xlu0 0
          %1137 = vperm.xlu0 %1136, %v1023
          %v1138 = vpop.permute.xlu0 %1137
          %1141 = vset.pattern.permute.xlu0 0
          %1142 = vperm.xlu0 %1141, %v1024
          %v1143 = vpop.permute.xlu0 %1142
          %1146 = vset.pattern.permute.xlu0 0
          %1147 = vperm.xlu0 %1146, %v1025
          %v1148 = vpop.permute.xlu0 %1147
          %1151 = vset.pattern.permute.xlu0 0
          %1152 = vperm.xlu0 %1151, %v1026
          %v1153 = vpop.permute.xlu0 %1152
          %v1155 = vsub.f32 %v924, %v1078
          %v1156 = vsub.f32 %v926, %v1083
          %v1157 = vsub.f32 %v929, %v1088
          %v1158 = vsub.f32 %v931, %v1093
          %v1159 = vsub.f32 %v934, %v1098
          %v1160 = vsub.f32 %v936, %v1103
          %v1161 = vsub.f32 %v939, %v1108
          %v1162 = vsub.f32 %v941, %v1113
          %v1163 = vsub.f32 %v944, %v1118
          %v1164 = vsub.f32 %v946, %v1123
          %v1165 = vsub.f32 %v949, %v1128
          %v1166 = vsub.f32 %v951, %v1133
          %v1167 = vsub.f32 %v954, %v1138
          %v1168 = vsub.f32 %v956, %v1143
          %v1169 = vsub.f32 %v959, %v1148
          %v1170 = vsub.f32 %v961, %v1153
          %v1171 = vpack.c.bf16 %v1156, %v1155
          %v1172 = vpack.c.bf16 %v1158, %v1157
          %v1173 = vpack.c.bf16 %v1160, %v1159
          %v1174 = vpack.c.bf16 %v1162, %v1161
          %v1175 = vpack.c.bf16 %v1164, %v1163
          %v1176 = vpack.c.bf16 %v1166, %v1165
          %v1177 = vpack.c.bf16 %v1168, %v1167
          %v1178 = vpack.c.bf16 %v1170, %v1169
          %v1179 = vunpack.c.l.bf16 %v1171
          %v1180 = vunpack.c.h.bf16 %v1171
          %v1181 = vunpack.c.l.bf16 %v1172
          %v1182 = vunpack.c.h.bf16 %v1172
          %v1183 = vunpack.c.l.bf16 %v1173
          %v1184 = vunpack.c.h.bf16 %v1173
          %v1185 = vunpack.c.l.bf16 %v1174
          %v1186 = vunpack.c.h.bf16 %v1174
          %v1187 = vunpack.c.l.bf16 %v1175
          %v1188 = vunpack.c.h.bf16 %v1175
          %v1189 = vunpack.c.l.bf16 %v1176
          %v1190 = vunpack.c.h.bf16 %v1176
          %v1191 = vunpack.c.l.bf16 %v1177
          %v1192 = vunpack.c.h.bf16 %v1177
          %v1193 = vunpack.c.l.bf16 %v1178
          %v1194 = vunpack.c.h.bf16 %v1178
          %v1195 = vmul.f32 %v1179, 1.442695
          %v1196 = vpow.pop %v1195
          %v1197 = vmul.f32 %v1180, 1.442695
          %v1198 = vpow.pop %v1197
          %v1199 = vmul.f32 %v1181, 1.442695
          %v1200 = vpow.pop %v1199
          %v1201 = vmul.f32 %v1182, 1.442695
          %v1202 = vpow.pop %v1201
          %v1203 = vmul.f32 %v1183, 1.442695
          %v1204 = vpow.pop %v1203
          %v1205 = vmul.f32 %v1184, 1.442695
          %v1206 = vpow.pop %v1205
          %v1207 = vmul.f32 %v1185, 1.442695
          %v1208 = vpow.pop %v1207
          %v1209 = vmul.f32 %v1186, 1.442695
          %v1210 = vpow.pop %v1209
          %v1211 = vmul.f32 %v1187, 1.442695
          %v1212 = vpow.pop %v1211
          %v1213 = vmul.f32 %v1188, 1.442695
          %v1214 = vpow.pop %v1213
          %v1215 = vmul.f32 %v1189, 1.442695
          %v1216 = vpow.pop %v1215
          %v1217 = vmul.f32 %v1190, 1.442695
          %v1218 = vpow.pop %v1217
          %v1219 = vmul.f32 %v1191, 1.442695
          %v1220 = vpow.pop %v1219
          %v1221 = vmul.f32 %v1192, 1.442695
          %v1222 = vpow.pop %v1221
          %v1223 = vmul.f32 %v1193, 1.442695
          %v1224 = vpow.pop %v1223
          %v1225 = vmul.f32 %v1194, 1.442695
          %v1226 = vpow.pop %v1225
          %v1227 = vpack.c.bf16 %v1198, %v1196
          %v1228 = vpack.c.bf16 %v1202, %v1200
          %v1229 = vpack.c.bf16 %v1206, %v1204
          %v1230 = vpack.c.bf16 %v1210, %v1208
          %v1231 = vpack.c.bf16 %v1214, %v1212
          %v1232 = vpack.c.bf16 %v1218, %v1216
          %v1233 = vpack.c.bf16 %v1222, %v1220
          %v1234 = vpack.c.bf16 %v1226, %v1224
          %v1235 = vld [vmem:[#allocation3] sm:$0xff]
          %v1236 = vld [vmem:[#allocation3 + $0x8] sm:$0xff]
          %v1237 = vld [vmem:[#allocation3 + $0x10] sm:$0xff]
          %v1238 = vld [vmem:[#allocation3 + $0x18] sm:$0xff]
          %v1239 = vld [vmem:[#allocation3 + $0x20] sm:$0xff]
          %v1240 = vld [vmem:[#allocation3 + $0x28] sm:$0xff]
          %v1241 = vld [vmem:[#allocation3 + $0x30] sm:$0xff]
          %v1242 = vld [vmem:[#allocation3 + $0x38] sm:$0xff]
          %v1243 = vld [vmem:[#allocation3 + $0x40] sm:$0xff]
          %v1244 = vld [vmem:[#allocation3 + $0x48] sm:$0xff]
          %v1245 = vld [vmem:[#allocation3 + $0x50] sm:$0xff]
          %v1246 = vld [vmem:[#allocation3 + $0x58] sm:$0xff]
          %v1247 = vld [vmem:[#allocation3 + $0x60] sm:$0xff]
          %v1248 = vld [vmem:[#allocation3 + $0x68] sm:$0xff]
          %v1249 = vld [vmem:[#allocation3 + $0x70] sm:$0xff]
          %v1250 = vld [vmem:[#allocation3 + $0x78] sm:$0xff]
          %v1251 = vmul.f32 %v1044, %v1235
          %v1252 = vmul.f32 %v1046, %v1236
          %v1253 = vmul.f32 %v1048, %v1237
          %v1254 = vmul.f32 %v1050, %v1238
          %v1255 = vmul.f32 %v1052, %v1239
          %v1256 = vmul.f32 %v1054, %v1240
          %v1257 = vmul.f32 %v1056, %v1241
          %v1258 = vmul.f32 %v1058, %v1242
          %v1259 = vmul.f32 %v1060, %v1243
          %v1260 = vmul.f32 %v1062, %v1244
          %v1261 = vmul.f32 %v1064, %v1245
          %v1262 = vmul.f32 %v1066, %v1246
          %v1263 = vmul.f32 %v1068, %v1247
          %v1264 = vmul.f32 %v1070, %v1248
          %v1265 = vmul.f32 %v1072, %v1249
          %v1266 = vmul.f32 %v1074, %v1250
          %v1267 = vunpack.c.l.bf16 %v1227
          %v1268 = vunpack.c.h.bf16 %v1227
          %v1269 = vunpack.c.l.bf16 %v1228
          %v1270 = vunpack.c.h.bf16 %v1228
          %v1271 = vunpack.c.l.bf16 %v1229
          %v1272 = vunpack.c.h.bf16 %v1229
          %v1273 = vunpack.c.l.bf16 %v1230
          %v1274 = vunpack.c.h.bf16 %v1230
          %v1275 = vunpack.c.l.bf16 %v1231
          %v1276 = vunpack.c.h.bf16 %v1231
          %v1277 = vunpack.c.l.bf16 %v1232
          %v1278 = vunpack.c.h.bf16 %v1232
          %v1279 = vunpack.c.l.bf16 %v1233
          %v1280 = vunpack.c.h.bf16 %v1233
          %v1281 = vunpack.c.l.bf16 %v1234
          %v1282 = vunpack.c.h.bf16 %v1234
          %1283 = vadd.xlane.f32.xlu0 %v1267
          %v1284 = vpop.xlane.xlu0 %1283
          %1285 = vadd.xlane.f32.xlu0 %v1268
          %v1286 = vpop.xlane.xlu0 %1285
          %1287 = vadd.xlane.f32.xlu0 %v1269
          %v1288 = vpop.xlane.xlu0 %1287
          %1289 = vadd.xlane.f32.xlu0 %v1270
          %v1290 = vpop.xlane.xlu0 %1289
          %1291 = vadd.xlane.f32.xlu0 %v1271
          %v1292 = vpop.xlane.xlu0 %1291
          %1293 = vadd.xlane.f32.xlu0 %v1272
          %v1294 = vpop.xlane.xlu0 %1293
          %1295 = vadd.xlane.f32.xlu0 %v1273
          %v1296 = vpop.xlane.xlu0 %1295
          %1297 = vadd.xlane.f32.xlu0 %v1274
          %v1298 = vpop.xlane.xlu0 %1297
          %1299 = vadd.xlane.f32.xlu0 %v1275
          %v1300 = vpop.xlane.xlu0 %1299
          %1301 = vadd.xlane.f32.xlu0 %v1276
          %v1302 = vpop.xlane.xlu0 %1301
          %1303 = vadd.xlane.f32.xlu0 %v1277
          %v1304 = vpop.xlane.xlu0 %1303
          %1305 = vadd.xlane.f32.xlu0 %v1278
          %v1306 = vpop.xlane.xlu0 %1305
          %1307 = vadd.xlane.f32.xlu0 %v1279
          %v1308 = vpop.xlane.xlu0 %1307
          %1309 = vadd.xlane.f32.xlu0 %v1280
          %v1310 = vpop.xlane.xlu0 %1309
          %1311 = vadd.xlane.f32.xlu0 %v1281
          %v1312 = vpop.xlane.xlu0 %1311
          %1313 = vadd.xlane.f32.xlu0 %v1282
          %v1314 = vpop.xlane.xlu0 %1313
          %v1315 = vadd.f32 %v1251, %v1284
          %v1316 = vadd.f32 %v1252, %v1286
          %v1317 = vadd.f32 %v1253, %v1288
          %v1318 = vadd.f32 %v1254, %v1290
          %v1319 = vadd.f32 %v1255, %v1292
          %v1320 = vadd.f32 %v1256, %v1294
          %v1321 = vadd.f32 %v1257, %v1296
          %v1322 = vadd.f32 %v1258, %v1298
          %v1323 = vadd.f32 %v1259, %v1300
          %v1324 = vadd.f32 %v1260, %v1302
          %v1325 = vadd.f32 %v1261, %v1304
          %v1326 = vadd.f32 %v1262, %v1306
          %v1327 = vadd.f32 %v1263, %v1308
          %v1328 = vadd.f32 %v1264, %v1310
          %v1329 = vadd.f32 %v1265, %v1312
          %v1330 = vadd.f32 %v1266, %v1314
          %1331 = vst.msk [vmem:[#allocation3] sm:$0xff] %vm709, %v1315
          %1332 = vst.msk [vmem:[#allocation3 + $0x8] sm:$0xff] %vm709, %v1316
          %1333 = vst.msk [vmem:[#allocation3 + $0x10] sm:$0xff] %vm709, %v1317
          %1334 = vst.msk [vmem:[#allocation3 + $0x18] sm:$0xff] %vm709, %v1318
          %1335 = vst.msk [vmem:[#allocation3 + $0x20] sm:$0xff] %vm709, %v1319
          %1336 = vst.msk [vmem:[#allocation3 + $0x28] sm:$0xff] %vm709, %v1320
          %1337 = vst.msk [vmem:[#allocation3 + $0x30] sm:$0xff] %vm709, %v1321
          %1338 = vst.msk [vmem:[#allocation3 + $0x38] sm:$0xff] %vm709, %v1322
          %1339 = vst.msk [vmem:[#allocation3 + $0x40] sm:$0xff] %vm709, %v1323
          %1340 = vst.msk [vmem:[#allocation3 + $0x48] sm:$0xff] %vm709, %v1324
          %1341 = vst.msk [vmem:[#allocation3 + $0x50] sm:$0xff] %vm709, %v1325
          %1342 = vst.msk [vmem:[#allocation3 + $0x58] sm:$0xff] %vm709, %v1326
          %1343 = vst.msk [vmem:[#allocation3 + $0x60] sm:$0xff] %vm709, %v1327
          %1344 = vst.msk [vmem:[#allocation3 + $0x68] sm:$0xff] %vm709, %v1328
          %1345 = vst.msk [vmem:[#allocation3 + $0x70] sm:$0xff] %vm709, %v1329
          %1346 = vst.msk [vmem:[#allocation3 + $0x78] sm:$0xff] %vm709, %v1330
          %s1347 = smul.addr %s766, 4
          %s1348 = scalar_lea.vmem %s660, %s1347 [#allocation7]
          %v1349 = vld [vmem:[%s1348] sm:$0xf]
          %v1350 = vld [vmem:[%s1348 + $0x4] sm:$0xf]
          %v1351 = vld [vmem:[%s1348 + $0x8] sm:$0xf]
          %v1352 = vld [vmem:[%s1348 + $0xc] sm:$0xf]
          %v1353 = vld [vmem:[%s1348 + $0x10] sm:$0xf]
          %v1354 = vld [vmem:[%s1348 + $0x14] sm:$0xf]
          %v1355 = vld [vmem:[%s1348 + $0x18] sm:$0xf]
          %v1356 = vld [vmem:[%s1348 + $0x1c] sm:$0xf]
          %v1357 = vld [vmem:[%s1348 + $0x20] sm:$0xf]
          %v1358 = vld [vmem:[%s1348 + $0x24] sm:$0xf]
          %v1359 = vld [vmem:[%s1348 + $0x28] sm:$0xf]
          %v1360 = vld [vmem:[%s1348 + $0x2c] sm:$0xf]
          %v1361 = vld [vmem:[%s1348 + $0x30] sm:$0xf]
          %v1362 = vld [vmem:[%s1348 + $0x34] sm:$0xf]
          %v1363 = vld [vmem:[%s1348 + $0x38] sm:$0xf]
          %v1364 = vld [vmem:[%s1348 + $0x3c] sm:$0xf]
          %v1365 = vld [vmem:[#allocation4] sm:$0xff]
          %v1366 = vld [vmem:[#allocation4 + $0x8] sm:$0xff]
          %v1367 = vld [vmem:[#allocation4 + $0x10] sm:$0xff]
          %v1368 = vld [vmem:[#allocation4 + $0x18] sm:$0xff]
          %v1369 = vld [vmem:[#allocation4 + $0x20] sm:$0xff]
          %v1370 = vld [vmem:[#allocation4 + $0x28] sm:$0xff]
          %v1371 = vld [vmem:[#allocation4 + $0x30] sm:$0xff]
          %v1372 = vld [vmem:[#allocation4 + $0x38] sm:$0xff]
          %v1373 = vld [vmem:[#allocation4 + $0x40] sm:$0xff]
          %v1374 = vld [vmem:[#allocation4 + $0x48] sm:$0xff]
          %v1375 = vld [vmem:[#allocation4 + $0x50] sm:$0xff]
          %v1376 = vld [vmem:[#allocation4 + $0x58] sm:$0xff]
          %v1377 = vld [vmem:[#allocation4 + $0x60] sm:$0xff]
          %v1378 = vld [vmem:[#allocation4 + $0x68] sm:$0xff]
          %v1379 = vld [vmem:[#allocation4 + $0x70] sm:$0xff]
          %v1380 = vld [vmem:[#allocation4 + $0x78] sm:$0xff]
          %1382 = vset.pattern.permute.xlu0 0
          %1383 = vperm.xlu0 %1382, %v1044
          %v1384 = vpop.permute.xlu0 %1383
          %1387 = vset.pattern.permute.xlu0 0
          %1388 = vperm.xlu0 %1387, %v1046
          %v1389 = vpop.permute.xlu0 %1388
          %1392 = vset.pattern.permute.xlu0 0
          %1393 = vperm.xlu0 %1392, %v1048
          %v1394 = vpop.permute.xlu0 %1393
          %1397 = vset.pattern.permute.xlu0 0
          %1398 = vperm.xlu0 %1397, %v1050
          %v1399 = vpop.permute.xlu0 %1398
          %1402 = vset.pattern.permute.xlu0 0
          %1403 = vperm.xlu0 %1402, %v1052
          %v1404 = vpop.permute.xlu0 %1403
          %1407 = vset.pattern.permute.xlu0 0
          %1408 = vperm.xlu0 %1407, %v1054
          %v1409 = vpop.permute.xlu0 %1408
          %1412 = vset.pattern.permute.xlu0 0
          %1413 = vperm.xlu0 %1412, %v1056
          %v1414 = vpop.permute.xlu0 %1413
          %1417 = vset.pattern.permute.xlu0 0
          %1418 = vperm.xlu0 %1417, %v1058
          %v1419 = vpop.permute.xlu0 %1418
          %1422 = vset.pattern.permute.xlu0 0
          %1423 = vperm.xlu0 %1422, %v1060
          %v1424 = vpop.permute.xlu0 %1423
          %1427 = vset.pattern.permute.xlu0 0
          %1428 = vperm.xlu0 %1427, %v1062
          %v1429 = vpop.permute.xlu0 %1428
          %1432 = vset.pattern.permute.xlu0 0
          %1433 = vperm.xlu0 %1432, %v1064
          %v1434 = vpop.permute.xlu0 %1433
          %1437 = vset.pattern.permute.xlu0 0
          %1438 = vperm.xlu0 %1437, %v1066
          %v1439 = vpop.permute.xlu0 %1438
          %1442 = vset.pattern.permute.xlu0 0
          %1443 = vperm.xlu0 %1442, %v1068
          %v1444 = vpop.permute.xlu0 %1443
          %1447 = vset.pattern.permute.xlu0 0
          %1448 = vperm.xlu0 %1447, %v1070
          %v1449 = vpop.permute.xlu0 %1448
          %1452 = vset.pattern.permute.xlu0 0
          %1453 = vperm.xlu0 %1452, %v1072
          %v1454 = vpop.permute.xlu0 %1453
          %1457 = vset.pattern.permute.xlu0 0
          %1458 = vperm.xlu0 %1457, %v1074
          %v1459 = vpop.permute.xlu0 %1458
          %v1461 = vmul.f32 %v1384, %v1365
          %v1462 = vmul.f32 %v1389, %v1366
          %v1463 = vmul.f32 %v1394, %v1367
          %v1464 = vmul.f32 %v1399, %v1368
          %v1465 = vmul.f32 %v1404, %v1369
          %v1466 = vmul.f32 %v1409, %v1370
          %v1467 = vmul.f32 %v1414, %v1371
          %v1468 = vmul.f32 %v1419, %v1372
          %v1469 = vmul.f32 %v1424, %v1373
          %v1470 = vmul.f32 %v1429, %v1374
          %v1471 = vmul.f32 %v1434, %v1375
          %v1472 = vmul.f32 %v1439, %v1376
          %v1473 = vmul.f32 %v1444, %v1377
          %v1474 = vmul.f32 %v1449, %v1378
          %v1475 = vmul.f32 %v1454, %v1379
          %v1476 = vmul.f32 %v1459, %v1380
          %v1493 = vunpack.c.l.b16 %v1349
          %v1494 = vunpack.c.l.b16 %v1350
          %v1495 = vunpack.c.l.b16 %v1351
          %v1496 = vunpack.c.l.b16 %v1352
          %v1497 = vunpack.c.l.b16 %v1353
          %v1498 = vunpack.c.l.b16 %v1354
          %v1499 = vunpack.c.l.b16 %v1355
          %v1500 = vunpack.c.l.b16 %v1356
          %v1501 = vunpack.c.l.b16 %v1357
          %v1502 = vunpack.c.l.b16 %v1358
          %v1503 = vunpack.c.l.b16 %v1359
          %v1504 = vunpack.c.l.b16 %v1360
          %v1505 = vunpack.c.l.b16 %v1361
          %v1506 = vunpack.c.l.b16 %v1362
          %v1507 = vunpack.c.l.b16 %v1363
          %v1508 = vunpack.c.l.b16 %v1364
          %v1509 = vpack.c.b16 %v1494, %v1493
          %v1510 = vpack.c.b16 %v1496, %v1495
          %v1511 = vpack.c.b16 %v1498, %v1497
          %v1512 = vpack.c.b16 %v1500, %v1499
          %v1513 = vpack.c.b16 %v1502, %v1501
          %v1514 = vpack.c.b16 %v1504, %v1503
          %v1515 = vpack.c.b16 %v1506, %v1505
          %v1516 = vpack.c.b16 %v1508, %v1507
          %1525 = vmatpush.bf16.msra.mxu0 %v1516
          %1526 = vmatpush.bf16.msra.mxu0 %v1515
          %1527 = vmatpush.bf16.msra.mxu0 %v1514
          %1528 = vmatpush.bf16.msra.mxu0 %v1513
          %1529 = vmatpush.bf16.msra.mxu0 %v1512
          %1530 = vmatpush.bf16.msra.mxu0 %v1511
          %1531 = vmatpush.bf16.msra.mxu0 %v1510
          %1532 = vmatpush.bf16.msra.mxu0 %v1509
          %1533 = vmatmul.bf16.gmra.mxu0 %v1227
          %v1534 = vpop.f32.mrf.mxu0
          %v1535 = vadd.f32 0.0, %v1534
          %v1536 = vpop.f32.mrf.mxu0
          %v1537 = vadd.f32 0.0, %v1536
          %1538 = vmatmul.bf16.gmra.mxu0 %v1228
          %v1539 = vpop.f32.mrf.mxu0
          %v1540 = vadd.f32 0.0, %v1539
          %v1541 = vpop.f32.mrf.mxu0
          %v1542 = vadd.f32 0.0, %v1541
          %1543 = vmatmul.bf16.gmra.mxu0 %v1229
          %v1544 = vpop.f32.mrf.mxu0
          %v1545 = vadd.f32 0.0, %v1544
          %v1546 = vpop.f32.mrf.mxu0
          %v1547 = vadd.f32 0.0, %v1546
          %1548 = vmatmul.bf16.gmra.mxu0 %v1230
          %v1549 = vpop.f32.mrf.mxu0
          %v1550 = vadd.f32 0.0, %v1549
          %v1551 = vpop.f32.mrf.mxu0
          %v1552 = vadd.f32 0.0, %v1551
          %1553 = vmatmul.bf16.gmra.mxu0 %v1231
          %v1554 = vpop.f32.mrf.mxu0
          %v1555 = vadd.f32 0.0, %v1554
          %v1556 = vpop.f32.mrf.mxu0
          %v1557 = vadd.f32 0.0, %v1556
          %1558 = vmatmul.bf16.gmra.mxu0 %v1232
          %v1559 = vpop.f32.mrf.mxu0
          %v1560 = vadd.f32 0.0, %v1559
          %v1561 = vpop.f32.mrf.mxu0
          %v1562 = vadd.f32 0.0, %v1561
          %1563 = vmatmul.bf16.gmra.mxu0 %v1233
          %v1564 = vpop.f32.mrf.mxu0
          %v1565 = vadd.f32 0.0, %v1564
          %v1566 = vpop.f32.mrf.mxu0
          %v1567 = vadd.f32 0.0, %v1566
          %1568 = vmatmul.bf16.gmra.mxu0 %v1234
          %v1569 = vpop.f32.mrf.mxu0
          %v1570 = vadd.f32 0.0, %v1569
          %v1571 = vpop.f32.mrf.mxu0
          %v1572 = vadd.f32 0.0, %v1571
          %1573 = vdwg.mxu0
          %v1574 = vadd.f32 %v1461, %v1535
          %v1575 = vadd.f32 %v1462, %v1537
          %v1576 = vadd.f32 %v1463, %v1540
          %v1577 = vadd.f32 %v1464, %v1542
          %v1578 = vadd.f32 %v1465, %v1545
          %v1579 = vadd.f32 %v1466, %v1547
          %v1580 = vadd.f32 %v1467, %v1550
          %v1581 = vadd.f32 %v1468, %v1552
          %v1582 = vadd.f32 %v1469, %v1555
          %v1583 = vadd.f32 %v1470, %v1557
          %v1584 = vadd.f32 %v1471, %v1560
          %v1585 = vadd.f32 %v1472, %v1562
          %v1586 = vadd.f32 %v1473, %v1565
          %v1587 = vadd.f32 %v1474, %v1567
          %v1588 = vadd.f32 %v1475, %v1570
          %v1589 = vadd.f32 %v1476, %v1572
          %1590 = vst.msk [vmem:[#allocation4] sm:$0xff] %vm742, %v1574
          %1591 = vst.msk [vmem:[#allocation4 + $0x8] sm:$0xff] %vm742, %v1575
          %1592 = vst.msk [vmem:[#allocation4 + $0x10] sm:$0xff] %vm742, %v1576
          %1593 = vst.msk [vmem:[#allocation4 + $0x18] sm:$0xff] %vm742, %v1577
          %1594 = vst.msk [vmem:[#allocation4 + $0x20] sm:$0xff] %vm742, %v1578
          %1595 = vst.msk [vmem:[#allocation4 + $0x28] sm:$0xff] %vm742, %v1579
          %1596 = vst.msk [vmem:[#allocation4 + $0x30] sm:$0xff] %vm742, %v1580
          %1597 = vst.msk [vmem:[#allocation4 + $0x38] sm:$0xff] %vm742, %v1581
          %1598 = vst.msk [vmem:[#allocation4 + $0x40] sm:$0xff] %vm742, %v1582
          %1599 = vst.msk [vmem:[#allocation4 + $0x48] sm:$0xff] %vm742, %v1583
          %1600 = vst.msk [vmem:[#allocation4 + $0x50] sm:$0xff] %vm742, %v1584
          %1601 = vst.msk [vmem:[#allocation4 + $0x58] sm:$0xff] %vm742, %v1585
          %1602 = vst.msk [vmem:[#allocation4 + $0x60] sm:$0xff] %vm742, %v1586
          %1603 = vst.msk [vmem:[#allocation4 + $0x68] sm:$0xff] %vm742, %v1587
          %1604 = vst.msk [vmem:[#allocation4 + $0x70] sm:$0xff] %vm742, %v1588
          %1605 = vst.msk [vmem:[#allocation4 + $0x78] sm:$0xff] %vm742, %v1589
          %1606 = vst.msk [vmem:[#allocation2] sm:$0xff] %vm709, %v1011
          %1607 = vst.msk [vmem:[#allocation2 + $0x8] sm:$0xff] %vm709, %v1012
          %1608 = vst.msk [vmem:[#allocation2 + $0x10] sm:$0xff] %vm709, %v1013
          %1609 = vst.msk [vmem:[#allocation2 + $0x18] sm:$0xff] %vm709, %v1014
          %1610 = vst.msk [vmem:[#allocation2 + $0x20] sm:$0xff] %vm709, %v1015
          %1611 = vst.msk [vmem:[#allocation2 + $0x28] sm:$0xff] %vm709, %v1016
          %1612 = vst.msk [vmem:[#allocation2 + $0x30] sm:$0xff] %vm709, %v1017
          %1613 = vst.msk [vmem:[#allocation2 + $0x38] sm:$0xff] %vm709, %v1018
          %1614 = vst.msk [vmem:[#allocation2 + $0x40] sm:$0xff] %vm709, %v1019
          %1615 = vst.msk [vmem:[#allocation2 + $0x48] sm:$0xff] %vm709, %v1020
          %1616 = vst.msk [vmem:[#allocation2 + $0x50] sm:$0xff] %vm709, %v1021
          %1617 = vst.msk [vmem:[#allocation2 + $0x58] sm:$0xff] %vm709, %v1022
          %1618 = vst.msk [vmem:[#allocation2 + $0x60] sm:$0xff] %vm709, %v1023
          %1619 = vst.msk [vmem:[#allocation2 + $0x68] sm:$0xff] %vm709, %v1024
          %1620 = vst.msk [vmem:[#allocation2 + $0x70] sm:$0xff] %vm709, %v1025
          %1621 = vst.msk [vmem:[#allocation2 + $0x78] sm:$0xff] %vm709, %v1026
        $region160: #{causal_self_attention.4} parent=142 // loop_footer
          %s762 = sadd.s32 %s760, 1
        $region161: #{causal_self_attention.4} parent=142 // loop_footer_branch
          %759 = sbr.rel target = $region157
        $region162: #{causal_self_attention.4} parent=142 // loop_exit
          _
        %s1622 = sshra.s32 %s692, 3
        %s1623 = sand.u32 %s692, 7
        %s1624 = smul.addr %s1622, 4
        %s1625 = scalar_lea.vmem %s653, %s1624 [#allocation6]
        %v1626 = vld [vmem:[%s1625] sm:$0xf]
        %v1627 = vld [vmem:[%s1625 + $0x4] sm:$0xf]
        %v1628 = vld [vmem:[%s1625 + $0x8] sm:$0xf]
        %v1629 = vld [vmem:[%s1625 + $0xc] sm:$0xf]
        %v1630 = vld [vmem:[%s1625 + $0x10] sm:$0xf]
        %v1631 = vld [vmem:[%s1625 + $0x14] sm:$0xf]
        %v1632 = vld [vmem:[%s1625 + $0x18] sm:$0xf]
        %v1633 = vld [vmem:[%s1625 + $0x1c] sm:$0xf]
        %v1634 = vld [vmem:[%s1625 + $0x20] sm:$0xf]
        %v1635 = vld [vmem:[%s1625 + $0x24] sm:$0xf]
        %v1636 = vld [vmem:[%s1625 + $0x28] sm:$0xf]
        %v1637 = vld [vmem:[%s1625 + $0x2c] sm:$0xf]
        %v1638 = vld [vmem:[%s1625 + $0x30] sm:$0xf]
        %v1639 = vld [vmem:[%s1625 + $0x34] sm:$0xf]
        %v1640 = vld [vmem:[%s1625 + $0x38] sm:$0xf]
        %v1641 = vld [vmem:[%s1625 + $0x3c] sm:$0xf]
        %v1658 = vunpack.c.l.b16 %v693
        %v1659 = vunpack.c.l.b16 %v694
        %v1660 = vunpack.c.l.b16 %v695
        %v1661 = vunpack.c.l.b16 %v696
        %v1662 = vunpack.c.l.b16 %v697
        %v1663 = vunpack.c.l.b16 %v698
        %v1664 = vunpack.c.l.b16 %v699
        %v1665 = vunpack.c.l.b16 %v700
        %v1666 = vunpack.c.l.b16 %v701
        %v1667 = vunpack.c.l.b16 %v702
        %v1668 = vunpack.c.l.b16 %v703
        %v1669 = vunpack.c.l.b16 %v704
        %v1670 = vunpack.c.l.b16 %v705
        %v1671 = vunpack.c.l.b16 %v706
        %v1672 = vunpack.c.l.b16 %v707
        %v1673 = vunpack.c.l.b16 %v708
        %v1674 = vpack.c.b16 %v1659, %v1658
        %v1675 = vpack.c.b16 %v1661, %v1660
        %v1676 = vpack.c.b16 %v1663, %v1662
        %v1677 = vpack.c.b16 %v1665, %v1664
        %v1678 = vpack.c.b16 %v1667, %v1666
        %v1679 = vpack.c.b16 %v1669, %v1668
        %v1680 = vpack.c.b16 %v1671, %v1670
        %v1681 = vpack.c.b16 %v1673, %v1672
        %v1698 = vunpack.c.l.b16 %v1626
        %v1699 = vunpack.c.l.b16 %v1627
        %v1700 = vunpack.c.l.b16 %v1628
        %v1701 = vunpack.c.l.b16 %v1629
        %v1702 = vunpack.c.l.b16 %v1630
        %v1703 = vunpack.c.l.b16 %v1631
        %v1704 = vunpack.c.l.b16 %v1632
        %v1705 = vunpack.c.l.b16 %v1633
        %v1706 = vunpack.c.l.b16 %v1634
        %v1707 = vunpack.c.l.b16 %v1635
        %v1708 = vunpack.c.l.b16 %v1636
        %v1709 = vunpack.c.l.b16 %v1637
        %v1710 = vunpack.c.l.b16 %v1638
        %v1711 = vunpack.c.l.b16 %v1639
        %v1712 = vunpack.c.l.b16 %v1640
        %v1713 = vunpack.c.l.b16 %v1641
        %v1714 = vpack.c.b16 %v1699, %v1698
        %v1715 = vpack.c.b16 %v1701, %v1700
        %v1716 = vpack.c.b16 %v1703, %v1702
        %v1717 = vpack.c.b16 %v1705, %v1704
        %v1718 = vpack.c.b16 %v1707, %v1706
        %v1719 = vpack.c.b16 %v1709, %v1708
        %v1720 = vpack.c.b16 %v1711, %v1710
        %v1721 = vpack.c.b16 %v1713, %v1712
        %v1723 = vsel %vm742, %v1674, 0
        %v1726 = vsel %vm742, %v1675, 0
        %v1729 = vsel %vm742, %v1676, 0
        %v1732 = vsel %vm742, %v1677, 0
        %v1735 = vsel %vm742, %v1678, 0
        %v1738 = vsel %vm742, %v1679, 0
        %v1741 = vsel %vm742, %v1680, 0
        %v1744 = vsel %vm742, %v1681, 0
        %v1747 = vsel %vm742, %v1714, 0
        %v1750 = vsel %vm742, %v1715, 0
        %v1753 = vsel %vm742, %v1716, 0
        %v1756 = vsel %vm742, %v1717, 0
        %v1759 = vsel %vm742, %v1718, 0
        %v1762 = vsel %vm742, %v1719, 0
        %v1765 = vsel %vm742, %v1720, 0
        %v1768 = vsel %vm742, %v1721, 0
        %1770 = vmatpush.bf16.xpose.msra.mxu0 %v1768
        %1771 = vmatpush.bf16.xpose.msra.mxu0 %v1765
        %1772 = vmatpush.bf16.xpose.msra.mxu0 %v1762
        %1773 = vmatpush.bf16.xpose.msra.mxu0 %v1759
        %1774 = vmatpush.bf16.xpose.msra.mxu0 %v1756
        %1775 = vmatpush.bf16.xpose.msra.mxu0 %v1753
        %1776 = vmatpush.bf16.xpose.msra.mxu0 %v1750
        %1777 = vmatpush.bf16.xpose.msra.mxu0 %v1747
        %1778 = vmatmul.bf16.gmra.mxu0 %v1723
        %v1779 = vpop.f32.mrf.mxu0
        %v1780 = vadd.f32 0.0, %v1779
        %v1781 = vpop.f32.mrf.mxu0
        %v1782 = vadd.f32 0.0, %v1781
        %1783 = vmatmul.bf16.gmra.mxu0 %v1726
        %v1784 = vpop.f32.mrf.mxu0
        %v1785 = vadd.f32 0.0, %v1784
        %v1786 = vpop.f32.mrf.mxu0
        %v1787 = vadd.f32 0.0, %v1786
        %1788 = vmatmul.bf16.gmra.mxu0 %v1729
        %v1789 = vpop.f32.mrf.mxu0
        %v1790 = vadd.f32 0.0, %v1789
        %v1791 = vpop.f32.mrf.mxu0
        %v1792 = vadd.f32 0.0, %v1791
        %1793 = vmatmul.bf16.gmra.mxu0 %v1732
        %v1794 = vpop.f32.mrf.mxu0
        %v1795 = vadd.f32 0.0, %v1794
        %v1796 = vpop.f32.mrf.mxu0
        %v1797 = vadd.f32 0.0, %v1796
        %1798 = vmatmul.bf16.gmra.mxu0 %v1735
        %v1799 = vpop.f32.mrf.mxu0
        %v1800 = vadd.f32 0.0, %v1799
        %v1801 = vpop.f32.mrf.mxu0
        %v1802 = vadd.f32 0.0, %v1801
        %1803 = vmatmul.bf16.gmra.mxu0 %v1738
        %v1804 = vpop.f32.mrf.mxu0
        %v1805 = vadd.f32 0.0, %v1804
        %v1806 = vpop.f32.mrf.mxu0
        %v1807 = vadd.f32 0.0, %v1806
        %1808 = vmatmul.bf16.gmra.mxu0 %v1741
        %v1809 = vpop.f32.mrf.mxu0
        %v1810 = vadd.f32 0.0, %v1809
        %v1811 = vpop.f32.mrf.mxu0
        %v1812 = vadd.f32 0.0, %v1811
        %1813 = vmatmul.bf16.gmra.mxu0 %v1744
        %v1814 = vpop.f32.mrf.mxu0
        %v1815 = vadd.f32 0.0, %v1814
        %v1816 = vpop.f32.mrf.mxu0
        %v1817 = vadd.f32 0.0, %v1816
        %1818 = vdwg.mxu0
        %v1819 = vlaneseq
        %v1820 = vshrl.u32 %v1819, 7
        %v1821 = vadd.s32 %v1820, 8
        %v1822 = vadd.s32 %v1820, 16
        %v1823 = vadd.s32 %v1820, 24
        %v1824 = vadd.s32 %v1820, 32
        %v1825 = vadd.s32 %v1820, 40
        %v1826 = vadd.s32 %v1820, 48
        %v1827 = vadd.s32 %v1820, 56
        %v1828 = vadd.s32 %v1820, 64
        %v1829 = vadd.s32 %v1820, 72
        %v1830 = vadd.s32 %v1820, 80
        %v1831 = vadd.s32 %v1820, 88
        %v1832 = vadd.s32 %v1820, 96
        %v1833 = vadd.s32 %v1820, 104
        %v1834 = vadd.s32 %v1820, 112
        %v1835 = vadd.s32 %v1820, 120
        %v1836 = vstv %s692
        %v1837 = vadd.s32 %v1836, %v1820
        %v1838 = vadd.s32 %v1836, %v1821
        %v1839 = vadd.s32 %v1836, %v1822
        %v1840 = vadd.s32 %v1836, %v1823
        %v1841 = vadd.s32 %v1836, %v1824
        %v1842 = vadd.s32 %v1836, %v1825
        %v1843 = vadd.s32 %v1836, %v1826
        %v1844 = vadd.s32 %v1836, %v1827
        %v1845 = vadd.s32 %v1836, %v1828
        %v1846 = vadd.s32 %v1836, %v1829
        %v1847 = vadd.s32 %v1836, %v1830
        %v1848 = vadd.s32 %v1836, %v1831
        %v1849 = vadd.s32 %v1836, %v1832
        %v1850 = vadd.s32 %v1836, %v1833
        %v1851 = vadd.s32 %v1836, %v1834
        %v1852 = vadd.s32 %v1836, %v1835
        %v1853 = vlaneseq
        %v1854 = vand.u32 %v1853, 127
        %v1855 = vstv %s692
        %v1856 = vadd.s32 %v1855, %v1854
        %vm1857 = vcmp.le.s32.totalorder %v1856, %v1837
        %vm1858 = vcmp.le.s32.totalorder %v1856, %v1838
        %vm1859 = vcmp.le.s32.totalorder %v1856, %v1839
        %vm1860 = vcmp.le.s32.totalorder %v1856, %v1840
        %vm1861 = vcmp.le.s32.totalorder %v1856, %v1841
        %vm1862 = vcmp.le.s32.totalorder %v1856, %v1842
        %vm1863 = vcmp.le.s32.totalorder %v1856, %v1843
        %vm1864 = vcmp.le.s32.totalorder %v1856, %v1844
        %vm1865 = vcmp.le.s32.totalorder %v1856, %v1845
        %vm1866 = vcmp.le.s32.totalorder %v1856, %v1846
        %vm1867 = vcmp.le.s32.totalorder %v1856, %v1847
        %vm1868 = vcmp.le.s32.totalorder %v1856, %v1848
        %vm1869 = vcmp.le.s32.totalorder %v1856, %v1849
        %vm1870 = vcmp.le.s32.totalorder %v1856, %v1850
        %vm1871 = vcmp.le.s32.totalorder %v1856, %v1851
        %vm1872 = vcmp.le.s32.totalorder %v1856, %v1852
        %v1873 = vsel %vm1857, %v1780, -1e+30
        %v1874 = vsel %vm1858, %v1782, -1e+30
        %v1875 = vsel %vm1859, %v1785, -1e+30
        %v1876 = vsel %vm1860, %v1787, -1e+30
        %v1877 = vsel %vm1861, %v1790, -1e+30
        %v1878 = vsel %vm1862, %v1792, -1e+30
        %v1879 = vsel %vm1863, %v1795, -1e+30
        %v1880 = vsel %vm1864, %v1797, -1e+30
        %v1881 = vsel %vm1865, %v1800, -1e+30
        %v1882 = vsel %vm1866, %v1802, -1e+30
        %v1883 = vsel %vm1867, %v1805, -1e+30
        %v1884 = vsel %vm1868, %v1807, -1e+30
        %v1885 = vsel %vm1869, %v1810, -1e+30
        %v1886 = vsel %vm1870, %v1812, -1e+30
        %v1887 = vsel %vm1871, %v1815, -1e+30
        %v1888 = vsel %vm1872, %v1817, -1e+30
        %v1889 = vld [vmem:[#allocation2] sm:$0xff]
        %v1890 = vld [vmem:[#allocation2 + $0x8] sm:$0xff]
        %v1891 = vld [vmem:[#allocation2 + $0x10] sm:$0xff]
        %v1892 = vld [vmem:[#allocation2 + $0x18] sm:$0xff]
        %v1893 = vld [vmem:[#allocation2 + $0x20] sm:$0xff]
        %v1894 = vld [vmem:[#allocation2 + $0x28] sm:$0xff]
        %v1895 = vld [vmem:[#allocation2 + $0x30] sm:$0xff]
        %v1896 = vld [vmem:[#allocation2 + $0x38] sm:$0xff]
        %v1897 = vld [vmem:[#allocation2 + $0x40] sm:$0xff]
        %v1898 = vld [vmem:[#allocation2 + $0x48] sm:$0xff]
        %v1899 = vld [vmem:[#allocation2 + $0x50] sm:$0xff]
        %v1900 = vld [vmem:[#allocation2 + $0x58] sm:$0xff]
        %v1901 = vld [vmem:[#allocation2 + $0x60] sm:$0xff]
        %v1902 = vld [vmem:[#allocation2 + $0x68] sm:$0xff]
        %v1903 = vld [vmem:[#allocation2 + $0x70] sm:$0xff]
        %v1904 = vld [vmem:[#allocation2 + $0x78] sm:$0xff]
        %1905 = vmax.xlane.f32.xlu0 %v1873
        %v1906 = vpop.xlane.xlu0 %1905
        %1907 = vmax.xlane.f32.xlu0 %v1874
        %v1908 = vpop.xlane.xlu0 %1907
        %1909 = vmax.xlane.f32.xlu0 %v1875
        %v1910 = vpop.xlane.xlu0 %1909
        %1911 = vmax.xlane.f32.xlu0 %v1876
        %v1912 = vpop.xlane.xlu0 %1911
        %1913 = vmax.xlane.f32.xlu0 %v1877
        %v1914 = vpop.xlane.xlu0 %1913
        %1915 = vmax.xlane.f32.xlu0 %v1878
        %v1916 = vpop.xlane.xlu0 %1915
        %1917 = vmax.xlane.f32.xlu0 %v1879
        %v1918 = vpop.xlane.xlu0 %1917
        %1919 = vmax.xlane.f32.xlu0 %v1880
        %v1920 = vpop.xlane.xlu0 %1919
        %1921 = vmax.xlane.f32.xlu0 %v1881
        %v1922 = vpop.xlane.xlu0 %1921
        %1923 = vmax.xlane.f32.xlu0 %v1882
        %v1924 = vpop.xlane.xlu0 %1923
        %1925 = vmax.xlane.f32.xlu0 %v1883
        %v1926 = vpop.xlane.xlu0 %1925
        %1927 = vmax.xlane.f32.xlu0 %v1884
        %v1928 = vpop.xlane.xlu0 %1927
        %1929 = vmax.xlane.f32.xlu0 %v1885
        %v1930 = vpop.xlane.xlu0 %1929
        %1931 = vmax.xlane.f32.xlu0 %v1886
        %v1932 = vpop.xlane.xlu0 %1931
        %1933 = vmax.xlane.f32.xlu0 %v1887
        %v1934 = vpop.xlane.xlu0 %1933
        %1935 = vmax.xlane.f32.xlu0 %v1888
        %v1936 = vpop.xlane.xlu0 %1935
        %v1937 = vmax.f32 %v1889, %v1906
        %v1938 = vmax.f32 %v1890, %v1908
        %v1939 = vmax.f32 %v1891, %v1910
        %v1940 = vmax.f32 %v1892, %v1912
        %v1941 = vmax.f32 %v1893, %v1914
        %v1942 = vmax.f32 %v1894, %v1916
        %v1943 = vmax.f32 %v1895, %v1918
        %v1944 = vmax.f32 %v1896, %v1920
        %v1945 = vmax.f32 %v1897, %v1922
        %v1946 = vmax.f32 %v1898, %v1924
        %v1947 = vmax.f32 %v1899, %v1926
        %v1948 = vmax.f32 %v1900, %v1928
        %v1949 = vmax.f32 %v1901, %v1930
        %v1950 = vmax.f32 %v1902, %v1932
        %v1951 = vmax.f32 %v1903, %v1934
        %v1952 = vmax.f32 %v1904, %v1936
        %v1953 = vsub.f32 %v1889, %v1937
        %v1954 = vsub.f32 %v1890, %v1938
        %v1955 = vsub.f32 %v1891, %v1939
        %v1956 = vsub.f32 %v1892, %v1940
        %v1957 = vsub.f32 %v1893, %v1941
        %v1958 = vsub.f32 %v1894, %v1942
        %v1959 = vsub.f32 %v1895, %v1943
        %v1960 = vsub.f32 %v1896, %v1944
        %v1961 = vsub.f32 %v1897, %v1945
        %v1962 = vsub.f32 %v1898, %v1946
        %v1963 = vsub.f32 %v1899, %v1947
        %v1964 = vsub.f32 %v1900, %v1948
        %v1965 = vsub.f32 %v1901, %v1949
        %v1966 = vsub.f32 %v1902, %v1950
        %v1967 = vsub.f32 %v1903, %v1951
        %v1968 = vsub.f32 %v1904, %v1952
        %v1969 = vmul.f32 %v1953, 1.442695
        %v1970 = vpow.pop %v1969
        %v1971 = vmul.f32 %v1954, 1.442695
        %v1972 = vpow.pop %v1971
        %v1973 = vmul.f32 %v1955, 1.442695
        %v1974 = vpow.pop %v1973
        %v1975 = vmul.f32 %v1956, 1.442695
        %v1976 = vpow.pop %v1975
        %v1977 = vmul.f32 %v1957, 1.442695
        %v1978 = vpow.pop %v1977
        %v1979 = vmul.f32 %v1958, 1.442695
        %v1980 = vpow.pop %v1979
        %v1981 = vmul.f32 %v1959, 1.442695
        %v1982 = vpow.pop %v1981
        %v1983 = vmul.f32 %v1960, 1.442695
        %v1984 = vpow.pop %v1983
        %v1985 = vmul.f32 %v1961, 1.442695
        %v1986 = vpow.pop %v1985
        %v1987 = vmul.f32 %v1962, 1.442695
        %v1988 = vpow.pop %v1987
        %v1989 = vmul.f32 %v1963, 1.442695
        %v1990 = vpow.pop %v1989
        %v1991 = vmul.f32 %v1964, 1.442695
        %v1992 = vpow.pop %v1991
        %v1993 = vmul.f32 %v1965, 1.442695
        %v1994 = vpow.pop %v1993
        %v1995 = vmul.f32 %v1966, 1.442695
        %v1996 = vpow.pop %v1995
        %v1997 = vmul.f32 %v1967, 1.442695
        %v1998 = vpow.pop %v1997
        %v1999 = vmul.f32 %v1968, 1.442695
        %v2000 = vpow.pop %v1999
        %2002 = vset.pattern.permute.xlu0 0
        %2003 = vperm.xlu0 %2002, %v1937
        %v2004 = vpop.permute.xlu0 %2003
        %2007 = vset.pattern.permute.xlu0 0
        %2008 = vperm.xlu0 %2007, %v1938
        %v2009 = vpop.permute.xlu0 %2008
        %2012 = vset.pattern.permute.xlu0 0
        %2013 = vperm.xlu0 %2012, %v1939
        %v2014 = vpop.permute.xlu0 %2013
        %2017 = vset.pattern.permute.xlu0 0
        %2018 = vperm.xlu0 %2017, %v1940
        %v2019 = vpop.permute.xlu0 %2018
        %2022 = vset.pattern.permute.xlu0 0
        %2023 = vperm.xlu0 %2022, %v1941
        %v2024 = vpop.permute.xlu0 %2023
        %2027 = vset.pattern.permute.xlu0 0
        %2028 = vperm.xlu0 %2027, %v1942
        %v2029 = vpop.permute.xlu0 %2028
        %2032 = vset.pattern.permute.xlu0 0
        %2033 = vperm.xlu0 %2032, %v1943
        %v2034 = vpop.permute.xlu0 %2033
        %2037 = vset.pattern.permute.xlu0 0
        %2038 = vperm.xlu0 %2037, %v1944
        %v2039 = vpop.permute.xlu0 %2038
        %2042 = vset.pattern.permute.xlu0 0
        %2043 = vperm.xlu0 %2042, %v1945
        %v2044 = vpop.permute.xlu0 %2043
        %2047 = vset.pattern.permute.xlu0 0
        %2048 = vperm.xlu0 %2047, %v1946
        %v2049 = vpop.permute.xlu0 %2048
        %2052 = vset.pattern.permute.xlu0 0
        %2053 = vperm.xlu0 %2052, %v1947
        %v2054 = vpop.permute.xlu0 %2053
        %2057 = vset.pattern.permute.xlu0 0
        %2058 = vperm.xlu0 %2057, %v1948
        %v2059 = vpop.permute.xlu0 %2058
        %2062 = vset.pattern.permute.xlu0 0
        %2063 = vperm.xlu0 %2062, %v1949
        %v2064 = vpop.permute.xlu0 %2063
        %2067 = vset.pattern.permute.xlu0 0
        %2068 = vperm.xlu0 %2067, %v1950
        %v2069 = vpop.permute.xlu0 %2068
        %2072 = vset.pattern.permute.xlu0 0
        %2073 = vperm.xlu0 %2072, %v1951
        %v2074 = vpop.permute.xlu0 %2073
        %2077 = vset.pattern.permute.xlu0 0
        %2078 = vperm.xlu0 %2077, %v1952
        %v2079 = vpop.permute.xlu0 %2078
        %v2081 = vsub.f32 %v1873, %v2004
        %v2082 = vsub.f32 %v1874, %v2009
        %v2083 = vsub.f32 %v1875, %v2014
        %v2084 = vsub.f32 %v1876, %v2019
        %v2085 = vsub.f32 %v1877, %v2024
        %v2086 = vsub.f32 %v1878, %v2029
        %v2087 = vsub.f32 %v1879, %v2034
        %v2088 = vsub.f32 %v1880, %v2039
        %v2089 = vsub.f32 %v1881, %v2044
        %v2090 = vsub.f32 %v1882, %v2049
        %v2091 = vsub.f32 %v1883, %v2054
        %v2092 = vsub.f32 %v1884, %v2059
        %v2093 = vsub.f32 %v1885, %v2064
        %v2094 = vsub.f32 %v1886, %v2069
        %v2095 = vsub.f32 %v1887, %v2074
        %v2096 = vsub.f32 %v1888, %v2079
        %v2097 = vpack.c.bf16 %v2082, %v2081
        %v2098 = vpack.c.bf16 %v2084, %v2083
        %v2099 = vpack.c.bf16 %v2086, %v2085
        %v2100 = vpack.c.bf16 %v2088, %v2087
        %v2101 = vpack.c.bf16 %v2090, %v2089
        %v2102 = vpack.c.bf16 %v2092, %v2091
        %v2103 = vpack.c.bf16 %v2094, %v2093
        %v2104 = vpack.c.bf16 %v2096, %v2095
        %v2105 = vunpack.c.l.bf16 %v2097
        %v2106 = vunpack.c.h.bf16 %v2097
        %v2107 = vunpack.c.l.bf16 %v2098
        %v2108 = vunpack.c.h.bf16 %v2098
        %v2109 = vunpack.c.l.bf16 %v2099
        %v2110 = vunpack.c.h.bf16 %v2099
        %v2111 = vunpack.c.l.bf16 %v2100
        %v2112 = vunpack.c.h.bf16 %v2100
        %v2113 = vunpack.c.l.bf16 %v2101
        %v2114 = vunpack.c.h.bf16 %v2101
        %v2115 = vunpack.c.l.bf16 %v2102
        %v2116 = vunpack.c.h.bf16 %v2102
        %v2117 = vunpack.c.l.bf16 %v2103
        %v2118 = vunpack.c.h.bf16 %v2103
        %v2119 = vunpack.c.l.bf16 %v2104
        %v2120 = vunpack.c.h.bf16 %v2104
        %v2121 = vmul.f32 %v2105, 1.442695
        %v2122 = vpow.pop %v2121
        %v2123 = vmul.f32 %v2106, 1.442695
        %v2124 = vpow.pop %v2123
        %v2125 = vmul.f32 %v2107, 1.442695
        %v2126 = vpow.pop %v2125
        %v2127 = vmul.f32 %v2108, 1.442695
        %v2128 = vpow.pop %v2127
        %v2129 = vmul.f32 %v2109, 1.442695
        %v2130 = vpow.pop %v2129
        %v2131 = vmul.f32 %v2110, 1.442695
        %v2132 = vpow.pop %v2131
        %v2133 = vmul.f32 %v2111, 1.442695
        %v2134 = vpow.pop %v2133
        %v2135 = vmul.f32 %v2112, 1.442695
        %v2136 = vpow.pop %v2135
        %v2137 = vmul.f32 %v2113, 1.442695
        %v2138 = vpow.pop %v2137
        %v2139 = vmul.f32 %v2114, 1.442695
        %v2140 = vpow.pop %v2139
        %v2141 = vmul.f32 %v2115, 1.442695
        %v2142 = vpow.pop %v2141
        %v2143 = vmul.f32 %v2116, 1.442695
        %v2144 = vpow.pop %v2143
        %v2145 = vmul.f32 %v2117, 1.442695
        %v2146 = vpow.pop %v2145
        %v2147 = vmul.f32 %v2118, 1.442695
        %v2148 = vpow.pop %v2147
        %v2149 = vmul.f32 %v2119, 1.442695
        %v2150 = vpow.pop %v2149
        %v2151 = vmul.f32 %v2120, 1.442695
        %v2152 = vpow.pop %v2151
        %v2153 = vpack.c.bf16 %v2124, %v2122
        %v2154 = vpack.c.bf16 %v2128, %v2126
        %v2155 = vpack.c.bf16 %v2132, %v2130
        %v2156 = vpack.c.bf16 %v2136, %v2134
        %v2157 = vpack.c.bf16 %v2140, %v2138
        %v2158 = vpack.c.bf16 %v2144, %v2142
        %v2159 = vpack.c.bf16 %v2148, %v2146
        %v2160 = vpack.c.bf16 %v2152, %v2150
        %v2161 = vld [vmem:[#allocation3] sm:$0xff]
        %v2162 = vld [vmem:[#allocation3 + $0x8] sm:$0xff]
        %v2163 = vld [vmem:[#allocation3 + $0x10] sm:$0xff]
        %v2164 = vld [vmem:[#allocation3 + $0x18] sm:$0xff]
        %v2165 = vld [vmem:[#allocation3 + $0x20] sm:$0xff]
        %v2166 = vld [vmem:[#allocation3 + $0x28] sm:$0xff]
        %v2167 = vld [vmem:[#allocation3 + $0x30] sm:$0xff]
        %v2168 = vld [vmem:[#allocation3 + $0x38] sm:$0xff]
        %v2169 = vld [vmem:[#allocation3 + $0x40] sm:$0xff]
        %v2170 = vld [vmem:[#allocation3 + $0x48] sm:$0xff]
        %v2171 = vld [vmem:[#allocation3 + $0x50] sm:$0xff]
        %v2172 = vld [vmem:[#allocation3 + $0x58] sm:$0xff]
        %v2173 = vld [vmem:[#allocation3 + $0x60] sm:$0xff]
        %v2174 = vld [vmem:[#allocation3 + $0x68] sm:$0xff]
        %v2175 = vld [vmem:[#allocation3 + $0x70] sm:$0xff]
        %v2176 = vld [vmem:[#allocation3 + $0x78] sm:$0xff]
        %v2177 = vmul.f32 %v1970, %v2161
        %v2178 = vmul.f32 %v1972, %v2162
        %v2179 = vmul.f32 %v1974, %v2163
        %v2180 = vmul.f32 %v1976, %v2164
        %v2181 = vmul.f32 %v1978, %v2165
        %v2182 = vmul.f32 %v1980, %v2166
        %v2183 = vmul.f32 %v1982, %v2167
        %v2184 = vmul.f32 %v1984, %v2168
        %v2185 = vmul.f32 %v1986, %v2169
        %v2186 = vmul.f32 %v1988, %v2170
        %v2187 = vmul.f32 %v1990, %v2171
        %v2188 = vmul.f32 %v1992, %v2172
        %v2189 = vmul.f32 %v1994, %v2173
        %v2190 = vmul.f32 %v1996, %v2174
        %v2191 = vmul.f32 %v1998, %v2175
        %v2192 = vmul.f32 %v2000, %v2176
        %v2193 = vunpack.c.l.bf16 %v2153
        %v2194 = vunpack.c.h.bf16 %v2153
        %v2195 = vunpack.c.l.bf16 %v2154
        %v2196 = vunpack.c.h.bf16 %v2154
        %v2197 = vunpack.c.l.bf16 %v2155
        %v2198 = vunpack.c.h.bf16 %v2155
        %v2199 = vunpack.c.l.bf16 %v2156
        %v2200 = vunpack.c.h.bf16 %v2156
        %v2201 = vunpack.c.l.bf16 %v2157
        %v2202 = vunpack.c.h.bf16 %v2157
        %v2203 = vunpack.c.l.bf16 %v2158
        %v2204 = vunpack.c.h.bf16 %v2158
        %v2205 = vunpack.c.l.bf16 %v2159
        %v2206 = vunpack.c.h.bf16 %v2159
        %v2207 = vunpack.c.l.bf16 %v2160
        %v2208 = vunpack.c.h.bf16 %v2160
        %2209 = vadd.xlane.f32.xlu0 %v2193
        %v2210 = vpop.xlane.xlu0 %2209
        %2211 = vadd.xlane.f32.xlu0 %v2194
        %v2212 = vpop.xlane.xlu0 %2211
        %2213 = vadd.xlane.f32.xlu0 %v2195
        %v2214 = vpop.xlane.xlu0 %2213
        %2215 = vadd.xlane.f32.xlu0 %v2196
        %v2216 = vpop.xlane.xlu0 %2215
        %2217 = vadd.xlane.f32.xlu0 %v2197
        %v2218 = vpop.xlane.xlu0 %2217
        %2219 = vadd.xlane.f32.xlu0 %v2198
        %v2220 = vpop.xlane.xlu0 %2219
        %2221 = vadd.xlane.f32.xlu0 %v2199
        %v2222 = vpop.xlane.xlu0 %2221
        %2223 = vadd.xlane.f32.xlu0 %v2200
        %v2224 = vpop.xlane.xlu0 %2223
        %2225 = vadd.xlane.f32.xlu0 %v2201
        %v2226 = vpop.xlane.xlu0 %2225
        %2227 = vadd.xlane.f32.xlu0 %v2202
        %v2228 = vpop.xlane.xlu0 %2227
        %2229 = vadd.xlane.f32.xlu0 %v2203
        %v2230 = vpop.xlane.xlu0 %2229
        %2231 = vadd.xlane.f32.xlu0 %v2204
        %v2232 = vpop.xlane.xlu0 %2231
        %2233 = vadd.xlane.f32.xlu0 %v2205
        %v2234 = vpop.xlane.xlu0 %2233
        %2235 = vadd.xlane.f32.xlu0 %v2206
        %v2236 = vpop.xlane.xlu0 %2235
        %2237 = vadd.xlane.f32.xlu0 %v2207
        %v2238 = vpop.xlane.xlu0 %2237
        %2239 = vadd.xlane.f32.xlu0 %v2208
        %v2240 = vpop.xlane.xlu0 %2239
        %v2241 = vadd.f32 %v2177, %v2210
        %v2242 = vadd.f32 %v2178, %v2212
        %v2243 = vadd.f32 %v2179, %v2214
        %v2244 = vadd.f32 %v2180, %v2216
        %v2245 = vadd.f32 %v2181, %v2218
        %v2246 = vadd.f32 %v2182, %v2220
        %v2247 = vadd.f32 %v2183, %v2222
        %v2248 = vadd.f32 %v2184, %v2224
        %v2249 = vadd.f32 %v2185, %v2226
        %v2250 = vadd.f32 %v2186, %v2228
        %v2251 = vadd.f32 %v2187, %v2230
        %v2252 = vadd.f32 %v2188, %v2232
        %v2253 = vadd.f32 %v2189, %v2234
        %v2254 = vadd.f32 %v2190, %v2236
        %v2255 = vadd.f32 %v2191, %v2238
        %v2256 = vadd.f32 %v2192, %v2240
        %2257 = vst.msk [vmem:[#allocation3] sm:$0xff] %vm709, %v2241
        %2258 = vst.msk [vmem:[#allocation3 + $0x8] sm:$0xff] %vm709, %v2242
        %2259 = vst.msk [vmem:[#allocation3 + $0x10] sm:$0xff] %vm709, %v2243
        %2260 = vst.msk [vmem:[#allocation3 + $0x18] sm:$0xff] %vm709, %v2244
        %2261 = vst.msk [vmem:[#allocation3 + $0x20] sm:$0xff] %vm709, %v2245
        %2262 = vst.msk [vmem:[#allocation3 + $0x28] sm:$0xff] %vm709, %v2246
        %2263 = vst.msk [vmem:[#allocation3 + $0x30] sm:$0xff] %vm709, %v2247
        %2264 = vst.msk [vmem:[#allocation3 + $0x38] sm:$0xff] %vm709, %v2248
        %2265 = vst.msk [vmem:[#allocation3 + $0x40] sm:$0xff] %vm709, %v2249
        %2266 = vst.msk [vmem:[#allocation3 + $0x48] sm:$0xff] %vm709, %v2250
        %2267 = vst.msk [vmem:[#allocation3 + $0x50] sm:$0xff] %vm709, %v2251
        %2268 = vst.msk [vmem:[#allocation3 + $0x58] sm:$0xff] %vm709, %v2252
        %2269 = vst.msk [vmem:[#allocation3 + $0x60] sm:$0xff] %vm709, %v2253
        %2270 = vst.msk [vmem:[#allocation3 + $0x68] sm:$0xff] %vm709, %v2254
        %2271 = vst.msk [vmem:[#allocation3 + $0x70] sm:$0xff] %vm709, %v2255
        %2272 = vst.msk [vmem:[#allocation3 + $0x78] sm:$0xff] %vm709, %v2256
        %s2273 = smul.addr %s1622, 4
        %s2274 = scalar_lea.vmem %s660, %s2273 [#allocation7]
        %v2275 = vld [vmem:[%s2274] sm:$0xf]
        %v2276 = vld [vmem:[%s2274 + $0x4] sm:$0xf]
        %v2277 = vld [vmem:[%s2274 + $0x8] sm:$0xf]
        %v2278 = vld [vmem:[%s2274 + $0xc] sm:$0xf]
        %v2279 = vld [vmem:[%s2274 + $0x10] sm:$0xf]
        %v2280 = vld [vmem:[%s2274 + $0x14] sm:$0xf]
        %v2281 = vld [vmem:[%s2274 + $0x18] sm:$0xf]
        %v2282 = vld [vmem:[%s2274 + $0x1c] sm:$0xf]
        %v2283 = vld [vmem:[%s2274 + $0x20] sm:$0xf]
        %v2284 = vld [vmem:[%s2274 + $0x24] sm:$0xf]
        %v2285 = vld [vmem:[%s2274 + $0x28] sm:$0xf]
        %v2286 = vld [vmem:[%s2274 + $0x2c] sm:$0xf]
        %v2287 = vld [vmem:[%s2274 + $0x30] sm:$0xf]
        %v2288 = vld [vmem:[%s2274 + $0x34] sm:$0xf]
        %v2289 = vld [vmem:[%s2274 + $0x38] sm:$0xf]
        %v2290 = vld [vmem:[%s2274 + $0x3c] sm:$0xf]
        %v2291 = vld [vmem:[#allocation4] sm:$0xff]
        %v2292 = vld [vmem:[#allocation4 + $0x8] sm:$0xff]
        %v2293 = vld [vmem:[#allocation4 + $0x10] sm:$0xff]
        %v2294 = vld [vmem:[#allocation4 + $0x18] sm:$0xff]
        %v2295 = vld [vmem:[#allocation4 + $0x20] sm:$0xff]
        %v2296 = vld [vmem:[#allocation4 + $0x28] sm:$0xff]
        %v2297 = vld [vmem:[#allocation4 + $0x30] sm:$0xff]
        %v2298 = vld [vmem:[#allocation4 + $0x38] sm:$0xff]
        %v2299 = vld [vmem:[#allocation4 + $0x40] sm:$0xff]
        %v2300 = vld [vmem:[#allocation4 + $0x48] sm:$0xff]
        %v2301 = vld [vmem:[#allocation4 + $0x50] sm:$0xff]
        %v2302 = vld [vmem:[#allocation4 + $0x58] sm:$0xff]
        %v2303 = vld [vmem:[#allocation4 + $0x60] sm:$0xff]
        %v2304 = vld [vmem:[#allocation4 + $0x68] sm:$0xff]
        %v2305 = vld [vmem:[#allocation4 + $0x70] sm:$0xff]
        %v2306 = vld [vmem:[#allocation4 + $0x78] sm:$0xff]
        %2308 = vset.pattern.permute.xlu0 0
        %2309 = vperm.xlu0 %2308, %v1970
        %v2310 = vpop.permute.xlu0 %2309
        %2313 = vset.pattern.permute.xlu0 0
        %2314 = vperm.xlu0 %2313, %v1972
        %v2315 = vpop.permute.xlu0 %2314
        %2318 = vset.pattern.permute.xlu0 0
        %2319 = vperm.xlu0 %2318, %v1974
        %v2320 = vpop.permute.xlu0 %2319
        %2323 = vset.pattern.permute.xlu0 0
        %2324 = vperm.xlu0 %2323, %v1976
        %v2325 = vpop.permute.xlu0 %2324
        %2328 = vset.pattern.permute.xlu0 0
        %2329 = vperm.xlu0 %2328, %v1978
        %v2330 = vpop.permute.xlu0 %2329
        %2333 = vset.pattern.permute.xlu0 0
        %2334 = vperm.xlu0 %2333, %v1980
        %v2335 = vpop.permute.xlu0 %2334
        %2338 = vset.pattern.permute.xlu0 0
        %2339 = vperm.xlu0 %2338, %v1982
        %v2340 = vpop.permute.xlu0 %2339
        %2343 = vset.pattern.permute.xlu0 0
        %2344 = vperm.xlu0 %2343, %v1984
        %v2345 = vpop.permute.xlu0 %2344
        %2348 = vset.pattern.permute.xlu0 0
        %2349 = vperm.xlu0 %2348, %v1986
        %v2350 = vpop.permute.xlu0 %2349
        %2353 = vset.pattern.permute.xlu0 0
        %2354 = vperm.xlu0 %2353, %v1988
        %v2355 = vpop.permute.xlu0 %2354
        %2358 = vset.pattern.permute.xlu0 0
        %2359 = vperm.xlu0 %2358, %v1990
        %v2360 = vpop.permute.xlu0 %2359
        %2363 = vset.pattern.permute.xlu0 0
        %2364 = vperm.xlu0 %2363, %v1992
        %v2365 = vpop.permute.xlu0 %2364
        %2368 = vset.pattern.permute.xlu0 0
        %2369 = vperm.xlu0 %2368, %v1994
        %v2370 = vpop.permute.xlu0 %2369
        %2373 = vset.pattern.permute.xlu0 0
        %2374 = vperm.xlu0 %2373, %v1996
        %v2375 = vpop.permute.xlu0 %2374
        %2378 = vset.pattern.permute.xlu0 0
        %2379 = vperm.xlu0 %2378, %v1998
        %v2380 = vpop.permute.xlu0 %2379
        %2383 = vset.pattern.permute.xlu0 0
        %2384 = vperm.xlu0 %2383, %v2000
        %v2385 = vpop.permute.xlu0 %2384
        %v2387 = vmul.f32 %v2310, %v2291
        %v2388 = vmul.f32 %v2315, %v2292
        %v2389 = vmul.f32 %v2320, %v2293
        %v2390 = vmul.f32 %v2325, %v2294
        %v2391 = vmul.f32 %v2330, %v2295
        %v2392 = vmul.f32 %v2335, %v2296
        %v2393 = vmul.f32 %v2340, %v2297
        %v2394 = vmul.f32 %v2345, %v2298
        %v2395 = vmul.f32 %v2350, %v2299
        %v2396 = vmul.f32 %v2355, %v2300
        %v2397 = vmul.f32 %v2360, %v2301
        %v2398 = vmul.f32 %v2365, %v2302
        %v2399 = vmul.f32 %v2370, %v2303
        %v2400 = vmul.f32 %v2375, %v2304
        %v2401 = vmul.f32 %v2380, %v2305
        %v2402 = vmul.f32 %v2385, %v2306
        %v2419 = vunpack.c.l.b16 %v2275
        %v2420 = vunpack.c.l.b16 %v2276
        %v2421 = vunpack.c.l.b16 %v2277
        %v2422 = vunpack.c.l.b16 %v2278
        %v2423 = vunpack.c.l.b16 %v2279
        %v2424 = vunpack.c.l.b16 %v2280
        %v2425 = vunpack.c.l.b16 %v2281
        %v2426 = vunpack.c.l.b16 %v2282
        %v2427 = vunpack.c.l.b16 %v2283
        %v2428 = vunpack.c.l.b16 %v2284
        %v2429 = vunpack.c.l.b16 %v2285
        %v2430 = vunpack.c.l.b16 %v2286
        %v2431 = vunpack.c.l.b16 %v2287
        %v2432 = vunpack.c.l.b16 %v2288
        %v2433 = vunpack.c.l.b16 %v2289
        %v2434 = vunpack.c.l.b16 %v2290
        %v2435 = vpack.c.b16 %v2420, %v2419
        %v2436 = vpack.c.b16 %v2422, %v2421
        %v2437 = vpack.c.b16 %v2424, %v2423
        %v2438 = vpack.c.b16 %v2426, %v2425
        %v2439 = vpack.c.b16 %v2428, %v2427
        %v2440 = vpack.c.b16 %v2430, %v2429
        %v2441 = vpack.c.b16 %v2432, %v2431
        %v2442 = vpack.c.b16 %v2434, %v2433
        %2451 = vmatpush.bf16.msra.mxu0 %v2442
        %2452 = vmatpush.bf16.msra.mxu0 %v2441
        %2453 = vmatpush.bf16.msra.mxu0 %v2440
        %2454 = vmatpush.bf16.msra.mxu0 %v2439
        %2455 = vmatpush.bf16.msra.mxu0 %v2438
        %2456 = vmatpush.bf16.msra.mxu0 %v2437
        %2457 = vmatpush.bf16.msra.mxu0 %v2436
        %2458 = vmatpush.bf16.msra.mxu0 %v2435
        %2459 = vmatmul.bf16.gmra.mxu0 %v2153
        %v2460 = vpop.f32.mrf.mxu0
        %v2461 = vadd.f32 0.0, %v2460
        %v2462 = vpop.f32.mrf.mxu0
        %v2463 = vadd.f32 0.0, %v2462
        %2464 = vmatmul.bf16.gmra.mxu0 %v2154
        %v2465 = vpop.f32.mrf.mxu0
        %v2466 = vadd.f32 0.0, %v2465
        %v2467 = vpop.f32.mrf.mxu0
        %v2468 = vadd.f32 0.0, %v2467
        %2469 = vmatmul.bf16.gmra.mxu0 %v2155
        %v2470 = vpop.f32.mrf.mxu0
        %v2471 = vadd.f32 0.0, %v2470
        %v2472 = vpop.f32.mrf.mxu0
        %v2473 = vadd.f32 0.0, %v2472
        %2474 = vmatmul.bf16.gmra.mxu0 %v2156
        %v2475 = vpop.f32.mrf.mxu0
        %v2476 = vadd.f32 0.0, %v2475
        %v2477 = vpop.f32.mrf.mxu0
        %v2478 = vadd.f32 0.0, %v2477
        %2479 = vmatmul.bf16.gmra.mxu0 %v2157
        %v2480 = vpop.f32.mrf.mxu0
        %v2481 = vadd.f32 0.0, %v2480
        %v2482 = vpop.f32.mrf.mxu0
        %v2483 = vadd.f32 0.0, %v2482
        %2484 = vmatmul.bf16.gmra.mxu0 %v2158
        %v2485 = vpop.f32.mrf.mxu0
        %v2486 = vadd.f32 0.0, %v2485
        %v2487 = vpop.f32.mrf.mxu0
        %v2488 = vadd.f32 0.0, %v2487
        %2489 = vmatmul.bf16.gmra.mxu0 %v2159
        %v2490 = vpop.f32.mrf.mxu0
        %v2491 = vadd.f32 0.0, %v2490
        %v2492 = vpop.f32.mrf.mxu0
        %v2493 = vadd.f32 0.0, %v2492
        %2494 = vmatmul.bf16.gmra.mxu0 %v2160
        %v2495 = vpop.f32.mrf.mxu0
        %v2496 = vadd.f32 0.0, %v2495
        %v2497 = vpop.f32.mrf.mxu0
        %v2498 = vadd.f32 0.0, %v2497
        %2499 = vdwg.mxu0
        %v2500 = vadd.f32 %v2387, %v2461
        %v2501 = vadd.f32 %v2388, %v2463
        %v2502 = vadd.f32 %v2389, %v2466
        %v2503 = vadd.f32 %v2390, %v2468
        %v2504 = vadd.f32 %v2391, %v2471
        %v2505 = vadd.f32 %v2392, %v2473
        %v2506 = vadd.f32 %v2393, %v2476
        %v2507 = vadd.f32 %v2394, %v2478
        %v2508 = vadd.f32 %v2395, %v2481
        %v2509 = vadd.f32 %v2396, %v2483
        %v2510 = vadd.f32 %v2397, %v2486
        %v2511 = vadd.f32 %v2398, %v2488
        %v2512 = vadd.f32 %v2399, %v2491
        %v2513 = vadd.f32 %v2400, %v2493
        %v2514 = vadd.f32 %v2401, %v2496
        %v2515 = vadd.f32 %v2402, %v2498
        %2516 = vst.msk [vmem:[#allocation4] sm:$0xff] %vm742, %v2500
        %2517 = vst.msk [vmem:[#allocation4 + $0x8] sm:$0xff] %vm742, %v2501
        %2518 = vst.msk [vmem:[#allocation4 + $0x10] sm:$0xff] %vm742, %v2502
        %2519 = vst.msk [vmem:[#allocation4 + $0x18] sm:$0xff] %vm742, %v2503
        %2520 = vst.msk [vmem:[#allocation4 + $0x20] sm:$0xff] %vm742, %v2504
        %2521 = vst.msk [vmem:[#allocation4 + $0x28] sm:$0xff] %vm742, %v2505
        %2522 = vst.msk [vmem:[#allocation4 + $0x30] sm:$0xff] %vm742, %v2506
        %2523 = vst.msk [vmem:[#allocation4 + $0x38] sm:$0xff] %vm742, %v2507
        %2524 = vst.msk [vmem:[#allocation4 + $0x40] sm:$0xff] %vm742, %v2508
        %2525 = vst.msk [vmem:[#allocation4 + $0x48] sm:$0xff] %vm742, %v2509
        %2526 = vst.msk [vmem:[#allocation4 + $0x50] sm:$0xff] %vm742, %v2510
        %2527 = vst.msk [vmem:[#allocation4 + $0x58] sm:$0xff] %vm742, %v2511
        %2528 = vst.msk [vmem:[#allocation4 + $0x60] sm:$0xff] %vm742, %v2512
        %2529 = vst.msk [vmem:[#allocation4 + $0x68] sm:$0xff] %vm742, %v2513
        %2530 = vst.msk [vmem:[#allocation4 + $0x70] sm:$0xff] %vm742, %v2514
        %2531 = vst.msk [vmem:[#allocation4 + $0x78] sm:$0xff] %vm742, %v2515
        %2532 = vst.msk [vmem:[#allocation2] sm:$0xff] %vm709, %v1937
        %2533 = vst.msk [vmem:[#allocation2 + $0x8] sm:$0xff] %vm709, %v1938
        %2534 = vst.msk [vmem:[#allocation2 + $0x10] sm:$0xff] %vm709, %v1939
        %2535 = vst.msk [vmem:[#allocation2 + $0x18] sm:$0xff] %vm709, %v1940
        %2536 = vst.msk [vmem:[#allocation2 + $0x20] sm:$0xff] %vm709, %v1941
        %2537 = vst.msk [vmem:[#allocation2 + $0x28] sm:$0xff] %vm709, %v1942
        %2538 = vst.msk [vmem:[#allocation2 + $0x30] sm:$0xff] %vm709, %v1943
        %2539 = vst.msk [vmem:[#allocation2 + $0x38] sm:$0xff] %vm709, %v1944
        %2540 = vst.msk [vmem:[#allocation2 + $0x40] sm:$0xff] %vm709, %v1945
        %2541 = vst.msk [vmem:[#allocation2 + $0x48] sm:$0xff] %vm709, %v1946
        %2542 = vst.msk [vmem:[#allocation2 + $0x50] sm:$0xff] %vm709, %v1947
        %2543 = vst.msk [vmem:[#allocation2 + $0x58] sm:$0xff] %vm709, %v1948
        %2544 = vst.msk [vmem:[#allocation2 + $0x60] sm:$0xff] %vm709, %v1949
        %2545 = vst.msk [vmem:[#allocation2 + $0x68] sm:$0xff] %vm709, %v1950
        %2546 = vst.msk [vmem:[#allocation2 + $0x70] sm:$0xff] %vm709, %v1951
        %2547 = vst.msk [vmem:[#allocation2 + $0x78] sm:$0xff] %vm709, %v1952
        %v2548 = vld [vmem:[#allocation3] sm:$0xff]
        %v2549 = vld [vmem:[#allocation3 + $0x8] sm:$0xff]
        %v2550 = vld [vmem:[#allocation3 + $0x10] sm:$0xff]
        %v2551 = vld [vmem:[#allocation3 + $0x18] sm:$0xff]
        %v2552 = vld [vmem:[#allocation3 + $0x20] sm:$0xff]
        %v2553 = vld [vmem:[#allocation3 + $0x28] sm:$0xff]
        %v2554 = vld [vmem:[#allocation3 + $0x30] sm:$0xff]
        %v2555 = vld [vmem:[#allocation3 + $0x38] sm:$0xff]
        %v2556 = vld [vmem:[#allocation3 + $0x40] sm:$0xff]
        %v2557 = vld [vmem:[#allocation3 + $0x48] sm:$0xff]
        %v2558 = vld [vmem:[#allocation3 + $0x50] sm:$0xff]
        %v2559 = vld [vmem:[#allocation3 + $0x58] sm:$0xff]
        %v2560 = vld [vmem:[#allocation3 + $0x60] sm:$0xff]
        %v2561 = vld [vmem:[#allocation3 + $0x68] sm:$0xff]
        %v2562 = vld [vmem:[#allocation3 + $0x70] sm:$0xff]
        %v2563 = vld [vmem:[#allocation3 + $0x78] sm:$0xff]
        %v2564 = vrcp.pop %v2548
        %v2565 = vrcp.pop %v2549
        %v2566 = vrcp.pop %v2550
        %v2567 = vrcp.pop %v2551
        %v2568 = vrcp.pop %v2552
        %v2569 = vrcp.pop %v2553
        %v2570 = vrcp.pop %v2554
        %v2571 = vrcp.pop %v2555
        %v2572 = vrcp.pop %v2556
        %v2573 = vrcp.pop %v2557
        %v2574 = vrcp.pop %v2558
        %v2575 = vrcp.pop %v2559
        %v2576 = vrcp.pop %v2560
        %v2577 = vrcp.pop %v2561
        %v2578 = vrcp.pop %v2562
        %v2579 = vrcp.pop %v2563
        %v2580 = vld [vmem:[#allocation4] sm:$0xff]
        %v2581 = vld [vmem:[#allocation4 + $0x8] sm:$0xff]
        %v2582 = vld [vmem:[#allocation4 + $0x10] sm:$0xff]
        %v2583 = vld [vmem:[#allocation4 + $0x18] sm:$0xff]
        %v2584 = vld [vmem:[#allocation4 + $0x20] sm:$0xff]
        %v2585 = vld [vmem:[#allocation4 + $0x28] sm:$0xff]
        %v2586 = vld [vmem:[#allocation4 + $0x30] sm:$0xff]
        %v2587 = vld [vmem:[#allocation4 + $0x38] sm:$0xff]
        %v2588 = vld [vmem:[#allocation4 + $0x40] sm:$0xff]
        %v2589 = vld [vmem:[#allocation4 + $0x48] sm:$0xff]
        %v2590 = vld [vmem:[#allocation4 + $0x50] sm:$0xff]
        %v2591 = vld [vmem:[#allocation4 + $0x58] sm:$0xff]
        %v2592 = vld [vmem:[#allocation4 + $0x60] sm:$0xff]
        %v2593 = vld [vmem:[#allocation4 + $0x68] sm:$0xff]
        %v2594 = vld [vmem:[#allocation4 + $0x70] sm:$0xff]
        %v2595 = vld [vmem:[#allocation4 + $0x78] sm:$0xff]
        %2597 = vset.pattern.permute.xlu0 0
        %2598 = vperm.xlu0 %2597, %v2564
        %v2599 = vpop.permute.xlu0 %2598
        %2602 = vset.pattern.permute.xlu0 0
        %2603 = vperm.xlu0 %2602, %v2565
        %v2604 = vpop.permute.xlu0 %2603
        %2607 = vset.pattern.permute.xlu0 0
        %2608 = vperm.xlu0 %2607, %v2566
        %v2609 = vpop.permute.xlu0 %2608
        %2612 = vset.pattern.permute.xlu0 0
        %2613 = vperm.xlu0 %2612, %v2567
        %v2614 = vpop.permute.xlu0 %2613
        %2617 = vset.pattern.permute.xlu0 0
        %2618 = vperm.xlu0 %2617, %v2568
        %v2619 = vpop.permute.xlu0 %2618
        %2622 = vset.pattern.permute.xlu0 0
        %2623 = vperm.xlu0 %2622, %v2569
        %v2624 = vpop.permute.xlu0 %2623
        %2627 = vset.pattern.permute.xlu0 0
        %2628 = vperm.xlu0 %2627, %v2570
        %v2629 = vpop.permute.xlu0 %2628
        %2632 = vset.pattern.permute.xlu0 0
        %2633 = vperm.xlu0 %2632, %v2571
        %v2634 = vpop.permute.xlu0 %2633
        %2637 = vset.pattern.permute.xlu0 0
        %2638 = vperm.xlu0 %2637, %v2572
        %v2639 = vpop.permute.xlu0 %2638
        %2642 = vset.pattern.permute.xlu0 0
        %2643 = vperm.xlu0 %2642, %v2573
        %v2644 = vpop.permute.xlu0 %2643
        %2647 = vset.pattern.permute.xlu0 0
        %2648 = vperm.xlu0 %2647, %v2574
        %v2649 = vpop.permute.xlu0 %2648
        %2652 = vset.pattern.permute.xlu0 0
        %2653 = vperm.xlu0 %2652, %v2575
        %v2654 = vpop.permute.xlu0 %2653
        %2657 = vset.pattern.permute.xlu0 0
        %2658 = vperm.xlu0 %2657, %v2576
        %v2659 = vpop.permute.xlu0 %2658
        %2662 = vset.pattern.permute.xlu0 0
        %2663 = vperm.xlu0 %2662, %v2577
        %v2664 = vpop.permute.xlu0 %2663
        %2667 = vset.pattern.permute.xlu0 0
        %2668 = vperm.xlu0 %2667, %v2578
        %v2669 = vpop.permute.xlu0 %2668
        %2672 = vset.pattern.permute.xlu0 0
        %2673 = vperm.xlu0 %2672, %v2579
        %v2674 = vpop.permute.xlu0 %2673
        %v2676 = vmul.f32 %v2580, %v2599
        %v2677 = vmul.f32 %v2581, %v2604
        %v2678 = vmul.f32 %v2582, %v2609
        %v2679 = vmul.f32 %v2583, %v2614
        %v2680 = vmul.f32 %v2584, %v2619
        %v2681 = vmul.f32 %v2585, %v2624
        %v2682 = vmul.f32 %v2586, %v2629
        %v2683 = vmul.f32 %v2587, %v2634
        %v2684 = vmul.f32 %v2588, %v2639
        %v2685 = vmul.f32 %v2589, %v2644
        %v2686 = vmul.f32 %v2590, %v2649
        %v2687 = vmul.f32 %v2591, %v2654
        %v2688 = vmul.f32 %v2592, %v2659
        %v2689 = vmul.f32 %v2593, %v2664
        %v2690 = vmul.f32 %v2594, %v2669
        %v2691 = vmul.f32 %v2595, %v2674
        %v2692 = vpack.c.bf16 %v2676, %v2676
        %v2693 = vpack.c.bf16 %v2677, %v2677
        %v2694 = vpack.c.bf16 %v2678, %v2678
        %v2695 = vpack.c.bf16 %v2679, %v2679
        %v2696 = vpack.c.bf16 %v2680, %v2680
        %v2697 = vpack.c.bf16 %v2681, %v2681
        %v2698 = vpack.c.bf16 %v2682, %v2682
        %v2699 = vpack.c.bf16 %v2683, %v2683
        %v2700 = vpack.c.bf16 %v2684, %v2684
        %v2701 = vpack.c.bf16 %v2685, %v2685
        %v2702 = vpack.c.bf16 %v2686, %v2686
        %v2703 = vpack.c.bf16 %v2687, %v2687
        %v2704 = vpack.c.bf16 %v2688, %v2688
        %v2705 = vpack.c.bf16 %v2689, %v2689
        %v2706 = vpack.c.bf16 %v2690, %v2690
        %v2707 = vpack.c.bf16 %v2691, %v2691
        %vm2708 = vcmask 519168
        %2709 = vst.msk [vmem:[%s687] sm:$0xf] %vm2708, %v2692
        %2710 = vst.msk [vmem:[%s687 + $0x4] sm:$0xf] %vm2708, %v2693
        %2711 = vst.msk [vmem:[%s687 + $0x8] sm:$0xf] %vm2708, %v2694
        %2712 = vst.msk [vmem:[%s687 + $0xc] sm:$0xf] %vm2708, %v2695
        %2713 = vst.msk [vmem:[%s687 + $0x10] sm:$0xf] %vm2708, %v2696
        %2714 = vst.msk [vmem:[%s687 + $0x14] sm:$0xf] %vm2708, %v2697
        %2715 = vst.msk [vmem:[%s687 + $0x18] sm:$0xf] %vm2708, %v2698
        %2716 = vst.msk [vmem:[%s687 + $0x1c] sm:$0xf] %vm2708, %v2699
        %2717 = vst.msk [vmem:[%s687 + $0x20] sm:$0xf] %vm2708, %v2700
        %2718 = vst.msk [vmem:[%s687 + $0x24] sm:$0xf] %vm2708, %v2701
        %2719 = vst.msk [vmem:[%s687 + $0x28] sm:$0xf] %vm2708, %v2702
        %2720 = vst.msk [vmem:[%s687 + $0x2c] sm:$0xf] %vm2708, %v2703
        %2721 = vst.msk [vmem:[%s687 + $0x30] sm:$0xf] %vm2708, %v2704
        %2722 = vst.msk [vmem:[%s687 + $0x34] sm:$0xf] %vm2708, %v2705
        %2723 = vst.msk [vmem:[%s687 + $0x38] sm:$0xf] %vm2708, %v2706
        %2724 = vst.msk [vmem:[%s687 + $0x3c] sm:$0xf] %vm2708, %v2707
        %v2725 = vld [vmem:[%s646] sm:$0xf]
        %v2726 = vld [vmem:[%s646 + $0x4] sm:$0xf]
        %v2727 = vld [vmem:[%s646 + $0x8] sm:$0xf]
        %v2728 = vld [vmem:[%s646 + $0xc] sm:$0xf]
        %v2729 = vld [vmem:[%s646 + $0x10] sm:$0xf]
        %v2730 = vld [vmem:[%s646 + $0x14] sm:$0xf]
        %v2731 = vld [vmem:[%s646 + $0x18] sm:$0xf]
        %v2732 = vld [vmem:[%s646 + $0x1c] sm:$0xf]
        %v2733 = vld [vmem:[%s646 + $0x20] sm:$0xf]
        %v2734 = vld [vmem:[%s646 + $0x24] sm:$0xf]
        %v2735 = vld [vmem:[%s646 + $0x28] sm:$0xf]
        %v2736 = vld [vmem:[%s646 + $0x2c] sm:$0xf]
        %v2737 = vld [vmem:[%s646 + $0x30] sm:$0xf]
        %v2738 = vld [vmem:[%s646 + $0x34] sm:$0xf]
        %v2739 = vld [vmem:[%s646 + $0x38] sm:$0xf]
        %v2740 = vld [vmem:[%s646 + $0x3c] sm:$0xf]
        %2741 = vst.msk [vmem:[#allocation2] sm:$0xff] %vm709, -1e+30
        %2742 = vst.msk [vmem:[#allocation2 + $0x8] sm:$0xff] %vm709, -1e+30
        %2743 = vst.msk [vmem:[#allocation2 + $0x10] sm:$0xff] %vm709, -1e+30
        %2744 = vst.msk [vmem:[#allocation2 + $0x18] sm:$0xff] %vm709, -1e+30
        %2745 = vst.msk [vmem:[#allocation2 + $0x20] sm:$0xff] %vm709, -1e+30
        %2746 = vst.msk [vmem:[#allocation2 + $0x28] sm:$0xff] %vm709, -1e+30
        %2747 = vst.msk [vmem:[#allocation2 + $0x30] sm:$0xff] %vm709, -1e+30
        %2748 = vst.msk [vmem:[#allocation2 + $0x38] sm:$0xff] %vm709, -1e+30
        %2749 = vst.msk [vmem:[#allocation2 + $0x40] sm:$0xff] %vm709, -1e+30
        %2750 = vst.msk [vmem:[#allocation2 + $0x48] sm:$0xff] %vm709, -1e+30
        %2751 = vst.msk [vmem:[#allocation2 + $0x50] sm:$0xff] %vm709, -1e+30
        %2752 = vst.msk [vmem:[#allocation2 + $0x58] sm:$0xff] %vm709, -1e+30
        %2753 = vst.msk [vmem:[#allocation2 + $0x60] sm:$0xff] %vm709, -1e+30
        %2754 = vst.msk [vmem:[#allocation2 + $0x68] sm:$0xff] %vm709, -1e+30
        %2755 = vst.msk [vmem:[#allocation2 + $0x70] sm:$0xff] %vm709, -1e+30
        %2756 = vst.msk [vmem:[#allocation2 + $0x78] sm:$0xff] %vm709, -1e+30
        %2757 = vst.msk [vmem:[#allocation3] sm:$0xff] %vm709, 0.0
        %2758 = vst.msk [vmem:[#allocation3 + $0x8] sm:$0xff] %vm709, 0.0
        %2759 = vst.msk [vmem:[#allocation3 + $0x10] sm:$0xff] %vm709, 0.0
        %2760 = vst.msk [vmem:[#allocation3 + $0x18] sm:$0xff] %vm709, 0.0
        %2761 = vst.msk [vmem:[#allocation3 + $0x20] sm:$0xff] %vm709, 0.0
        %2762 = vst.msk [vmem:[#allocation3 + $0x28] sm:$0xff] %vm709, 0.0
        %2763 = vst.msk [vmem:[#allocation3 + $0x30] sm:$0xff] %vm709, 0.0
        %2764 = vst.msk [vmem:[#allocation3 + $0x38] sm:$0xff] %vm709, 0.0
        %2765 = vst.msk [vmem:[#allocation3 + $0x40] sm:$0xff] %vm709, 0.0
        %2766 = vst.msk [vmem:[#allocation3 + $0x48] sm:$0xff] %vm709, 0.0
        %2767 = vst.msk [vmem:[#allocation3 + $0x50] sm:$0xff] %vm709, 0.0
        %2768 = vst.msk [vmem:[#allocation3 + $0x58] sm:$0xff] %vm709, 0.0
        %2769 = vst.msk [vmem:[#allocation3 + $0x60] sm:$0xff] %vm709, 0.0
        %2770 = vst.msk [vmem:[#allocation3 + $0x68] sm:$0xff] %vm709, 0.0
        %2771 = vst.msk [vmem:[#allocation3 + $0x70] sm:$0xff] %vm709, 0.0
        %2772 = vst.msk [vmem:[#allocation3 + $0x78] sm:$0xff] %vm709, 0.0
        %2773 = vst.msk [vmem:[#allocation4] sm:$0xff] %vm742, 0.0
        %2774 = vst.msk [vmem:[#allocation4 + $0x8] sm:$0xff] %vm742, 0.0
        %2775 = vst.msk [vmem:[#allocation4 + $0x10] sm:$0xff] %vm742, 0.0
        %2776 = vst.msk [vmem:[#allocation4 + $0x18] sm:$0xff] %vm742, 0.0
        %2777 = vst.msk [vmem:[#allocation4 + $0x20] sm:$0xff] %vm742, 0.0
        %2778 = vst.msk [vmem:[#allocation4 + $0x28] sm:$0xff] %vm742, 0.0
        %2779 = vst.msk [vmem:[#allocation4 + $0x30] sm:$0xff] %vm742, 0.0
        %2780 = vst.msk [vmem:[#allocation4 + $0x38] sm:$0xff] %vm742, 0.0
        %2781 = vst.msk [vmem:[#allocation4 + $0x40] sm:$0xff] %vm742, 0.0
        %2782 = vst.msk [vmem:[#allocation4 + $0x48] sm:$0xff] %vm742, 0.0
        %2783 = vst.msk [vmem:[#allocation4 + $0x50] sm:$0xff] %vm742, 0.0
        %2784 = vst.msk [vmem:[#allocation4 + $0x58] sm:$0xff] %vm742, 0.0
        %2785 = vst.msk [vmem:[#allocation4 + $0x60] sm:$0xff] %vm742, 0.0
        %2786 = vst.msk [vmem:[#allocation4 + $0x68] sm:$0xff] %vm742, 0.0
        %2787 = vst.msk [vmem:[#allocation4 + $0x70] sm:$0xff] %vm742, 0.0
        %2788 = vst.msk [vmem:[#allocation4 + $0x78] sm:$0xff] %vm742, 0.0
        // While loop
        $region163: #{causal_self_attention.4} parent=142 // loop_pre_header
          _
        $region164: #{causal_self_attention.4} parent=142 // loop_header
          %s2790 = sphi 0, %s2792
          %p2791 = scmp.ge.s32.totalorder %s2790, %s21
        $region165: #{causal_self_attention.4} parent=142 // loop_header_branch
          %2794 = sbr.rel (%p2791) target = $region169
        $region166: #{causal_self_attention.4} parent=142 // loop_body
          %s2795 = smul.u32 %s2790, 128
          %s2796 = sshra.s32 %s2795, 3
          %s2797 = sand.u32 %s2795, 7
          %s2798 = smul.addr %s2796, 4
          %s2799 = scalar_lea.vmem %s653, %s2798 [#allocation6]
          %v2800 = vld [vmem:[%s2799] sm:$0xf]
          %v2801 = vld [vmem:[%s2799 + $0x4] sm:$0xf]
          %v2802 = vld [vmem:[%s2799 + $0x8] sm:$0xf]
          %v2803 = vld [vmem:[%s2799 + $0xc] sm:$0xf]
          %v2804 = vld [vmem:[%s2799 + $0x10] sm:$0xf]
          %v2805 = vld [vmem:[%s2799 + $0x14] sm:$0xf]
          %v2806 = vld [vmem:[%s2799 + $0x18] sm:$0xf]
          %v2807 = vld [vmem:[%s2799 + $0x1c] sm:$0xf]
          %v2808 = vld [vmem:[%s2799 + $0x20] sm:$0xf]
          %v2809 = vld [vmem:[%s2799 + $0x24] sm:$0xf]
          %v2810 = vld [vmem:[%s2799 + $0x28] sm:$0xf]
          %v2811 = vld [vmem:[%s2799 + $0x2c] sm:$0xf]
          %v2812 = vld [vmem:[%s2799 + $0x30] sm:$0xf]
          %v2813 = vld [vmem:[%s2799 + $0x34] sm:$0xf]
          %v2814 = vld [vmem:[%s2799 + $0x38] sm:$0xf]
          %v2815 = vld [vmem:[%s2799 + $0x3c] sm:$0xf]
          %v2832 = vunpack.c.l.b16 %v2725
          %v2833 = vunpack.c.l.b16 %v2726
          %v2834 = vunpack.c.l.b16 %v2727
          %v2835 = vunpack.c.l.b16 %v2728
          %v2836 = vunpack.c.l.b16 %v2729
          %v2837 = vunpack.c.l.b16 %v2730
          %v2838 = vunpack.c.l.b16 %v2731
          %v2839 = vunpack.c.l.b16 %v2732
          %v2840 = vunpack.c.l.b16 %v2733
          %v2841 = vunpack.c.l.b16 %v2734
          %v2842 = vunpack.c.l.b16 %v2735
          %v2843 = vunpack.c.l.b16 %v2736
          %v2844 = vunpack.c.l.b16 %v2737
          %v2845 = vunpack.c.l.b16 %v2738
          %v2846 = vunpack.c.l.b16 %v2739
          %v2847 = vunpack.c.l.b16 %v2740
          %v2848 = vpack.c.b16 %v2833, %v2832
          %v2849 = vpack.c.b16 %v2835, %v2834
          %v2850 = vpack.c.b16 %v2837, %v2836
          %v2851 = vpack.c.b16 %v2839, %v2838
          %v2852 = vpack.c.b16 %v2841, %v2840
          %v2853 = vpack.c.b16 %v2843, %v2842
          %v2854 = vpack.c.b16 %v2845, %v2844
          %v2855 = vpack.c.b16 %v2847, %v2846
          %2856 = vrot.lane.b32.xlu0 %v2848, 64
          %v2857 = vpop.permute.xlu0 %2856
          %2858 = vrot.lane.b32.xlu0 %v2849, 64
          %v2859 = vpop.permute.xlu0 %2858
          %2860 = vrot.lane.b32.xlu0 %v2850, 64
          %v2861 = vpop.permute.xlu0 %2860
          %2862 = vrot.lane.b32.xlu0 %v2851, 64
          %v2863 = vpop.permute.xlu0 %2862
          %2864 = vrot.lane.b32.xlu0 %v2852, 64
          %v2865 = vpop.permute.xlu0 %2864
          %2866 = vrot.lane.b32.xlu0 %v2853, 64
          %v2867 = vpop.permute.xlu0 %2866
          %2868 = vrot.lane.b32.xlu0 %v2854, 64
          %v2869 = vpop.permute.xlu0 %2868
          %2870 = vrot.lane.b32.xlu0 %v2855, 64
          %v2871 = vpop.permute.xlu0 %2870
          %v2888 = vunpack.c.l.b16 %v2800
          %v2889 = vunpack.c.l.b16 %v2801
          %v2890 = vunpack.c.l.b16 %v2802
          %v2891 = vunpack.c.l.b16 %v2803
          %v2892 = vunpack.c.l.b16 %v2804
          %v2893 = vunpack.c.l.b16 %v2805
          %v2894 = vunpack.c.l.b16 %v2806
          %v2895 = vunpack.c.l.b16 %v2807
          %v2896 = vunpack.c.l.b16 %v2808
          %v2897 = vunpack.c.l.b16 %v2809
          %v2898 = vunpack.c.l.b16 %v2810
          %v2899 = vunpack.c.l.b16 %v2811
          %v2900 = vunpack.c.l.b16 %v2812
          %v2901 = vunpack.c.l.b16 %v2813
          %v2902 = vunpack.c.l.b16 %v2814
          %v2903 = vunpack.c.l.b16 %v2815
          %v2904 = vpack.c.b16 %v2889, %v2888
          %v2905 = vpack.c.b16 %v2891, %v2890
          %v2906 = vpack.c.b16 %v2893, %v2892
          %v2907 = vpack.c.b16 %v2895, %v2894
          %v2908 = vpack.c.b16 %v2897, %v2896
          %v2909 = vpack.c.b16 %v2899, %v2898
          %v2910 = vpack.c.b16 %v2901, %v2900
          %v2911 = vpack.c.b16 %v2903, %v2902
          %2912 = vrot.lane.b32.xlu0 %v2904, 64
          %v2913 = vpop.permute.xlu0 %2912
          %2914 = vrot.lane.b32.xlu0 %v2905, 64
          %v2915 = vpop.permute.xlu0 %2914
          %2916 = vrot.lane.b32.xlu0 %v2906, 64
          %v2917 = vpop.permute.xlu0 %2916
          %2918 = vrot.lane.b32.xlu0 %v2907, 64
          %v2919 = vpop.permute.xlu0 %2918
          %2920 = vrot.lane.b32.xlu0 %v2908, 64
          %v2921 = vpop.permute.xlu0 %2920
          %2922 = vrot.lane.b32.xlu0 %v2909, 64
          %v2923 = vpop.permute.xlu0 %2922
          %2924 = vrot.lane.b32.xlu0 %v2910, 64
          %v2925 = vpop.permute.xlu0 %2924
          %2926 = vrot.lane.b32.xlu0 %v2911, 64
          %v2927 = vpop.permute.xlu0 %2926
          %v2929 = vsel %vm742, %v2857, 0
          %v2932 = vsel %vm742, %v2859, 0
          %v2935 = vsel %vm742, %v2861, 0
          %v2938 = vsel %vm742, %v2863, 0
          %v2941 = vsel %vm742, %v2865, 0
          %v2944 = vsel %vm742, %v2867, 0
          %v2947 = vsel %vm742, %v2869, 0
          %v2950 = vsel %vm742, %v2871, 0
          %v2953 = vsel %vm742, %v2913, 0
          %v2956 = vsel %vm742, %v2915, 0
          %v2959 = vsel %vm742, %v2917, 0
          %v2962 = vsel %vm742, %v2919, 0
          %v2965 = vsel %vm742, %v2921, 0
          %v2968 = vsel %vm742, %v2923, 0
          %v2971 = vsel %vm742, %v2925, 0
          %v2974 = vsel %vm742, %v2927, 0
          %2976 = vmatpush.bf16.xpose.msra.mxu0 %v2974
          %2977 = vmatpush.bf16.xpose.msra.mxu0 %v2971
          %2978 = vmatpush.bf16.xpose.msra.mxu0 %v2968
          %2979 = vmatpush.bf16.xpose.msra.mxu0 %v2965
          %2980 = vmatpush.bf16.xpose.msra.mxu0 %v2962
          %2981 = vmatpush.bf16.xpose.msra.mxu0 %v2959
          %2982 = vmatpush.bf16.xpose.msra.mxu0 %v2956
          %2983 = vmatpush.bf16.xpose.msra.mxu0 %v2953
          %2984 = vmatmul.bf16.gmra.mxu0 %v2929
          %v2985 = vpop.f32.mrf.mxu0
          %v2986 = vadd.f32 0.0, %v2985
          %v2987 = vpop.f32.mrf.mxu0
          %v2988 = vadd.f32 0.0, %v2987
          %2989 = vmatmul.bf16.gmra.mxu0 %v2932
          %v2990 = vpop.f32.mrf.mxu0
          %v2991 = vadd.f32 0.0, %v2990
          %v2992 = vpop.f32.mrf.mxu0
          %v2993 = vadd.f32 0.0, %v2992
          %2994 = vmatmul.bf16.gmra.mxu0 %v2935
          %v2995 = vpop.f32.mrf.mxu0
          %v2996 = vadd.f32 0.0, %v2995
          %v2997 = vpop.f32.mrf.mxu0
          %v2998 = vadd.f32 0.0, %v2997
          %2999 = vmatmul.bf16.gmra.mxu0 %v2938
          %v3000 = vpop.f32.mrf.mxu0
          %v3001 = vadd.f32 0.0, %v3000
          %v3002 = vpop.f32.mrf.mxu0
          %v3003 = vadd.f32 0.0, %v3002
          %3004 = vmatmul.bf16.gmra.mxu0 %v2941
          %v3005 = vpop.f32.mrf.mxu0
          %v3006 = vadd.f32 0.0, %v3005
          %v3007 = vpop.f32.mrf.mxu0
          %v3008 = vadd.f32 0.0, %v3007
          %3009 = vmatmul.bf16.gmra.mxu0 %v2944
          %v3010 = vpop.f32.mrf.mxu0
          %v3011 = vadd.f32 0.0, %v3010
          %v3012 = vpop.f32.mrf.mxu0
          %v3013 = vadd.f32 0.0, %v3012
          %3014 = vmatmul.bf16.gmra.mxu0 %v2947
          %v3015 = vpop.f32.mrf.mxu0
          %v3016 = vadd.f32 0.0, %v3015
          %v3017 = vpop.f32.mrf.mxu0
          %v3018 = vadd.f32 0.0, %v3017
          %3019 = vmatmul.bf16.gmra.mxu0 %v2950
          %v3020 = vpop.f32.mrf.mxu0
          %v3021 = vadd.f32 0.0, %v3020
          %v3022 = vpop.f32.mrf.mxu0
          %v3023 = vadd.f32 0.0, %v3022
          %3024 = vdwg.mxu0
          %v3025 = vld [vmem:[#allocation2] sm:$0xff]
          %v3026 = vld [vmem:[#allocation2 + $0x8] sm:$0xff]
          %v3027 = vld [vmem:[#allocation2 + $0x10] sm:$0xff]
          %v3028 = vld [vmem:[#allocation2 + $0x18] sm:$0xff]
          %v3029 = vld [vmem:[#allocation2 + $0x20] sm:$0xff]
          %v3030 = vld [vmem:[#allocation2 + $0x28] sm:$0xff]
          %v3031 = vld [vmem:[#allocation2 + $0x30] sm:$0xff]
          %v3032 = vld [vmem:[#allocation2 + $0x38] sm:$0xff]
          %v3033 = vld [vmem:[#allocation2 + $0x40] sm:$0xff]
          %v3034 = vld [vmem:[#allocation2 + $0x48] sm:$0xff]
          %v3035 = vld [vmem:[#allocation2 + $0x50] sm:$0xff]
          %v3036 = vld [vmem:[#allocation2 + $0x58] sm:$0xff]
          %v3037 = vld [vmem:[#allocation2 + $0x60] sm:$0xff]
          %v3038 = vld [vmem:[#allocation2 + $0x68] sm:$0xff]
          %v3039 = vld [vmem:[#allocation2 + $0x70] sm:$0xff]
          %v3040 = vld [vmem:[#allocation2 + $0x78] sm:$0xff]
          %3041 = vmax.xlane.f32.xlu0 %v2986
          %v3042 = vpop.xlane.xlu0 %3041
          %3043 = vmax.xlane.f32.xlu0 %v2988
          %v3044 = vpop.xlane.xlu0 %3043
          %3045 = vmax.xlane.f32.xlu0 %v2991
          %v3046 = vpop.xlane.xlu0 %3045
          %3047 = vmax.xlane.f32.xlu0 %v2993
          %v3048 = vpop.xlane.xlu0 %3047
          %3049 = vmax.xlane.f32.xlu0 %v2996
          %v3050 = vpop.xlane.xlu0 %3049
          %3051 = vmax.xlane.f32.xlu0 %v2998
          %v3052 = vpop.xlane.xlu0 %3051
          %3053 = vmax.xlane.f32.xlu0 %v3001
          %v3054 = vpop.xlane.xlu0 %3053
          %3055 = vmax.xlane.f32.xlu0 %v3003
          %v3056 = vpop.xlane.xlu0 %3055
          %3057 = vmax.xlane.f32.xlu0 %v3006
          %v3058 = vpop.xlane.xlu0 %3057
          %3059 = vmax.xlane.f32.xlu0 %v3008
          %v3060 = vpop.xlane.xlu0 %3059
          %3061 = vmax.xlane.f32.xlu0 %v3011
          %v3062 = vpop.xlane.xlu0 %3061
          %3063 = vmax.xlane.f32.xlu0 %v3013
          %v3064 = vpop.xlane.xlu0 %3063
          %3065 = vmax.xlane.f32.xlu0 %v3016
          %v3066 = vpop.xlane.xlu0 %3065
          %3067 = vmax.xlane.f32.xlu0 %v3018
          %v3068 = vpop.xlane.xlu0 %3067
          %3069 = vmax.xlane.f32.xlu0 %v3021
          %v3070 = vpop.xlane.xlu0 %3069
          %3071 = vmax.xlane.f32.xlu0 %v3023
          %v3072 = vpop.xlane.xlu0 %3071
          %v3073 = vmax.f32 %v3025, %v3042
          %v3074 = vmax.f32 %v3026, %v3044
          %v3075 = vmax.f32 %v3027, %v3046
          %v3076 = vmax.f32 %v3028, %v3048
          %v3077 = vmax.f32 %v3029, %v3050
          %v3078 = vmax.f32 %v3030, %v3052
          %v3079 = vmax.f32 %v3031, %v3054
          %v3080 = vmax.f32 %v3032, %v3056
          %v3081 = vmax.f32 %v3033, %v3058
          %v3082 = vmax.f32 %v3034, %v3060
          %v3083 = vmax.f32 %v3035, %v3062
          %v3084 = vmax.f32 %v3036, %v3064
          %v3085 = vmax.f32 %v3037, %v3066
          %v3086 = vmax.f32 %v3038, %v3068
          %v3087 = vmax.f32 %v3039, %v3070
          %v3088 = vmax.f32 %v3040, %v3072
          %v3089 = vsub.f32 %v3025, %v3073
          %v3090 = vsub.f32 %v3026, %v3074
          %v3091 = vsub.f32 %v3027, %v3075
          %v3092 = vsub.f32 %v3028, %v3076
          %v3093 = vsub.f32 %v3029, %v3077
          %v3094 = vsub.f32 %v3030, %v3078
          %v3095 = vsub.f32 %v3031, %v3079
          %v3096 = vsub.f32 %v3032, %v3080
          %v3097 = vsub.f32 %v3033, %v3081
          %v3098 = vsub.f32 %v3034, %v3082
          %v3099 = vsub.f32 %v3035, %v3083
          %v3100 = vsub.f32 %v3036, %v3084
          %v3101 = vsub.f32 %v3037, %v3085
          %v3102 = vsub.f32 %v3038, %v3086
          %v3103 = vsub.f32 %v3039, %v3087
          %v3104 = vsub.f32 %v3040, %v3088
          %v3105 = vmul.f32 %v3089, 1.442695
          %v3106 = vpow.pop %v3105
          %v3107 = vmul.f32 %v3090, 1.442695
          %v3108 = vpow.pop %v3107
          %v3109 = vmul.f32 %v3091, 1.442695
          %v3110 = vpow.pop %v3109
          %v3111 = vmul.f32 %v3092, 1.442695
          %v3112 = vpow.pop %v3111
          %v3113 = vmul.f32 %v3093, 1.442695
          %v3114 = vpow.pop %v3113
          %v3115 = vmul.f32 %v3094, 1.442695
          %v3116 = vpow.pop %v3115
          %v3117 = vmul.f32 %v3095, 1.442695
          %v3118 = vpow.pop %v3117
          %v3119 = vmul.f32 %v3096, 1.442695
          %v3120 = vpow.pop %v3119
          %v3121 = vmul.f32 %v3097, 1.442695
          %v3122 = vpow.pop %v3121
          %v3123 = vmul.f32 %v3098, 1.442695
          %v3124 = vpow.pop %v3123
          %v3125 = vmul.f32 %v3099, 1.442695
          %v3126 = vpow.pop %v3125
          %v3127 = vmul.f32 %v3100, 1.442695
          %v3128 = vpow.pop %v3127
          %v3129 = vmul.f32 %v3101, 1.442695
          %v3130 = vpow.pop %v3129
          %v3131 = vmul.f32 %v3102, 1.442695
          %v3132 = vpow.pop %v3131
          %v3133 = vmul.f32 %v3103, 1.442695
          %v3134 = vpow.pop %v3133
          %v3135 = vmul.f32 %v3104, 1.442695
          %v3136 = vpow.pop %v3135
          %3138 = vset.pattern.permute.xlu0 0
          %3139 = vperm.xlu0 %3138, %v3073
          %v3140 = vpop.permute.xlu0 %3139
          %3143 = vset.pattern.permute.xlu0 0
          %3144 = vperm.xlu0 %3143, %v3074
          %v3145 = vpop.permute.xlu0 %3144
          %3148 = vset.pattern.permute.xlu0 0
          %3149 = vperm.xlu0 %3148, %v3075
          %v3150 = vpop.permute.xlu0 %3149
          %3153 = vset.pattern.permute.xlu0 0
          %3154 = vperm.xlu0 %3153, %v3076
          %v3155 = vpop.permute.xlu0 %3154
          %3158 = vset.pattern.permute.xlu0 0
          %3159 = vperm.xlu0 %3158, %v3077
          %v3160 = vpop.permute.xlu0 %3159
          %3163 = vset.pattern.permute.xlu0 0
          %3164 = vperm.xlu0 %3163, %v3078
          %v3165 = vpop.permute.xlu0 %3164
          %3168 = vset.pattern.permute.xlu0 0
          %3169 = vperm.xlu0 %3168, %v3079
          %v3170 = vpop.permute.xlu0 %3169
          %3173 = vset.pattern.permute.xlu0 0
          %3174 = vperm.xlu0 %3173, %v3080
          %v3175 = vpop.permute.xlu0 %3174
          %3178 = vset.pattern.permute.xlu0 0
          %3179 = vperm.xlu0 %3178, %v3081
          %v3180 = vpop.permute.xlu0 %3179
          %3183 = vset.pattern.permute.xlu0 0
          %3184 = vperm.xlu0 %3183, %v3082
          %v3185 = vpop.permute.xlu0 %3184
          %3188 = vset.pattern.permute.xlu0 0
          %3189 = vperm.xlu0 %3188, %v3083
          %v3190 = vpop.permute.xlu0 %3189
          %3193 = vset.pattern.permute.xlu0 0
          %3194 = vperm.xlu0 %3193, %v3084
          %v3195 = vpop.permute.xlu0 %3194
          %3198 = vset.pattern.permute.xlu0 0
          %3199 = vperm.xlu0 %3198, %v3085
          %v3200 = vpop.permute.xlu0 %3199
          %3203 = vset.pattern.permute.xlu0 0
          %3204 = vperm.xlu0 %3203, %v3086
          %v3205 = vpop.permute.xlu0 %3204
          %3208 = vset.pattern.permute.xlu0 0
          %3209 = vperm.xlu0 %3208, %v3087
          %v3210 = vpop.permute.xlu0 %3209
          %3213 = vset.pattern.permute.xlu0 0
          %3214 = vperm.xlu0 %3213, %v3088
          %v3215 = vpop.permute.xlu0 %3214
          %v3217 = vsub.f32 %v2986, %v3140
          %v3218 = vsub.f32 %v2988, %v3145
          %v3219 = vsub.f32 %v2991, %v3150
          %v3220 = vsub.f32 %v2993, %v3155
          %v3221 = vsub.f32 %v2996, %v3160
          %v3222 = vsub.f32 %v2998, %v3165
          %v3223 = vsub.f32 %v3001, %v3170
          %v3224 = vsub.f32 %v3003, %v3175
          %v3225 = vsub.f32 %v3006, %v3180
          %v3226 = vsub.f32 %v3008, %v3185
          %v3227 = vsub.f32 %v3011, %v3190
          %v3228 = vsub.f32 %v3013, %v3195
          %v3229 = vsub.f32 %v3016, %v3200
          %v3230 = vsub.f32 %v3018, %v3205
          %v3231 = vsub.f32 %v3021, %v3210
          %v3232 = vsub.f32 %v3023, %v3215
          %v3233 = vpack.c.bf16 %v3218, %v3217
          %v3234 = vpack.c.bf16 %v3220, %v3219
          %v3235 = vpack.c.bf16 %v3222, %v3221
          %v3236 = vpack.c.bf16 %v3224, %v3223
          %v3237 = vpack.c.bf16 %v3226, %v3225
          %v3238 = vpack.c.bf16 %v3228, %v3227
          %v3239 = vpack.c.bf16 %v3230, %v3229
          %v3240 = vpack.c.bf16 %v3232, %v3231
          %v3241 = vunpack.c.l.bf16 %v3233
          %v3242 = vunpack.c.h.bf16 %v3233
          %v3243 = vunpack.c.l.bf16 %v3234
          %v3244 = vunpack.c.h.bf16 %v3234
          %v3245 = vunpack.c.l.bf16 %v3235
          %v3246 = vunpack.c.h.bf16 %v3235
          %v3247 = vunpack.c.l.bf16 %v3236
          %v3248 = vunpack.c.h.bf16 %v3236
          %v3249 = vunpack.c.l.bf16 %v3237
          %v3250 = vunpack.c.h.bf16 %v3237
          %v3251 = vunpack.c.l.bf16 %v3238
          %v3252 = vunpack.c.h.bf16 %v3238
          %v3253 = vunpack.c.l.bf16 %v3239
          %v3254 = vunpack.c.h.bf16 %v3239
          %v3255 = vunpack.c.l.bf16 %v3240
          %v3256 = vunpack.c.h.bf16 %v3240
          %v3257 = vmul.f32 %v3241, 1.442695
          %v3258 = vpow.pop %v3257
          %v3259 = vmul.f32 %v3242, 1.442695
          %v3260 = vpow.pop %v3259
          %v3261 = vmul.f32 %v3243, 1.442695
          %v3262 = vpow.pop %v3261
          %v3263 = vmul.f32 %v3244, 1.442695
          %v3264 = vpow.pop %v3263
          %v3265 = vmul.f32 %v3245, 1.442695
          %v3266 = vpow.pop %v3265
          %v3267 = vmul.f32 %v3246, 1.442695
          %v3268 = vpow.pop %v3267
          %v3269 = vmul.f32 %v3247, 1.442695
          %v3270 = vpow.pop %v3269
          %v3271 = vmul.f32 %v3248, 1.442695
          %v3272 = vpow.pop %v3271
          %v3273 = vmul.f32 %v3249, 1.442695
          %v3274 = vpow.pop %v3273
          %v3275 = vmul.f32 %v3250, 1.442695
          %v3276 = vpow.pop %v3275
          %v3277 = vmul.f32 %v3251, 1.442695
          %v3278 = vpow.pop %v3277
          %v3279 = vmul.f32 %v3252, 1.442695
          %v3280 = vpow.pop %v3279
          %v3281 = vmul.f32 %v3253, 1.442695
          %v3282 = vpow.pop %v3281
          %v3283 = vmul.f32 %v3254, 1.442695
          %v3284 = vpow.pop %v3283
          %v3285 = vmul.f32 %v3255, 1.442695
          %v3286 = vpow.pop %v3285
          %v3287 = vmul.f32 %v3256, 1.442695
          %v3288 = vpow.pop %v3287
          %v3289 = vpack.c.bf16 %v3260, %v3258
          %v3290 = vpack.c.bf16 %v3264, %v3262
          %v3291 = vpack.c.bf16 %v3268, %v3266
          %v3292 = vpack.c.bf16 %v3272, %v3270
          %v3293 = vpack.c.bf16 %v3276, %v3274
          %v3294 = vpack.c.bf16 %v3280, %v3278
          %v3295 = vpack.c.bf16 %v3284, %v3282
          %v3296 = vpack.c.bf16 %v3288, %v3286
          %v3297 = vld [vmem:[#allocation3] sm:$0xff]
          %v3298 = vld [vmem:[#allocation3 + $0x8] sm:$0xff]
          %v3299 = vld [vmem:[#allocation3 + $0x10] sm:$0xff]
          %v3300 = vld [vmem:[#allocation3 + $0x18] sm:$0xff]
          %v3301 = vld [vmem:[#allocation3 + $0x20] sm:$0xff]
          %v3302 = vld [vmem:[#allocation3 + $0x28] sm:$0xff]
          %v3303 = vld [vmem:[#allocation3 + $0x30] sm:$0xff]
          %v3304 = vld [vmem:[#allocation3 + $0x38] sm:$0xff]
          %v3305 = vld [vmem:[#allocation3 + $0x40] sm:$0xff]
          %v3306 = vld [vmem:[#allocation3 + $0x48] sm:$0xff]
          %v3307 = vld [vmem:[#allocation3 + $0x50] sm:$0xff]
          %v3308 = vld [vmem:[#allocation3 + $0x58] sm:$0xff]
          %v3309 = vld [vmem:[#allocation3 + $0x60] sm:$0xff]
          %v3310 = vld [vmem:[#allocation3 + $0x68] sm:$0xff]
          %v3311 = vld [vmem:[#allocation3 + $0x70] sm:$0xff]
          %v3312 = vld [vmem:[#allocation3 + $0x78] sm:$0xff]
          %v3313 = vmul.f32 %v3106, %v3297
          %v3314 = vmul.f32 %v3108, %v3298
          %v3315 = vmul.f32 %v3110, %v3299
          %v3316 = vmul.f32 %v3112, %v3300
          %v3317 = vmul.f32 %v3114, %v3301
          %v3318 = vmul.f32 %v3116, %v3302
          %v3319 = vmul.f32 %v3118, %v3303
          %v3320 = vmul.f32 %v3120, %v3304
          %v3321 = vmul.f32 %v3122, %v3305
          %v3322 = vmul.f32 %v3124, %v3306
          %v3323 = vmul.f32 %v3126, %v3307
          %v3324 = vmul.f32 %v3128, %v3308
          %v3325 = vmul.f32 %v3130, %v3309
          %v3326 = vmul.f32 %v3132, %v3310
          %v3327 = vmul.f32 %v3134, %v3311
          %v3328 = vmul.f32 %v3136, %v3312
          %v3329 = vunpack.c.l.bf16 %v3289
          %v3330 = vunpack.c.h.bf16 %v3289
          %v3331 = vunpack.c.l.bf16 %v3290
          %v3332 = vunpack.c.h.bf16 %v3290
          %v3333 = vunpack.c.l.bf16 %v3291
          %v3334 = vunpack.c.h.bf16 %v3291
          %v3335 = vunpack.c.l.bf16 %v3292
          %v3336 = vunpack.c.h.bf16 %v3292
          %v3337 = vunpack.c.l.bf16 %v3293
          %v3338 = vunpack.c.h.bf16 %v3293
          %v3339 = vunpack.c.l.bf16 %v3294
          %v3340 = vunpack.c.h.bf16 %v3294
          %v3341 = vunpack.c.l.bf16 %v3295
          %v3342 = vunpack.c.h.bf16 %v3295
          %v3343 = vunpack.c.l.bf16 %v3296
          %v3344 = vunpack.c.h.bf16 %v3296
          %3345 = vadd.xlane.f32.xlu0 %v3329
          %v3346 = vpop.xlane.xlu0 %3345
          %3347 = vadd.xlane.f32.xlu0 %v3330
          %v3348 = vpop.xlane.xlu0 %3347
          %3349 = vadd.xlane.f32.xlu0 %v3331
          %v3350 = vpop.xlane.xlu0 %3349
          %3351 = vadd.xlane.f32.xlu0 %v3332
          %v3352 = vpop.xlane.xlu0 %3351
          %3353 = vadd.xlane.f32.xlu0 %v3333
          %v3354 = vpop.xlane.xlu0 %3353
          %3355 = vadd.xlane.f32.xlu0 %v3334
          %v3356 = vpop.xlane.xlu0 %3355
          %3357 = vadd.xlane.f32.xlu0 %v3335
          %v3358 = vpop.xlane.xlu0 %3357
          %3359 = vadd.xlane.f32.xlu0 %v3336
          %v3360 = vpop.xlane.xlu0 %3359
          %3361 = vadd.xlane.f32.xlu0 %v3337
          %v3362 = vpop.xlane.xlu0 %3361
          %3363 = vadd.xlane.f32.xlu0 %v3338
          %v3364 = vpop.xlane.xlu0 %3363
          %3365 = vadd.xlane.f32.xlu0 %v3339
          %v3366 = vpop.xlane.xlu0 %3365
          %3367 = vadd.xlane.f32.xlu0 %v3340
          %v3368 = vpop.xlane.xlu0 %3367
          %3369 = vadd.xlane.f32.xlu0 %v3341
          %v3370 = vpop.xlane.xlu0 %3369
          %3371 = vadd.xlane.f32.xlu0 %v3342
          %v3372 = vpop.xlane.xlu0 %3371
          %3373 = vadd.xlane.f32.xlu0 %v3343
          %v3374 = vpop.xlane.xlu0 %3373
          %3375 = vadd.xlane.f32.xlu0 %v3344
          %v3376 = vpop.xlane.xlu0 %3375
          %v3377 = vadd.f32 %v3313, %v3346
          %v3378 = vadd.f32 %v3314, %v3348
          %v3379 = vadd.f32 %v3315, %v3350
          %v3380 = vadd.f32 %v3316, %v3352
          %v3381 = vadd.f32 %v3317, %v3354
          %v3382 = vadd.f32 %v3318, %v3356
          %v3383 = vadd.f32 %v3319, %v3358
          %v3384 = vadd.f32 %v3320, %v3360
          %v3385 = vadd.f32 %v3321, %v3362
          %v3386 = vadd.f32 %v3322, %v3364
          %v3387 = vadd.f32 %v3323, %v3366
          %v3388 = vadd.f32 %v3324, %v3368
          %v3389 = vadd.f32 %v3325, %v3370
          %v3390 = vadd.f32 %v3326, %v3372
          %v3391 = vadd.f32 %v3327, %v3374
          %v3392 = vadd.f32 %v3328, %v3376
          %3393 = vst.msk [vmem:[#allocation3] sm:$0xff] %vm709, %v3377
          %3394 = vst.msk [vmem:[#allocation3 + $0x8] sm:$0xff] %vm709, %v3378
          %3395 = vst.msk [vmem:[#allocation3 + $0x10] sm:$0xff] %vm709, %v3379
          %3396 = vst.msk [vmem:[#allocation3 + $0x18] sm:$0xff] %vm709, %v3380
          %3397 = vst.msk [vmem:[#allocation3 + $0x20] sm:$0xff] %vm709, %v3381
          %3398 = vst.msk [vmem:[#allocation3 + $0x28] sm:$0xff] %vm709, %v3382
          %3399 = vst.msk [vmem:[#allocation3 + $0x30] sm:$0xff] %vm709, %v3383
          %3400 = vst.msk [vmem:[#allocation3 + $0x38] sm:$0xff] %vm709, %v3384
          %3401 = vst.msk [vmem:[#allocation3 + $0x40] sm:$0xff] %vm709, %v3385
          %3402 = vst.msk [vmem:[#allocation3 + $0x48] sm:$0xff] %vm709, %v3386
          %3403 = vst.msk [vmem:[#allocation3 + $0x50] sm:$0xff] %vm709, %v3387
          %3404 = vst.msk [vmem:[#allocation3 + $0x58] sm:$0xff] %vm709, %v3388
          %3405 = vst.msk [vmem:[#allocation3 + $0x60] sm:$0xff] %vm709, %v3389
          %3406 = vst.msk [vmem:[#allocation3 + $0x68] sm:$0xff] %vm709, %v3390
          %3407 = vst.msk [vmem:[#allocation3 + $0x70] sm:$0xff] %vm709, %v3391
          %3408 = vst.msk [vmem:[#allocation3 + $0x78] sm:$0xff] %vm709, %v3392
          %s3409 = smul.addr %s2796, 4
          %s3410 = scalar_lea.vmem %s660, %s3409 [#allocation7]
          %v3411 = vld [vmem:[%s3410] sm:$0xf]
          %v3412 = vld [vmem:[%s3410 + $0x4] sm:$0xf]
          %v3413 = vld [vmem:[%s3410 + $0x8] sm:$0xf]
          %v3414 = vld [vmem:[%s3410 + $0xc] sm:$0xf]
          %v3415 = vld [vmem:[%s3410 + $0x10] sm:$0xf]
          %v3416 = vld [vmem:[%s3410 + $0x14] sm:$0xf]
          %v3417 = vld [vmem:[%s3410 + $0x18] sm:$0xf]
          %v3418 = vld [vmem:[%s3410 + $0x1c] sm:$0xf]
          %v3419 = vld [vmem:[%s3410 + $0x20] sm:$0xf]
          %v3420 = vld [vmem:[%s3410 + $0x24] sm:$0xf]
          %v3421 = vld [vmem:[%s3410 + $0x28] sm:$0xf]
          %v3422 = vld [vmem:[%s3410 + $0x2c] sm:$0xf]
          %v3423 = vld [vmem:[%s3410 + $0x30] sm:$0xf]
          %v3424 = vld [vmem:[%s3410 + $0x34] sm:$0xf]
          %v3425 = vld [vmem:[%s3410 + $0x38] sm:$0xf]
          %v3426 = vld [vmem:[%s3410 + $0x3c] sm:$0xf]
          %v3427 = vld [vmem:[#allocation4] sm:$0xff]
          %v3428 = vld [vmem:[#allocation4 + $0x8] sm:$0xff]
          %v3429 = vld [vmem:[#allocation4 + $0x10] sm:$0xff]
          %v3430 = vld [vmem:[#allocation4 + $0x18] sm:$0xff]
          %v3431 = vld [vmem:[#allocation4 + $0x20] sm:$0xff]
          %v3432 = vld [vmem:[#allocation4 + $0x28] sm:$0xff]
          %v3433 = vld [vmem:[#allocation4 + $0x30] sm:$0xff]
          %v3434 = vld [vmem:[#allocation4 + $0x38] sm:$0xff]
          %v3435 = vld [vmem:[#allocation4 + $0x40] sm:$0xff]
          %v3436 = vld [vmem:[#allocation4 + $0x48] sm:$0xff]
          %v3437 = vld [vmem:[#allocation4 + $0x50] sm:$0xff]
          %v3438 = vld [vmem:[#allocation4 + $0x58] sm:$0xff]
          %v3439 = vld [vmem:[#allocation4 + $0x60] sm:$0xff]
          %v3440 = vld [vmem:[#allocation4 + $0x68] sm:$0xff]
          %v3441 = vld [vmem:[#allocation4 + $0x70] sm:$0xff]
          %v3442 = vld [vmem:[#allocation4 + $0x78] sm:$0xff]
          %3444 = vset.pattern.permute.xlu0 0
          %3445 = vperm.xlu0 %3444, %v3106
          %v3446 = vpop.permute.xlu0 %3445
          %3449 = vset.pattern.permute.xlu0 0
          %3450 = vperm.xlu0 %3449, %v3108
          %v3451 = vpop.permute.xlu0 %3450
          %3454 = vset.pattern.permute.xlu0 0
          %3455 = vperm.xlu0 %3454, %v3110
          %v3456 = vpop.permute.xlu0 %3455
          %3459 = vset.pattern.permute.xlu0 0
          %3460 = vperm.xlu0 %3459, %v3112
          %v3461 = vpop.permute.xlu0 %3460
          %3464 = vset.pattern.permute.xlu0 0
          %3465 = vperm.xlu0 %3464, %v3114
          %v3466 = vpop.permute.xlu0 %3465
          %3469 = vset.pattern.permute.xlu0 0
          %3470 = vperm.xlu0 %3469, %v3116
          %v3471 = vpop.permute.xlu0 %3470
          %3474 = vset.pattern.permute.xlu0 0
          %3475 = vperm.xlu0 %3474, %v3118
          %v3476 = vpop.permute.xlu0 %3475
          %3479 = vset.pattern.permute.xlu0 0
          %3480 = vperm.xlu0 %3479, %v3120
          %v3481 = vpop.permute.xlu0 %3480
          %3484 = vset.pattern.permute.xlu0 0
          %3485 = vperm.xlu0 %3484, %v3122
          %v3486 = vpop.permute.xlu0 %3485
          %3489 = vset.pattern.permute.xlu0 0
          %3490 = vperm.xlu0 %3489, %v3124
          %v3491 = vpop.permute.xlu0 %3490
          %3494 = vset.pattern.permute.xlu0 0
          %3495 = vperm.xlu0 %3494, %v3126
          %v3496 = vpop.permute.xlu0 %3495
          %3499 = vset.pattern.permute.xlu0 0
          %3500 = vperm.xlu0 %3499, %v3128
          %v3501 = vpop.permute.xlu0 %3500
          %3504 = vset.pattern.permute.xlu0 0
          %3505 = vperm.xlu0 %3504, %v3130
          %v3506 = vpop.permute.xlu0 %3505
          %3509 = vset.pattern.permute.xlu0 0
          %3510 = vperm.xlu0 %3509, %v3132
          %v3511 = vpop.permute.xlu0 %3510
          %3514 = vset.pattern.permute.xlu0 0
          %3515 = vperm.xlu0 %3514, %v3134
          %v3516 = vpop.permute.xlu0 %3515
          %3519 = vset.pattern.permute.xlu0 0
          %3520 = vperm.xlu0 %3519, %v3136
          %v3521 = vpop.permute.xlu0 %3520
          %v3523 = vmul.f32 %v3446, %v3427
          %v3524 = vmul.f32 %v3451, %v3428
          %v3525 = vmul.f32 %v3456, %v3429
          %v3526 = vmul.f32 %v3461, %v3430
          %v3527 = vmul.f32 %v3466, %v3431
          %v3528 = vmul.f32 %v3471, %v3432
          %v3529 = vmul.f32 %v3476, %v3433
          %v3530 = vmul.f32 %v3481, %v3434
          %v3531 = vmul.f32 %v3486, %v3435
          %v3532 = vmul.f32 %v3491, %v3436
          %v3533 = vmul.f32 %v3496, %v3437
          %v3534 = vmul.f32 %v3501, %v3438
          %v3535 = vmul.f32 %v3506, %v3439
          %v3536 = vmul.f32 %v3511, %v3440
          %v3537 = vmul.f32 %v3516, %v3441
          %v3538 = vmul.f32 %v3521, %v3442
          %v3555 = vunpack.c.l.b16 %v3411
          %v3556 = vunpack.c.l.b16 %v3412
          %v3557 = vunpack.c.l.b16 %v3413
          %v3558 = vunpack.c.l.b16 %v3414
          %v3559 = vunpack.c.l.b16 %v3415
          %v3560 = vunpack.c.l.b16 %v3416
          %v3561 = vunpack.c.l.b16 %v3417
          %v3562 = vunpack.c.l.b16 %v3418
          %v3563 = vunpack.c.l.b16 %v3419
          %v3564 = vunpack.c.l.b16 %v3420
          %v3565 = vunpack.c.l.b16 %v3421
          %v3566 = vunpack.c.l.b16 %v3422
          %v3567 = vunpack.c.l.b16 %v3423
          %v3568 = vunpack.c.l.b16 %v3424
          %v3569 = vunpack.c.l.b16 %v3425
          %v3570 = vunpack.c.l.b16 %v3426
          %v3571 = vpack.c.b16 %v3556, %v3555
          %v3572 = vpack.c.b16 %v3558, %v3557
          %v3573 = vpack.c.b16 %v3560, %v3559
          %v3574 = vpack.c.b16 %v3562, %v3561
          %v3575 = vpack.c.b16 %v3564, %v3563
          %v3576 = vpack.c.b16 %v3566, %v3565
          %v3577 = vpack.c.b16 %v3568, %v3567
          %v3578 = vpack.c.b16 %v3570, %v3569
          %3579 = vrot.lane.b32.xlu0 %v3571, 64
          %v3580 = vpop.permute.xlu0 %3579
          %3581 = vrot.lane.b32.xlu0 %v3572, 64
          %v3582 = vpop.permute.xlu0 %3581
          %3583 = vrot.lane.b32.xlu0 %v3573, 64
          %v3584 = vpop.permute.xlu0 %3583
          %3585 = vrot.lane.b32.xlu0 %v3574, 64
          %v3586 = vpop.permute.xlu0 %3585
          %3587 = vrot.lane.b32.xlu0 %v3575, 64
          %v3588 = vpop.permute.xlu0 %3587
          %3589 = vrot.lane.b32.xlu0 %v3576, 64
          %v3590 = vpop.permute.xlu0 %3589
          %3591 = vrot.lane.b32.xlu0 %v3577, 64
          %v3592 = vpop.permute.xlu0 %3591
          %3593 = vrot.lane.b32.xlu0 %v3578, 64
          %v3594 = vpop.permute.xlu0 %3593
          %3603 = vmatpush.bf16.msra.mxu0 %v3594
          %3604 = vmatpush.bf16.msra.mxu0 %v3592
          %3605 = vmatpush.bf16.msra.mxu0 %v3590
          %3606 = vmatpush.bf16.msra.mxu0 %v3588
          %3607 = vmatpush.bf16.msra.mxu0 %v3586
          %3608 = vmatpush.bf16.msra.mxu0 %v3584
          %3609 = vmatpush.bf16.msra.mxu0 %v3582
          %3610 = vmatpush.bf16.msra.mxu0 %v3580
          %3611 = vmatmul.bf16.gmra.mxu0 %v3289
          %v3612 = vpop.f32.mrf.mxu0
          %v3613 = vadd.f32 0.0, %v3612
          %v3614 = vpop.f32.mrf.mxu0
          %v3615 = vadd.f32 0.0, %v3614
          %3616 = vmatmul.bf16.gmra.mxu0 %v3290
          %v3617 = vpop.f32.mrf.mxu0
          %v3618 = vadd.f32 0.0, %v3617
          %v3619 = vpop.f32.mrf.mxu0
          %v3620 = vadd.f32 0.0, %v3619
          %3621 = vmatmul.bf16.gmra.mxu0 %v3291
          %v3622 = vpop.f32.mrf.mxu0
          %v3623 = vadd.f32 0.0, %v3622
          %v3624 = vpop.f32.mrf.mxu0
          %v3625 = vadd.f32 0.0, %v3624
          %3626 = vmatmul.bf16.gmra.mxu0 %v3292
          %v3627 = vpop.f32.mrf.mxu0
          %v3628 = vadd.f32 0.0, %v3627
          %v3629 = vpop.f32.mrf.mxu0
          %v3630 = vadd.f32 0.0, %v3629
          %3631 = vmatmul.bf16.gmra.mxu0 %v3293
          %v3632 = vpop.f32.mrf.mxu0
          %v3633 = vadd.f32 0.0, %v3632
          %v3634 = vpop.f32.mrf.mxu0
          %v3635 = vadd.f32 0.0, %v3634
          %3636 = vmatmul.bf16.gmra.mxu0 %v3294
          %v3637 = vpop.f32.mrf.mxu0
          %v3638 = vadd.f32 0.0, %v3637
          %v3639 = vpop.f32.mrf.mxu0
          %v3640 = vadd.f32 0.0, %v3639
          %3641 = vmatmul.bf16.gmra.mxu0 %v3295
          %v3642 = vpop.f32.mrf.mxu0
          %v3643 = vadd.f32 0.0, %v3642
          %v3644 = vpop.f32.mrf.mxu0
          %v3645 = vadd.f32 0.0, %v3644
          %3646 = vmatmul.bf16.gmra.mxu0 %v3296
          %v3647 = vpop.f32.mrf.mxu0
          %v3648 = vadd.f32 0.0, %v3647
          %v3649 = vpop.f32.mrf.mxu0
          %v3650 = vadd.f32 0.0, %v3649
          %3651 = vdwg.mxu0
          %v3652 = vadd.f32 %v3523, %v3613
          %v3653 = vadd.f32 %v3524, %v3615
          %v3654 = vadd.f32 %v3525, %v3618
          %v3655 = vadd.f32 %v3526, %v3620
          %v3656 = vadd.f32 %v3527, %v3623
          %v3657 = vadd.f32 %v3528, %v3625
          %v3658 = vadd.f32 %v3529, %v3628
          %v3659 = vadd.f32 %v3530, %v3630
          %v3660 = vadd.f32 %v3531, %v3633
          %v3661 = vadd.f32 %v3532, %v3635
          %v3662 = vadd.f32 %v3533, %v3638
          %v3663 = vadd.f32 %v3534, %v3640
          %v3664 = vadd.f32 %v3535, %v3643
          %v3665 = vadd.f32 %v3536, %v3645
          %v3666 = vadd.f32 %v3537, %v3648
          %v3667 = vadd.f32 %v3538, %v3650
          %3668 = vst.msk [vmem:[#allocation4] sm:$0xff] %vm742, %v3652
          %3669 = vst.msk [vmem:[#allocation4 + $0x8] sm:$0xff] %vm742, %v3653
          %3670 = vst.msk [vmem:[#allocation4 + $0x10] sm:$0xff] %vm742, %v3654
          %3671 = vst.msk [vmem:[#allocation4 + $0x18] sm:$0xff] %vm742, %v3655
          %3672 = vst.msk [vmem:[#allocation4 + $0x20] sm:$0xff] %vm742, %v3656
          %3673 = vst.msk [vmem:[#allocation4 + $0x28] sm:$0xff] %vm742, %v3657
          %3674 = vst.msk [vmem:[#allocation4 + $0x30] sm:$0xff] %vm742, %v3658
          %3675 = vst.msk [vmem:[#allocation4 + $0x38] sm:$0xff] %vm742, %v3659
          %3676 = vst.msk [vmem:[#allocation4 + $0x40] sm:$0xff] %vm742, %v3660
          %3677 = vst.msk [vmem:[#allocation4 + $0x48] sm:$0xff] %vm742, %v3661
          %3678 = vst.msk [vmem:[#allocation4 + $0x50] sm:$0xff] %vm742, %v3662
          %3679 = vst.msk [vmem:[#allocation4 + $0x58] sm:$0xff] %vm742, %v3663
          %3680 = vst.msk [vmem:[#allocation4 + $0x60] sm:$0xff] %vm742, %v3664
          %3681 = vst.msk [vmem:[#allocation4 + $0x68] sm:$0xff] %vm742, %v3665
          %3682 = vst.msk [vmem:[#allocation4 + $0x70] sm:$0xff] %vm742, %v3666
          %3683 = vst.msk [vmem:[#allocation4 + $0x78] sm:$0xff] %vm742, %v3667
          %3684 = vst.msk [vmem:[#allocation2] sm:$0xff] %vm709, %v3073
          %3685 = vst.msk [vmem:[#allocation2 + $0x8] sm:$0xff] %vm709, %v3074
          %3686 = vst.msk [vmem:[#allocation2 + $0x10] sm:$0xff] %vm709, %v3075
          %3687 = vst.msk [vmem:[#allocation2 + $0x18] sm:$0xff] %vm709, %v3076
          %3688 = vst.msk [vmem:[#allocation2 + $0x20] sm:$0xff] %vm709, %v3077
          %3689 = vst.msk [vmem:[#allocation2 + $0x28] sm:$0xff] %vm709, %v3078
          %3690 = vst.msk [vmem:[#allocation2 + $0x30] sm:$0xff] %vm709, %v3079
          %3691 = vst.msk [vmem:[#allocation2 + $0x38] sm:$0xff] %vm709, %v3080
          %3692 = vst.msk [vmem:[#allocation2 + $0x40] sm:$0xff] %vm709, %v3081
          %3693 = vst.msk [vmem:[#allocation2 + $0x48] sm:$0xff] %vm709, %v3082
          %3694 = vst.msk [vmem:[#allocation2 + $0x50] sm:$0xff] %vm709, %v3083
          %3695 = vst.msk [vmem:[#allocation2 + $0x58] sm:$0xff] %vm709, %v3084
          %3696 = vst.msk [vmem:[#allocation2 + $0x60] sm:$0xff] %vm709, %v3085
          %3697 = vst.msk [vmem:[#allocation2 + $0x68] sm:$0xff] %vm709, %v3086
          %3698 = vst.msk [vmem:[#allocation2 + $0x70] sm:$0xff] %vm709, %v3087
          %3699 = vst.msk [vmem:[#allocation2 + $0x78] sm:$0xff] %vm709, %v3088
        $region167: #{causal_self_attention.4} parent=142 // loop_footer
          %s2792 = sadd.s32 %s2790, 1
        $region168: #{causal_self_attention.4} parent=142 // loop_footer_branch
          %2789 = sbr.rel target = $region164
        $region169: #{causal_self_attention.4} parent=142 // loop_exit
          _
        %v3700 = vld [vmem:[%s1625] sm:$0xf]
        %v3701 = vld [vmem:[%s1625 + $0x4] sm:$0xf]
        %v3702 = vld [vmem:[%s1625 + $0x8] sm:$0xf]
        %v3703 = vld [vmem:[%s1625 + $0xc] sm:$0xf]
        %v3704 = vld [vmem:[%s1625 + $0x10] sm:$0xf]
        %v3705 = vld [vmem:[%s1625 + $0x14] sm:$0xf]
        %v3706 = vld [vmem:[%s1625 + $0x18] sm:$0xf]
        %v3707 = vld [vmem:[%s1625 + $0x1c] sm:$0xf]
        %v3708 = vld [vmem:[%s1625 + $0x20] sm:$0xf]
        %v3709 = vld [vmem:[%s1625 + $0x24] sm:$0xf]
        %v3710 = vld [vmem:[%s1625 + $0x28] sm:$0xf]
        %v3711 = vld [vmem:[%s1625 + $0x2c] sm:$0xf]
        %v3712 = vld [vmem:[%s1625 + $0x30] sm:$0xf]
        %v3713 = vld [vmem:[%s1625 + $0x34] sm:$0xf]
        %v3714 = vld [vmem:[%s1625 + $0x38] sm:$0xf]
        %v3715 = vld [vmem:[%s1625 + $0x3c] sm:$0xf]
        %v3732 = vunpack.c.l.b16 %v2725
        %v3733 = vunpack.c.l.b16 %v2726
        %v3734 = vunpack.c.l.b16 %v2727
        %v3735 = vunpack.c.l.b16 %v2728
        %v3736 = vunpack.c.l.b16 %v2729
        %v3737 = vunpack.c.l.b16 %v2730
        %v3738 = vunpack.c.l.b16 %v2731
        %v3739 = vunpack.c.l.b16 %v2732
        %v3740 = vunpack.c.l.b16 %v2733
        %v3741 = vunpack.c.l.b16 %v2734
        %v3742 = vunpack.c.l.b16 %v2735
        %v3743 = vunpack.c.l.b16 %v2736
        %v3744 = vunpack.c.l.b16 %v2737
        %v3745 = vunpack.c.l.b16 %v2738
        %v3746 = vunpack.c.l.b16 %v2739
        %v3747 = vunpack.c.l.b16 %v2740
        %v3748 = vpack.c.b16 %v3733, %v3732
        %v3749 = vpack.c.b16 %v3735, %v3734
        %v3750 = vpack.c.b16 %v3737, %v3736
        %v3751 = vpack.c.b16 %v3739, %v3738
        %v3752 = vpack.c.b16 %v3741, %v3740
        %v3753 = vpack.c.b16 %v3743, %v3742
        %v3754 = vpack.c.b16 %v3745, %v3744
        %v3755 = vpack.c.b16 %v3747, %v3746
        %3756 = vrot.lane.b32.xlu0 %v3748, 64
        %v3757 = vpop.permute.xlu0 %3756
        %3758 = vrot.lane.b32.xlu0 %v3749, 64
        %v3759 = vpop.permute.xlu0 %3758
        %3760 = vrot.lane.b32.xlu0 %v3750, 64
        %v3761 = vpop.permute.xlu0 %3760
        %3762 = vrot.lane.b32.xlu0 %v3751, 64
        %v3763 = vpop.permute.xlu0 %3762
        %3764 = vrot.lane.b32.xlu0 %v3752, 64
        %v3765 = vpop.permute.xlu0 %3764
        %3766 = vrot.lane.b32.xlu0 %v3753, 64
        %v3767 = vpop.permute.xlu0 %3766
        %3768 = vrot.lane.b32.xlu0 %v3754, 64
        %v3769 = vpop.permute.xlu0 %3768
        %3770 = vrot.lane.b32.xlu0 %v3755, 64
        %v3771 = vpop.permute.xlu0 %3770
        %v3788 = vunpack.c.l.b16 %v3700
        %v3789 = vunpack.c.l.b16 %v3701
        %v3790 = vunpack.c.l.b16 %v3702
        %v3791 = vunpack.c.l.b16 %v3703
        %v3792 = vunpack.c.l.b16 %v3704
        %v3793 = vunpack.c.l.b16 %v3705
        %v3794 = vunpack.c.l.b16 %v3706
        %v3795 = vunpack.c.l.b16 %v3707
        %v3796 = vunpack.c.l.b16 %v3708
        %v3797 = vunpack.c.l.b16 %v3709
        %v3798 = vunpack.c.l.b16 %v3710
        %v3799 = vunpack.c.l.b16 %v3711
        %v3800 = vunpack.c.l.b16 %v3712
        %v3801 = vunpack.c.l.b16 %v3713
        %v3802 = vunpack.c.l.b16 %v3714
        %v3803 = vunpack.c.l.b16 %v3715
        %v3804 = vpack.c.b16 %v3789, %v3788
        %v3805 = vpack.c.b16 %v3791, %v3790
        %v3806 = vpack.c.b16 %v3793, %v3792
        %v3807 = vpack.c.b16 %v3795, %v3794
        %v3808 = vpack.c.b16 %v3797, %v3796
        %v3809 = vpack.c.b16 %v3799, %v3798
        %v3810 = vpack.c.b16 %v3801, %v3800
        %v3811 = vpack.c.b16 %v3803, %v3802
        %3812 = vrot.lane.b32.xlu0 %v3804, 64
        %v3813 = vpop.permute.xlu0 %3812
        %3814 = vrot.lane.b32.xlu0 %v3805, 64
        %v3815 = vpop.permute.xlu0 %3814
        %3816 = vrot.lane.b32.xlu0 %v3806, 64
        %v3817 = vpop.permute.xlu0 %3816
        %3818 = vrot.lane.b32.xlu0 %v3807, 64
        %v3819 = vpop.permute.xlu0 %3818
        %3820 = vrot.lane.b32.xlu0 %v3808, 64
        %v3821 = vpop.permute.xlu0 %3820
        %3822 = vrot.lane.b32.xlu0 %v3809, 64
        %v3823 = vpop.permute.xlu0 %3822
        %3824 = vrot.lane.b32.xlu0 %v3810, 64
        %v3825 = vpop.permute.xlu0 %3824
        %3826 = vrot.lane.b32.xlu0 %v3811, 64
        %v3827 = vpop.permute.xlu0 %3826
        %v3829 = vsel %vm742, %v3757, 0
        %v3832 = vsel %vm742, %v3759, 0
        %v3835 = vsel %vm742, %v3761, 0
        %v3838 = vsel %vm742, %v3763, 0
        %v3841 = vsel %vm742, %v3765, 0
        %v3844 = vsel %vm742, %v3767, 0
        %v3847 = vsel %vm742, %v3769, 0
        %v3850 = vsel %vm742, %v3771, 0
        %v3853 = vsel %vm742, %v3813, 0
        %v3856 = vsel %vm742, %v3815, 0
        %v3859 = vsel %vm742, %v3817, 0
        %v3862 = vsel %vm742, %v3819, 0
        %v3865 = vsel %vm742, %v3821, 0
        %v3868 = vsel %vm742, %v3823, 0
        %v3871 = vsel %vm742, %v3825, 0
        %v3874 = vsel %vm742, %v3827, 0
        %3876 = vmatpush.bf16.xpose.msra.mxu0 %v3874
        %3877 = vmatpush.bf16.xpose.msra.mxu0 %v3871
        %3878 = vmatpush.bf16.xpose.msra.mxu0 %v3868
        %3879 = vmatpush.bf16.xpose.msra.mxu0 %v3865
        %3880 = vmatpush.bf16.xpose.msra.mxu0 %v3862
        %3881 = vmatpush.bf16.xpose.msra.mxu0 %v3859
        %3882 = vmatpush.bf16.xpose.msra.mxu0 %v3856
        %3883 = vmatpush.bf16.xpose.msra.mxu0 %v3853
        %3884 = vmatmul.bf16.gmra.mxu0 %v3829
        %v3885 = vpop.f32.mrf.mxu0
        %v3886 = vadd.f32 0.0, %v3885
        %v3887 = vpop.f32.mrf.mxu0
        %v3888 = vadd.f32 0.0, %v3887
        %3889 = vmatmul.bf16.gmra.mxu0 %v3832
        %v3890 = vpop.f32.mrf.mxu0
        %v3891 = vadd.f32 0.0, %v3890
        %v3892 = vpop.f32.mrf.mxu0
        %v3893 = vadd.f32 0.0, %v3892
        %3894 = vmatmul.bf16.gmra.mxu0 %v3835
        %v3895 = vpop.f32.mrf.mxu0
        %v3896 = vadd.f32 0.0, %v3895
        %v3897 = vpop.f32.mrf.mxu0
        %v3898 = vadd.f32 0.0, %v3897
        %3899 = vmatmul.bf16.gmra.mxu0 %v3838
        %v3900 = vpop.f32.mrf.mxu0
        %v3901 = vadd.f32 0.0, %v3900
        %v3902 = vpop.f32.mrf.mxu0
        %v3903 = vadd.f32 0.0, %v3902
        %3904 = vmatmul.bf16.gmra.mxu0 %v3841
        %v3905 = vpop.f32.mrf.mxu0
        %v3906 = vadd.f32 0.0, %v3905
        %v3907 = vpop.f32.mrf.mxu0
        %v3908 = vadd.f32 0.0, %v3907
        %3909 = vmatmul.bf16.gmra.mxu0 %v3844
        %v3910 = vpop.f32.mrf.mxu0
        %v3911 = vadd.f32 0.0, %v3910
        %v3912 = vpop.f32.mrf.mxu0
        %v3913 = vadd.f32 0.0, %v3912
        %3914 = vmatmul.bf16.gmra.mxu0 %v3847
        %v3915 = vpop.f32.mrf.mxu0
        %v3916 = vadd.f32 0.0, %v3915
        %v3917 = vpop.f32.mrf.mxu0
        %v3918 = vadd.f32 0.0, %v3917
        %3919 = vmatmul.bf16.gmra.mxu0 %v3850
        %v3920 = vpop.f32.mrf.mxu0
        %v3921 = vadd.f32 0.0, %v3920
        %v3922 = vpop.f32.mrf.mxu0
        %v3923 = vadd.f32 0.0, %v3922
        %3924 = vdwg.mxu0
        %v3925 = vsel %vm1857, %v3886, -1e+30
        %v3926 = vsel %vm1858, %v3888, -1e+30
        %v3927 = vsel %vm1859, %v3891, -1e+30
        %v3928 = vsel %vm1860, %v3893, -1e+30
        %v3929 = vsel %vm1861, %v3896, -1e+30
        %v3930 = vsel %vm1862, %v3898, -1e+30
        %v3931 = vsel %vm1863, %v3901, -1e+30
        %v3932 = vsel %vm1864, %v3903, -1e+30
        %v3933 = vsel %vm1865, %v3906, -1e+30
        %v3934 = vsel %vm1866, %v3908, -1e+30
        %v3935 = vsel %vm1867, %v3911, -1e+30
        %v3936 = vsel %vm1868, %v3913, -1e+30
        %v3937 = vsel %vm1869, %v3916, -1e+30
        %v3938 = vsel %vm1870, %v3918, -1e+30
        %v3939 = vsel %vm1871, %v3921, -1e+30
        %v3940 = vsel %vm1872, %v3923, -1e+30
        %v3941 = vld [vmem:[#allocation2] sm:$0xff]
        %v3942 = vld [vmem:[#allocation2 + $0x8] sm:$0xff]
        %v3943 = vld [vmem:[#allocation2 + $0x10] sm:$0xff]
        %v3944 = vld [vmem:[#allocation2 + $0x18] sm:$0xff]
        %v3945 = vld [vmem:[#allocation2 + $0x20] sm:$0xff]
        %v3946 = vld [vmem:[#allocation2 + $0x28] sm:$0xff]
        %v3947 = vld [vmem:[#allocation2 + $0x30] sm:$0xff]
        %v3948 = vld [vmem:[#allocation2 + $0x38] sm:$0xff]
        %v3949 = vld [vmem:[#allocation2 + $0x40] sm:$0xff]
        %v3950 = vld [vmem:[#allocation2 + $0x48] sm:$0xff]
        %v3951 = vld [vmem:[#allocation2 + $0x50] sm:$0xff]
        %v3952 = vld [vmem:[#allocation2 + $0x58] sm:$0xff]
        %v3953 = vld [vmem:[#allocation2 + $0x60] sm:$0xff]
        %v3954 = vld [vmem:[#allocation2 + $0x68] sm:$0xff]
        %v3955 = vld [vmem:[#allocation2 + $0x70] sm:$0xff]
        %v3956 = vld [vmem:[#allocation2 + $0x78] sm:$0xff]
        %3957 = vmax.xlane.f32.xlu0 %v3925
        %v3958 = vpop.xlane.xlu0 %3957
        %3959 = vmax.xlane.f32.xlu0 %v3926
        %v3960 = vpop.xlane.xlu0 %3959
        %3961 = vmax.xlane.f32.xlu0 %v3927
        %v3962 = vpop.xlane.xlu0 %3961
        %3963 = vmax.xlane.f32.xlu0 %v3928
        %v3964 = vpop.xlane.xlu0 %3963
        %3965 = vmax.xlane.f32.xlu0 %v3929
        %v3966 = vpop.xlane.xlu0 %3965
        %3967 = vmax.xlane.f32.xlu0 %v3930
        %v3968 = vpop.xlane.xlu0 %3967
        %3969 = vmax.xlane.f32.xlu0 %v3931
        %v3970 = vpop.xlane.xlu0 %3969
        %3971 = vmax.xlane.f32.xlu0 %v3932
        %v3972 = vpop.xlane.xlu0 %3971
        %3973 = vmax.xlane.f32.xlu0 %v3933
        %v3974 = vpop.xlane.xlu0 %3973
        %3975 = vmax.xlane.f32.xlu0 %v3934
        %v3976 = vpop.xlane.xlu0 %3975
        %3977 = vmax.xlane.f32.xlu0 %v3935
        %v3978 = vpop.xlane.xlu0 %3977
        %3979 = vmax.xlane.f32.xlu0 %v3936
        %v3980 = vpop.xlane.xlu0 %3979
        %3981 = vmax.xlane.f32.xlu0 %v3937
        %v3982 = vpop.xlane.xlu0 %3981
        %3983 = vmax.xlane.f32.xlu0 %v3938
        %v3984 = vpop.xlane.xlu0 %3983
        %3985 = vmax.xlane.f32.xlu0 %v3939
        %v3986 = vpop.xlane.xlu0 %3985
        %3987 = vmax.xlane.f32.xlu0 %v3940
        %v3988 = vpop.xlane.xlu0 %3987
        %v3989 = vmax.f32 %v3941, %v3958
        %v3990 = vmax.f32 %v3942, %v3960
        %v3991 = vmax.f32 %v3943, %v3962
        %v3992 = vmax.f32 %v3944, %v3964
        %v3993 = vmax.f32 %v3945, %v3966
        %v3994 = vmax.f32 %v3946, %v3968
        %v3995 = vmax.f32 %v3947, %v3970
        %v3996 = vmax.f32 %v3948, %v3972
        %v3997 = vmax.f32 %v3949, %v3974
        %v3998 = vmax.f32 %v3950, %v3976
        %v3999 = vmax.f32 %v3951, %v3978
        %v4000 = vmax.f32 %v3952, %v3980
        %v4001 = vmax.f32 %v3953, %v3982
        %v4002 = vmax.f32 %v3954, %v3984
        %v4003 = vmax.f32 %v3955, %v3986
        %v4004 = vmax.f32 %v3956, %v3988
        %v4005 = vsub.f32 %v3941, %v3989
        %v4006 = vsub.f32 %v3942, %v3990
        %v4007 = vsub.f32 %v3943, %v3991
        %v4008 = vsub.f32 %v3944, %v3992
        %v4009 = vsub.f32 %v3945, %v3993
        %v4010 = vsub.f32 %v3946, %v3994
        %v4011 = vsub.f32 %v3947, %v3995
        %v4012 = vsub.f32 %v3948, %v3996
        %v4013 = vsub.f32 %v3949, %v3997
        %v4014 = vsub.f32 %v3950, %v3998
        %v4015 = vsub.f32 %v3951, %v3999
        %v4016 = vsub.f32 %v3952, %v4000
        %v4017 = vsub.f32 %v3953, %v4001
        %v4018 = vsub.f32 %v3954, %v4002
        %v4019 = vsub.f32 %v3955, %v4003
        %v4020 = vsub.f32 %v3956, %v4004
        %v4021 = vmul.f32 %v4005, 1.442695
        %v4022 = vpow.pop %v4021
        %v4023 = vmul.f32 %v4006, 1.442695
        %v4024 = vpow.pop %v4023
        %v4025 = vmul.f32 %v4007, 1.442695
        %v4026 = vpow.pop %v4025
        %v4027 = vmul.f32 %v4008, 1.442695
        %v4028 = vpow.pop %v4027
        %v4029 = vmul.f32 %v4009, 1.442695
        %v4030 = vpow.pop %v4029
        %v4031 = vmul.f32 %v4010, 1.442695
        %v4032 = vpow.pop %v4031
        %v4033 = vmul.f32 %v4011, 1.442695
        %v4034 = vpow.pop %v4033
        %v4035 = vmul.f32 %v4012, 1.442695
        %v4036 = vpow.pop %v4035
        %v4037 = vmul.f32 %v4013, 1.442695
        %v4038 = vpow.pop %v4037
        %v4039 = vmul.f32 %v4014, 1.442695
        %v4040 = vpow.pop %v4039
        %v4041 = vmul.f32 %v4015, 1.442695
        %v4042 = vpow.pop %v4041
        %v4043 = vmul.f32 %v4016, 1.442695
        %v4044 = vpow.pop %v4043
        %v4045 = vmul.f32 %v4017, 1.442695
        %v4046 = vpow.pop %v4045
        %v4047 = vmul.f32 %v4018, 1.442695
        %v4048 = vpow.pop %v4047
        %v4049 = vmul.f32 %v4019, 1.442695
        %v4050 = vpow.pop %v4049
        %v4051 = vmul.f32 %v4020, 1.442695
        %v4052 = vpow.pop %v4051
        %4054 = vset.pattern.permute.xlu0 0
        %4055 = vperm.xlu0 %4054, %v3989
        %v4056 = vpop.permute.xlu0 %4055
        %4059 = vset.pattern.permute.xlu0 0
        %4060 = vperm.xlu0 %4059, %v3990
        %v4061 = vpop.permute.xlu0 %4060
        %4064 = vset.pattern.permute.xlu0 0
        %4065 = vperm.xlu0 %4064, %v3991
        %v4066 = vpop.permute.xlu0 %4065
        %4069 = vset.pattern.permute.xlu0 0
        %4070 = vperm.xlu0 %4069, %v3992
        %v4071 = vpop.permute.xlu0 %4070
        %4074 = vset.pattern.permute.xlu0 0
        %4075 = vperm.xlu0 %4074, %v3993
        %v4076 = vpop.permute.xlu0 %4075
        %4079 = vset.pattern.permute.xlu0 0
        %4080 = vperm.xlu0 %4079, %v3994
        %v4081 = vpop.permute.xlu0 %4080
        %4084 = vset.pattern.permute.xlu0 0
        %4085 = vperm.xlu0 %4084, %v3995
        %v4086 = vpop.permute.xlu0 %4085
        %4089 = vset.pattern.permute.xlu0 0
        %4090 = vperm.xlu0 %4089, %v3996
        %v4091 = vpop.permute.xlu0 %4090
        %4094 = vset.pattern.permute.xlu0 0
        %4095 = vperm.xlu0 %4094, %v3997
        %v4096 = vpop.permute.xlu0 %4095
        %4099 = vset.pattern.permute.xlu0 0
        %4100 = vperm.xlu0 %4099, %v3998
        %v4101 = vpop.permute.xlu0 %4100
        %4104 = vset.pattern.permute.xlu0 0
        %4105 = vperm.xlu0 %4104, %v3999
        %v4106 = vpop.permute.xlu0 %4105
        %4109 = vset.pattern.permute.xlu0 0
        %4110 = vperm.xlu0 %4109, %v4000
        %v4111 = vpop.permute.xlu0 %4110
        %4114 = vset.pattern.permute.xlu0 0
        %4115 = vperm.xlu0 %4114, %v4001
        %v4116 = vpop.permute.xlu0 %4115
        %4119 = vset.pattern.permute.xlu0 0
        %4120 = vperm.xlu0 %4119, %v4002
        %v4121 = vpop.permute.xlu0 %4120
        %4124 = vset.pattern.permute.xlu0 0
        %4125 = vperm.xlu0 %4124, %v4003
        %v4126 = vpop.permute.xlu0 %4125
        %4129 = vset.pattern.permute.xlu0 0
        %4130 = vperm.xlu0 %4129, %v4004
        %v4131 = vpop.permute.xlu0 %4130
        %v4133 = vsub.f32 %v3925, %v4056
        %v4134 = vsub.f32 %v3926, %v4061
        %v4135 = vsub.f32 %v3927, %v4066
        %v4136 = vsub.f32 %v3928, %v4071
        %v4137 = vsub.f32 %v3929, %v4076
        %v4138 = vsub.f32 %v3930, %v4081
        %v4139 = vsub.f32 %v3931, %v4086
        %v4140 = vsub.f32 %v3932, %v4091
        %v4141 = vsub.f32 %v3933, %v4096
        %v4142 = vsub.f32 %v3934, %v4101
        %v4143 = vsub.f32 %v3935, %v4106
        %v4144 = vsub.f32 %v3936, %v4111
        %v4145 = vsub.f32 %v3937, %v4116
        %v4146 = vsub.f32 %v3938, %v4121
        %v4147 = vsub.f32 %v3939, %v4126
        %v4148 = vsub.f32 %v3940, %v4131
        %v4149 = vpack.c.bf16 %v4134, %v4133
        %v4150 = vpack.c.bf16 %v4136, %v4135
        %v4151 = vpack.c.bf16 %v4138, %v4137
        %v4152 = vpack.c.bf16 %v4140, %v4139
        %v4153 = vpack.c.bf16 %v4142, %v4141
        %v4154 = vpack.c.bf16 %v4144, %v4143
        %v4155 = vpack.c.bf16 %v4146, %v4145
        %v4156 = vpack.c.bf16 %v4148, %v4147
        %v4157 = vunpack.c.l.bf16 %v4149
        %v4158 = vunpack.c.h.bf16 %v4149
        %v4159 = vunpack.c.l.bf16 %v4150
        %v4160 = vunpack.c.h.bf16 %v4150
        %v4161 = vunpack.c.l.bf16 %v4151
        %v4162 = vunpack.c.h.bf16 %v4151
        %v4163 = vunpack.c.l.bf16 %v4152
        %v4164 = vunpack.c.h.bf16 %v4152
        %v4165 = vunpack.c.l.bf16 %v4153
        %v4166 = vunpack.c.h.bf16 %v4153
        %v4167 = vunpack.c.l.bf16 %v4154
        %v4168 = vunpack.c.h.bf16 %v4154
        %v4169 = vunpack.c.l.bf16 %v4155
        %v4170 = vunpack.c.h.bf16 %v4155
        %v4171 = vunpack.c.l.bf16 %v4156
        %v4172 = vunpack.c.h.bf16 %v4156
        %v4173 = vmul.f32 %v4157, 1.442695
        %v4174 = vpow.pop %v4173
        %v4175 = vmul.f32 %v4158, 1.442695
        %v4176 = vpow.pop %v4175
        %v4177 = vmul.f32 %v4159, 1.442695
        %v4178 = vpow.pop %v4177
        %v4179 = vmul.f32 %v4160, 1.442695
        %v4180 = vpow.pop %v4179
        %v4181 = vmul.f32 %v4161, 1.442695
        %v4182 = vpow.pop %v4181
        %v4183 = vmul.f32 %v4162, 1.442695
        %v4184 = vpow.pop %v4183
        %v4185 = vmul.f32 %v4163, 1.442695
        %v4186 = vpow.pop %v4185
        %v4187 = vmul.f32 %v4164, 1.442695
        %v4188 = vpow.pop %v4187
        %v4189 = vmul.f32 %v4165, 1.442695
        %v4190 = vpow.pop %v4189
        %v4191 = vmul.f32 %v4166, 1.442695
        %v4192 = vpow.pop %v4191
        %v4193 = vmul.f32 %v4167, 1.442695
        %v4194 = vpow.pop %v4193
        %v4195 = vmul.f32 %v4168, 1.442695
        %v4196 = vpow.pop %v4195
        %v4197 = vmul.f32 %v4169, 1.442695
        %v4198 = vpow.pop %v4197
        %v4199 = vmul.f32 %v4170, 1.442695
        %v4200 = vpow.pop %v4199
        %v4201 = vmul.f32 %v4171, 1.442695
        %v4202 = vpow.pop %v4201
        %v4203 = vmul.f32 %v4172, 1.442695
        %v4204 = vpow.pop %v4203
        %v4205 = vpack.c.bf16 %v4176, %v4174
        %v4206 = vpack.c.bf16 %v4180, %v4178
        %v4207 = vpack.c.bf16 %v4184, %v4182
        %v4208 = vpack.c.bf16 %v4188, %v4186
        %v4209 = vpack.c.bf16 %v4192, %v4190
        %v4210 = vpack.c.bf16 %v4196, %v4194
        %v4211 = vpack.c.bf16 %v4200, %v4198
        %v4212 = vpack.c.bf16 %v4204, %v4202
        %v4213 = vld [vmem:[#allocation3] sm:$0xff]
        %v4214 = vld [vmem:[#allocation3 + $0x8] sm:$0xff]
        %v4215 = vld [vmem:[#allocation3 + $0x10] sm:$0xff]
        %v4216 = vld [vmem:[#allocation3 + $0x18] sm:$0xff]
        %v4217 = vld [vmem:[#allocation3 + $0x20] sm:$0xff]
        %v4218 = vld [vmem:[#allocation3 + $0x28] sm:$0xff]
        %v4219 = vld [vmem:[#allocation3 + $0x30] sm:$0xff]
        %v4220 = vld [vmem:[#allocation3 + $0x38] sm:$0xff]
        %v4221 = vld [vmem:[#allocation3 + $0x40] sm:$0xff]
        %v4222 = vld [vmem:[#allocation3 + $0x48] sm:$0xff]
        %v4223 = vld [vmem:[#allocation3 + $0x50] sm:$0xff]
        %v4224 = vld [vmem:[#allocation3 + $0x58] sm:$0xff]
        %v4225 = vld [vmem:[#allocation3 + $0x60] sm:$0xff]
        %v4226 = vld [vmem:[#allocation3 + $0x68] sm:$0xff]
        %v4227 = vld [vmem:[#allocation3 + $0x70] sm:$0xff]
        %v4228 = vld [vmem:[#allocation3 + $0x78] sm:$0xff]
        %v4229 = vmul.f32 %v4022, %v4213
        %v4230 = vmul.f32 %v4024, %v4214
        %v4231 = vmul.f32 %v4026, %v4215
        %v4232 = vmul.f32 %v4028, %v4216
        %v4233 = vmul.f32 %v4030, %v4217
        %v4234 = vmul.f32 %v4032, %v4218
        %v4235 = vmul.f32 %v4034, %v4219
        %v4236 = vmul.f32 %v4036, %v4220
        %v4237 = vmul.f32 %v4038, %v4221
        %v4238 = vmul.f32 %v4040, %v4222
        %v4239 = vmul.f32 %v4042, %v4223
        %v4240 = vmul.f32 %v4044, %v4224
        %v4241 = vmul.f32 %v4046, %v4225
        %v4242 = vmul.f32 %v4048, %v4226
        %v4243 = vmul.f32 %v4050, %v4227
        %v4244 = vmul.f32 %v4052, %v4228
        %v4245 = vunpack.c.l.bf16 %v4205
        %v4246 = vunpack.c.h.bf16 %v4205
        %v4247 = vunpack.c.l.bf16 %v4206
        %v4248 = vunpack.c.h.bf16 %v4206
        %v4249 = vunpack.c.l.bf16 %v4207
        %v4250 = vunpack.c.h.bf16 %v4207
        %v4251 = vunpack.c.l.bf16 %v4208
        %v4252 = vunpack.c.h.bf16 %v4208
        %v4253 = vunpack.c.l.bf16 %v4209
        %v4254 = vunpack.c.h.bf16 %v4209
        %v4255 = vunpack.c.l.bf16 %v4210
        %v4256 = vunpack.c.h.bf16 %v4210
        %v4257 = vunpack.c.l.bf16 %v4211
        %v4258 = vunpack.c.h.bf16 %v4211
        %v4259 = vunpack.c.l.bf16 %v4212
        %v4260 = vunpack.c.h.bf16 %v4212
        %4261 = vadd.xlane.f32.xlu0 %v4245
        %v4262 = vpop.xlane.xlu0 %4261
        %4263 = vadd.xlane.f32.xlu0 %v4246
        %v4264 = vpop.xlane.xlu0 %4263
        %4265 = vadd.xlane.f32.xlu0 %v4247
        %v4266 = vpop.xlane.xlu0 %4265
        %4267 = vadd.xlane.f32.xlu0 %v4248
        %v4268 = vpop.xlane.xlu0 %4267
        %4269 = vadd.xlane.f32.xlu0 %v4249
        %v4270 = vpop.xlane.xlu0 %4269
        %4271 = vadd.xlane.f32.xlu0 %v4250
        %v4272 = vpop.xlane.xlu0 %4271
        %4273 = vadd.xlane.f32.xlu0 %v4251
        %v4274 = vpop.xlane.xlu0 %4273
        %4275 = vadd.xlane.f32.xlu0 %v4252
        %v4276 = vpop.xlane.xlu0 %4275
        %4277 = vadd.xlane.f32.xlu0 %v4253
        %v4278 = vpop.xlane.xlu0 %4277
        %4279 = vadd.xlane.f32.xlu0 %v4254
        %v4280 = vpop.xlane.xlu0 %4279
        %4281 = vadd.xlane.f32.xlu0 %v4255
        %v4282 = vpop.xlane.xlu0 %4281
        %4283 = vadd.xlane.f32.xlu0 %v4256
        %v4284 = vpop.xlane.xlu0 %4283
        %4285 = vadd.xlane.f32.xlu0 %v4257
        %v4286 = vpop.xlane.xlu0 %4285
        %4287 = vadd.xlane.f32.xlu0 %v4258
        %v4288 = vpop.xlane.xlu0 %4287
        %4289 = vadd.xlane.f32.xlu0 %v4259
        %v4290 = vpop.xlane.xlu0 %4289
        %4291 = vadd.xlane.f32.xlu0 %v4260
        %v4292 = vpop.xlane.xlu0 %4291
        %v4293 = vadd.f32 %v4229, %v4262
        %v4294 = vadd.f32 %v4230, %v4264
        %v4295 = vadd.f32 %v4231, %v4266
        %v4296 = vadd.f32 %v4232, %v4268
        %v4297 = vadd.f32 %v4233, %v4270
        %v4298 = vadd.f32 %v4234, %v4272
        %v4299 = vadd.f32 %v4235, %v4274
        %v4300 = vadd.f32 %v4236, %v4276
        %v4301 = vadd.f32 %v4237, %v4278
        %v4302 = vadd.f32 %v4238, %v4280
        %v4303 = vadd.f32 %v4239, %v4282
        %v4304 = vadd.f32 %v4240, %v4284
        %v4305 = vadd.f32 %v4241, %v4286
        %v4306 = vadd.f32 %v4242, %v4288
        %v4307 = vadd.f32 %v4243, %v4290
        %v4308 = vadd.f32 %v4244, %v4292
        %4309 = vst.msk [vmem:[#allocation3] sm:$0xff] %vm709, %v4293
        %4310 = vst.msk [vmem:[#allocation3 + $0x8] sm:$0xff] %vm709, %v4294
        %4311 = vst.msk [vmem:[#allocation3 + $0x10] sm:$0xff] %vm709, %v4295
        %4312 = vst.msk [vmem:[#allocation3 + $0x18] sm:$0xff] %vm709, %v4296
        %4313 = vst.msk [vmem:[#allocation3 + $0x20] sm:$0xff] %vm709, %v4297
        %4314 = vst.msk [vmem:[#allocation3 + $0x28] sm:$0xff] %vm709, %v4298
        %4315 = vst.msk [vmem:[#allocation3 + $0x30] sm:$0xff] %vm709, %v4299
        %4316 = vst.msk [vmem:[#allocation3 + $0x38] sm:$0xff] %vm709, %v4300
        %4317 = vst.msk [vmem:[#allocation3 + $0x40] sm:$0xff] %vm709, %v4301
        %4318 = vst.msk [vmem:[#allocation3 + $0x48] sm:$0xff] %vm709, %v4302
        %4319 = vst.msk [vmem:[#allocation3 + $0x50] sm:$0xff] %vm709, %v4303
        %4320 = vst.msk [vmem:[#allocation3 + $0x58] sm:$0xff] %vm709, %v4304
        %4321 = vst.msk [vmem:[#allocation3 + $0x60] sm:$0xff] %vm709, %v4305
        %4322 = vst.msk [vmem:[#allocation3 + $0x68] sm:$0xff] %vm709, %v4306
        %4323 = vst.msk [vmem:[#allocation3 + $0x70] sm:$0xff] %vm709, %v4307
        %4324 = vst.msk [vmem:[#allocation3 + $0x78] sm:$0xff] %vm709, %v4308
        %v4325 = vld [vmem:[%s2274] sm:$0xf]
        %v4326 = vld [vmem:[%s2274 + $0x4] sm:$0xf]
        %v4327 = vld [vmem:[%s2274 + $0x8] sm:$0xf]
        %v4328 = vld [vmem:[%s2274 + $0xc] sm:$0xf]
        %v4329 = vld [vmem:[%s2274 + $0x10] sm:$0xf]
        %v4330 = vld [vmem:[%s2274 + $0x14] sm:$0xf]
        %v4331 = vld [vmem:[%s2274 + $0x18] sm:$0xf]
        %v4332 = vld [vmem:[%s2274 + $0x1c] sm:$0xf]
        %v4333 = vld [vmem:[%s2274 + $0x20] sm:$0xf]
        %v4334 = vld [vmem:[%s2274 + $0x24] sm:$0xf]
        %v4335 = vld [vmem:[%s2274 + $0x28] sm:$0xf]
        %v4336 = vld [vmem:[%s2274 + $0x2c] sm:$0xf]
        %v4337 = vld [vmem:[%s2274 + $0x30] sm:$0xf]
        %v4338 = vld [vmem:[%s2274 + $0x34] sm:$0xf]
        %v4339 = vld [vmem:[%s2274 + $0x38] sm:$0xf]
        %v4340 = vld [vmem:[%s2274 + $0x3c] sm:$0xf]
        %v4341 = vld [vmem:[#allocation4] sm:$0xff]
        %v4342 = vld [vmem:[#allocation4 + $0x8] sm:$0xff]
        %v4343 = vld [vmem:[#allocation4 + $0x10] sm:$0xff]
        %v4344 = vld [vmem:[#allocation4 + $0x18] sm:$0xff]
        %v4345 = vld [vmem:[#allocation4 + $0x20] sm:$0xff]
        %v4346 = vld [vmem:[#allocation4 + $0x28] sm:$0xff]
        %v4347 = vld [vmem:[#allocation4 + $0x30] sm:$0xff]
        %v4348 = vld [vmem:[#allocation4 + $0x38] sm:$0xff]
        %v4349 = vld [vmem:[#allocation4 + $0x40] sm:$0xff]
        %v4350 = vld [vmem:[#allocation4 + $0x48] sm:$0xff]
        %v4351 = vld [vmem:[#allocation4 + $0x50] sm:$0xff]
        %v4352 = vld [vmem:[#allocation4 + $0x58] sm:$0xff]
        %v4353 = vld [vmem:[#allocation4 + $0x60] sm:$0xff]
        %v4354 = vld [vmem:[#allocation4 + $0x68] sm:$0xff]
        %v4355 = vld [vmem:[#allocation4 + $0x70] sm:$0xff]
        %v4356 = vld [vmem:[#allocation4 + $0x78] sm:$0xff]
        %4358 = vset.pattern.permute.xlu0 0
        %4359 = vperm.xlu0 %4358, %v4022
        %v4360 = vpop.permute.xlu0 %4359
        %4363 = vset.pattern.permute.xlu0 0
        %4364 = vperm.xlu0 %4363, %v4024
        %v4365 = vpop.permute.xlu0 %4364
        %4368 = vset.pattern.permute.xlu0 0
        %4369 = vperm.xlu0 %4368, %v4026
        %v4370 = vpop.permute.xlu0 %4369
        %4373 = vset.pattern.permute.xlu0 0
        %4374 = vperm.xlu0 %4373, %v4028
        %v4375 = vpop.permute.xlu0 %4374
        %4378 = vset.pattern.permute.xlu0 0
        %4379 = vperm.xlu0 %4378, %v4030
        %v4380 = vpop.permute.xlu0 %4379
        %4383 = vset.pattern.permute.xlu0 0
        %4384 = vperm.xlu0 %4383, %v4032
        %v4385 = vpop.permute.xlu0 %4384
        %4388 = vset.pattern.permute.xlu0 0
        %4389 = vperm.xlu0 %4388, %v4034
        %v4390 = vpop.permute.xlu0 %4389
        %4393 = vset.pattern.permute.xlu0 0
        %4394 = vperm.xlu0 %4393, %v4036
        %v4395 = vpop.permute.xlu0 %4394
        %4398 = vset.pattern.permute.xlu0 0
        %4399 = vperm.xlu0 %4398, %v4038
        %v4400 = vpop.permute.xlu0 %4399
        %4403 = vset.pattern.permute.xlu0 0
        %4404 = vperm.xlu0 %4403, %v4040
        %v4405 = vpop.permute.xlu0 %4404
        %4408 = vset.pattern.permute.xlu0 0
        %4409 = vperm.xlu0 %4408, %v4042
        %v4410 = vpop.permute.xlu0 %4409
        %4413 = vset.pattern.permute.xlu0 0
        %4414 = vperm.xlu0 %4413, %v4044
        %v4415 = vpop.permute.xlu0 %4414
        %4418 = vset.pattern.permute.xlu0 0
        %4419 = vperm.xlu0 %4418, %v4046
        %v4420 = vpop.permute.xlu0 %4419
        %4423 = vset.pattern.permute.xlu0 0
        %4424 = vperm.xlu0 %4423, %v4048
        %v4425 = vpop.permute.xlu0 %4424
        %4428 = vset.pattern.permute.xlu0 0
        %4429 = vperm.xlu0 %4428, %v4050
        %v4430 = vpop.permute.xlu0 %4429
        %4433 = vset.pattern.permute.xlu0 0
        %4434 = vperm.xlu0 %4433, %v4052
        %v4435 = vpop.permute.xlu0 %4434
        %v4437 = vmul.f32 %v4360, %v4341
        %v4438 = vmul.f32 %v4365, %v4342
        %v4439 = vmul.f32 %v4370, %v4343
        %v4440 = vmul.f32 %v4375, %v4344
        %v4441 = vmul.f32 %v4380, %v4345
        %v4442 = vmul.f32 %v4385, %v4346
        %v4443 = vmul.f32 %v4390, %v4347
        %v4444 = vmul.f32 %v4395, %v4348
        %v4445 = vmul.f32 %v4400, %v4349
        %v4446 = vmul.f32 %v4405, %v4350
        %v4447 = vmul.f32 %v4410, %v4351
        %v4448 = vmul.f32 %v4415, %v4352
        %v4449 = vmul.f32 %v4420, %v4353
        %v4450 = vmul.f32 %v4425, %v4354
        %v4451 = vmul.f32 %v4430, %v4355
        %v4452 = vmul.f32 %v4435, %v4356
        %v4469 = vunpack.c.l.b16 %v4325
        %v4470 = vunpack.c.l.b16 %v4326
        %v4471 = vunpack.c.l.b16 %v4327
        %v4472 = vunpack.c.l.b16 %v4328
        %v4473 = vunpack.c.l.b16 %v4329
        %v4474 = vunpack.c.l.b16 %v4330
        %v4475 = vunpack.c.l.b16 %v4331
        %v4476 = vunpack.c.l.b16 %v4332
        %v4477 = vunpack.c.l.b16 %v4333
        %v4478 = vunpack.c.l.b16 %v4334
        %v4479 = vunpack.c.l.b16 %v4335
        %v4480 = vunpack.c.l.b16 %v4336
        %v4481 = vunpack.c.l.b16 %v4337
        %v4482 = vunpack.c.l.b16 %v4338
        %v4483 = vunpack.c.l.b16 %v4339
        %v4484 = vunpack.c.l.b16 %v4340
        %v4485 = vpack.c.b16 %v4470, %v4469
        %v4486 = vpack.c.b16 %v4472, %v4471
        %v4487 = vpack.c.b16 %v4474, %v4473
        %v4488 = vpack.c.b16 %v4476, %v4475
        %v4489 = vpack.c.b16 %v4478, %v4477
        %v4490 = vpack.c.b16 %v4480, %v4479
        %v4491 = vpack.c.b16 %v4482, %v4481
        %v4492 = vpack.c.b16 %v4484, %v4483
        %4493 = vrot.lane.b32.xlu0 %v4485, 64
        %v4494 = vpop.permute.xlu0 %4493
        %4495 = vrot.lane.b32.xlu0 %v4486, 64
        %v4496 = vpop.permute.xlu0 %4495
        %4497 = vrot.lane.b32.xlu0 %v4487, 64
        %v4498 = vpop.permute.xlu0 %4497
        %4499 = vrot.lane.b32.xlu0 %v4488, 64
        %v4500 = vpop.permute.xlu0 %4499
        %4501 = vrot.lane.b32.xlu0 %v4489, 64
        %v4502 = vpop.permute.xlu0 %4501
        %4503 = vrot.lane.b32.xlu0 %v4490, 64
        %v4504 = vpop.permute.xlu0 %4503
        %4505 = vrot.lane.b32.xlu0 %v4491, 64
        %v4506 = vpop.permute.xlu0 %4505
        %4507 = vrot.lane.b32.xlu0 %v4492, 64
        %v4508 = vpop.permute.xlu0 %4507
        %4517 = vmatpush.bf16.msra.mxu0 %v4508
        %4518 = vmatpush.bf16.msra.mxu0 %v4506
        %4519 = vmatpush.bf16.msra.mxu0 %v4504
        %4520 = vmatpush.bf16.msra.mxu0 %v4502
        %4521 = vmatpush.bf16.msra.mxu0 %v4500
        %4522 = vmatpush.bf16.msra.mxu0 %v4498
        %4523 = vmatpush.bf16.msra.mxu0 %v4496
        %4524 = vmatpush.bf16.msra.mxu0 %v4494
        %4525 = vmatmul.bf16.gmra.mxu0 %v4205
        %v4526 = vpop.f32.mrf.mxu0
        %v4527 = vadd.f32 0.0, %v4526
        %v4528 = vpop.f32.mrf.mxu0
        %v4529 = vadd.f32 0.0, %v4528
        %4530 = vmatmul.bf16.gmra.mxu0 %v4206
        %v4531 = vpop.f32.mrf.mxu0
        %v4532 = vadd.f32 0.0, %v4531
        %v4533 = vpop.f32.mrf.mxu0
        %v4534 = vadd.f32 0.0, %v4533
        %4535 = vmatmul.bf16.gmra.mxu0 %v4207
        %v4536 = vpop.f32.mrf.mxu0
        %v4537 = vadd.f32 0.0, %v4536
        %v4538 = vpop.f32.mrf.mxu0
        %v4539 = vadd.f32 0.0, %v4538
        %4540 = vmatmul.bf16.gmra.mxu0 %v4208
        %v4541 = vpop.f32.mrf.mxu0
        %v4542 = vadd.f32 0.0, %v4541
        %v4543 = vpop.f32.mrf.mxu0
        %v4544 = vadd.f32 0.0, %v4543
        %4545 = vmatmul.bf16.gmra.mxu0 %v4209
        %v4546 = vpop.f32.mrf.mxu0
        %v4547 = vadd.f32 0.0, %v4546
        %v4548 = vpop.f32.mrf.mxu0
        %v4549 = vadd.f32 0.0, %v4548
        %4550 = vmatmul.bf16.gmra.mxu0 %v4210
        %v4551 = vpop.f32.mrf.mxu0
        %v4552 = vadd.f32 0.0, %v4551
        %v4553 = vpop.f32.mrf.mxu0
        %v4554 = vadd.f32 0.0, %v4553
        %4555 = vmatmul.bf16.gmra.mxu0 %v4211
        %v4556 = vpop.f32.mrf.mxu0
        %v4557 = vadd.f32 0.0, %v4556
        %v4558 = vpop.f32.mrf.mxu0
        %v4559 = vadd.f32 0.0, %v4558
        %4560 = vmatmul.bf16.gmra.mxu0 %v4212
        %v4561 = vpop.f32.mrf.mxu0
        %v4562 = vadd.f32 0.0, %v4561
        %v4563 = vpop.f32.mrf.mxu0
        %v4564 = vadd.f32 0.0, %v4563
        %4565 = vdwg.mxu0
        %v4566 = vadd.f32 %v4437, %v4527
        %v4567 = vadd.f32 %v4438, %v4529
        %v4568 = vadd.f32 %v4439, %v4532
        %v4569 = vadd.f32 %v4440, %v4534
        %v4570 = vadd.f32 %v4441, %v4537
        %v4571 = vadd.f32 %v4442, %v4539
        %v4572 = vadd.f32 %v4443, %v4542
        %v4573 = vadd.f32 %v4444, %v4544
        %v4574 = vadd.f32 %v4445, %v4547
        %v4575 = vadd.f32 %v4446, %v4549
        %v4576 = vadd.f32 %v4447, %v4552
        %v4577 = vadd.f32 %v4448, %v4554
        %v4578 = vadd.f32 %v4449, %v4557
        %v4579 = vadd.f32 %v4450, %v4559
        %v4580 = vadd.f32 %v4451, %v4562
        %v4581 = vadd.f32 %v4452, %v4564
        %4582 = vst.msk [vmem:[#allocation4] sm:$0xff] %vm742, %v4566
        %4583 = vst.msk [vmem:[#allocation4 + $0x8] sm:$0xff] %vm742, %v4567
        %4584 = vst.msk [vmem:[#allocation4 + $0x10] sm:$0xff] %vm742, %v4568
        %4585 = vst.msk [vmem:[#allocation4 + $0x18] sm:$0xff] %vm742, %v4569
        %4586 = vst.msk [vmem:[#allocation4 + $0x20] sm:$0xff] %vm742, %v4570
        %4587 = vst.msk [vmem:[#allocation4 + $0x28] sm:$0xff] %vm742, %v4571
        %4588 = vst.msk [vmem:[#allocation4 + $0x30] sm:$0xff] %vm742, %v4572
        %4589 = vst.msk [vmem:[#allocation4 + $0x38] sm:$0xff] %vm742, %v4573
        %4590 = vst.msk [vmem:[#allocation4 + $0x40] sm:$0xff] %vm742, %v4574
        %4591 = vst.msk [vmem:[#allocation4 + $0x48] sm:$0xff] %vm742, %v4575
        %4592 = vst.msk [vmem:[#allocation4 + $0x50] sm:$0xff] %vm742, %v4576
        %4593 = vst.msk [vmem:[#allocation4 + $0x58] sm:$0xff] %vm742, %v4577
        %4594 = vst.msk [vmem:[#allocation4 + $0x60] sm:$0xff] %vm742, %v4578
        %4595 = vst.msk [vmem:[#allocation4 + $0x68] sm:$0xff] %vm742, %v4579
        %4596 = vst.msk [vmem:[#allocation4 + $0x70] sm:$0xff] %vm742, %v4580
        %4597 = vst.msk [vmem:[#allocation4 + $0x78] sm:$0xff] %vm742, %v4581
        %4598 = vst.msk [vmem:[#allocation2] sm:$0xff] %vm709, %v3989
        %4599 = vst.msk [vmem:[#allocation2 + $0x8] sm:$0xff] %vm709, %v3990
        %4600 = vst.msk [vmem:[#allocation2 + $0x10] sm:$0xff] %vm709, %v3991
        %4601 = vst.msk [vmem:[#allocation2 + $0x18] sm:$0xff] %vm709, %v3992
        %4602 = vst.msk [vmem:[#allocation2 + $0x20] sm:$0xff] %vm709, %v3993
        %4603 = vst.msk [vmem:[#allocation2 + $0x28] sm:$0xff] %vm709, %v3994
        %4604 = vst.msk [vmem:[#allocation2 + $0x30] sm:$0xff] %vm709, %v3995
        %4605 = vst.msk [vmem:[#allocation2 + $0x38] sm:$0xff] %vm709, %v3996
        %4606 = vst.msk [vmem:[#allocation2 + $0x40] sm:$0xff] %vm709, %v3997
        %4607 = vst.msk [vmem:[#allocation2 + $0x48] sm:$0xff] %vm709, %v3998
        %4608 = vst.msk [vmem:[#allocation2 + $0x50] sm:$0xff] %vm709, %v3999
        %4609 = vst.msk [vmem:[#allocation2 + $0x58] sm:$0xff] %vm709, %v4000
        %4610 = vst.msk [vmem:[#allocation2 + $0x60] sm:$0xff] %vm709, %v4001
        %4611 = vst.msk [vmem:[#allocation2 + $0x68] sm:$0xff] %vm709, %v4002
        %4612 = vst.msk [vmem:[#allocation2 + $0x70] sm:$0xff] %vm709, %v4003
        %4613 = vst.msk [vmem:[#allocation2 + $0x78] sm:$0xff] %vm709, %v4004
        %v4614 = vld [vmem:[#allocation3] sm:$0xff]
        %v4615 = vld [vmem:[#allocation3 + $0x8] sm:$0xff]
        %v4616 = vld [vmem:[#allocation3 + $0x10] sm:$0xff]
        %v4617 = vld [vmem:[#allocation3 + $0x18] sm:$0xff]
        %v4618 = vld [vmem:[#allocation3 + $0x20] sm:$0xff]
        %v4619 = vld [vmem:[#allocation3 + $0x28] sm:$0xff]
        %v4620 = vld [vmem:[#allocation3 + $0x30] sm:$0xff]
        %v4621 = vld [vmem:[#allocation3 + $0x38] sm:$0xff]
        %v4622 = vld [vmem:[#allocation3 + $0x40] sm:$0xff]
        %v4623 = vld [vmem:[#allocation3 + $0x48] sm:$0xff]
        %v4624 = vld [vmem:[#allocation3 + $0x50] sm:$0xff]
        %v4625 = vld [vmem:[#allocation3 + $0x58] sm:$0xff]
        %v4626 = vld [vmem:[#allocation3 + $0x60] sm:$0xff]
        %v4627 = vld [vmem:[#allocation3 + $0x68] sm:$0xff]
        %v4628 = vld [vmem:[#allocation3 + $0x70] sm:$0xff]
        %v4629 = vld [vmem:[#allocation3 + $0x78] sm:$0xff]
        %v4630 = vrcp.pop %v4614
        %v4631 = vrcp.pop %v4615
        %v4632 = vrcp.pop %v4616
        %v4633 = vrcp.pop %v4617
        %v4634 = vrcp.pop %v4618
        %v4635 = vrcp.pop %v4619
        %v4636 = vrcp.pop %v4620
        %v4637 = vrcp.pop %v4621
        %v4638 = vrcp.pop %v4622
        %v4639 = vrcp.pop %v4623
        %v4640 = vrcp.pop %v4624
        %v4641 = vrcp.pop %v4625
        %v4642 = vrcp.pop %v4626
        %v4643 = vrcp.pop %v4627
        %v4644 = vrcp.pop %v4628
        %v4645 = vrcp.pop %v4629
        %v4646 = vld [vmem:[#allocation4] sm:$0xff]
        %v4647 = vld [vmem:[#allocation4 + $0x8] sm:$0xff]
        %v4648 = vld [vmem:[#allocation4 + $0x10] sm:$0xff]
        %v4649 = vld [vmem:[#allocation4 + $0x18] sm:$0xff]
        %v4650 = vld [vmem:[#allocation4 + $0x20] sm:$0xff]
        %v4651 = vld [vmem:[#allocation4 + $0x28] sm:$0xff]
        %v4652 = vld [vmem:[#allocation4 + $0x30] sm:$0xff]
        %v4653 = vld [vmem:[#allocation4 + $0x38] sm:$0xff]
        %v4654 = vld [vmem:[#allocation4 + $0x40] sm:$0xff]
        %v4655 = vld [vmem:[#allocation4 + $0x48] sm:$0xff]
        %v4656 = vld [vmem:[#allocation4 + $0x50] sm:$0xff]
        %v4657 = vld [vmem:[#allocation4 + $0x58] sm:$0xff]
        %v4658 = vld [vmem:[#allocation4 + $0x60] sm:$0xff]
        %v4659 = vld [vmem:[#allocation4 + $0x68] sm:$0xff]
        %v4660 = vld [vmem:[#allocation4 + $0x70] sm:$0xff]
        %v4661 = vld [vmem:[#allocation4 + $0x78] sm:$0xff]
        %4663 = vset.pattern.permute.xlu0 0
        %4664 = vperm.xlu0 %4663, %v4630
        %v4665 = vpop.permute.xlu0 %4664
        %4668 = vset.pattern.permute.xlu0 0
        %4669 = vperm.xlu0 %4668, %v4631
        %v4670 = vpop.permute.xlu0 %4669
        %4673 = vset.pattern.permute.xlu0 0
        %4674 = vperm.xlu0 %4673, %v4632
        %v4675 = vpop.permute.xlu0 %4674
        %4678 = vset.pattern.permute.xlu0 0
        %4679 = vperm.xlu0 %4678, %v4633
        %v4680 = vpop.permute.xlu0 %4679
        %4683 = vset.pattern.permute.xlu0 0
        %4684 = vperm.xlu0 %4683, %v4634
        %v4685 = vpop.permute.xlu0 %4684
        %4688 = vset.pattern.permute.xlu0 0
        %4689 = vperm.xlu0 %4688, %v4635
        %v4690 = vpop.permute.xlu0 %4689
        %4693 = vset.pattern.permute.xlu0 0
        %4694 = vperm.xlu0 %4693, %v4636
        %v4695 = vpop.permute.xlu0 %4694
        %4698 = vset.pattern.permute.xlu0 0
        %4699 = vperm.xlu0 %4698, %v4637
        %v4700 = vpop.permute.xlu0 %4699
        %4703 = vset.pattern.permute.xlu0 0
        %4704 = vperm.xlu0 %4703, %v4638
        %v4705 = vpop.permute.xlu0 %4704
        %4708 = vset.pattern.permute.xlu0 0
        %4709 = vperm.xlu0 %4708, %v4639
        %v4710 = vpop.permute.xlu0 %4709
        %4713 = vset.pattern.permute.xlu0 0
        %4714 = vperm.xlu0 %4713, %v4640
        %v4715 = vpop.permute.xlu0 %4714
        %4718 = vset.pattern.permute.xlu0 0
        %4719 = vperm.xlu0 %4718, %v4641
        %v4720 = vpop.permute.xlu0 %4719
        %4723 = vset.pattern.permute.xlu0 0
        %4724 = vperm.xlu0 %4723, %v4642
        %v4725 = vpop.permute.xlu0 %4724
        %4728 = vset.pattern.permute.xlu0 0
        %4729 = vperm.xlu0 %4728, %v4643
        %v4730 = vpop.permute.xlu0 %4729
        %4733 = vset.pattern.permute.xlu0 0
        %4734 = vperm.xlu0 %4733, %v4644
        %v4735 = vpop.permute.xlu0 %4734
        %4738 = vset.pattern.permute.xlu0 0
        %4739 = vperm.xlu0 %4738, %v4645
        %v4740 = vpop.permute.xlu0 %4739
        %v4742 = vmul.f32 %v4646, %v4665
        %v4743 = vmul.f32 %v4647, %v4670
        %v4744 = vmul.f32 %v4648, %v4675
        %v4745 = vmul.f32 %v4649, %v4680
        %v4746 = vmul.f32 %v4650, %v4685
        %v4747 = vmul.f32 %v4651, %v4690
        %v4748 = vmul.f32 %v4652, %v4695
        %v4749 = vmul.f32 %v4653, %v4700
        %v4750 = vmul.f32 %v4654, %v4705
        %v4751 = vmul.f32 %v4655, %v4710
        %v4752 = vmul.f32 %v4656, %v4715
        %v4753 = vmul.f32 %v4657, %v4720
        %v4754 = vmul.f32 %v4658, %v4725
        %v4755 = vmul.f32 %v4659, %v4730
        %v4756 = vmul.f32 %v4660, %v4735
        %v4757 = vmul.f32 %v4661, %v4740
        %v4758 = vpack.c.bf16 %v4742, %v4742
        %v4759 = vpack.c.bf16 %v4743, %v4743
        %v4760 = vpack.c.bf16 %v4744, %v4744
        %v4761 = vpack.c.bf16 %v4745, %v4745
        %v4762 = vpack.c.bf16 %v4746, %v4746
        %v4763 = vpack.c.bf16 %v4747, %v4747
        %v4764 = vpack.c.bf16 %v4748, %v4748
        %v4765 = vpack.c.bf16 %v4749, %v4749
        %v4766 = vpack.c.bf16 %v4750, %v4750
        %v4767 = vpack.c.bf16 %v4751, %v4751
        %v4768 = vpack.c.bf16 %v4752, %v4752
        %v4769 = vpack.c.bf16 %v4753, %v4753
        %v4770 = vpack.c.bf16 %v4754, %v4754
        %v4771 = vpack.c.bf16 %v4755, %v4755
        %v4772 = vpack.c.bf16 %v4756, %v4756
        %v4773 = vpack.c.bf16 %v4757, %v4757
        %4790 = vrot.lane.b32.xlu0 %v4758, 64
        %v4791 = vpop.permute.xlu0 %4790
        %4792 = vrot.lane.b32.xlu0 %v4759, 64
        %v4793 = vpop.permute.xlu0 %4792
        %4794 = vrot.lane.b32.xlu0 %v4760, 64
        %v4795 = vpop.permute.xlu0 %4794
        %4796 = vrot.lane.b32.xlu0 %v4761, 64
        %v4797 = vpop.permute.xlu0 %4796
        %4798 = vrot.lane.b32.xlu0 %v4762, 64
        %v4799 = vpop.permute.xlu0 %4798
        %4800 = vrot.lane.b32.xlu0 %v4763, 64
        %v4801 = vpop.permute.xlu0 %4800
        %4802 = vrot.lane.b32.xlu0 %v4764, 64
        %v4803 = vpop.permute.xlu0 %4802
        %4804 = vrot.lane.b32.xlu0 %v4765, 64
        %v4805 = vpop.permute.xlu0 %4804
        %4806 = vrot.lane.b32.xlu0 %v4766, 64
        %v4807 = vpop.permute.xlu0 %4806
        %4808 = vrot.lane.b32.xlu0 %v4767, 64
        %v4809 = vpop.permute.xlu0 %4808
        %4810 = vrot.lane.b32.xlu0 %v4768, 64
        %v4811 = vpop.permute.xlu0 %4810
        %4812 = vrot.lane.b32.xlu0 %v4769, 64
        %v4813 = vpop.permute.xlu0 %4812
        %4814 = vrot.lane.b32.xlu0 %v4770, 64
        %v4815 = vpop.permute.xlu0 %4814
        %4816 = vrot.lane.b32.xlu0 %v4771, 64
        %v4817 = vpop.permute.xlu0 %4816
        %4818 = vrot.lane.b32.xlu0 %v4772, 64
        %v4819 = vpop.permute.xlu0 %4818
        %4820 = vrot.lane.b32.xlu0 %v4773, 64
        %v4821 = vpop.permute.xlu0 %4820
        %vm4838 = vcmask 1043968
        %4839 = vst.msk [vmem:[%s687] sm:$0xf] %vm4838, %v4791
        %4840 = vst.msk [vmem:[%s687 + $0x4] sm:$0xf] %vm4838, %v4793
        %4841 = vst.msk [vmem:[%s687 + $0x8] sm:$0xf] %vm4838, %v4795
        %4842 = vst.msk [vmem:[%s687 + $0xc] sm:$0xf] %vm4838, %v4797
        %4843 = vst.msk [vmem:[%s687 + $0x10] sm:$0xf] %vm4838, %v4799
        %4844 = vst.msk [vmem:[%s687 + $0x14] sm:$0xf] %vm4838, %v4801
        %4845 = vst.msk [vmem:[%s687 + $0x18] sm:$0xf] %vm4838, %v4803
        %4846 = vst.msk [vmem:[%s687 + $0x1c] sm:$0xf] %vm4838, %v4805
        %4847 = vst.msk [vmem:[%s687 + $0x20] sm:$0xf] %vm4838, %v4807
        %4848 = vst.msk [vmem:[%s687 + $0x24] sm:$0xf] %vm4838, %v4809
        %4849 = vst.msk [vmem:[%s687 + $0x28] sm:$0xf] %vm4838, %v4811
        %4850 = vst.msk [vmem:[%s687 + $0x2c] sm:$0xf] %vm4838, %v4813
        %4851 = vst.msk [vmem:[%s687 + $0x30] sm:$0xf] %vm4838, %v4815
        %4852 = vst.msk [vmem:[%s687 + $0x34] sm:$0xf] %vm4838, %v4817
        %4853 = vst.msk [vmem:[%s687 + $0x38] sm:$0xf] %vm4838, %v4819
        %4854 = vst.msk [vmem:[%s687 + $0x3c] sm:$0xf] %vm4838, %v4821
        %s4855 = sand.u32 %s135, 1
        %s4856 = sand.u32 %s135, 1
        %s4857 = smul.addr %s4856, 64
        %s4858 = scalar_lea.vmem [#allocation8], %s4857
        // Predicated region
        $region170: #{causal_self_attention.4} parent=142 // pred_check
          %p4859 = pneg %p145
        $region171: #{causal_self_attention.4} parent=142 // pred_check_branch
          %4861 = sbr.rel (%p4859) target = $region173
        $region172: #{causal_self_attention.4} parent=142 // pred_region
          %s4862 = smul.u32 16, %s21
          %s4863 = smul.addr %s4862, 2
          %s4864 = sadd.s32 %s20, %s4863
          %s4865 = smul.addr %s19, 64
          %s4866 = sadd.s32 %s4864, %s4865
          %s4867 = smul.addr %s4866, 4
          %s4868 = scalar_lea.vmem %s3, %s4867
          // Predicated region
          $region174: #{causal_self_attention.4} parent=172 // pred_check
            _
          $region175: #{causal_self_attention.4} parent=172 // pred_check_branch
            %4870 = sbr.rel (0) target = $region177
          $region176: #{causal_self_attention.4} parent=172 // pred_region
            // Predicated region
            $region178: #{causal_self_attention.4} parent=176 // pred_check
              _
            $region179: #{causal_self_attention.4} parent=176 // pred_check_branch
              %4872 = sbr.rel target = $region181
            $region180: #{causal_self_attention.4} parent=176 // pred_region
              // Predicated region
              $region193: #{causal_self_attention.4} parent=180 // pred_check
                _
              $region194: #{causal_self_attention.4} parent=180 // pred_check_branch
                %4918 = sbr.rel (0) target = $region196
              $region195: #{causal_self_attention.4} parent=180 // pred_region
                loop: start=0, step=1, limit=1
                $region197: #{causal_self_attention.4} parent=195 // loop_pre_header
                  _
                $region198: #{causal_self_attention.4} parent=195 // loop_header
                  %s4920 = sphi 0, %s4924
                  %p4921 = scmp.ge.s32.totalorder %s4920, 1
                  %s4925 = sphi %s4858, %s4858
                  %s4926 = sphi %s4868, %s4868
                $region199: #{causal_self_attention.4} parent=195 // loop_header_branch
                  %4923 = sbr.rel (%p4921) target = $region203
                $region200: #{causal_self_attention.4} parent=195 // loop_body
                  _
                $region201: #{causal_self_attention.4} parent=195 // loop_footer
                  %s4924 = sadd.s32 1, %s4920
                $region202: #{causal_self_attention.4} parent=195 // loop_footer_branch
                  %4919 = sbr.rel target = $region198
                $region203: #{causal_self_attention.4} parent=195 // loop_exit
                  _
                %s4928 = ssub.s32 16, 1
                loop: start=0, step=1, limit=1
                $region204: #{causal_self_attention.4} parent=195 // loop_pre_header
                  _
                $region205: #{causal_self_attention.4} parent=195 // loop_header
                  %s4930 = sphi 0, %s4934
                  %p4931 = scmp.ge.s32.totalorder %s4930, 1
                  %s4935 = sphi %s4858, %s4858
                  %s4936 = sphi %s4868, %s4868
                $region206: #{causal_self_attention.4} parent=195 // loop_header_branch
                  %4933 = sbr.rel (%p4931) target = $region210
                $region207: #{causal_self_attention.4} parent=195 // loop_body
                  %v4937 = vld [vmem:[%s4935] sm:%s4928]
                  %4938 = vst [vmem:[%s4936] sm:%s4928] %v4937
                  %v4939 = vld [vmem:[%s4935 + $0x4] sm:%s4928]
                  %4940 = vst [vmem:[%s4936 + $0x8] sm:%s4928] %v4939
                  %v4941 = vld [vmem:[%s4935 + $0x8] sm:%s4928]
                  %4942 = vst [vmem:[%s4936 + $0x10] sm:%s4928] %v4941
                  %v4943 = vld [vmem:[%s4935 + $0xc] sm:%s4928]
                  %4944 = vst [vmem:[%s4936 + $0x18] sm:%s4928] %v4943
                  %v4945 = vld [vmem:[%s4935 + $0x10] sm:%s4928]
                  %4946 = vst [vmem:[%s4936 + $0x20] sm:%s4928] %v4945
                  %v4947 = vld [vmem:[%s4935 + $0x14] sm:%s4928]
                  %4948 = vst [vmem:[%s4936 + $0x28] sm:%s4928] %v4947
                  %v4949 = vld [vmem:[%s4935 + $0x18] sm:%s4928]
                  %4950 = vst [vmem:[%s4936 + $0x30] sm:%s4928] %v4949
                  %v4951 = vld [vmem:[%s4935 + $0x1c] sm:%s4928]
                  %4952 = vst [vmem:[%s4936 + $0x38] sm:%s4928] %v4951
                  %v4953 = vld [vmem:[%s4935 + $0x20] sm:%s4928]
                  %4954 = vst [vmem:[%s4936 + $0x40] sm:%s4928] %v4953
                  %v4955 = vld [vmem:[%s4935 + $0x24] sm:%s4928]
                  %4956 = vst [vmem:[%s4936 + $0x48] sm:%s4928] %v4955
                  %v4957 = vld [vmem:[%s4935 + $0x28] sm:%s4928]
                  %4958 = vst [vmem:[%s4936 + $0x50] sm:%s4928] %v4957
                  %v4959 = vld [vmem:[%s4935 + $0x2c] sm:%s4928]
                  %4960 = vst [vmem:[%s4936 + $0x58] sm:%s4928] %v4959
                  %v4961 = vld [vmem:[%s4935 + $0x30] sm:%s4928]
                  %4962 = vst [vmem:[%s4936 + $0x60] sm:%s4928] %v4961
                  %v4963 = vld [vmem:[%s4935 + $0x34] sm:%s4928]
                  %4964 = vst [vmem:[%s4936 + $0x68] sm:%s4928] %v4963
                  %v4965 = vld [vmem:[%s4935 + $0x38] sm:%s4928]
                  %4966 = vst [vmem:[%s4936 + $0x70] sm:%s4928] %v4965
                  %v4967 = vld [vmem:[%s4935 + $0x3c] sm:%s4928]
                  %4968 = vst [vmem:[%s4936 + $0x78] sm:%s4928] %v4967
                $region208: #{causal_self_attention.4} parent=195 // loop_footer
                  %s4934 = sadd.s32 1, %s4930
                $region209: #{causal_self_attention.4} parent=195 // loop_footer_branch
                  %4929 = sbr.rel target = $region205
                $region210: #{causal_self_attention.4} parent=195 // loop_exit
                  _
              $region196: #{causal_self_attention.4} parent=180 // pred_fallthru
                _
            $region181: #{causal_self_attention.4} parent=176 // pred_fallthru
              _
            // Predicated region
            $region182: #{causal_self_attention.4} parent=176 // pred_check
              _
            $region183: #{causal_self_attention.4} parent=176 // pred_check_branch
              %4874 = sbr.rel (0) target = $region185
            $region184: #{causal_self_attention.4} parent=176 // pred_region
              %s4876 = ssub.s32 16, 1
              loop: start=0, step=1, limit=1
              $region186: #{causal_self_attention.4} parent=184 // loop_pre_header
                _
              $region187: #{causal_self_attention.4} parent=184 // loop_header
                %s4878 = sphi 0, %s4882
                %p4879 = scmp.ge.s32.totalorder %s4878, 1
                %s4883 = sphi %s4858, %s4858
                %s4884 = sphi %s4868, %s4868
              $region188: #{causal_self_attention.4} parent=184 // loop_header_branch
                %4881 = sbr.rel (%p4879) target = $region192
              $region189: #{causal_self_attention.4} parent=184 // loop_body
                %v4885 = vld [vmem:[%s4883] sm:%s4876]
                %4886 = vst [vmem:[%s4884] sm:%s4876] %v4885
                %v4887 = vld [vmem:[%s4883 + $0x4] sm:%s4876]
                %4888 = vst [vmem:[%s4884 + $0x8] sm:%s4876] %v4887
                %v4889 = vld [vmem:[%s4883 + $0x8] sm:%s4876]
                %4890 = vst [vmem:[%s4884 + $0x10] sm:%s4876] %v4889
                %v4891 = vld [vmem:[%s4883 + $0xc] sm:%s4876]
                %4892 = vst [vmem:[%s4884 + $0x18] sm:%s4876] %v4891
                %v4893 = vld [vmem:[%s4883 + $0x10] sm:%s4876]
                %4894 = vst [vmem:[%s4884 + $0x20] sm:%s4876] %v4893
                %v4895 = vld [vmem:[%s4883 + $0x14] sm:%s4876]
                %4896 = vst [vmem:[%s4884 + $0x28] sm:%s4876] %v4895
                %v4897 = vld [vmem:[%s4883 + $0x18] sm:%s4876]
                %4898 = vst [vmem:[%s4884 + $0x30] sm:%s4876] %v4897
                %v4899 = vld [vmem:[%s4883 + $0x1c] sm:%s4876]
                %4900 = vst [vmem:[%s4884 + $0x38] sm:%s4876] %v4899
                %v4901 = vld [vmem:[%s4883 + $0x20] sm:%s4876]
                %4902 = vst [vmem:[%s4884 + $0x40] sm:%s4876] %v4901
                %v4903 = vld [vmem:[%s4883 + $0x24] sm:%s4876]
                %4904 = vst [vmem:[%s4884 + $0x48] sm:%s4876] %v4903
                %v4905 = vld [vmem:[%s4883 + $0x28] sm:%s4876]
                %4906 = vst [vmem:[%s4884 + $0x50] sm:%s4876] %v4905
                %v4907 = vld [vmem:[%s4883 + $0x2c] sm:%s4876]
                %4908 = vst [vmem:[%s4884 + $0x58] sm:%s4876] %v4907
                %v4909 = vld [vmem:[%s4883 + $0x30] sm:%s4876]
                %4910 = vst [vmem:[%s4884 + $0x60] sm:%s4876] %v4909
                %v4911 = vld [vmem:[%s4883 + $0x34] sm:%s4876]
                %4912 = vst [vmem:[%s4884 + $0x68] sm:%s4876] %v4911
                %v4913 = vld [vmem:[%s4883 + $0x38] sm:%s4876]
                %4914 = vst [vmem:[%s4884 + $0x70] sm:%s4876] %v4913
                %v4915 = vld [vmem:[%s4883 + $0x3c] sm:%s4876]
                %4916 = vst [vmem:[%s4884 + $0x78] sm:%s4876] %v4915
              $region190: #{causal_self_attention.4} parent=184 // loop_footer
                %s4882 = sadd.s32 1, %s4878
              $region191: #{causal_self_attention.4} parent=184 // loop_footer_branch
                %4877 = sbr.rel target = $region187
              $region192: #{causal_self_attention.4} parent=184 // loop_exit
                _
            $region185: #{causal_self_attention.4} parent=176 // pred_fallthru
              _
          $region177: #{causal_self_attention.4} parent=172 // pred_fallthru
            _
          %4969 = vnop
        $region173: #{causal_self_attention.4} parent=142 // pred_fallthru
          _
      $region143: #{causal_self_attention.4} parent=5 // pred_fallthru
        _
      %p4970 = scmp.le.s32.totalorder 2, %s9
      // Predicated region
      $region211: #{causal_self_attention.4} parent=5 // pred_check
        %p4971 = pneg %p4970
      $region212: #{causal_self_attention.4} parent=5 // pred_check_branch
        %4973 = sbr.rel (%p4971) target = $region214
      $region213: #{causal_self_attention.4} parent=5 // pred_region
        %s4974 = ssub.s32 %s9, 2
        // Predicated region
        $region215: #{causal_self_attention.4} parent=213 // pred_check
          %p4975 = pneg %p151
        $region216: #{causal_self_attention.4} parent=213 // pred_check_branch
          %4977 = sbr.rel (%p4975) target = $region218
        $region217: #{causal_self_attention.4} parent=213 // pred_region
          %s4978 = sand.u32 %s136, 1
          %s4979 = sand.u32 %s136, 1
          %s4980 = smul.addr %s4979, 64
          %s4981 = scalar_lea.vmem [#allocation8], %s4980
        $region218: #{causal_self_attention.4} parent=213 // pred_fallthru
          _
      $region214: #{causal_self_attention.4} parent=5 // pred_fallthru
        _
    $region6: #{causal_self_attention.4} parent=1 // loop_footer
      %s13 = sadd.s32 1, %s9
    $region7: #{causal_self_attention.4} parent=1 // loop_footer_branch
      %8 = sbr.rel target = $region3
    $region8: #{causal_self_attention.4} parent=1 // loop_exit
      _

</llo_original>
